<compile_context>
chip_gen: v6e
topology: v6e:2x2x1
jax: 0.10.0
libtpu: 0.0.40
codegen_flags: <defaults>
</compile_context>

<pallas_src>
import numpy as np

import jax
import jax.numpy as jnp
from jax.experimental import pallas as pl
from jax.experimental.pallas import tpu as pltpu


# real / padded channel widths (everything kept lane-dense at 128)
C1, C2, F, O = 10, 20, 100, 10
C1P, C2P, FP, OP = 128, 128, 128, 128


def _mm(a, b):
    return jnp.dot(a, b, preferred_element_type=jnp.float32)


# ----------------------------------------------------------------------------
# The fused kernel: one batch-block per grid step, everything resident in VMEM
# ----------------------------------------------------------------------------

def _fused_cnn_kernel(x_ref, t1_ref, b1_ref, w2_ref, b2_ref,
                      wf1_ref, bf1_ref, wf2_ref, bf2_ref, o_ref):
    bt = x_ref.shape[0]
    x = x_ref[...]                                            # (bt, 28, 28) f32

    # ---- conv1 (5x5, Cin=1): single MXU matmul against Toeplitz-packed
    # weights.  LHS rows = (b, i), columns = (dh, w); RHS columns = (j, c).
    lhs = jnp.concatenate(
        [x[:, dh:dh + 24, :].reshape(bt * 24, 28) for dh in range(5)],
        axis=-1)                                              # (bt*24, 140)
    h1 = jnp.maximum(_mm(lhs, t1_ref[...]) + b1_ref[...], 0.0)  # (bt*24, 24*C1P)

    # ---- 2x2 max pool #1 (pure max; relu already applied, relu/pool commute)
    h1 = h1.reshape(bt * 24, 12, 2 * C1P)
    h1 = jnp.maximum(h1[..., :C1P], h1[..., C1P:])            # pool over j
    h1 = h1.reshape(bt * 12, 2, 12, C1P)
    pool1 = jnp.maximum(h1[:, 0], h1[:, 1])                   # pool over i
    pool1 = pool1.reshape(bt, 12, 12, C1P)                    # (b, i2, j2, c)

    # ---- conv2 (3x3, Cin=10): ONE MXU matmul with K = 9*C1P.  The 9 shifted
    # patches are concatenated along the lane-aligned channel axis so the MXU
    # accumulates over all taps internally (no VPU partial-sum adds).
    xcat = jnp.concatenate(
        [pool1[:, dh:dh + 10, dw:dw + 10, :].reshape(bt * 100, C1P)
         for dh in range(3) for dw in range(3)],
        axis=-1)                                              # (bt*100, 9*C1P)
    h2 = jnp.maximum(_mm(xcat, w2_ref[...]) + b2_ref[...], 0.0)  # (bt*100, C2P)

    # ---- 2x2 max pool #2
    h2 = h2.reshape(bt * 5, 2, 10, C2P)
    h2 = jnp.maximum(h2[:, 0], h2[:, 1])                      # pool over p
    h2 = h2.reshape(bt * 5, 5, 2 * C2P)
    pool2 = jnp.maximum(h2[..., :C2P], h2[..., C2P:])         # pool over q

    # ---- fc1 + ReLU, fc2 (torch .view flatten order handled by the
    # pre-permuted / pre-padded fc1 weights)
    flat = pool2.reshape(bt, 25 * C2P)                        # (bt, 3200)
    f1 = jnp.maximum(_mm(flat, wf1_ref[...]) + bf1_ref[...], 0.0)   # (bt, FP)
    out = _mm(f1, wf2_ref[...]) + bf2_ref[...]                # (bt, OP) lane-dense
    o_ref[...] = out.astype(o_ref.dtype)


# ----------------------------------------------------------------------------
# Host-side one-time weight repacking (outside the per-call path)
# ----------------------------------------------------------------------------

def prepare_params(params):
    w1 = np.asarray(params["w1"], np.float32)     # (10, 1, 5, 5)
    b1 = np.asarray(params["b1"], np.float32)     # (10,)
    w2 = np.asarray(params["w2"], np.float32)     # (20, 10, 3, 3)
    b2 = np.asarray(params["b2"], np.float32)     # (20,)
    wf1 = np.asarray(params["wf1"], np.float32)   # (100, 500)
    bf1 = np.asarray(params["bf1"], np.float32)   # (100,)
    wf2 = np.asarray(params["wf2"], np.float32)   # (10, 100)
    bf2 = np.asarray(params["bf2"], np.float32)   # (10,)

    # conv1 as one Toeplitz ("lowered") matrix: rows = (dh, w), cols = (j, c)
    t1 = np.zeros((5, 28, 24 * C1P), np.float32)
    for dh in range(5):
        for dw in range(5):
            for j in range(24):
                t1[dh, j + dw, j * C1P:j * C1P + C1] = w1[:, 0, dh, dw]
    t1 = t1.reshape(5 * 28, 24 * C1P)
    b1p = np.zeros((1, 24 * C1P), np.float32)
    for j in range(24):
        b1p[0, j * C1P:j * C1P + C1] = b1

    # conv2: rows = (dh*3+dw, ci), cols = co
    w2p = np.zeros((9, C1P, C2P), np.float32)
    w2p[:, :C1, :C2] = np.transpose(w2, (2, 3, 1, 0)).reshape(9, C1, C2)
    w2p = w2p.reshape(9 * C1P, C2P)
    b2p = np.zeros((1, C2P), np.float32)
    b2p[0, :C2] = b2

    # fc1: torch flatten order is (c, h, w); our activations are (h, w, c_pad)
    a = np.transpose(wf1.reshape(F, C2, 5, 5), (2, 3, 1, 0))   # (h, w, c, f)
    wf1p4 = np.zeros((5, 5, C2P, FP), np.float32)
    wf1p4[:, :, :C2, :F] = a
    wf1p = wf1p4.reshape(25 * C2P, FP)
    bf1p = np.zeros((1, FP), np.float32)
    bf1p[0, :F] = bf1

    wf2p = np.zeros((FP, OP), np.float32)
    wf2p[:F, :O] = wf2.T
    bf2p = np.zeros((1, OP), np.float32)
    bf2p[0, :O] = bf2

    return {
        "t1": jnp.asarray(t1), "b1": jnp.asarray(b1p),
        "w2": jnp.asarray(w2p), "b2": jnp.asarray(b2p),
        "wf1": jnp.asarray(wf1p), "bf1": jnp.asarray(bf1p),
        "wf2": jnp.asarray(wf2p), "bf2": jnp.asarray(bf2p),
    }


def _round_up(x, m):
    return (x + m - 1) // m * m


def cnn_forward(prep, x):
    """x: (B, 1, 28, 28) f32 -> logits (B, 10).  Single fused Pallas call."""
    B = x.shape[0]
    x2 = x.reshape(B, 28, 28).astype(jnp.float32)         # Cin == 1
    bt = B if B <= 8 else 8
    bpad = _round_up(B, bt)
    if bpad != B:
        x2 = jnp.pad(x2, ((0, bpad - B), (0, 0), (0, 0)))

    out = pl.pallas_call(
        _fused_cnn_kernel,
        out_shape=jax.ShapeDtypeStruct((bpad, OP), jnp.float32),
        grid_spec=pltpu.PrefetchScalarGridSpec(
            num_scalar_prefetch=0,
            grid=(bpad // bt,),
            in_specs=[
                pl.BlockSpec((bt, 28, 28), lambda i: (i, 0, 0)),
                pl.BlockSpec((5 * 28, 24 * C1P), lambda i: (0, 0)),
                pl.BlockSpec((1, 24 * C1P), lambda i: (0, 0)),
                pl.BlockSpec((9 * C1P, C2P), lambda i: (0, 0)),
                pl.BlockSpec((1, C2P), lambda i: (0, 0)),
                pl.BlockSpec((25 * C2P, FP), lambda i: (0, 0)),
                pl.BlockSpec((1, FP), lambda i: (0, 0)),
                pl.BlockSpec((FP, OP), lambda i: (0, 0)),
                pl.BlockSpec((1, OP), lambda i: (0, 0)),
            ],
            out_specs=pl.BlockSpec((bt, OP), lambda i: (i, 0)),
        ),
        compiler_params=pltpu.CompilerParams(
            dimension_semantics=("parallel",),
            vmem_limit_bytes=32 * 1024 * 1024,
        ),
    )(x2, prep["t1"], prep["b1"], prep["w2"], prep["b2"],
      prep["wf1"], prep["bf1"], prep["wf2"], prep["bf2"])
    # single narrow slice, only at the very end
    return out[:B, :O]


# ----------------------------------------------------------------------------
# Params init + pure-JAX reference (correctness check only)
# ----------------------------------------------------------------------------

def init_params(key):
    ks = jax.random.split(key, 8)
    s = 0.1
    return {
        "w1": jax.random.normal(ks[0], (10, 1, 5, 5), jnp.float32) * s,
        "b1": jax.random.normal(ks[1], (10,), jnp.float32) * s,
        "w2": jax.random.normal(ks[2], (20, 10, 3, 3), jnp.float32) * s,
        "b2": jax.random.normal(ks[3], (20,), jnp.float32) * s,
        "wf1": jax.random.normal(ks[4], (100, 500), jnp.float32) * s,
        "bf1": jax.random.normal(ks[5], (100,), jnp.float32) * s,
        "wf2": jax.random.normal(ks[6], (10, 100), jnp.float32) * s,
        "bf2": jax.random.normal(ks[7], (10,), jnp.float32) * s,
    }


def cnn_reference(params, x):
    def conv(x, w, b):
        y = jax.lax.conv_general_dilated(
            x, w, window_strides=(1, 1), padding="VALID",
            dimension_numbers=("NCHW", "OIHW", "NCHW"))
        return y + b.reshape(1, -1, 1, 1)

    def pool_relu(x):
        B, C, H, W = x.shape
        y = x.reshape(B, C, H // 2, 2, W // 2, 2).max(axis=(3, 5))
        return jnp.maximum(y, 0.0)

    B = x.shape[0]
    x = pool_relu(conv(x, params["w1"], params["b1"]))
    x = pool_relu(conv(x, params["w2"], params["b2"]))
    x = x.reshape(B, -1)
    x = jnp.maximum(x @ params["wf1"].T + params["bf1"], 0.0)
    x = x @ params["wf2"].T + params["bf2"]
    return x


if __name__ == "__main__":
    key = jax.random.PRNGKey(0)
    k_params, k_x = jax.random.split(key)

    params = init_params(k_params)
    prep = prepare_params(params)          # one-time weight repack (host side)

    # Input must be (B, 1, 28, 28) so the flattened features == 500.
    x = jax.random.normal(k_x, (2, 1, 28, 28), jnp.float32)

    fwd = jax.jit(cnn_forward)
    out = jax.block_until_ready(fwd(prep, x))

    ref = cnn_reference(params, x)
    assert out.shape == (2, 10), out.shape
    err = float(jnp.max(jnp.abs(out - ref)))
    assert jnp.allclose(out, ref, rtol=1e-3, atol=1e-3), err

    print("KERNEL_OK")
</pallas_src>

<mosaic_0001>
module attributes {stable_mosaic.version = 11 : i64} {
  func.func @_fused_cnn_kernel(%arg0: i32, %arg1: memref<2x28x28xf32, #tpu.memory_space<vmem>>, %arg2: memref<140x3072xf32, #tpu.memory_space<vmem>>, %arg3: memref<1x3072xf32, #tpu.memory_space<vmem>>, %arg4: memref<1152x128xf32, #tpu.memory_space<vmem>>, %arg5: memref<1x128xf32, #tpu.memory_space<vmem>>, %arg6: memref<3200x128xf32, #tpu.memory_space<vmem>>, %arg7: memref<1x128xf32, #tpu.memory_space<vmem>>, %arg8: memref<128x128xf32, #tpu.memory_space<vmem>>, %arg9: memref<1x128xf32, #tpu.memory_space<vmem>>, %arg10: memref<2x128xf32, #tpu.memory_space<vmem>>) attributes {dimension_semantics = [#tpu.dimension_semantics<parallel>], iteration_bounds = array<i64: 1>, scalar_prefetch = 0 : i64, scratch_operands = 0 : i64, tpu.core_type = #tpu.core_type<tc>, window_params = [{transform_indices = @transform_0, window_bounds = array<i64: 2, 28, 28>}, {pipeline_mode = #tpu.pipeline_mode<synchronous>, transform_indices = @transform_1, window_bounds = array<i64: 140, 3072>}, {pipeline_mode = #tpu.pipeline_mode<synchronous>, transform_indices = @transform_2, window_bounds = array<i64: 1, 3072>}, {pipeline_mode = #tpu.pipeline_mode<synchronous>, transform_indices = @transform_3, window_bounds = array<i64: 1152, 128>}, {pipeline_mode = #tpu.pipeline_mode<synchronous>, transform_indices = @transform_4, window_bounds = array<i64: 1, 128>}, {pipeline_mode = #tpu.pipeline_mode<synchronous>, transform_indices = @transform_5, window_bounds = array<i64: 3200, 128>}, {pipeline_mode = #tpu.pipeline_mode<synchronous>, transform_indices = @transform_6, window_bounds = array<i64: 1, 128>}, {pipeline_mode = #tpu.pipeline_mode<synchronous>, transform_indices = @transform_7, window_bounds = array<i64: 128, 128>}, {pipeline_mode = #tpu.pipeline_mode<synchronous>, transform_indices = @transform_8, window_bounds = array<i64: 1, 128>}, {transform_indices = @transform_9, window_bounds = array<i64: 2, 128>}]} {
    %c0 = arith.constant 0 : index
    %c0_0 = arith.constant 0 : index
    %c0_1 = arith.constant 0 : index
    %0 = vector.load %arg1[%c0, %c0_0, %c0_1] : memref<2x28x28xf32, #tpu.memory_space<vmem>>, vector<2x28x28xf32>
    %1 = vector.extract_strided_slice %0 {offsets = [0, 0, 0], sizes = [2, 24, 28], strides = [1, 1, 1]} : vector<2x28x28xf32> to vector<2x24x28xf32>
    %2 = vector.shape_cast %1 : vector<2x24x28xf32> to vector<48x28xf32>
    %3 = vector.extract_strided_slice %0 {offsets = [0, 1, 0], sizes = [2, 24, 28], strides = [1, 1, 1]} : vector<2x28x28xf32> to vector<2x24x28xf32>
    %4 = vector.shape_cast %3 : vector<2x24x28xf32> to vector<48x28xf32>
    %5 = vector.extract_strided_slice %0 {offsets = [0, 2, 0], sizes = [2, 24, 28], strides = [1, 1, 1]} : vector<2x28x28xf32> to vector<2x24x28xf32>
    %6 = vector.shape_cast %5 : vector<2x24x28xf32> to vector<48x28xf32>
    %7 = vector.extract_strided_slice %0 {offsets = [0, 3, 0], sizes = [2, 24, 28], strides = [1, 1, 1]} : vector<2x28x28xf32> to vector<2x24x28xf32>
    %8 = vector.shape_cast %7 : vector<2x24x28xf32> to vector<48x28xf32>
    %9 = vector.extract_strided_slice %0 {offsets = [0, 4, 0], sizes = [2, 24, 28], strides = [1, 1, 1]} : vector<2x28x28xf32> to vector<2x24x28xf32>
    %10 = vector.shape_cast %9 : vector<2x24x28xf32> to vector<48x28xf32>
    %11 = tpu.concatenate %2, %4, %6, %8, %10 in 1 : vector<48x28xf32>, vector<48x28xf32>, vector<48x28xf32>, vector<48x28xf32>, vector<48x28xf32> -> vector<48x140xf32>
    %c0_2 = arith.constant 0 : index
    %c0_3 = arith.constant 0 : index
    %12 = vector.load %arg2[%c0_2, %c0_3] : memref<140x3072xf32, #tpu.memory_space<vmem>>, vector<140x3072xf32>
    %cst = arith.constant dense<0.000000e+00> : vector<48x3072xf32>
    %13 = tpu.matmul %11, %12, %cst {dimension_numbers = #tpu.dot_dimension_numbers<[1], [0], [0], [1], [0, 0, 1, 1], [], []>} : vector<48x140xf32>, vector<140x3072xf32>, vector<48x3072xf32> -> vector<48x3072xf32>
    %c0_4 = arith.constant 0 : index
    %c0_5 = arith.constant 0 : index
    %14 = vector.load %arg3[%c0_4, %c0_5] : memref<1x3072xf32, #tpu.memory_space<vmem>>, vector<1x3072xf32>
    %15 = vector.broadcast %14 : vector<1x3072xf32> to vector<48x3072xf32>
    %16 = arith.addf %13, %15 : vector<48x3072xf32>
    %cst_6 = arith.constant 0.000000e+00 : f32
    %17 = vector.broadcast %cst_6 : f32 to vector<48x3072xf32>
    %18 = arith.maximumf %16, %17 : vector<48x3072xf32>
    %19 = vector.shape_cast %18 : vector<48x3072xf32> to vector<48x12x256xf32>
    %20 = vector.extract_strided_slice %19 {offsets = [0, 0, 0], sizes = [48, 12, 128], strides = [1, 1, 1]} : vector<48x12x256xf32> to vector<48x12x128xf32>
    %21 = vector.extract_strided_slice %19 {offsets = [0, 0, 128], sizes = [48, 12, 128], strides = [1, 1, 1]} : vector<48x12x256xf32> to vector<48x12x128xf32>
    %22 = arith.maximumf %20, %21 : vector<48x12x128xf32>
    %23 = vector.shape_cast %22 : vector<48x12x128xf32> to vector<24x2x12x128xf32>
    %24 = vector.extract_strided_slice %23 {offsets = [0, 0, 0, 0], sizes = [24, 1, 12, 128], strides = [1, 1, 1, 1]} : vector<24x2x12x128xf32> to vector<24x1x12x128xf32>
    %25 = vector.shape_cast %24 : vector<24x1x12x128xf32> to vector<24x12x128xf32>
    %26 = vector.extract_strided_slice %23 {offsets = [0, 1, 0, 0], sizes = [24, 1, 12, 128], strides = [1, 1, 1, 1]} : vector<24x2x12x128xf32> to vector<24x1x12x128xf32>
    %27 = vector.shape_cast %26 : vector<24x1x12x128xf32> to vector<24x12x128xf32>
    %28 = arith.maximumf %25, %27 : vector<24x12x128xf32>
    %29 = vector.shape_cast %28 : vector<24x12x128xf32> to vector<2x12x12x128xf32>
    %30 = vector.extract_strided_slice %29 {offsets = [0, 0, 0, 0], sizes = [2, 10, 10, 128], strides = [1, 1, 1, 1]} : vector<2x12x12x128xf32> to vector<2x10x10x128xf32>
    %31 = vector.shape_cast %30 : vector<2x10x10x128xf32> to vector<200x128xf32>
    %32 = vector.extract_strided_slice %29 {offsets = [0, 0, 1, 0], sizes = [2, 10, 10, 128], strides = [1, 1, 1, 1]} : vector<2x12x12x128xf32> to vector<2x10x10x128xf32>
    %33 = vector.shape_cast %32 : vector<2x10x10x128xf32> to vector<200x128xf32>
    %34 = vector.extract_strided_slice %29 {offsets = [0, 0, 2, 0], sizes = [2, 10, 10, 128], strides = [1, 1, 1, 1]} : vector<2x12x12x128xf32> to vector<2x10x10x128xf32>
    %35 = vector.shape_cast %34 : vector<2x10x10x128xf32> to vector<200x128xf32>
    %36 = vector.extract_strided_slice %29 {offsets = [0, 1, 0, 0], sizes = [2, 10, 10, 128], strides = [1, 1, 1, 1]} : vector<2x12x12x128xf32> to vector<2x10x10x128xf32>
    %37 = vector.shape_cast %36 : vector<2x10x10x128xf32> to vector<200x128xf32>
    %38 = vector.extract_strided_slice %29 {offsets = [0, 1, 1, 0], sizes = [2, 10, 10, 128], strides = [1, 1, 1, 1]} : vector<2x12x12x128xf32> to vector<2x10x10x128xf32>
    %39 = vector.shape_cast %38 : vector<2x10x10x128xf32> to vector<200x128xf32>
    %40 = vector.extract_strided_slice %29 {offsets = [0, 1, 2, 0], sizes = [2, 10, 10, 128], strides = [1, 1, 1, 1]} : vector<2x12x12x128xf32> to vector<2x10x10x128xf32>
    %41 = vector.shape_cast %40 : vector<2x10x10x128xf32> to vector<200x128xf32>
    %42 = vector.extract_strided_slice %29 {offsets = [0, 2, 0, 0], sizes = [2, 10, 10, 128], strides = [1, 1, 1, 1]} : vector<2x12x12x128xf32> to vector<2x10x10x128xf32>
    %43 = vector.shape_cast %42 : vector<2x10x10x128xf32> to vector<200x128xf32>
    %44 = vector.extract_strided_slice %29 {offsets = [0, 2, 1, 0], sizes = [2, 10, 10, 128], strides = [1, 1, 1, 1]} : vector<2x12x12x128xf32> to vector<2x10x10x128xf32>
    %45 = vector.shape_cast %44 : vector<2x10x10x128xf32> to vector<200x128xf32>
    %46 = vector.extract_strided_slice %29 {offsets = [0, 2, 2, 0], sizes = [2, 10, 10, 128], strides = [1, 1, 1, 1]} : vector<2x12x12x128xf32> to vector<2x10x10x128xf32>
    %47 = vector.shape_cast %46 : vector<2x10x10x128xf32> to vector<200x128xf32>
    %48 = tpu.concatenate %31, %33, %35, %37, %39, %41, %43, %45, %47 in 1 : vector<200x128xf32>, vector<200x128xf32>, vector<200x128xf32>, vector<200x128xf32>, vector<200x128xf32>, vector<200x128xf32>, vector<200x128xf32>, vector<200x128xf32>, vector<200x128xf32> -> vector<200x1152xf32>
    %c0_7 = arith.constant 0 : index
    %c0_8 = arith.constant 0 : index
    %49 = vector.load %arg4[%c0_7, %c0_8] : memref<1152x128xf32, #tpu.memory_space<vmem>>, vector<1152x128xf32>
    %cst_9 = arith.constant dense<0.000000e+00> : vector<200x128xf32>
    %50 = tpu.matmul %48, %49, %cst_9 {dimension_numbers = #tpu.dot_dimension_numbers<[1], [0], [0], [1], [0, 0, 1, 1], [], []>} : vector<200x1152xf32>, vector<1152x128xf32>, vector<200x128xf32> -> vector<200x128xf32>
    %c0_10 = arith.constant 0 : index
    %c0_11 = arith.constant 0 : index
    %51 = vector.load %arg5[%c0_10, %c0_11] : memref<1x128xf32, #tpu.memory_space<vmem>>, vector<1x128xf32>
    %52 = vector.broadcast %51 : vector<1x128xf32> to vector<200x128xf32>
    %53 = arith.addf %50, %52 : vector<200x128xf32>
    %cst_12 = arith.constant 0.000000e+00 : f32
    %54 = vector.broadcast %cst_12 : f32 to vector<200x128xf32>
    %55 = arith.maximumf %53, %54 : vector<200x128xf32>
    %56 = vector.shape_cast %55 : vector<200x128xf32> to vector<10x2x10x128xf32>
    %57 = vector.extract_strided_slice %56 {offsets = [0, 0, 0, 0], sizes = [10, 1, 10, 128], strides = [1, 1, 1, 1]} : vector<10x2x10x128xf32> to vector<10x1x10x128xf32>
    %58 = vector.shape_cast %57 : vector<10x1x10x128xf32> to vector<10x10x128xf32>
    %59 = vector.extract_strided_slice %56 {offsets = [0, 1, 0, 0], sizes = [10, 1, 10, 128], strides = [1, 1, 1, 1]} : vector<10x2x10x128xf32> to vector<10x1x10x128xf32>
    %60 = vector.shape_cast %59 : vector<10x1x10x128xf32> to vector<10x10x128xf32>
    %61 = arith.maximumf %58, %60 : vector<10x10x128xf32>
    %62 = vector.shape_cast %61 : vector<10x10x128xf32> to vector<10x5x256xf32>
    %63 = vector.extract_strided_slice %62 {offsets = [0, 0, 0], sizes = [10, 5, 128], strides = [1, 1, 1]} : vector<10x5x256xf32> to vector<10x5x128xf32>
    %64 = vector.extract_strided_slice %62 {offsets = [0, 0, 128], sizes = [10, 5, 128], strides = [1, 1, 1]} : vector<10x5x256xf32> to vector<10x5x128xf32>
    %65 = arith.maximumf %63, %64 : vector<10x5x128xf32>
    %66 = vector.shape_cast %65 : vector<10x5x128xf32> to vector<2x3200xf32>
    %c0_13 = arith.constant 0 : index
    %c0_14 = arith.constant 0 : index
    %67 = vector.load %arg6[%c0_13, %c0_14] : memref<3200x128xf32, #tpu.memory_space<vmem>>, vector<3200x128xf32>
    %cst_15 = arith.constant dense<0.000000e+00> : vector<2x128xf32>
    %68 = tpu.matmul %66, %67, %cst_15 {dimension_numbers = #tpu.dot_dimension_numbers<[1], [0], [0], [1], [0, 0, 1, 1], [], []>} : vector<2x3200xf32>, vector<3200x128xf32>, vector<2x128xf32> -> vector<2x128xf32>
    %c0_16 = arith.constant 0 : index
    %c0_17 = arith.constant 0 : index
    %69 = vector.load %arg7[%c0_16, %c0_17] : memref<1x128xf32, #tpu.memory_space<vmem>>, vector<1x128xf32>
    %70 = vector.broadcast %69 : vector<1x128xf32> to vector<2x128xf32>
    %71 = arith.addf %68, %70 : vector<2x128xf32>
    %cst_18 = arith.constant 0.000000e+00 : f32
    %72 = vector.broadcast %cst_18 : f32 to vector<2x128xf32>
    %73 = arith.maximumf %71, %72 : vector<2x128xf32>
    %c0_19 = arith.constant 0 : index
    %c0_20 = arith.constant 0 : index
    %74 = vector.load %arg8[%c0_19, %c0_20] : memref<128x128xf32, #tpu.memory_space<vmem>>, vector<128x128xf32>
    %cst_21 = arith.constant dense<0.000000e+00> : vector<2x128xf32>
    %75 = tpu.matmul %73, %74, %cst_21 {dimension_numbers = #tpu.dot_dimension_numbers<[1], [0], [0], [1], [0, 0, 1, 1], [], []>} : vector<2x128xf32>, vector<128x128xf32>, vector<2x128xf32> -> vector<2x128xf32>
    %c0_22 = arith.constant 0 : index
    %c0_23 = arith.constant 0 : index
    %76 = vector.load %arg9[%c0_22, %c0_23] : memref<1x128xf32, #tpu.memory_space<vmem>>, vector<1x128xf32>
    %77 = vector.broadcast %76 : vector<1x128xf32> to vector<2x128xf32>
    %78 = arith.addf %75, %77 : vector<2x128xf32>
    %c0_24 = arith.constant 0 : index
    %c0_25 = arith.constant 0 : index
    %79 = vector.load %arg10[%c0_24, %c0_25] : memref<2x128xf32, #tpu.memory_space<vmem>>, vector<2x128xf32>
    tpu.vector_store %arg10[%c0_24, %c0_25], %78 {strides = array<i32>} : memref<2x128xf32, #tpu.memory_space<vmem>>, vector<2x128xf32>,
    return
  }
  func.func @transform_0(%arg0: i32) -> (i32, i32, i32) {
    %c0_i32 = arith.constant 0 : i32
    %c0_i32_0 = arith.constant 0 : i32
    %c0_i32_1 = arith.constant 0 : i32
    return %arg0, %c0_i32, %c0_i32_0 : i32, i32, i32
  }
  func.func @transform_1(%arg0: i32) -> (i32, i32) {
    %c0_i32 = arith.constant 0 : i32
    %c0_i32_0 = arith.constant 0 : i32
    %c0_i32_1 = arith.constant 0 : i32
    return %c0_i32, %c0_i32_0 : i32, i32
  }
  func.func @transform_2(%arg0: i32) -> (i32, i32) {
    %c0_i32 = arith.constant 0 : i32
    %c0_i32_0 = arith.constant 0 : i32
    %c0_i32_1 = arith.constant 0 : i32
    return %c0_i32, %c0_i32_0 : i32, i32
  }
  func.func @transform_3(%arg0: i32) -> (i32, i32) {
    %c0_i32 = arith.constant 0 : i32
    %c0_i32_0 = arith.constant 0 : i32
    %c0_i32_1 = arith.constant 0 : i32
    return %c0_i32, %c0_i32_0 : i32, i32
  }
  func.func @transform_4(%arg0: i32) -> (i32, i32) {
    %c0_i32 = arith.constant 0 : i32
    %c0_i32_0 = arith.constant 0 : i32
    %c0_i32_1 = arith.constant 0 : i32
    return %c0_i32, %c0_i32_0 : i32, i32
  }
  func.func @transform_5(%arg0: i32) -> (i32, i32) {
    %c0_i32 = arith.constant 0 : i32
    %c0_i32_0 = arith.constant 0 : i32
    %c0_i32_1 = arith.constant 0 : i32
    return %c0_i32, %c0_i32_0 : i32, i32
  }
  func.func @transform_6(%arg0: i32) -> (i32, i32) {
    %c0_i32 = arith.constant 0 : i32
    %c0_i32_0 = arith.constant 0 : i32
    %c0_i32_1 = arith.constant 0 : i32
    return %c0_i32, %c0_i32_0 : i32, i32
  }
  func.func @transform_7(%arg0: i32) -> (i32, i32) {
    %c0_i32 = arith.constant 0 : i32
    %c0_i32_0 = arith.constant 0 : i32
    %c0_i32_1 = arith.constant 0 : i32
    return %c0_i32, %c0_i32_0 : i32, i32
  }
  func.func @transform_8(%arg0: i32) -> (i32, i32) {
    %c0_i32 = arith.constant 0 : i32
    %c0_i32_0 = arith.constant 0 : i32
    %c0_i32_1 = arith.constant 0 : i32
    return %c0_i32, %c0_i32_0 : i32, i32
  }
  func.func @transform_9(%arg0: i32) -> (i32, i32) {
    %c0_i32 = arith.constant 0 : i32
    %c0_i32_0 = arith.constant 0 : i32
    return %arg0, %c0_i32 : i32, i32
  }
}

</mosaic_0001>

<llo_original>
// kernel: cnn_forward.1
$region0: #{cnn_forward.1}
  #allocation0 [shape = 'u32[]', space=smem, size = 0x4, offset = 0x4, fixed_abs, tag = 'smem constant byte address 0x4 - core index']
  #allocation1 [shape = 'u32[144,128]{1,0:T(1,128)}', space=vmem, size = 0x12000, scoped, tag = 'internal scratch']
  %s0 = inlined_call_operand.vmem [shape: f32[2,28,28], index: 0, kind: input, shape index: {}]
  %s1 = inlined_call_operand.hbm [shape: f32[140,3072], index: 1, kind: input, shape index: {}]
  %s2 = inlined_call_operand.hbm [shape: f32[1,3072], index: 2, kind: input, shape index: {}]
  %s3 = inlined_call_operand.hbm [shape: f32[1152,128], index: 3, kind: input, shape index: {}]
  %s4 = inlined_call_operand.hbm [shape: f32[1,128], index: 4, kind: input, shape index: {}]
  %s5 = inlined_call_operand.hbm [shape: f32[3200,128], index: 5, kind: input, shape index: {}]
  %s6 = inlined_call_operand.hbm [shape: f32[1,128], index: 6, kind: input, shape index: {}]
  %s7 = inlined_call_operand.hbm [shape: f32[128,128], index: 7, kind: input, shape index: {}]
  %s8 = inlined_call_operand.hbm [shape: f32[1,128], index: 8, kind: input, shape index: {}]
  %s9 = inlined_call_operand.hbm [shape: f32[2,128], index: 9, kind: output, shape index: {}]
  %s10 = sld [smem:[#allocation0]]
  $region78: #{cnn_forward.1} parent=0
    _
  %s12 = ssub.s32 1, %s10
  %s13 = scalar_select 0, %s12, %s10
  $region1: #{cnn_forward.1} parent=0
    #allocation2 [shape = 'u8[1769472]{0}', space=vmem, size = 0x1b0000, scoped, tag = 'input window, operand 1, single buffered']
    #allocation3 [shape = 's32[1]{0}', space=sflag, size = 0x4, scoped, tag = 'scoped memory for cnn_forward.1']
    #allocation4 [shape = 's32[1]{0}', space=sflag, size = 0x4, scoped, tag = 'scoped memory for cnn_forward.1']
    #allocation5 [shape = 'u8[12288]{0}', space=vmem, size = 0x3000, scoped, tag = 'input window, operand 2, single buffered']
    #allocation6 [shape = 's32[1]{0}', space=sflag, size = 0x4, scoped, tag = 'scoped memory for cnn_forward.1']
    #allocation7 [shape = 'u8[589824]{0}', space=vmem, size = 0x90000, scoped, tag = 'input window, operand 3, single buffered']
    #allocation8 [shape = 'u8[512]{0}', space=vmem, size = 0x400, scoped, tag = 'input window, operand 4, single buffered']
    #allocation9 [shape = 's32[1]{0}', space=sflag, size = 0x4, scoped, tag = 'scoped memory for cnn_forward.1']
    #allocation10 [shape = 'u8[1638400]{0}', space=vmem, size = 0x190000, scoped, tag = 'input window, operand 5, single buffered']
    #allocation11 [shape = 'u8[512]{0}', space=vmem, size = 0x400, scoped, tag = 'input window, operand 6, single buffered']
    #allocation12 [shape = 's32[1]{0}', space=sflag, size = 0x4, scoped, tag = 'scoped memory for cnn_forward.1']
    #allocation13 [shape = 'u8[65536]{0}', space=vmem, size = 0x10000, scoped, tag = 'input window, operand 7, single buffered']
    #allocation14 [shape = 'u8[512]{0}', space=vmem, size = 0x400, scoped, tag = 'input window, operand 8, single buffered']
    #allocation15 [shape = 's32[1]{0}', space=sflag, size = 0x4, scoped, tag = 'scoped memory for cnn_forward.1']
    #allocation16 [shape = 'u8[1024]{0}', space=vmem, size = 0x400, scoped, tag = 'output window, operand 0, single buffered']
    %14 = vsyncpa [#allocation3], 0
    %15 = vsyncpa [#allocation6], 0
    %16 = vsyncpa [#allocation9], 0
    %17 = vsyncpa [#allocation12], 0
    %18 = vsyncpa [#allocation15], 0
    %19 = vsyncpa [#allocation4], 0
    // Predicated region
    $region2: #{cnn_forward.1} parent=1 // pred_check
      _
    $region3: #{cnn_forward.1} parent=1 // pred_check_branch
      %21 = sbr.rel (0) target = $region5
    $region4: #{cnn_forward.1} parent=1 // pred_region
      _
    $region5: #{cnn_forward.1} parent=1 // pred_fallthru
      _
    // Predicated region
    $region6: #{cnn_forward.1} parent=1 // pred_check
      _
    $region7: #{cnn_forward.1} parent=1 // pred_check_branch
      %23 = sbr.rel (0) target = $region9
    $region8: #{cnn_forward.1} parent=1 // pred_region
      %s25 = ssub.s32 55296, 55296
      %26 = vsyncadd [#allocation3], %s25
      %s27 = sshll.u32 [#allocation2], 4
      %s28 = int_to_ptr.vmem [resolvable:$true] %s27
      %33 = dma.hbm_to_vmem [thread:$0]  %s1, 55296, %s28, [#allocation3], 3072, 3072, 192
    $region9: #{cnn_forward.1} parent=1 // pred_fallthru
      _
    // Predicated region
    $region10: #{cnn_forward.1} parent=1 // pred_check
      _
    $region11: #{cnn_forward.1} parent=1 // pred_check_branch
      %35 = sbr.rel (0) target = $region13
    $region12: #{cnn_forward.1} parent=1 // pred_region
      %s37 = ssub.s32 384, 384
      %38 = vsyncadd [#allocation6], %s37
      %s40 = sshll.u32 [#allocation5], 4
      %s41 = int_to_ptr.vmem [resolvable:$true] %s40
      %43 = dma.hbm_to_vmem [thread:$0]  %s2, 384, %s41, [#allocation6]
    $region13: #{cnn_forward.1} parent=1 // pred_fallthru
      _
    // Predicated region
    $region14: #{cnn_forward.1} parent=1 // pred_check
      _
    $region15: #{cnn_forward.1} parent=1 // pred_check_branch
      %45 = sbr.rel (0) target = $region17
    $region16: #{cnn_forward.1} parent=1 // pred_region
      %s47 = ssub.s32 18432, 18432
      %48 = vsyncadd [#allocation6], %s47
      %s49 = sshll.u32 [#allocation7], 4
      %s50 = int_to_ptr.vmem [resolvable:$true] %s49
      %55 = dma.hbm_to_vmem [thread:$0]  %s3, 18432, %s50, [#allocation6], 128, 128, 8
    $region17: #{cnn_forward.1} parent=1 // pred_fallthru
      _
    // Predicated region
    $region18: #{cnn_forward.1} parent=1 // pred_check
      _
    $region19: #{cnn_forward.1} parent=1 // pred_check_branch
      %57 = sbr.rel (0) target = $region21
    $region20: #{cnn_forward.1} parent=1 // pred_region
      %s59 = ssub.s32 16, 16
      %60 = vsyncadd [#allocation9], %s59
      %s62 = sshll.u32 [#allocation8], 4
      %s63 = int_to_ptr.vmem [resolvable:$true] %s62
      %65 = dma.hbm_to_vmem [thread:$0]  %s4, 16, %s63, [#allocation9]
    $region21: #{cnn_forward.1} parent=1 // pred_fallthru
      _
    // Predicated region
    $region22: #{cnn_forward.1} parent=1 // pred_check
      _
    $region23: #{cnn_forward.1} parent=1 // pred_check_branch
      %67 = sbr.rel (0) target = $region25
    $region24: #{cnn_forward.1} parent=1 // pred_region
      %s69 = ssub.s32 51200, 51200
      %70 = vsyncadd [#allocation9], %s69
      %s71 = sshll.u32 [#allocation10], 4
      %s72 = int_to_ptr.vmem [resolvable:$true] %s71
      %77 = dma.hbm_to_vmem [thread:$0]  %s5, 51200, %s72, [#allocation9], 128, 128, 8
    $region25: #{cnn_forward.1} parent=1 // pred_fallthru
      _
    // Predicated region
    $region26: #{cnn_forward.1} parent=1 // pred_check
      _
    $region27: #{cnn_forward.1} parent=1 // pred_check_branch
      %79 = sbr.rel (0) target = $region29
    $region28: #{cnn_forward.1} parent=1 // pred_region
      %s81 = ssub.s32 16, 16
      %82 = vsyncadd [#allocation12], %s81
      %s84 = sshll.u32 [#allocation11], 4
      %s85 = int_to_ptr.vmem [resolvable:$true] %s84
      %87 = dma.hbm_to_vmem [thread:$0]  %s6, 16, %s85, [#allocation12]
    $region29: #{cnn_forward.1} parent=1 // pred_fallthru
      _
    // Predicated region
    $region30: #{cnn_forward.1} parent=1 // pred_check
      _
    $region31: #{cnn_forward.1} parent=1 // pred_check_branch
      %89 = sbr.rel (0) target = $region33
    $region32: #{cnn_forward.1} parent=1 // pred_region
      %s91 = ssub.s32 2048, 2048
      %92 = vsyncadd [#allocation12], %s91
      %s93 = sshll.u32 [#allocation13], 4
      %s94 = int_to_ptr.vmem [resolvable:$true] %s93
      %99 = dma.hbm_to_vmem [thread:$0]  %s7, 2048, %s94, [#allocation12], 128, 128, 8
    $region33: #{cnn_forward.1} parent=1 // pred_fallthru
      _
    // Predicated region
    $region34: #{cnn_forward.1} parent=1 // pred_check
      _
    $region35: #{cnn_forward.1} parent=1 // pred_check_branch
      %101 = sbr.rel (0) target = $region37
    $region36: #{cnn_forward.1} parent=1 // pred_region
      %s103 = ssub.s32 16, 16
      %104 = vsyncadd [#allocation15], %s103
      %s106 = sshll.u32 [#allocation14], 4
      %s107 = int_to_ptr.vmem [resolvable:$true] %s106
      %109 = dma.hbm_to_vmem [thread:$0]  %s8, 16, %s107, [#allocation15]
    $region37: #{cnn_forward.1} parent=1 // pred_fallthru
      _
    // Predicated region
    $region38: #{cnn_forward.1} parent=1 // pred_check
      _
    $region39: #{cnn_forward.1} parent=1 // pred_check_branch
      %111 = sbr.rel (0) target = $region41
    $region40: #{cnn_forward.1} parent=1 // pred_region
      %112 = dma.done [#allocation3], 55296
    $region41: #{cnn_forward.1} parent=1 // pred_fallthru
      _
    // Predicated region
    $region42: #{cnn_forward.1} parent=1 // pred_check
      _
    $region43: #{cnn_forward.1} parent=1 // pred_check_branch
      %114 = sbr.rel (0) target = $region45
    $region44: #{cnn_forward.1} parent=1 // pred_region
      %115 = dma.done [#allocation6], 384
    $region45: #{cnn_forward.1} parent=1 // pred_fallthru
      _
    // Predicated region
    $region46: #{cnn_forward.1} parent=1 // pred_check
      _
    $region47: #{cnn_forward.1} parent=1 // pred_check_branch
      %117 = sbr.rel (0) target = $region49
    $region48: #{cnn_forward.1} parent=1 // pred_region
      %118 = dma.done [#allocation6], 18432
    $region49: #{cnn_forward.1} parent=1 // pred_fallthru
      _
    // Predicated region
    $region50: #{cnn_forward.1} parent=1 // pred_check
      _
    $region51: #{cnn_forward.1} parent=1 // pred_check_branch
      %120 = sbr.rel (0) target = $region53
    $region52: #{cnn_forward.1} parent=1 // pred_region
      %121 = dma.done [#allocation9], 16
    $region53: #{cnn_forward.1} parent=1 // pred_fallthru
      _
    // Predicated region
    $region54: #{cnn_forward.1} parent=1 // pred_check
      _
    $region55: #{cnn_forward.1} parent=1 // pred_check_branch
      %123 = sbr.rel (0) target = $region57
    $region56: #{cnn_forward.1} parent=1 // pred_region
      %124 = dma.done [#allocation9], 51200
    $region57: #{cnn_forward.1} parent=1 // pred_fallthru
      _
    // Predicated region
    $region58: #{cnn_forward.1} parent=1 // pred_check
      _
    $region59: #{cnn_forward.1} parent=1 // pred_check_branch
      %126 = sbr.rel (0) target = $region61
    $region60: #{cnn_forward.1} parent=1 // pred_region
      %127 = dma.done [#allocation12], 16
    $region61: #{cnn_forward.1} parent=1 // pred_fallthru
      _
    // Predicated region
    $region62: #{cnn_forward.1} parent=1 // pred_check
      _
    $region63: #{cnn_forward.1} parent=1 // pred_check_branch
      %129 = sbr.rel (0) target = $region65
    $region64: #{cnn_forward.1} parent=1 // pred_region
      %130 = dma.done [#allocation12], 2048
    $region65: #{cnn_forward.1} parent=1 // pred_fallthru
      _
    // Predicated region
    $region66: #{cnn_forward.1} parent=1 // pred_check
      _
    $region67: #{cnn_forward.1} parent=1 // pred_check_branch
      %132 = sbr.rel (0) target = $region69
    $region68: #{cnn_forward.1} parent=1 // pred_region
      %133 = dma.done [#allocation15], 16
    $region69: #{cnn_forward.1} parent=1 // pred_fallthru
      _
    %v134 = vld [vmem:[%s0] sm:$0xff]
    %v135 = vld [vmem:[%s0 + $0x8] sm:$0xff]
    %v136 = vld [vmem:[%s0 + $0x10] sm:$0xff]
    %v137 = vld [vmem:[%s0 + $0x18] sm:$0xf]
    %v138 = vld [vmem:[%s0 + $0x20] sm:$0xff]
    %v139 = vld [vmem:[%s0 + $0x28] sm:$0xff]
    %v140 = vld [vmem:[%s0 + $0x30] sm:$0xff]
    %v141 = vld [vmem:[%s0 + $0x38] sm:$0xf]
    %vm150 = vcmask 1046528
    %v151 = vrot.slane %v134, 1
    %v152 = vrot.slane %v135, 1
    %v153 = vsel %vm150, %v151, %v152
    %v154 = vrot.slane %v136, 1
    %v155 = vsel %vm150, %v152, %v154
    %v156 = vrot.slane %v137, 1
    %v157 = vsel %vm150, %v154, %v156
    %v158 = vrot.slane %v138, 1
    %v159 = vrot.slane %v139, 1
    %v160 = vsel %vm150, %v158, %v159
    %v161 = vrot.slane %v140, 1
    %v162 = vsel %vm150, %v159, %v161
    %v163 = vrot.slane %v141, 1
    %v164 = vsel %vm150, %v161, %v163
    %vm165 = vcmask 1045504
    %v166 = vrot.slane %v134, 2
    %v167 = vrot.slane %v135, 2
    %v168 = vsel %vm165, %v166, %v167
    %v169 = vrot.slane %v136, 2
    %v170 = vsel %vm165, %v167, %v169
    %v171 = vrot.slane %v137, 2
    %v172 = vsel %vm165, %v169, %v171
    %v173 = vrot.slane %v138, 2
    %v174 = vrot.slane %v139, 2
    %v175 = vsel %vm165, %v173, %v174
    %v176 = vrot.slane %v140, 2
    %v177 = vsel %vm165, %v174, %v176
    %v178 = vrot.slane %v141, 2
    %v179 = vsel %vm165, %v176, %v178
    %vm180 = vcmask 1044480
    %v181 = vrot.slane %v134, 3
    %v182 = vrot.slane %v135, 3
    %v183 = vsel %vm180, %v181, %v182
    %v184 = vrot.slane %v136, 3
    %v185 = vsel %vm180, %v182, %v184
    %v186 = vrot.slane %v137, 3
    %v187 = vsel %vm180, %v184, %v186
    %v188 = vrot.slane %v138, 3
    %v189 = vrot.slane %v139, 3
    %v190 = vsel %vm180, %v188, %v189
    %v191 = vrot.slane %v140, 3
    %v192 = vsel %vm180, %v189, %v191
    %v193 = vrot.slane %v141, 3
    %v194 = vsel %vm180, %v191, %v193
    %vm195 = vcmask 1043456
    %v196 = vrot.slane %v134, 4
    %v197 = vrot.slane %v135, 4
    %v198 = vsel %vm195, %v196, %v197
    %v199 = vrot.slane %v136, 4
    %v200 = vsel %vm195, %v197, %v199
    %v201 = vrot.slane %v137, 4
    %v202 = vsel %vm195, %v199, %v201
    %v203 = vrot.slane %v138, 4
    %v204 = vrot.slane %v139, 4
    %v205 = vsel %vm195, %v203, %v204
    %v206 = vrot.slane %v140, 4
    %v207 = vsel %vm195, %v204, %v206
    %v208 = vrot.slane %v141, 4
    %v209 = vsel %vm195, %v206, %v208
    %210 = vrot.lane.b32.xlu0 %v153, 28
    %v211 = vpop.permute.xlu0 %210
    %212 = vrot.lane.b32.xlu0 %v155, 28
    %v213 = vpop.permute.xlu0 %212
    %214 = vrot.lane.b32.xlu0 %v157, 28
    %v215 = vpop.permute.xlu0 %214
    %216 = vrot.lane.b32.xlu0 %v160, 28
    %v217 = vpop.permute.xlu0 %216
    %218 = vrot.lane.b32.xlu0 %v162, 28
    %v219 = vpop.permute.xlu0 %218
    %220 = vrot.lane.b32.xlu0 %v164, 28
    %v221 = vpop.permute.xlu0 %220
    %228 = vrot.lane.b32.xlu0 %v168, 56
    %v229 = vpop.permute.xlu0 %228
    %230 = vrot.lane.b32.xlu0 %v170, 56
    %v231 = vpop.permute.xlu0 %230
    %232 = vrot.lane.b32.xlu0 %v172, 56
    %v233 = vpop.permute.xlu0 %232
    %234 = vrot.lane.b32.xlu0 %v175, 56
    %v235 = vpop.permute.xlu0 %234
    %236 = vrot.lane.b32.xlu0 %v177, 56
    %v237 = vpop.permute.xlu0 %236
    %238 = vrot.lane.b32.xlu0 %v179, 56
    %v239 = vpop.permute.xlu0 %238
    %246 = vrot.lane.b32.xlu0 %v183, 84
    %v247 = vpop.permute.xlu0 %246
    %248 = vrot.lane.b32.xlu0 %v185, 84
    %v249 = vpop.permute.xlu0 %248
    %250 = vrot.lane.b32.xlu0 %v187, 84
    %v251 = vpop.permute.xlu0 %250
    %252 = vrot.lane.b32.xlu0 %v190, 84
    %v253 = vpop.permute.xlu0 %252
    %254 = vrot.lane.b32.xlu0 %v192, 84
    %v255 = vpop.permute.xlu0 %254
    %256 = vrot.lane.b32.xlu0 %v194, 84
    %v257 = vpop.permute.xlu0 %256
    %264 = vrot.lane.b32.xlu0 %v198, 112
    %v265 = vpop.permute.xlu0 %264
    %266 = vrot.lane.b32.xlu0 %v200, 112
    %v267 = vpop.permute.xlu0 %266
    %268 = vrot.lane.b32.xlu0 %v202, 112
    %v269 = vpop.permute.xlu0 %268
    %270 = vrot.lane.b32.xlu0 %v205, 112
    %v271 = vpop.permute.xlu0 %270
    %272 = vrot.lane.b32.xlu0 %v207, 112
    %v273 = vpop.permute.xlu0 %272
    %274 = vrot.lane.b32.xlu0 %v209, 112
    %v275 = vpop.permute.xlu0 %274
    %vm282 = vcmask 228352
    %v283 = vsel %vm282, %v134, %v211
    %v284 = vsel %vm282, %v135, %v213
    %v285 = vsel %vm282, %v136, %v215
    %v286 = vsel %vm282, %v138, %v217
    %v287 = vsel %vm282, %v139, %v219
    %v288 = vsel %vm282, %v140, %v221
    %vm289 = vcmask 457728
    %v290 = vsel %vm289, %v283, %v229
    %v291 = vsel %vm289, %v284, %v231
    %v292 = vsel %vm289, %v285, %v233
    %v293 = vsel %vm289, %v286, %v235
    %v294 = vsel %vm289, %v287, %v237
    %v295 = vsel %vm289, %v288, %v239
    %vm296 = vcmask 687104
    %v297 = vsel %vm296, %v290, %v247
    %v298 = vsel %vm296, %v291, %v249
    %v299 = vsel %vm296, %v292, %v251
    %v300 = vsel %vm296, %v293, %v253
    %v301 = vsel %vm296, %v294, %v255
    %v302 = vsel %vm296, %v295, %v257
    %vm303 = vcmask 916480
    %v304 = vsel %vm303, %v297, %v265
    %v305 = vsel %vm303, %v298, %v267
    %v306 = vsel %vm303, %v299, %v269
    %v307 = vsel %vm303, %v300, %v271
    %v308 = vsel %vm303, %v301, %v273
    %v309 = vsel %vm303, %v302, %v275
    %v310 = vld [vmem:[#allocation2] sm:$0xff]
    %v311 = vld [vmem:[#allocation2 + $0x8] sm:$0xff]
    %v312 = vld [vmem:[#allocation2 + $0x10] sm:$0xff]
    %v313 = vld [vmem:[#allocation2 + $0x18] sm:$0xff]
    %v314 = vld [vmem:[#allocation2 + $0x20] sm:$0xff]
    %v315 = vld [vmem:[#allocation2 + $0x28] sm:$0xff]
    %v316 = vld [vmem:[#allocation2 + $0x30] sm:$0xff]
    %v317 = vld [vmem:[#allocation2 + $0x38] sm:$0xff]
    %v318 = vld [vmem:[#allocation2 + $0x40] sm:$0xff]
    %v319 = vld [vmem:[#allocation2 + $0x48] sm:$0xff]
    %v320 = vld [vmem:[#allocation2 + $0x50] sm:$0xff]
    %v321 = vld [vmem:[#allocation2 + $0x58] sm:$0xff]
    %v322 = vld [vmem:[#allocation2 + $0x60] sm:$0xff]
    %v323 = vld [vmem:[#allocation2 + $0x68] sm:$0xff]
    %v324 = vld [vmem:[#allocation2 + $0x70] sm:$0xff]
    %v325 = vld [vmem:[#allocation2 + $0x78] sm:$0xff]
    %v326 = vld [vmem:[#allocation2 + $0x80] sm:$0xff]
    %v327 = vld [vmem:[#allocation2 + $0x88] sm:$0xff]
    %v328 = vld [vmem:[#allocation2 + $0x90] sm:$0xff]
    %v329 = vld [vmem:[#allocation2 + $0x98] sm:$0xff]
    %v330 = vld [vmem:[#allocation2 + $0xa0] sm:$0xff]
    %v331 = vld [vmem:[#allocation2 + $0xa8] sm:$0xff]
    %v332 = vld [vmem:[#allocation2 + $0xb0] sm:$0xff]
    %v333 = vld [vmem:[#allocation2 + $0xb8] sm:$0xff]
    %v334 = vld [vmem:[#allocation2 + $0xc0] sm:$0xff]
    %v335 = vld [vmem:[#allocation2 + $0xc8] sm:$0xff]
    %v336 = vld [vmem:[#allocation2 + $0xd0] sm:$0xff]
    %v337 = vld [vmem:[#allocation2 + $0xd8] sm:$0xff]
    %v338 = vld [vmem:[#allocation2 + $0xe0] sm:$0xff]
    %v339 = vld [vmem:[#allocation2 + $0xe8] sm:$0xff]
    %v340 = vld [vmem:[#allocation2 + $0xf0] sm:$0xff]
    %v341 = vld [vmem:[#allocation2 + $0xf8] sm:$0xff]
    %v342 = vld [vmem:[#allocation2 + $0x100] sm:$0xff]
    %v343 = vld [vmem:[#allocation2 + $0x108] sm:$0xff]
    %v344 = vld [vmem:[#allocation2 + $0x110] sm:$0xff]
    %v345 = vld [vmem:[#allocation2 + $0x118] sm:$0xff]
    %v346 = vld [vmem:[#allocation2 + $0x120] sm:$0xff]
    %v347 = vld [vmem:[#allocation2 + $0x128] sm:$0xff]
    %v348 = vld [vmem:[#allocation2 + $0x130] sm:$0xff]
    %v349 = vld [vmem:[#allocation2 + $0x138] sm:$0xff]
    %v350 = vld [vmem:[#allocation2 + $0x140] sm:$0xff]
    %v351 = vld [vmem:[#allocation2 + $0x148] sm:$0xff]
    %v352 = vld [vmem:[#allocation2 + $0x150] sm:$0xff]
    %v353 = vld [vmem:[#allocation2 + $0x158] sm:$0xff]
    %v354 = vld [vmem:[#allocation2 + $0x160] sm:$0xff]
    %v355 = vld [vmem:[#allocation2 + $0x168] sm:$0xff]
    %v356 = vld [vmem:[#allocation2 + $0x170] sm:$0xff]
    %v357 = vld [vmem:[#allocation2 + $0x178] sm:$0xff]
    %v358 = vld [vmem:[#allocation2 + $0x180] sm:$0xff]
    %v359 = vld [vmem:[#allocation2 + $0x188] sm:$0xff]
    %v360 = vld [vmem:[#allocation2 + $0x190] sm:$0xff]
    %v361 = vld [vmem:[#allocation2 + $0x198] sm:$0xff]
    %v362 = vld [vmem:[#allocation2 + $0x1a0] sm:$0xff]
    %v363 = vld [vmem:[#allocation2 + $0x1a8] sm:$0xff]
    %v364 = vld [vmem:[#allocation2 + $0x1b0] sm:$0xff]
    %v365 = vld [vmem:[#allocation2 + $0x1b8] sm:$0xff]
    %v366 = vld [vmem:[#allocation2 + $0x1c0] sm:$0xff]
    %v367 = vld [vmem:[#allocation2 + $0x1c8] sm:$0xff]
    %v368 = vld [vmem:[#allocation2 + $0x1d0] sm:$0xff]
    %v369 = vld [vmem:[#allocation2 + $0x1d8] sm:$0xff]
    %v370 = vld [vmem:[#allocation2 + $0x1e0] sm:$0xff]
    %v371 = vld [vmem:[#allocation2 + $0x1e8] sm:$0xff]
    %v372 = vld [vmem:[#allocation2 + $0x1f0] sm:$0xff]
    %v373 = vld [vmem:[#allocation2 + $0x1f8] sm:$0xff]
    %v374 = vld [vmem:[#allocation2 + $0x200] sm:$0xff]
    %v375 = vld [vmem:[#allocation2 + $0x208] sm:$0xff]
    %v376 = vld [vmem:[#allocation2 + $0x210] sm:$0xff]
    %v377 = vld [vmem:[#allocation2 + $0x218] sm:$0xff]
    %v378 = vld [vmem:[#allocation2 + $0x220] sm:$0xff]
    %v379 = vld [vmem:[#allocation2 + $0x228] sm:$0xff]
    %v380 = vld [vmem:[#allocation2 + $0x230] sm:$0xff]
    %v381 = vld [vmem:[#allocation2 + $0x238] sm:$0xff]
    %v382 = vld [vmem:[#allocation2 + $0x240] sm:$0xff]
    %v383 = vld [vmem:[#allocation2 + $0x248] sm:$0xff]
    %v384 = vld [vmem:[#allocation2 + $0x250] sm:$0xff]
    %v385 = vld [vmem:[#allocation2 + $0x258] sm:$0xff]
    %v386 = vld [vmem:[#allocation2 + $0x260] sm:$0xff]
    %v387 = vld [vmem:[#allocation2 + $0x268] sm:$0xff]
    %v388 = vld [vmem:[#allocation2 + $0x270] sm:$0xff]
    %v389 = vld [vmem:[#allocation2 + $0x278] sm:$0xff]
    %v390 = vld [vmem:[#allocation2 + $0x280] sm:$0xff]
    %v391 = vld [vmem:[#allocation2 + $0x288] sm:$0xff]
    %v392 = vld [vmem:[#allocation2 + $0x290] sm:$0xff]
    %v393 = vld [vmem:[#allocation2 + $0x298] sm:$0xff]
    %v394 = vld [vmem:[#allocation2 + $0x2a0] sm:$0xff]
    %v395 = vld [vmem:[#allocation2 + $0x2a8] sm:$0xff]
    %v396 = vld [vmem:[#allocation2 + $0x2b0] sm:$0xff]
    %v397 = vld [vmem:[#allocation2 + $0x2b8] sm:$0xff]
    %v398 = vld [vmem:[#allocation2 + $0x2c0] sm:$0xff]
    %v399 = vld [vmem:[#allocation2 + $0x2c8] sm:$0xff]
    %v400 = vld [vmem:[#allocation2 + $0x2d0] sm:$0xff]
    %v401 = vld [vmem:[#allocation2 + $0x2d8] sm:$0xff]
    %v402 = vld [vmem:[#allocation2 + $0x2e0] sm:$0xff]
    %v403 = vld [vmem:[#allocation2 + $0x2e8] sm:$0xff]
    %v404 = vld [vmem:[#allocation2 + $0x2f0] sm:$0xff]
    %v405 = vld [vmem:[#allocation2 + $0x2f8] sm:$0xff]
    %v406 = vld [vmem:[#allocation2 + $0x300] sm:$0xff]
    %v407 = vld [vmem:[#allocation2 + $0x308] sm:$0xff]
    %v408 = vld [vmem:[#allocation2 + $0x310] sm:$0xff]
    %v409 = vld [vmem:[#allocation2 + $0x318] sm:$0xff]
    %v410 = vld [vmem:[#allocation2 + $0x320] sm:$0xff]
    %v411 = vld [vmem:[#allocation2 + $0x328] sm:$0xff]
    %v412 = vld [vmem:[#allocation2 + $0x330] sm:$0xff]
    %v413 = vld [vmem:[#allocation2 + $0x338] sm:$0xff]
    %v414 = vld [vmem:[#allocation2 + $0x340] sm:$0xff]
    %v415 = vld [vmem:[#allocation2 + $0x348] sm:$0xff]
    %v416 = vld [vmem:[#allocation2 + $0x350] sm:$0xff]
    %v417 = vld [vmem:[#allocation2 + $0x358] sm:$0xff]
    %v418 = vld [vmem:[#allocation2 + $0x360] sm:$0xff]
    %v419 = vld [vmem:[#allocation2 + $0x368] sm:$0xff]
    %v420 = vld [vmem:[#allocation2 + $0x370] sm:$0xff]
    %v421 = vld [vmem:[#allocation2 + $0x378] sm:$0xff]
    %v422 = vld [vmem:[#allocation2 + $0x380] sm:$0xff]
    %v423 = vld [vmem:[#allocation2 + $0x388] sm:$0xff]
    %v424 = vld [vmem:[#allocation2 + $0x390] sm:$0xff]
    %v425 = vld [vmem:[#allocation2 + $0x398] sm:$0xff]
    %v426 = vld [vmem:[#allocation2 + $0x3a0] sm:$0xff]
    %v427 = vld [vmem:[#allocation2 + $0x3a8] sm:$0xff]
    %v428 = vld [vmem:[#allocation2 + $0x3b0] sm:$0xff]
    %v429 = vld [vmem:[#allocation2 + $0x3b8] sm:$0xff]
    %v430 = vld [vmem:[#allocation2 + $0x3c0] sm:$0xff]
    %v431 = vld [vmem:[#allocation2 + $0x3c8] sm:$0xff]
    %v432 = vld [vmem:[#allocation2 + $0x3d0] sm:$0xff]
    %v433 = vld [vmem:[#allocation2 + $0x3d8] sm:$0xff]
    %v434 = vld [vmem:[#allocation2 + $0x3e0] sm:$0xff]
    %v435 = vld [vmem:[#allocation2 + $0x3e8] sm:$0xff]
    %v436 = vld [vmem:[#allocation2 + $0x3f0] sm:$0xff]
    %v437 = vld [vmem:[#allocation2 + $0x3f8] sm:$0xff]
    %v438 = vld [vmem:[#allocation2 + $0x400] sm:$0xff]
    %v439 = vld [vmem:[#allocation2 + $0x408] sm:$0xff]
    %v440 = vld [vmem:[#allocation2 + $0x410] sm:$0xff]
    %v441 = vld [vmem:[#allocation2 + $0x418] sm:$0xff]
    %v442 = vld [vmem:[#allocation2 + $0x420] sm:$0xff]
    %v443 = vld [vmem:[#allocation2 + $0x428] sm:$0xff]
    %v444 = vld [vmem:[#allocation2 + $0x430] sm:$0xff]
    %v445 = vld [vmem:[#allocation2 + $0x438] sm:$0xff]
    %v446 = vld [vmem:[#allocation2 + $0x440] sm:$0xff]
    %v447 = vld [vmem:[#allocation2 + $0x448] sm:$0xff]
    %v448 = vld [vmem:[#allocation2 + $0x450] sm:$0xff]
    %v449 = vld [vmem:[#allocation2 + $0x458] sm:$0xff]
    %v450 = vld [vmem:[#allocation2 + $0x460] sm:$0xff]
    %v451 = vld [vmem:[#allocation2 + $0x468] sm:$0xff]
    %v452 = vld [vmem:[#allocation2 + $0x470] sm:$0xff]
    %v453 = vld [vmem:[#allocation2 + $0x478] sm:$0xff]
    %v454 = vld [vmem:[#allocation2 + $0x480] sm:$0xff]
    %v455 = vld [vmem:[#allocation2 + $0x488] sm:$0xff]
    %v456 = vld [vmem:[#allocation2 + $0x490] sm:$0xff]
    %v457 = vld [vmem:[#allocation2 + $0x498] sm:$0xff]
    %v458 = vld [vmem:[#allocation2 + $0x4a0] sm:$0xff]
    %v459 = vld [vmem:[#allocation2 + $0x4a8] sm:$0xff]
    %v460 = vld [vmem:[#allocation2 + $0x4b0] sm:$0xff]
    %v461 = vld [vmem:[#allocation2 + $0x4b8] sm:$0xff]
    %v462 = vld [vmem:[#allocation2 + $0x4c0] sm:$0xff]
    %v463 = vld [vmem:[#allocation2 + $0x4c8] sm:$0xff]
    %v464 = vld [vmem:[#allocation2 + $0x4d0] sm:$0xff]
    %v465 = vld [vmem:[#allocation2 + $0x4d8] sm:$0xff]
    %v466 = vld [vmem:[#allocation2 + $0x4e0] sm:$0xff]
    %v467 = vld [vmem:[#allocation2 + $0x4e8] sm:$0xff]
    %v468 = vld [vmem:[#allocation2 + $0x4f0] sm:$0xff]
    %v469 = vld [vmem:[#allocation2 + $0x4f8] sm:$0xff]
    %v470 = vld [vmem:[#allocation2 + $0x500] sm:$0xff]
    %v471 = vld [vmem:[#allocation2 + $0x508] sm:$0xff]
    %v472 = vld [vmem:[#allocation2 + $0x510] sm:$0xff]
    %v473 = vld [vmem:[#allocation2 + $0x518] sm:$0xff]
    %v474 = vld [vmem:[#allocation2 + $0x520] sm:$0xff]
    %v475 = vld [vmem:[#allocation2 + $0x528] sm:$0xff]
    %v476 = vld [vmem:[#allocation2 + $0x530] sm:$0xff]
    %v477 = vld [vmem:[#allocation2 + $0x538] sm:$0xff]
    %v478 = vld [vmem:[#allocation2 + $0x540] sm:$0xff]
    %v479 = vld [vmem:[#allocation2 + $0x548] sm:$0xff]
    %v480 = vld [vmem:[#allocation2 + $0x550] sm:$0xff]
    %v481 = vld [vmem:[#allocation2 + $0x558] sm:$0xff]
    %v482 = vld [vmem:[#allocation2 + $0x560] sm:$0xff]
    %v483 = vld [vmem:[#allocation2 + $0x568] sm:$0xff]
    %v484 = vld [vmem:[#allocation2 + $0x570] sm:$0xff]
    %v485 = vld [vmem:[#allocation2 + $0x578] sm:$0xff]
    %v486 = vld [vmem:[#allocation2 + $0x580] sm:$0xff]
    %v487 = vld [vmem:[#allocation2 + $0x588] sm:$0xff]
    %v488 = vld [vmem:[#allocation2 + $0x590] sm:$0xff]
    %v489 = vld [vmem:[#allocation2 + $0x598] sm:$0xff]
    %v490 = vld [vmem:[#allocation2 + $0x5a0] sm:$0xff]
    %v491 = vld [vmem:[#allocation2 + $0x5a8] sm:$0xff]
    %v492 = vld [vmem:[#allocation2 + $0x5b0] sm:$0xff]
    %v493 = vld [vmem:[#allocation2 + $0x5b8] sm:$0xff]
    %v494 = vld [vmem:[#allocation2 + $0x5c0] sm:$0xff]
    %v495 = vld [vmem:[#allocation2 + $0x5c8] sm:$0xff]
    %v496 = vld [vmem:[#allocation2 + $0x5d0] sm:$0xff]
    %v497 = vld [vmem:[#allocation2 + $0x5d8] sm:$0xff]
    %v498 = vld [vmem:[#allocation2 + $0x5e0] sm:$0xff]
    %v499 = vld [vmem:[#allocation2 + $0x5e8] sm:$0xff]
    %v500 = vld [vmem:[#allocation2 + $0x5f0] sm:$0xff]
    %v501 = vld [vmem:[#allocation2 + $0x5f8] sm:$0xff]
    %v502 = vld [vmem:[#allocation2 + $0x600] sm:$0xff]
    %v503 = vld [vmem:[#allocation2 + $0x608] sm:$0xff]
    %v504 = vld [vmem:[#allocation2 + $0x610] sm:$0xff]
    %v505 = vld [vmem:[#allocation2 + $0x618] sm:$0xff]
    %v506 = vld [vmem:[#allocation2 + $0x620] sm:$0xff]
    %v507 = vld [vmem:[#allocation2 + $0x628] sm:$0xff]
    %v508 = vld [vmem:[#allocation2 + $0x630] sm:$0xff]
    %v509 = vld [vmem:[#allocation2 + $0x638] sm:$0xff]
    %v510 = vld [vmem:[#allocation2 + $0x640] sm:$0xff]
    %v511 = vld [vmem:[#allocation2 + $0x648] sm:$0xff]
    %v512 = vld [vmem:[#allocation2 + $0x650] sm:$0xff]
    %v513 = vld [vmem:[#allocation2 + $0x658] sm:$0xff]
    %v514 = vld [vmem:[#allocation2 + $0x660] sm:$0xff]
    %v515 = vld [vmem:[#allocation2 + $0x668] sm:$0xff]
    %v516 = vld [vmem:[#allocation2 + $0x670] sm:$0xff]
    %v517 = vld [vmem:[#allocation2 + $0x678] sm:$0xff]
    %v518 = vld [vmem:[#allocation2 + $0x680] sm:$0xff]
    %v519 = vld [vmem:[#allocation2 + $0x688] sm:$0xff]
    %v520 = vld [vmem:[#allocation2 + $0x690] sm:$0xff]
    %v521 = vld [vmem:[#allocation2 + $0x698] sm:$0xff]
    %v522 = vld [vmem:[#allocation2 + $0x6a0] sm:$0xff]
    %v523 = vld [vmem:[#allocation2 + $0x6a8] sm:$0xff]
    %v524 = vld [vmem:[#allocation2 + $0x6b0] sm:$0xff]
    %v525 = vld [vmem:[#allocation2 + $0x6b8] sm:$0xff]
    %v526 = vld [vmem:[#allocation2 + $0x6c0] sm:$0xff]
    %v527 = vld [vmem:[#allocation2 + $0x6c8] sm:$0xff]
    %v528 = vld [vmem:[#allocation2 + $0x6d0] sm:$0xff]
    %v529 = vld [vmem:[#allocation2 + $0x6d8] sm:$0xff]
    %v530 = vld [vmem:[#allocation2 + $0x6e0] sm:$0xff]
    %v531 = vld [vmem:[#allocation2 + $0x6e8] sm:$0xff]
    %v532 = vld [vmem:[#allocation2 + $0x6f0] sm:$0xff]
    %v533 = vld [vmem:[#allocation2 + $0x6f8] sm:$0xff]
    %v534 = vld [vmem:[#allocation2 + $0x700] sm:$0xff]
    %v535 = vld [vmem:[#allocation2 + $0x708] sm:$0xff]
    %v536 = vld [vmem:[#allocation2 + $0x710] sm:$0xff]
    %v537 = vld [vmem:[#allocation2 + $0x718] sm:$0xff]
    %v538 = vld [vmem:[#allocation2 + $0x720] sm:$0xff]
    %v539 = vld [vmem:[#allocation2 + $0x728] sm:$0xff]
    %v540 = vld [vmem:[#allocation2 + $0x730] sm:$0xff]
    %v541 = vld [vmem:[#allocation2 + $0x738] sm:$0xff]
    %v542 = vld [vmem:[#allocation2 + $0x740] sm:$0xff]
    %v543 = vld [vmem:[#allocation2 + $0x748] sm:$0xff]
    %v544 = vld [vmem:[#allocation2 + $0x750] sm:$0xff]
    %v545 = vld [vmem:[#allocation2 + $0x758] sm:$0xff]
    %v546 = vld [vmem:[#allocation2 + $0x760] sm:$0xff]
    %v547 = vld [vmem:[#allocation2 + $0x768] sm:$0xff]
    %v548 = vld [vmem:[#allocation2 + $0x770] sm:$0xff]
    %v549 = vld [vmem:[#allocation2 + $0x778] sm:$0xff]
    %v550 = vld [vmem:[#allocation2 + $0x780] sm:$0xff]
    %v551 = vld [vmem:[#allocation2 + $0x788] sm:$0xff]
    %v552 = vld [vmem:[#allocation2 + $0x790] sm:$0xff]
    %v553 = vld [vmem:[#allocation2 + $0x798] sm:$0xff]
    %v554 = vld [vmem:[#allocation2 + $0x7a0] sm:$0xff]
    %v555 = vld [vmem:[#allocation2 + $0x7a8] sm:$0xff]
    %v556 = vld [vmem:[#allocation2 + $0x7b0] sm:$0xff]
    %v557 = vld [vmem:[#allocation2 + $0x7b8] sm:$0xff]
    %v558 = vld [vmem:[#allocation2 + $0x7c0] sm:$0xff]
    %v559 = vld [vmem:[#allocation2 + $0x7c8] sm:$0xff]
    %v560 = vld [vmem:[#allocation2 + $0x7d0] sm:$0xff]
    %v561 = vld [vmem:[#allocation2 + $0x7d8] sm:$0xff]
    %v562 = vld [vmem:[#allocation2 + $0x7e0] sm:$0xff]
    %v563 = vld [vmem:[#allocation2 + $0x7e8] sm:$0xff]
    %v564 = vld [vmem:[#allocation2 + $0x7f0] sm:$0xff]
    %v565 = vld [vmem:[#allocation2 + $0x7f8] sm:$0xff]
    %v566 = vld [vmem:[#allocation2 + $0x800] sm:$0xff]
    %v567 = vld [vmem:[#allocation2 + $0x808] sm:$0xff]
    %v568 = vld [vmem:[#allocation2 + $0x810] sm:$0xff]
    %v569 = vld [vmem:[#allocation2 + $0x818] sm:$0xff]
    %v570 = vld [vmem:[#allocation2 + $0x820] sm:$0xff]
    %v571 = vld [vmem:[#allocation2 + $0x828] sm:$0xff]
    %v572 = vld [vmem:[#allocation2 + $0x830] sm:$0xff]
    %v573 = vld [vmem:[#allocation2 + $0x838] sm:$0xff]
    %v574 = vld [vmem:[#allocation2 + $0x840] sm:$0xff]
    %v575 = vld [vmem:[#allocation2 + $0x848] sm:$0xff]
    %v576 = vld [vmem:[#allocation2 + $0x850] sm:$0xff]
    %v577 = vld [vmem:[#allocation2 + $0x858] sm:$0xff]
    %v578 = vld [vmem:[#allocation2 + $0x860] sm:$0xff]
    %v579 = vld [vmem:[#allocation2 + $0x868] sm:$0xff]
    %v580 = vld [vmem:[#allocation2 + $0x870] sm:$0xff]
    %v581 = vld [vmem:[#allocation2 + $0x878] sm:$0xff]
    %v582 = vld [vmem:[#allocation2 + $0x880] sm:$0xff]
    %v583 = vld [vmem:[#allocation2 + $0x888] sm:$0xff]
    %v584 = vld [vmem:[#allocation2 + $0x890] sm:$0xff]
    %v585 = vld [vmem:[#allocation2 + $0x898] sm:$0xff]
    %v586 = vld [vmem:[#allocation2 + $0x8a0] sm:$0xff]
    %v587 = vld [vmem:[#allocation2 + $0x8a8] sm:$0xff]
    %v588 = vld [vmem:[#allocation2 + $0x8b0] sm:$0xff]
    %v589 = vld [vmem:[#allocation2 + $0x8b8] sm:$0xff]
    %v590 = vld [vmem:[#allocation2 + $0x8c0] sm:$0xff]
    %v591 = vld [vmem:[#allocation2 + $0x8c8] sm:$0xff]
    %v592 = vld [vmem:[#allocation2 + $0x8d0] sm:$0xff]
    %v593 = vld [vmem:[#allocation2 + $0x8d8] sm:$0xff]
    %v594 = vld [vmem:[#allocation2 + $0x8e0] sm:$0xff]
    %v595 = vld [vmem:[#allocation2 + $0x8e8] sm:$0xff]
    %v596 = vld [vmem:[#allocation2 + $0x8f0] sm:$0xff]
    %v597 = vld [vmem:[#allocation2 + $0x8f8] sm:$0xff]
    %v598 = vld [vmem:[#allocation2 + $0x900] sm:$0xff]
    %v599 = vld [vmem:[#allocation2 + $0x908] sm:$0xff]
    %v600 = vld [vmem:[#allocation2 + $0x910] sm:$0xff]
    %v601 = vld [vmem:[#allocation2 + $0x918] sm:$0xff]
    %v602 = vld [vmem:[#allocation2 + $0x920] sm:$0xff]
    %v603 = vld [vmem:[#allocation2 + $0x928] sm:$0xff]
    %v604 = vld [vmem:[#allocation2 + $0x930] sm:$0xff]
    %v605 = vld [vmem:[#allocation2 + $0x938] sm:$0xff]
    %v606 = vld [vmem:[#allocation2 + $0x940] sm:$0xff]
    %v607 = vld [vmem:[#allocation2 + $0x948] sm:$0xff]
    %v608 = vld [vmem:[#allocation2 + $0x950] sm:$0xff]
    %v609 = vld [vmem:[#allocation2 + $0x958] sm:$0xff]
    %v610 = vld [vmem:[#allocation2 + $0x960] sm:$0xff]
    %v611 = vld [vmem:[#allocation2 + $0x968] sm:$0xff]
    %v612 = vld [vmem:[#allocation2 + $0x970] sm:$0xff]
    %v613 = vld [vmem:[#allocation2 + $0x978] sm:$0xff]
    %v614 = vld [vmem:[#allocation2 + $0x980] sm:$0xff]
    %v615 = vld [vmem:[#allocation2 + $0x988] sm:$0xff]
    %v616 = vld [vmem:[#allocation2 + $0x990] sm:$0xff]
    %v617 = vld [vmem:[#allocation2 + $0x998] sm:$0xff]
    %v618 = vld [vmem:[#allocation2 + $0x9a0] sm:$0xff]
    %v619 = vld [vmem:[#allocation2 + $0x9a8] sm:$0xff]
    %v620 = vld [vmem:[#allocation2 + $0x9b0] sm:$0xff]
    %v621 = vld [vmem:[#allocation2 + $0x9b8] sm:$0xff]
    %v622 = vld [vmem:[#allocation2 + $0x9c0] sm:$0xff]
    %v623 = vld [vmem:[#allocation2 + $0x9c8] sm:$0xff]
    %v624 = vld [vmem:[#allocation2 + $0x9d0] sm:$0xff]
    %v625 = vld [vmem:[#allocation2 + $0x9d8] sm:$0xff]
    %v626 = vld [vmem:[#allocation2 + $0x9e0] sm:$0xff]
    %v627 = vld [vmem:[#allocation2 + $0x9e8] sm:$0xff]
    %v628 = vld [vmem:[#allocation2 + $0x9f0] sm:$0xff]
    %v629 = vld [vmem:[#allocation2 + $0x9f8] sm:$0xff]
    %v630 = vld [vmem:[#allocation2 + $0xa00] sm:$0xff]
    %v631 = vld [vmem:[#allocation2 + $0xa08] sm:$0xff]
    %v632 = vld [vmem:[#allocation2 + $0xa10] sm:$0xff]
    %v633 = vld [vmem:[#allocation2 + $0xa18] sm:$0xff]
    %v634 = vld [vmem:[#allocation2 + $0xa20] sm:$0xff]
    %v635 = vld [vmem:[#allocation2 + $0xa28] sm:$0xff]
    %v636 = vld [vmem:[#allocation2 + $0xa30] sm:$0xff]
    %v637 = vld [vmem:[#allocation2 + $0xa38] sm:$0xff]
    %v638 = vld [vmem:[#allocation2 + $0xa40] sm:$0xff]
    %v639 = vld [vmem:[#allocation2 + $0xa48] sm:$0xff]
    %v640 = vld [vmem:[#allocation2 + $0xa50] sm:$0xff]
    %v641 = vld [vmem:[#allocation2 + $0xa58] sm:$0xff]
    %v642 = vld [vmem:[#allocation2 + $0xa60] sm:$0xff]
    %v643 = vld [vmem:[#allocation2 + $0xa68] sm:$0xff]
    %v644 = vld [vmem:[#allocation2 + $0xa70] sm:$0xff]
    %v645 = vld [vmem:[#allocation2 + $0xa78] sm:$0xff]
    %v646 = vld [vmem:[#allocation2 + $0xa80] sm:$0xff]
    %v647 = vld [vmem:[#allocation2 + $0xa88] sm:$0xff]
    %v648 = vld [vmem:[#allocation2 + $0xa90] sm:$0xff]
    %v649 = vld [vmem:[#allocation2 + $0xa98] sm:$0xff]
    %v650 = vld [vmem:[#allocation2 + $0xaa0] sm:$0xff]
    %v651 = vld [vmem:[#allocation2 + $0xaa8] sm:$0xff]
    %v652 = vld [vmem:[#allocation2 + $0xab0] sm:$0xff]
    %v653 = vld [vmem:[#allocation2 + $0xab8] sm:$0xff]
    %v654 = vld [vmem:[#allocation2 + $0xac0] sm:$0xff]
    %v655 = vld [vmem:[#allocation2 + $0xac8] sm:$0xff]
    %v656 = vld [vmem:[#allocation2 + $0xad0] sm:$0xff]
    %v657 = vld [vmem:[#allocation2 + $0xad8] sm:$0xff]
    %v658 = vld [vmem:[#allocation2 + $0xae0] sm:$0xff]
    %v659 = vld [vmem:[#allocation2 + $0xae8] sm:$0xff]
    %v660 = vld [vmem:[#allocation2 + $0xaf0] sm:$0xff]
    %v661 = vld [vmem:[#allocation2 + $0xaf8] sm:$0xff]
    %v662 = vld [vmem:[#allocation2 + $0xb00] sm:$0xff]
    %v663 = vld [vmem:[#allocation2 + $0xb08] sm:$0xff]
    %v664 = vld [vmem:[#allocation2 + $0xb10] sm:$0xff]
    %v665 = vld [vmem:[#allocation2 + $0xb18] sm:$0xff]
    %v666 = vld [vmem:[#allocation2 + $0xb20] sm:$0xff]
    %v667 = vld [vmem:[#allocation2 + $0xb28] sm:$0xff]
    %v668 = vld [vmem:[#allocation2 + $0xb30] sm:$0xff]
    %v669 = vld [vmem:[#allocation2 + $0xb38] sm:$0xff]
    %v670 = vld [vmem:[#allocation2 + $0xb40] sm:$0xff]
    %v671 = vld [vmem:[#allocation2 + $0xb48] sm:$0xff]
    %v672 = vld [vmem:[#allocation2 + $0xb50] sm:$0xff]
    %v673 = vld [vmem:[#allocation2 + $0xb58] sm:$0xff]
    %v674 = vld [vmem:[#allocation2 + $0xb60] sm:$0xff]
    %v675 = vld [vmem:[#allocation2 + $0xb68] sm:$0xff]
    %v676 = vld [vmem:[#allocation2 + $0xb70] sm:$0xff]
    %v677 = vld [vmem:[#allocation2 + $0xb78] sm:$0xff]
    %v678 = vld [vmem:[#allocation2 + $0xb80] sm:$0xff]
    %v679 = vld [vmem:[#allocation2 + $0xb88] sm:$0xff]
    %v680 = vld [vmem:[#allocation2 + $0xb90] sm:$0xff]
    %v681 = vld [vmem:[#allocation2 + $0xb98] sm:$0xff]
    %v682 = vld [vmem:[#allocation2 + $0xba0] sm:$0xff]
    %v683 = vld [vmem:[#allocation2 + $0xba8] sm:$0xff]
    %v684 = vld [vmem:[#allocation2 + $0xbb0] sm:$0xff]
    %v685 = vld [vmem:[#allocation2 + $0xbb8] sm:$0xff]
    %v686 = vld [vmem:[#allocation2 + $0xbc0] sm:$0xff]
    %v687 = vld [vmem:[#allocation2 + $0xbc8] sm:$0xff]
    %v688 = vld [vmem:[#allocation2 + $0xbd0] sm:$0xff]
    %v689 = vld [vmem:[#allocation2 + $0xbd8] sm:$0xff]
    %v690 = vld [vmem:[#allocation2 + $0xbe0] sm:$0xff]
    %v691 = vld [vmem:[#allocation2 + $0xbe8] sm:$0xff]
    %v692 = vld [vmem:[#allocation2 + $0xbf0] sm:$0xff]
    %v693 = vld [vmem:[#allocation2 + $0xbf8] sm:$0xff]
    %v694 = vld [vmem:[#allocation2 + $0xc00] sm:$0xff]
    %v695 = vld [vmem:[#allocation2 + $0xc08] sm:$0xff]
    %v696 = vld [vmem:[#allocation2 + $0xc10] sm:$0xff]
    %v697 = vld [vmem:[#allocation2 + $0xc18] sm:$0xff]
    %v698 = vld [vmem:[#allocation2 + $0xc20] sm:$0xff]
    %v699 = vld [vmem:[#allocation2 + $0xc28] sm:$0xff]
    %v700 = vld [vmem:[#allocation2 + $0xc30] sm:$0xff]
    %v701 = vld [vmem:[#allocation2 + $0xc38] sm:$0xff]
    %v702 = vld [vmem:[#allocation2 + $0xc40] sm:$0xff]
    %v703 = vld [vmem:[#allocation2 + $0xc48] sm:$0xff]
    %v704 = vld [vmem:[#allocation2 + $0xc50] sm:$0xff]
    %v705 = vld [vmem:[#allocation2 + $0xc58] sm:$0xff]
    %v706 = vld [vmem:[#allocation2 + $0xc60] sm:$0xff]
    %v707 = vld [vmem:[#allocation2 + $0xc68] sm:$0xff]
    %v708 = vld [vmem:[#allocation2 + $0xc70] sm:$0xff]
    %v709 = vld [vmem:[#allocation2 + $0xc78] sm:$0xff]
    %v710 = vld [vmem:[#allocation2 + $0xc80] sm:$0xff]
    %v711 = vld [vmem:[#allocation2 + $0xc88] sm:$0xff]
    %v712 = vld [vmem:[#allocation2 + $0xc90] sm:$0xff]
    %v713 = vld [vmem:[#allocation2 + $0xc98] sm:$0xff]
    %v714 = vld [vmem:[#allocation2 + $0xca0] sm:$0xff]
    %v715 = vld [vmem:[#allocation2 + $0xca8] sm:$0xff]
    %v716 = vld [vmem:[#allocation2 + $0xcb0] sm:$0xff]
    %v717 = vld [vmem:[#allocation2 + $0xcb8] sm:$0xff]
    %v718 = vld [vmem:[#allocation2 + $0xcc0] sm:$0xf]
    %v719 = vld [vmem:[#allocation2 + $0xcc8] sm:$0xf]
    %v720 = vld [vmem:[#allocation2 + $0xcd0] sm:$0xf]
    %v721 = vld [vmem:[#allocation2 + $0xcd8] sm:$0xf]
    %v722 = vld [vmem:[#allocation2 + $0xce0] sm:$0xf]
    %v723 = vld [vmem:[#allocation2 + $0xce8] sm:$0xf]
    %v724 = vld [vmem:[#allocation2 + $0xcf0] sm:$0xf]
    %v725 = vld [vmem:[#allocation2 + $0xcf8] sm:$0xf]
    %v726 = vld [vmem:[#allocation2 + $0xd00] sm:$0xf]
    %v727 = vld [vmem:[#allocation2 + $0xd08] sm:$0xf]
    %v728 = vld [vmem:[#allocation2 + $0xd10] sm:$0xf]
    %v729 = vld [vmem:[#allocation2 + $0xd18] sm:$0xf]
    %v730 = vld [vmem:[#allocation2 + $0xd20] sm:$0xf]
    %v731 = vld [vmem:[#allocation2 + $0xd28] sm:$0xf]
    %v732 = vld [vmem:[#allocation2 + $0xd30] sm:$0xf]
    %v733 = vld [vmem:[#allocation2 + $0xd38] sm:$0xf]
    %v734 = vld [vmem:[#allocation2 + $0xd40] sm:$0xf]
    %v735 = vld [vmem:[#allocation2 + $0xd48] sm:$0xf]
    %v736 = vld [vmem:[#allocation2 + $0xd50] sm:$0xf]
    %v737 = vld [vmem:[#allocation2 + $0xd58] sm:$0xf]
    %v738 = vld [vmem:[#allocation2 + $0xd60] sm:$0xf]
    %v739 = vld [vmem:[#allocation2 + $0xd68] sm:$0xf]
    %v740 = vld [vmem:[#allocation2 + $0xd70] sm:$0xf]
    %v741 = vld [vmem:[#allocation2 + $0xd78] sm:$0xf]
    %v742 = vld [vmem:[#allocation5] sm:$0xff]
    %v743 = vld [vmem:[#allocation5 + $0x8] sm:$0xff]
    %v744 = vld [vmem:[#allocation5 + $0x10] sm:$0xff]
    %v748 = vlaneseq
    %v749 = vshrl.u32 %v748, 7
    %v750 = vsub.s32 0, %v749
    %v751 = vrot.slane %v742, %v750
    %v752 = vlaneseq
    %v753 = vshrl.u32 %v752, 7
    %v754 = vsub.s32 1, %v753
    %v755 = vrot.slane %v742, %v754
    %v756 = vlaneseq
    %v757 = vshrl.u32 %v756, 7
    %v758 = vsub.s32 2, %v757
    %v759 = vrot.slane %v742, %v758
    %v760 = vlaneseq
    %v761 = vshrl.u32 %v760, 7
    %v762 = vsub.s32 3, %v761
    %v763 = vrot.slane %v742, %v762
    %v764 = vlaneseq
    %v765 = vshrl.u32 %v764, 7
    %v766 = vsub.s32 4, %v765
    %v767 = vrot.slane %v742, %v766
    %v768 = vlaneseq
    %v769 = vshrl.u32 %v768, 7
    %v770 = vsub.s32 5, %v769
    %v771 = vrot.slane %v742, %v770
    %v772 = vlaneseq
    %v773 = vshrl.u32 %v772, 7
    %v774 = vsub.s32 6, %v773
    %v775 = vrot.slane %v742, %v774
    %v776 = vlaneseq
    %v777 = vshrl.u32 %v776, 7
    %v778 = vsub.s32 7, %v777
    %v779 = vrot.slane %v742, %v778
    %v780 = vlaneseq
    %v781 = vshrl.u32 %v780, 7
    %v782 = vsub.s32 0, %v781
    %v783 = vrot.slane %v743, %v782
    %v784 = vlaneseq
    %v785 = vshrl.u32 %v784, 7
    %v786 = vsub.s32 1, %v785
    %v787 = vrot.slane %v743, %v786
    %v788 = vlaneseq
    %v789 = vshrl.u32 %v788, 7
    %v790 = vsub.s32 2, %v789
    %v791 = vrot.slane %v743, %v790
    %v792 = vlaneseq
    %v793 = vshrl.u32 %v792, 7
    %v794 = vsub.s32 3, %v793
    %v795 = vrot.slane %v743, %v794
    %v796 = vlaneseq
    %v797 = vshrl.u32 %v796, 7
    %v798 = vsub.s32 4, %v797
    %v799 = vrot.slane %v743, %v798
    %v800 = vlaneseq
    %v801 = vshrl.u32 %v800, 7
    %v802 = vsub.s32 5, %v801
    %v803 = vrot.slane %v743, %v802
    %v804 = vlaneseq
    %v805 = vshrl.u32 %v804, 7
    %v806 = vsub.s32 6, %v805
    %v807 = vrot.slane %v743, %v806
    %v808 = vlaneseq
    %v809 = vshrl.u32 %v808, 7
    %v810 = vsub.s32 7, %v809
    %v811 = vrot.slane %v743, %v810
    %v812 = vlaneseq
    %v813 = vshrl.u32 %v812, 7
    %v814 = vsub.s32 0, %v813
    %v815 = vrot.slane %v744, %v814
    %v816 = vlaneseq
    %v817 = vshrl.u32 %v816, 7
    %v818 = vsub.s32 1, %v817
    %v819 = vrot.slane %v744, %v818
    %v820 = vlaneseq
    %v821 = vshrl.u32 %v820, 7
    %v822 = vsub.s32 2, %v821
    %v823 = vrot.slane %v744, %v822
    %v824 = vlaneseq
    %v825 = vshrl.u32 %v824, 7
    %v826 = vsub.s32 3, %v825
    %v827 = vrot.slane %v744, %v826
    %v828 = vlaneseq
    %v829 = vshrl.u32 %v828, 7
    %v830 = vsub.s32 4, %v829
    %v831 = vrot.slane %v744, %v830
    %v832 = vlaneseq
    %v833 = vshrl.u32 %v832, 7
    %v834 = vsub.s32 5, %v833
    %v835 = vrot.slane %v744, %v834
    %v836 = vlaneseq
    %v837 = vshrl.u32 %v836, 7
    %v838 = vsub.s32 6, %v837
    %v839 = vrot.slane %v744, %v838
    %v840 = vlaneseq
    %v841 = vshrl.u32 %v840, 7
    %v842 = vsub.s32 7, %v841
    %v843 = vrot.slane %v744, %v842
    %vm868 = vcmask 97280
    %v869 = vsel %vm868, %v265, 0
    %v871 = vsel %vm868, %v267, 0
    %v873 = vsel %vm868, %v269, 0
    %v875 = vsel %vm868, %v271, 0
    %v877 = vsel %vm868, %v273, 0
    %v879 = vsel %vm868, %v275, 0
    %v882 = vsel %vm195, %v718, 0
    %v885 = vsel %vm195, %v719, 0
    %v888 = vsel %vm195, %v720, 0
    %v891 = vsel %vm195, %v721, 0
    %v894 = vsel %vm195, %v722, 0
    %v897 = vsel %vm195, %v723, 0
    %v900 = vsel %vm195, %v724, 0
    %v903 = vsel %vm195, %v725, 0
    %v906 = vsel %vm195, %v726, 0
    %v909 = vsel %vm195, %v727, 0
    %v912 = vsel %vm195, %v728, 0
    %v915 = vsel %vm195, %v729, 0
    %v918 = vsel %vm195, %v730, 0
    %v921 = vsel %vm195, %v731, 0
    %v924 = vsel %vm195, %v732, 0
    %v927 = vsel %vm195, %v733, 0
    %v930 = vsel %vm195, %v734, 0
    %v933 = vsel %vm195, %v735, 0
    %v936 = vsel %vm195, %v736, 0
    %v939 = vsel %vm195, %v737, 0
    %v942 = vsel %vm195, %v738, 0
    %v945 = vsel %vm195, %v739, 0
    %v948 = vsel %vm195, %v740, 0
    %v951 = vsel %vm195, %v741, 0
    %953 = vmatprep.subr.mxu0 %v671
    %954 = vmatpush1.msra.mxu0 %v670
    %955 = vmatprep.subr.mxu0 %v647
    %956 = vmatpush1.msra.mxu0 %v646
    %957 = vmatprep.subr.mxu0 %v623
    %958 = vmatpush1.msra.mxu0 %v622
    %959 = vmatprep.subr.mxu0 %v599
    %960 = vmatpush1.msra.mxu0 %v598
    %961 = vmatprep.subr.mxu0 %v575
    %962 = vmatpush1.msra.mxu0 %v574
    %963 = vmatprep.subr.mxu0 %v551
    %964 = vmatpush1.msra.mxu0 %v550
    %965 = vmatprep.subr.mxu0 %v527
    %966 = vmatpush1.msra.mxu0 %v526
    %967 = vmatprep.subr.mxu0 %v503
    %968 = vmatpush1.msra.mxu0 %v502
    %969 = vmatprep.subr.mxu0 %v479
    %970 = vmatpush1.msra.mxu0 %v478
    %971 = vmatprep.subr.mxu0 %v455
    %972 = vmatpush1.msra.mxu0 %v454
    %973 = vmatprep.subr.mxu0 %v431
    %974 = vmatpush1.msra.mxu0 %v430
    %975 = vmatprep.subr.mxu0 %v407
    %976 = vmatpush1.msra.mxu0 %v406
    %977 = vmatprep.subr.mxu0 %v383
    %978 = vmatpush1.msra.mxu0 %v382
    %979 = vmatprep.subr.mxu0 %v359
    %980 = vmatpush1.msra.mxu0 %v358
    %981 = vmatprep.subr.mxu0 %v335
    %982 = vmatpush1.msra.mxu0 %v334
    %983 = vmatprep.subr.mxu0 %v311
    %984 = vmatpush1.msra.mxu0 %v310
    %985 = vmatprep.subr.mxu0 0.0
    %986 = vmatpush2.msra.mxu0 0.0
    %987 = vmatprep.subr.mxu0 0.0
    %988 = vmatpush2.msra.mxu0 0.0
    %989 = vmatprep.subr.mxu0 0.0
    %990 = vmatpush2.msra.mxu0 0.0
    %991 = vmatprep.subr.mxu0 0.0
    %992 = vmatpush2.msra.mxu0 0.0
    %993 = vmatprep.subr.mxu0 0.0
    %994 = vmatpush2.msra.mxu0 0.0
    %995 = vmatprep.subr.mxu0 0.0
    %996 = vmatpush2.msra.mxu0 0.0
    %997 = vmatprep.subr.mxu0 0.0
    %998 = vmatpush2.msra.mxu0 0.0
    %999 = vmatprep.subr.mxu0 0.0
    %1000 = vmatpush2.msra.mxu0 0.0
    %1001 = vmatprep.subr.mxu0 0.0
    %1002 = vmatpush2.msra.mxu0 0.0
    %1003 = vmatprep.subr.mxu0 0.0
    %1004 = vmatpush2.msra.mxu0 0.0
    %1005 = vmatprep.subr.mxu0 0.0
    %1006 = vmatpush2.msra.mxu0 0.0
    %1007 = vmatprep.subr.mxu0 0.0
    %1008 = vmatpush2.msra.mxu0 0.0
    %1009 = vmatprep.subr.mxu0 0.0
    %1010 = vmatpush2.msra.mxu0 0.0
    %1011 = vmatprep.subr.mxu0 0.0
    %1012 = vmatpush2.msra.mxu0 0.0
    %1013 = vmatprep.subr.mxu0 %v885
    %1014 = vmatpush2.msra.mxu0 %v882
    %1015 = vmatprep.subr.mxu0 %v695
    %1016 = vmatpush2.msra.mxu0 %v694
    %1017 = vmatprep.mubr.f32.mxu0 %v869
    %1018 = vmatmul.mubr.f32.gmra.mxu0 %v304
    %v1019 = vpop.f32.mrf.mxu0
    %v1020 = vadd.f32 %v751, %v1019
    %v1021 = vpop.f32.mrf.mxu0
    %v1022 = vadd.f32 %v755, %v1021
    %1023 = vmatprep.mubr.f32.mxu0 %v871
    %1024 = vmatmul.mubr.f32.gmra.mxu0 %v305
    %v1025 = vpop.f32.mrf.mxu0
    %v1026 = vadd.f32 %v751, %v1025
    %v1027 = vpop.f32.mrf.mxu0
    %v1028 = vadd.f32 %v755, %v1027
    %1029 = vmatprep.mubr.f32.mxu0 %v873
    %1030 = vmatmul.mubr.f32.gmra.mxu0 %v306
    %v1031 = vpop.f32.mrf.mxu0
    %v1032 = vadd.f32 %v751, %v1031
    %v1033 = vpop.f32.mrf.mxu0
    %v1034 = vadd.f32 %v755, %v1033
    %1035 = vmatprep.mubr.f32.mxu0 %v875
    %1036 = vmatmul.mubr.f32.gmra.mxu0 %v307
    %v1037 = vpop.f32.mrf.mxu0
    %v1038 = vadd.f32 %v751, %v1037
    %v1039 = vpop.f32.mrf.mxu0
    %v1040 = vadd.f32 %v755, %v1039
    %1041 = vmatprep.mubr.f32.mxu0 %v877
    %1042 = vmatmul.mubr.f32.gmra.mxu0 %v308
    %v1043 = vpop.f32.mrf.mxu0
    %v1044 = vadd.f32 %v751, %v1043
    %v1045 = vpop.f32.mrf.mxu0
    %v1046 = vadd.f32 %v755, %v1045
    %1047 = vmatprep.mubr.f32.mxu0 %v879
    %1048 = vmatmul.mubr.f32.gmra.mxu0 %v309
    %v1049 = vpop.f32.mrf.mxu0
    %v1050 = vadd.f32 %v751, %v1049
    %v1051 = vpop.f32.mrf.mxu0
    %v1052 = vadd.f32 %v755, %v1051
    %1053 = vdwg.mxu0
    %1054 = vmatprep.subr.mxu0 %v673
    %1055 = vmatpush1.msra.mxu0 %v672
    %1056 = vmatprep.subr.mxu0 %v649
    %1057 = vmatpush1.msra.mxu0 %v648
    %1058 = vmatprep.subr.mxu0 %v625
    %1059 = vmatpush1.msra.mxu0 %v624
    %1060 = vmatprep.subr.mxu0 %v601
    %1061 = vmatpush1.msra.mxu0 %v600
    %1062 = vmatprep.subr.mxu0 %v577
    %1063 = vmatpush1.msra.mxu0 %v576
    %1064 = vmatprep.subr.mxu0 %v553
    %1065 = vmatpush1.msra.mxu0 %v552
    %1066 = vmatprep.subr.mxu0 %v529
    %1067 = vmatpush1.msra.mxu0 %v528
    %1068 = vmatprep.subr.mxu0 %v505
    %1069 = vmatpush1.msra.mxu0 %v504
    %1070 = vmatprep.subr.mxu0 %v481
    %1071 = vmatpush1.msra.mxu0 %v480
    %1072 = vmatprep.subr.mxu0 %v457
    %1073 = vmatpush1.msra.mxu0 %v456
    %1074 = vmatprep.subr.mxu0 %v433
    %1075 = vmatpush1.msra.mxu0 %v432
    %1076 = vmatprep.subr.mxu0 %v409
    %1077 = vmatpush1.msra.mxu0 %v408
    %1078 = vmatprep.subr.mxu0 %v385
    %1079 = vmatpush1.msra.mxu0 %v384
    %1080 = vmatprep.subr.mxu0 %v361
    %1081 = vmatpush1.msra.mxu0 %v360
    %1082 = vmatprep.subr.mxu0 %v337
    %1083 = vmatpush1.msra.mxu0 %v336
    %1084 = vmatprep.subr.mxu0 %v313
    %1085 = vmatpush1.msra.mxu0 %v312
    %1086 = vmatprep.subr.mxu0 0.0
    %1087 = vmatpush2.msra.mxu0 0.0
    %1088 = vmatprep.subr.mxu0 0.0
    %1089 = vmatpush2.msra.mxu0 0.0
    %1090 = vmatprep.subr.mxu0 0.0
    %1091 = vmatpush2.msra.mxu0 0.0
    %1092 = vmatprep.subr.mxu0 0.0
    %1093 = vmatpush2.msra.mxu0 0.0
    %1094 = vmatprep.subr.mxu0 0.0
    %1095 = vmatpush2.msra.mxu0 0.0
    %1096 = vmatprep.subr.mxu0 0.0
    %1097 = vmatpush2.msra.mxu0 0.0
    %1098 = vmatprep.subr.mxu0 0.0
    %1099 = vmatpush2.msra.mxu0 0.0
    %1100 = vmatprep.subr.mxu0 0.0
    %1101 = vmatpush2.msra.mxu0 0.0
    %1102 = vmatprep.subr.mxu0 0.0
    %1103 = vmatpush2.msra.mxu0 0.0
    %1104 = vmatprep.subr.mxu0 0.0
    %1105 = vmatpush2.msra.mxu0 0.0
    %1106 = vmatprep.subr.mxu0 0.0
    %1107 = vmatpush2.msra.mxu0 0.0
    %1108 = vmatprep.subr.mxu0 0.0
    %1109 = vmatpush2.msra.mxu0 0.0
    %1110 = vmatprep.subr.mxu0 0.0
    %1111 = vmatpush2.msra.mxu0 0.0
    %1112 = vmatprep.subr.mxu0 0.0
    %1113 = vmatpush2.msra.mxu0 0.0
    %1114 = vmatprep.subr.mxu0 %v891
    %1115 = vmatpush2.msra.mxu0 %v888
    %1116 = vmatprep.subr.mxu0 %v697
    %1117 = vmatpush2.msra.mxu0 %v696
    %1118 = vmatprep.mubr.f32.mxu0 %v869
    %1119 = vmatmul.mubr.f32.gmra.mxu0 %v304
    %v1120 = vpop.f32.mrf.mxu0
    %v1121 = vadd.f32 %v759, %v1120
    %v1122 = vpop.f32.mrf.mxu0
    %v1123 = vadd.f32 %v763, %v1122
    %1124 = vmatprep.mubr.f32.mxu0 %v871
    %1125 = vmatmul.mubr.f32.gmra.mxu0 %v305
    %v1126 = vpop.f32.mrf.mxu0
    %v1127 = vadd.f32 %v759, %v1126
    %v1128 = vpop.f32.mrf.mxu0
    %v1129 = vadd.f32 %v763, %v1128
    %1130 = vmatprep.mubr.f32.mxu0 %v873
    %1131 = vmatmul.mubr.f32.gmra.mxu0 %v306
    %v1132 = vpop.f32.mrf.mxu0
    %v1133 = vadd.f32 %v759, %v1132
    %v1134 = vpop.f32.mrf.mxu0
    %v1135 = vadd.f32 %v763, %v1134
    %1136 = vmatprep.mubr.f32.mxu0 %v875
    %1137 = vmatmul.mubr.f32.gmra.mxu0 %v307
    %v1138 = vpop.f32.mrf.mxu0
    %v1139 = vadd.f32 %v759, %v1138
    %v1140 = vpop.f32.mrf.mxu0
    %v1141 = vadd.f32 %v763, %v1140
    %1142 = vmatprep.mubr.f32.mxu0 %v877
    %1143 = vmatmul.mubr.f32.gmra.mxu0 %v308
    %v1144 = vpop.f32.mrf.mxu0
    %v1145 = vadd.f32 %v759, %v1144
    %v1146 = vpop.f32.mrf.mxu0
    %v1147 = vadd.f32 %v763, %v1146
    %1148 = vmatprep.mubr.f32.mxu0 %v879
    %1149 = vmatmul.mubr.f32.gmra.mxu0 %v309
    %v1150 = vpop.f32.mrf.mxu0
    %v1151 = vadd.f32 %v759, %v1150
    %v1152 = vpop.f32.mrf.mxu0
    %v1153 = vadd.f32 %v763, %v1152
    %1154 = vdwg.mxu0
    %1155 = vmatprep.subr.mxu0 %v675
    %1156 = vmatpush1.msra.mxu0 %v674
    %1157 = vmatprep.subr.mxu0 %v651
    %1158 = vmatpush1.msra.mxu0 %v650
    %1159 = vmatprep.subr.mxu0 %v627
    %1160 = vmatpush1.msra.mxu0 %v626
    %1161 = vmatprep.subr.mxu0 %v603
    %1162 = vmatpush1.msra.mxu0 %v602
    %1163 = vmatprep.subr.mxu0 %v579
    %1164 = vmatpush1.msra.mxu0 %v578
    %1165 = vmatprep.subr.mxu0 %v555
    %1166 = vmatpush1.msra.mxu0 %v554
    %1167 = vmatprep.subr.mxu0 %v531
    %1168 = vmatpush1.msra.mxu0 %v530
    %1169 = vmatprep.subr.mxu0 %v507
    %1170 = vmatpush1.msra.mxu0 %v506
    %1171 = vmatprep.subr.mxu0 %v483
    %1172 = vmatpush1.msra.mxu0 %v482
    %1173 = vmatprep.subr.mxu0 %v459
    %1174 = vmatpush1.msra.mxu0 %v458
    %1175 = vmatprep.subr.mxu0 %v435
    %1176 = vmatpush1.msra.mxu0 %v434
    %1177 = vmatprep.subr.mxu0 %v411
    %1178 = vmatpush1.msra.mxu0 %v410
    %1179 = vmatprep.subr.mxu0 %v387
    %1180 = vmatpush1.msra.mxu0 %v386
    %1181 = vmatprep.subr.mxu0 %v363
    %1182 = vmatpush1.msra.mxu0 %v362
    %1183 = vmatprep.subr.mxu0 %v339
    %1184 = vmatpush1.msra.mxu0 %v338
    %1185 = vmatprep.subr.mxu0 %v315
    %1186 = vmatpush1.msra.mxu0 %v314
    %1187 = vmatprep.subr.mxu0 0.0
    %1188 = vmatpush2.msra.mxu0 0.0
    %1189 = vmatprep.subr.mxu0 0.0
    %1190 = vmatpush2.msra.mxu0 0.0
    %1191 = vmatprep.subr.mxu0 0.0
    %1192 = vmatpush2.msra.mxu0 0.0
    %1193 = vmatprep.subr.mxu0 0.0
    %1194 = vmatpush2.msra.mxu0 0.0
    %1195 = vmatprep.subr.mxu0 0.0
    %1196 = vmatpush2.msra.mxu0 0.0
    %1197 = vmatprep.subr.mxu0 0.0
    %1198 = vmatpush2.msra.mxu0 0.0
    %1199 = vmatprep.subr.mxu0 0.0
    %1200 = vmatpush2.msra.mxu0 0.0
    %1201 = vmatprep.subr.mxu0 0.0
    %1202 = vmatpush2.msra.mxu0 0.0
    %1203 = vmatprep.subr.mxu0 0.0
    %1204 = vmatpush2.msra.mxu0 0.0
    %1205 = vmatprep.subr.mxu0 0.0
    %1206 = vmatpush2.msra.mxu0 0.0
    %1207 = vmatprep.subr.mxu0 0.0
    %1208 = vmatpush2.msra.mxu0 0.0
    %1209 = vmatprep.subr.mxu0 0.0
    %1210 = vmatpush2.msra.mxu0 0.0
    %1211 = vmatprep.subr.mxu0 0.0
    %1212 = vmatpush2.msra.mxu0 0.0
    %1213 = vmatprep.subr.mxu0 0.0
    %1214 = vmatpush2.msra.mxu0 0.0
    %1215 = vmatprep.subr.mxu0 %v897
    %1216 = vmatpush2.msra.mxu0 %v894
    %1217 = vmatprep.subr.mxu0 %v699
    %1218 = vmatpush2.msra.mxu0 %v698
    %1219 = vmatprep.mubr.f32.mxu0 %v869
    %1220 = vmatmul.mubr.f32.gmra.mxu0 %v304
    %v1221 = vpop.f32.mrf.mxu0
    %v1222 = vadd.f32 %v767, %v1221
    %v1223 = vpop.f32.mrf.mxu0
    %v1224 = vadd.f32 %v771, %v1223
    %1225 = vmatprep.mubr.f32.mxu0 %v871
    %1226 = vmatmul.mubr.f32.gmra.mxu0 %v305
    %v1227 = vpop.f32.mrf.mxu0
    %v1228 = vadd.f32 %v767, %v1227
    %v1229 = vpop.f32.mrf.mxu0
    %v1230 = vadd.f32 %v771, %v1229
    %1231 = vmatprep.mubr.f32.mxu0 %v873
    %1232 = vmatmul.mubr.f32.gmra.mxu0 %v306
    %v1233 = vpop.f32.mrf.mxu0
    %v1234 = vadd.f32 %v767, %v1233
    %v1235 = vpop.f32.mrf.mxu0
    %v1236 = vadd.f32 %v771, %v1235
    %1237 = vmatprep.mubr.f32.mxu0 %v875
    %1238 = vmatmul.mubr.f32.gmra.mxu0 %v307
    %v1239 = vpop.f32.mrf.mxu0
    %v1240 = vadd.f32 %v767, %v1239
    %v1241 = vpop.f32.mrf.mxu0
    %v1242 = vadd.f32 %v771, %v1241
    %1243 = vmatprep.mubr.f32.mxu0 %v877
    %1244 = vmatmul.mubr.f32.gmra.mxu0 %v308
    %v1245 = vpop.f32.mrf.mxu0
    %v1246 = vadd.f32 %v767, %v1245
    %v1247 = vpop.f32.mrf.mxu0
    %v1248 = vadd.f32 %v771, %v1247
    %1249 = vmatprep.mubr.f32.mxu0 %v879
    %1250 = vmatmul.mubr.f32.gmra.mxu0 %v309
    %v1251 = vpop.f32.mrf.mxu0
    %v1252 = vadd.f32 %v767, %v1251
    %v1253 = vpop.f32.mrf.mxu0
    %v1254 = vadd.f32 %v771, %v1253
    %1255 = vdwg.mxu0
    %1256 = vmatprep.subr.mxu0 %v677
    %1257 = vmatpush1.msra.mxu0 %v676
    %1258 = vmatprep.subr.mxu0 %v653
    %1259 = vmatpush1.msra.mxu0 %v652
    %1260 = vmatprep.subr.mxu0 %v629
    %1261 = vmatpush1.msra.mxu0 %v628
    %1262 = vmatprep.subr.mxu0 %v605
    %1263 = vmatpush1.msra.mxu0 %v604
    %1264 = vmatprep.subr.mxu0 %v581
    %1265 = vmatpush1.msra.mxu0 %v580
    %1266 = vmatprep.subr.mxu0 %v557
    %1267 = vmatpush1.msra.mxu0 %v556
    %1268 = vmatprep.subr.mxu0 %v533
    %1269 = vmatpush1.msra.mxu0 %v532
    %1270 = vmatprep.subr.mxu0 %v509
    %1271 = vmatpush1.msra.mxu0 %v508
    %1272 = vmatprep.subr.mxu0 %v485
    %1273 = vmatpush1.msra.mxu0 %v484
    %1274 = vmatprep.subr.mxu0 %v461
    %1275 = vmatpush1.msra.mxu0 %v460
    %1276 = vmatprep.subr.mxu0 %v437
    %1277 = vmatpush1.msra.mxu0 %v436
    %1278 = vmatprep.subr.mxu0 %v413
    %1279 = vmatpush1.msra.mxu0 %v412
    %1280 = vmatprep.subr.mxu0 %v389
    %1281 = vmatpush1.msra.mxu0 %v388
    %1282 = vmatprep.subr.mxu0 %v365
    %1283 = vmatpush1.msra.mxu0 %v364
    %1284 = vmatprep.subr.mxu0 %v341
    %1285 = vmatpush1.msra.mxu0 %v340
    %1286 = vmatprep.subr.mxu0 %v317
    %1287 = vmatpush1.msra.mxu0 %v316
    %1288 = vmatprep.subr.mxu0 0.0
    %1289 = vmatpush2.msra.mxu0 0.0
    %1290 = vmatprep.subr.mxu0 0.0
    %1291 = vmatpush2.msra.mxu0 0.0
    %1292 = vmatprep.subr.mxu0 0.0
    %1293 = vmatpush2.msra.mxu0 0.0
    %1294 = vmatprep.subr.mxu0 0.0
    %1295 = vmatpush2.msra.mxu0 0.0
    %1296 = vmatprep.subr.mxu0 0.0
    %1297 = vmatpush2.msra.mxu0 0.0
    %1298 = vmatprep.subr.mxu0 0.0
    %1299 = vmatpush2.msra.mxu0 0.0
    %1300 = vmatprep.subr.mxu0 0.0
    %1301 = vmatpush2.msra.mxu0 0.0
    %1302 = vmatprep.subr.mxu0 0.0
    %1303 = vmatpush2.msra.mxu0 0.0
    %1304 = vmatprep.subr.mxu0 0.0
    %1305 = vmatpush2.msra.mxu0 0.0
    %1306 = vmatprep.subr.mxu0 0.0
    %1307 = vmatpush2.msra.mxu0 0.0
    %1308 = vmatprep.subr.mxu0 0.0
    %1309 = vmatpush2.msra.mxu0 0.0
    %1310 = vmatprep.subr.mxu0 0.0
    %1311 = vmatpush2.msra.mxu0 0.0
    %1312 = vmatprep.subr.mxu0 0.0
    %1313 = vmatpush2.msra.mxu0 0.0
    %1314 = vmatprep.subr.mxu0 0.0
    %1315 = vmatpush2.msra.mxu0 0.0
    %1316 = vmatprep.subr.mxu0 %v903
    %1317 = vmatpush2.msra.mxu0 %v900
    %1318 = vmatprep.subr.mxu0 %v701
    %1319 = vmatpush2.msra.mxu0 %v700
    %1320 = vmatprep.mubr.f32.mxu0 %v869
    %1321 = vmatmul.mubr.f32.gmra.mxu0 %v304
    %v1322 = vpop.f32.mrf.mxu0
    %v1323 = vadd.f32 %v775, %v1322
    %v1324 = vpop.f32.mrf.mxu0
    %v1325 = vadd.f32 %v779, %v1324
    %1326 = vmatprep.mubr.f32.mxu0 %v871
    %1327 = vmatmul.mubr.f32.gmra.mxu0 %v305
    %v1328 = vpop.f32.mrf.mxu0
    %v1329 = vadd.f32 %v775, %v1328
    %v1330 = vpop.f32.mrf.mxu0
    %v1331 = vadd.f32 %v779, %v1330
    %1332 = vmatprep.mubr.f32.mxu0 %v873
    %1333 = vmatmul.mubr.f32.gmra.mxu0 %v306
    %v1334 = vpop.f32.mrf.mxu0
    %v1335 = vadd.f32 %v775, %v1334
    %v1336 = vpop.f32.mrf.mxu0
    %v1337 = vadd.f32 %v779, %v1336
    %1338 = vmatprep.mubr.f32.mxu0 %v875
    %1339 = vmatmul.mubr.f32.gmra.mxu0 %v307
    %v1340 = vpop.f32.mrf.mxu0
    %v1341 = vadd.f32 %v775, %v1340
    %v1342 = vpop.f32.mrf.mxu0
    %v1343 = vadd.f32 %v779, %v1342
    %1344 = vmatprep.mubr.f32.mxu0 %v877
    %1345 = vmatmul.mubr.f32.gmra.mxu0 %v308
    %v1346 = vpop.f32.mrf.mxu0
    %v1347 = vadd.f32 %v775, %v1346
    %v1348 = vpop.f32.mrf.mxu0
    %v1349 = vadd.f32 %v779, %v1348
    %1350 = vmatprep.mubr.f32.mxu0 %v879
    %1351 = vmatmul.mubr.f32.gmra.mxu0 %v309
    %v1352 = vpop.f32.mrf.mxu0
    %v1353 = vadd.f32 %v775, %v1352
    %v1354 = vpop.f32.mrf.mxu0
    %v1355 = vadd.f32 %v779, %v1354
    %1356 = vdwg.mxu0
    %1357 = vmatprep.subr.mxu0 %v679
    %1358 = vmatpush1.msra.mxu0 %v678
    %1359 = vmatprep.subr.mxu0 %v655
    %1360 = vmatpush1.msra.mxu0 %v654
    %1361 = vmatprep.subr.mxu0 %v631
    %1362 = vmatpush1.msra.mxu0 %v630
    %1363 = vmatprep.subr.mxu0 %v607
    %1364 = vmatpush1.msra.mxu0 %v606
    %1365 = vmatprep.subr.mxu0 %v583
    %1366 = vmatpush1.msra.mxu0 %v582
    %1367 = vmatprep.subr.mxu0 %v559
    %1368 = vmatpush1.msra.mxu0 %v558
    %1369 = vmatprep.subr.mxu0 %v535
    %1370 = vmatpush1.msra.mxu0 %v534
    %1371 = vmatprep.subr.mxu0 %v511
    %1372 = vmatpush1.msra.mxu0 %v510
    %1373 = vmatprep.subr.mxu0 %v487
    %1374 = vmatpush1.msra.mxu0 %v486
    %1375 = vmatprep.subr.mxu0 %v463
    %1376 = vmatpush1.msra.mxu0 %v462
    %1377 = vmatprep.subr.mxu0 %v439
    %1378 = vmatpush1.msra.mxu0 %v438
    %1379 = vmatprep.subr.mxu0 %v415
    %1380 = vmatpush1.msra.mxu0 %v414
    %1381 = vmatprep.subr.mxu0 %v391
    %1382 = vmatpush1.msra.mxu0 %v390
    %1383 = vmatprep.subr.mxu0 %v367
    %1384 = vmatpush1.msra.mxu0 %v366
    %1385 = vmatprep.subr.mxu0 %v343
    %1386 = vmatpush1.msra.mxu0 %v342
    %1387 = vmatprep.subr.mxu0 %v319
    %1388 = vmatpush1.msra.mxu0 %v318
    %1389 = vmatprep.subr.mxu0 0.0
    %1390 = vmatpush2.msra.mxu0 0.0
    %1391 = vmatprep.subr.mxu0 0.0
    %1392 = vmatpush2.msra.mxu0 0.0
    %1393 = vmatprep.subr.mxu0 0.0
    %1394 = vmatpush2.msra.mxu0 0.0
    %1395 = vmatprep.subr.mxu0 0.0
    %1396 = vmatpush2.msra.mxu0 0.0
    %1397 = vmatprep.subr.mxu0 0.0
    %1398 = vmatpush2.msra.mxu0 0.0
    %1399 = vmatprep.subr.mxu0 0.0
    %1400 = vmatpush2.msra.mxu0 0.0
    %1401 = vmatprep.subr.mxu0 0.0
    %1402 = vmatpush2.msra.mxu0 0.0
    %1403 = vmatprep.subr.mxu0 0.0
    %1404 = vmatpush2.msra.mxu0 0.0
    %1405 = vmatprep.subr.mxu0 0.0
    %1406 = vmatpush2.msra.mxu0 0.0
    %1407 = vmatprep.subr.mxu0 0.0
    %1408 = vmatpush2.msra.mxu0 0.0
    %1409 = vmatprep.subr.mxu0 0.0
    %1410 = vmatpush2.msra.mxu0 0.0
    %1411 = vmatprep.subr.mxu0 0.0
    %1412 = vmatpush2.msra.mxu0 0.0
    %1413 = vmatprep.subr.mxu0 0.0
    %1414 = vmatpush2.msra.mxu0 0.0
    %1415 = vmatprep.subr.mxu0 0.0
    %1416 = vmatpush2.msra.mxu0 0.0
    %1417 = vmatprep.subr.mxu0 %v909
    %1418 = vmatpush2.msra.mxu0 %v906
    %1419 = vmatprep.subr.mxu0 %v703
    %1420 = vmatpush2.msra.mxu0 %v702
    %1421 = vmatprep.mubr.f32.mxu0 %v869
    %1422 = vmatmul.mubr.f32.gmra.mxu0 %v304
    %v1423 = vpop.f32.mrf.mxu0
    %v1424 = vadd.f32 %v783, %v1423
    %v1425 = vpop.f32.mrf.mxu0
    %v1426 = vadd.f32 %v787, %v1425
    %1427 = vmatprep.mubr.f32.mxu0 %v871
    %1428 = vmatmul.mubr.f32.gmra.mxu0 %v305
    %v1429 = vpop.f32.mrf.mxu0
    %v1430 = vadd.f32 %v783, %v1429
    %v1431 = vpop.f32.mrf.mxu0
    %v1432 = vadd.f32 %v787, %v1431
    %1433 = vmatprep.mubr.f32.mxu0 %v873
    %1434 = vmatmul.mubr.f32.gmra.mxu0 %v306
    %v1435 = vpop.f32.mrf.mxu0
    %v1436 = vadd.f32 %v783, %v1435
    %v1437 = vpop.f32.mrf.mxu0
    %v1438 = vadd.f32 %v787, %v1437
    %1439 = vmatprep.mubr.f32.mxu0 %v875
    %1440 = vmatmul.mubr.f32.gmra.mxu0 %v307
    %v1441 = vpop.f32.mrf.mxu0
    %v1442 = vadd.f32 %v783, %v1441
    %v1443 = vpop.f32.mrf.mxu0
    %v1444 = vadd.f32 %v787, %v1443
    %1445 = vmatprep.mubr.f32.mxu0 %v877
    %1446 = vmatmul.mubr.f32.gmra.mxu0 %v308
    %v1447 = vpop.f32.mrf.mxu0
    %v1448 = vadd.f32 %v783, %v1447
    %v1449 = vpop.f32.mrf.mxu0
    %v1450 = vadd.f32 %v787, %v1449
    %1451 = vmatprep.mubr.f32.mxu0 %v879
    %1452 = vmatmul.mubr.f32.gmra.mxu0 %v309
    %v1453 = vpop.f32.mrf.mxu0
    %v1454 = vadd.f32 %v783, %v1453
    %v1455 = vpop.f32.mrf.mxu0
    %v1456 = vadd.f32 %v787, %v1455
    %1457 = vdwg.mxu0
    %1458 = vmatprep.subr.mxu0 %v681
    %1459 = vmatpush1.msra.mxu0 %v680
    %1460 = vmatprep.subr.mxu0 %v657
    %1461 = vmatpush1.msra.mxu0 %v656
    %1462 = vmatprep.subr.mxu0 %v633
    %1463 = vmatpush1.msra.mxu0 %v632
    %1464 = vmatprep.subr.mxu0 %v609
    %1465 = vmatpush1.msra.mxu0 %v608
    %1466 = vmatprep.subr.mxu0 %v585
    %1467 = vmatpush1.msra.mxu0 %v584
    %1468 = vmatprep.subr.mxu0 %v561
    %1469 = vmatpush1.msra.mxu0 %v560
    %1470 = vmatprep.subr.mxu0 %v537
    %1471 = vmatpush1.msra.mxu0 %v536
    %1472 = vmatprep.subr.mxu0 %v513
    %1473 = vmatpush1.msra.mxu0 %v512
    %1474 = vmatprep.subr.mxu0 %v489
    %1475 = vmatpush1.msra.mxu0 %v488
    %1476 = vmatprep.subr.mxu0 %v465
    %1477 = vmatpush1.msra.mxu0 %v464
    %1478 = vmatprep.subr.mxu0 %v441
    %1479 = vmatpush1.msra.mxu0 %v440
    %1480 = vmatprep.subr.mxu0 %v417
    %1481 = vmatpush1.msra.mxu0 %v416
    %1482 = vmatprep.subr.mxu0 %v393
    %1483 = vmatpush1.msra.mxu0 %v392
    %1484 = vmatprep.subr.mxu0 %v369
    %1485 = vmatpush1.msra.mxu0 %v368
    %1486 = vmatprep.subr.mxu0 %v345
    %1487 = vmatpush1.msra.mxu0 %v344
    %1488 = vmatprep.subr.mxu0 %v321
    %1489 = vmatpush1.msra.mxu0 %v320
    %1490 = vmatprep.subr.mxu0 0.0
    %1491 = vmatpush2.msra.mxu0 0.0
    %1492 = vmatprep.subr.mxu0 0.0
    %1493 = vmatpush2.msra.mxu0 0.0
    %1494 = vmatprep.subr.mxu0 0.0
    %1495 = vmatpush2.msra.mxu0 0.0
    %1496 = vmatprep.subr.mxu0 0.0
    %1497 = vmatpush2.msra.mxu0 0.0
    %1498 = vmatprep.subr.mxu0 0.0
    %1499 = vmatpush2.msra.mxu0 0.0
    %1500 = vmatprep.subr.mxu0 0.0
    %1501 = vmatpush2.msra.mxu0 0.0
    %1502 = vmatprep.subr.mxu0 0.0
    %1503 = vmatpush2.msra.mxu0 0.0
    %1504 = vmatprep.subr.mxu0 0.0
    %1505 = vmatpush2.msra.mxu0 0.0
    %1506 = vmatprep.subr.mxu0 0.0
    %1507 = vmatpush2.msra.mxu0 0.0
    %1508 = vmatprep.subr.mxu0 0.0
    %1509 = vmatpush2.msra.mxu0 0.0
    %1510 = vmatprep.subr.mxu0 0.0
    %1511 = vmatpush2.msra.mxu0 0.0
    %1512 = vmatprep.subr.mxu0 0.0
    %1513 = vmatpush2.msra.mxu0 0.0
    %1514 = vmatprep.subr.mxu0 0.0
    %1515 = vmatpush2.msra.mxu0 0.0
    %1516 = vmatprep.subr.mxu0 0.0
    %1517 = vmatpush2.msra.mxu0 0.0
    %1518 = vmatprep.subr.mxu0 %v915
    %1519 = vmatpush2.msra.mxu0 %v912
    %1520 = vmatprep.subr.mxu0 %v705
    %1521 = vmatpush2.msra.mxu0 %v704
    %1522 = vmatprep.mubr.f32.mxu0 %v869
    %1523 = vmatmul.mubr.f32.gmra.mxu0 %v304
    %v1524 = vpop.f32.mrf.mxu0
    %v1525 = vadd.f32 %v791, %v1524
    %v1526 = vpop.f32.mrf.mxu0
    %v1527 = vadd.f32 %v795, %v1526
    %1528 = vmatprep.mubr.f32.mxu0 %v871
    %1529 = vmatmul.mubr.f32.gmra.mxu0 %v305
    %v1530 = vpop.f32.mrf.mxu0
    %v1531 = vadd.f32 %v791, %v1530
    %v1532 = vpop.f32.mrf.mxu0
    %v1533 = vadd.f32 %v795, %v1532
    %1534 = vmatprep.mubr.f32.mxu0 %v873
    %1535 = vmatmul.mubr.f32.gmra.mxu0 %v306
    %v1536 = vpop.f32.mrf.mxu0
    %v1537 = vadd.f32 %v791, %v1536
    %v1538 = vpop.f32.mrf.mxu0
    %v1539 = vadd.f32 %v795, %v1538
    %1540 = vmatprep.mubr.f32.mxu0 %v875
    %1541 = vmatmul.mubr.f32.gmra.mxu0 %v307
    %v1542 = vpop.f32.mrf.mxu0
    %v1543 = vadd.f32 %v791, %v1542
    %v1544 = vpop.f32.mrf.mxu0
    %v1545 = vadd.f32 %v795, %v1544
    %1546 = vmatprep.mubr.f32.mxu0 %v877
    %1547 = vmatmul.mubr.f32.gmra.mxu0 %v308
    %v1548 = vpop.f32.mrf.mxu0
    %v1549 = vadd.f32 %v791, %v1548
    %v1550 = vpop.f32.mrf.mxu0
    %v1551 = vadd.f32 %v795, %v1550
    %1552 = vmatprep.mubr.f32.mxu0 %v879
    %1553 = vmatmul.mubr.f32.gmra.mxu0 %v309
    %v1554 = vpop.f32.mrf.mxu0
    %v1555 = vadd.f32 %v791, %v1554
    %v1556 = vpop.f32.mrf.mxu0
    %v1557 = vadd.f32 %v795, %v1556
    %1558 = vdwg.mxu0
    %1559 = vmatprep.subr.mxu0 %v683
    %1560 = vmatpush1.msra.mxu0 %v682
    %1561 = vmatprep.subr.mxu0 %v659
    %1562 = vmatpush1.msra.mxu0 %v658
    %1563 = vmatprep.subr.mxu0 %v635
    %1564 = vmatpush1.msra.mxu0 %v634
    %1565 = vmatprep.subr.mxu0 %v611
    %1566 = vmatpush1.msra.mxu0 %v610
    %1567 = vmatprep.subr.mxu0 %v587
    %1568 = vmatpush1.msra.mxu0 %v586
    %1569 = vmatprep.subr.mxu0 %v563
    %1570 = vmatpush1.msra.mxu0 %v562
    %1571 = vmatprep.subr.mxu0 %v539
    %1572 = vmatpush1.msra.mxu0 %v538
    %1573 = vmatprep.subr.mxu0 %v515
    %1574 = vmatpush1.msra.mxu0 %v514
    %1575 = vmatprep.subr.mxu0 %v491
    %1576 = vmatpush1.msra.mxu0 %v490
    %1577 = vmatprep.subr.mxu0 %v467
    %1578 = vmatpush1.msra.mxu0 %v466
    %1579 = vmatprep.subr.mxu0 %v443
    %1580 = vmatpush1.msra.mxu0 %v442
    %1581 = vmatprep.subr.mxu0 %v419
    %1582 = vmatpush1.msra.mxu0 %v418
    %1583 = vmatprep.subr.mxu0 %v395
    %1584 = vmatpush1.msra.mxu0 %v394
    %1585 = vmatprep.subr.mxu0 %v371
    %1586 = vmatpush1.msra.mxu0 %v370
    %1587 = vmatprep.subr.mxu0 %v347
    %1588 = vmatpush1.msra.mxu0 %v346
    %1589 = vmatprep.subr.mxu0 %v323
    %1590 = vmatpush1.msra.mxu0 %v322
    %1591 = vmatprep.subr.mxu0 0.0
    %1592 = vmatpush2.msra.mxu0 0.0
    %1593 = vmatprep.subr.mxu0 0.0
    %1594 = vmatpush2.msra.mxu0 0.0
    %1595 = vmatprep.subr.mxu0 0.0
    %1596 = vmatpush2.msra.mxu0 0.0
    %1597 = vmatprep.subr.mxu0 0.0
    %1598 = vmatpush2.msra.mxu0 0.0
    %1599 = vmatprep.subr.mxu0 0.0
    %1600 = vmatpush2.msra.mxu0 0.0
    %1601 = vmatprep.subr.mxu0 0.0
    %1602 = vmatpush2.msra.mxu0 0.0
    %1603 = vmatprep.subr.mxu0 0.0
    %1604 = vmatpush2.msra.mxu0 0.0
    %1605 = vmatprep.subr.mxu0 0.0
    %1606 = vmatpush2.msra.mxu0 0.0
    %1607 = vmatprep.subr.mxu0 0.0
    %1608 = vmatpush2.msra.mxu0 0.0
    %1609 = vmatprep.subr.mxu0 0.0
    %1610 = vmatpush2.msra.mxu0 0.0
    %1611 = vmatprep.subr.mxu0 0.0
    %1612 = vmatpush2.msra.mxu0 0.0
    %1613 = vmatprep.subr.mxu0 0.0
    %1614 = vmatpush2.msra.mxu0 0.0
    %1615 = vmatprep.subr.mxu0 0.0
    %1616 = vmatpush2.msra.mxu0 0.0
    %1617 = vmatprep.subr.mxu0 0.0
    %1618 = vmatpush2.msra.mxu0 0.0
    %1619 = vmatprep.subr.mxu0 %v921
    %1620 = vmatpush2.msra.mxu0 %v918
    %1621 = vmatprep.subr.mxu0 %v707
    %1622 = vmatpush2.msra.mxu0 %v706
    %1623 = vmatprep.mubr.f32.mxu0 %v869
    %1624 = vmatmul.mubr.f32.gmra.mxu0 %v304
    %v1625 = vpop.f32.mrf.mxu0
    %v1626 = vadd.f32 %v799, %v1625
    %v1627 = vpop.f32.mrf.mxu0
    %v1628 = vadd.f32 %v803, %v1627
    %1629 = vmatprep.mubr.f32.mxu0 %v871
    %1630 = vmatmul.mubr.f32.gmra.mxu0 %v305
    %v1631 = vpop.f32.mrf.mxu0
    %v1632 = vadd.f32 %v799, %v1631
    %v1633 = vpop.f32.mrf.mxu0
    %v1634 = vadd.f32 %v803, %v1633
    %1635 = vmatprep.mubr.f32.mxu0 %v873
    %1636 = vmatmul.mubr.f32.gmra.mxu0 %v306
    %v1637 = vpop.f32.mrf.mxu0
    %v1638 = vadd.f32 %v799, %v1637
    %v1639 = vpop.f32.mrf.mxu0
    %v1640 = vadd.f32 %v803, %v1639
    %1641 = vmatprep.mubr.f32.mxu0 %v875
    %1642 = vmatmul.mubr.f32.gmra.mxu0 %v307
    %v1643 = vpop.f32.mrf.mxu0
    %v1644 = vadd.f32 %v799, %v1643
    %v1645 = vpop.f32.mrf.mxu0
    %v1646 = vadd.f32 %v803, %v1645
    %1647 = vmatprep.mubr.f32.mxu0 %v877
    %1648 = vmatmul.mubr.f32.gmra.mxu0 %v308
    %v1649 = vpop.f32.mrf.mxu0
    %v1650 = vadd.f32 %v799, %v1649
    %v1651 = vpop.f32.mrf.mxu0
    %v1652 = vadd.f32 %v803, %v1651
    %1653 = vmatprep.mubr.f32.mxu0 %v879
    %1654 = vmatmul.mubr.f32.gmra.mxu0 %v309
    %v1655 = vpop.f32.mrf.mxu0
    %v1656 = vadd.f32 %v799, %v1655
    %v1657 = vpop.f32.mrf.mxu0
    %v1658 = vadd.f32 %v803, %v1657
    %1659 = vdwg.mxu0
    %1660 = vmatprep.subr.mxu0 %v685
    %1661 = vmatpush1.msra.mxu0 %v684
    %1662 = vmatprep.subr.mxu0 %v661
    %1663 = vmatpush1.msra.mxu0 %v660
    %1664 = vmatprep.subr.mxu0 %v637
    %1665 = vmatpush1.msra.mxu0 %v636
    %1666 = vmatprep.subr.mxu0 %v613
    %1667 = vmatpush1.msra.mxu0 %v612
    %1668 = vmatprep.subr.mxu0 %v589
    %1669 = vmatpush1.msra.mxu0 %v588
    %1670 = vmatprep.subr.mxu0 %v565
    %1671 = vmatpush1.msra.mxu0 %v564
    %1672 = vmatprep.subr.mxu0 %v541
    %1673 = vmatpush1.msra.mxu0 %v540
    %1674 = vmatprep.subr.mxu0 %v517
    %1675 = vmatpush1.msra.mxu0 %v516
    %1676 = vmatprep.subr.mxu0 %v493
    %1677 = vmatpush1.msra.mxu0 %v492
    %1678 = vmatprep.subr.mxu0 %v469
    %1679 = vmatpush1.msra.mxu0 %v468
    %1680 = vmatprep.subr.mxu0 %v445
    %1681 = vmatpush1.msra.mxu0 %v444
    %1682 = vmatprep.subr.mxu0 %v421
    %1683 = vmatpush1.msra.mxu0 %v420
    %1684 = vmatprep.subr.mxu0 %v397
    %1685 = vmatpush1.msra.mxu0 %v396
    %1686 = vmatprep.subr.mxu0 %v373
    %1687 = vmatpush1.msra.mxu0 %v372
    %1688 = vmatprep.subr.mxu0 %v349
    %1689 = vmatpush1.msra.mxu0 %v348
    %1690 = vmatprep.subr.mxu0 %v325
    %1691 = vmatpush1.msra.mxu0 %v324
    %1692 = vmatprep.subr.mxu0 0.0
    %1693 = vmatpush2.msra.mxu0 0.0
    %1694 = vmatprep.subr.mxu0 0.0
    %1695 = vmatpush2.msra.mxu0 0.0
    %1696 = vmatprep.subr.mxu0 0.0
    %1697 = vmatpush2.msra.mxu0 0.0
    %1698 = vmatprep.subr.mxu0 0.0
    %1699 = vmatpush2.msra.mxu0 0.0
    %1700 = vmatprep.subr.mxu0 0.0
    %1701 = vmatpush2.msra.mxu0 0.0
    %1702 = vmatprep.subr.mxu0 0.0
    %1703 = vmatpush2.msra.mxu0 0.0
    %1704 = vmatprep.subr.mxu0 0.0
    %1705 = vmatpush2.msra.mxu0 0.0
    %1706 = vmatprep.subr.mxu0 0.0
    %1707 = vmatpush2.msra.mxu0 0.0
    %1708 = vmatprep.subr.mxu0 0.0
    %1709 = vmatpush2.msra.mxu0 0.0
    %1710 = vmatprep.subr.mxu0 0.0
    %1711 = vmatpush2.msra.mxu0 0.0
    %1712 = vmatprep.subr.mxu0 0.0
    %1713 = vmatpush2.msra.mxu0 0.0
    %1714 = vmatprep.subr.mxu0 0.0
    %1715 = vmatpush2.msra.mxu0 0.0
    %1716 = vmatprep.subr.mxu0 0.0
    %1717 = vmatpush2.msra.mxu0 0.0
    %1718 = vmatprep.subr.mxu0 0.0
    %1719 = vmatpush2.msra.mxu0 0.0
    %1720 = vmatprep.subr.mxu0 %v927
    %1721 = vmatpush2.msra.mxu0 %v924
    %1722 = vmatprep.subr.mxu0 %v709
    %1723 = vmatpush2.msra.mxu0 %v708
    %1724 = vmatprep.mubr.f32.mxu0 %v869
    %1725 = vmatmul.mubr.f32.gmra.mxu0 %v304
    %v1726 = vpop.f32.mrf.mxu0
    %v1727 = vadd.f32 %v807, %v1726
    %v1728 = vpop.f32.mrf.mxu0
    %v1729 = vadd.f32 %v811, %v1728
    %1730 = vmatprep.mubr.f32.mxu0 %v871
    %1731 = vmatmul.mubr.f32.gmra.mxu0 %v305
    %v1732 = vpop.f32.mrf.mxu0
    %v1733 = vadd.f32 %v807, %v1732
    %v1734 = vpop.f32.mrf.mxu0
    %v1735 = vadd.f32 %v811, %v1734
    %1736 = vmatprep.mubr.f32.mxu0 %v873
    %1737 = vmatmul.mubr.f32.gmra.mxu0 %v306
    %v1738 = vpop.f32.mrf.mxu0
    %v1739 = vadd.f32 %v807, %v1738
    %v1740 = vpop.f32.mrf.mxu0
    %v1741 = vadd.f32 %v811, %v1740
    %1742 = vmatprep.mubr.f32.mxu0 %v875
    %1743 = vmatmul.mubr.f32.gmra.mxu0 %v307
    %v1744 = vpop.f32.mrf.mxu0
    %v1745 = vadd.f32 %v807, %v1744
    %v1746 = vpop.f32.mrf.mxu0
    %v1747 = vadd.f32 %v811, %v1746
    %1748 = vmatprep.mubr.f32.mxu0 %v877
    %1749 = vmatmul.mubr.f32.gmra.mxu0 %v308
    %v1750 = vpop.f32.mrf.mxu0
    %v1751 = vadd.f32 %v807, %v1750
    %v1752 = vpop.f32.mrf.mxu0
    %v1753 = vadd.f32 %v811, %v1752
    %1754 = vmatprep.mubr.f32.mxu0 %v879
    %1755 = vmatmul.mubr.f32.gmra.mxu0 %v309
    %v1756 = vpop.f32.mrf.mxu0
    %v1757 = vadd.f32 %v807, %v1756
    %v1758 = vpop.f32.mrf.mxu0
    %v1759 = vadd.f32 %v811, %v1758
    %1760 = vdwg.mxu0
    %1761 = vmatprep.subr.mxu0 %v687
    %1762 = vmatpush1.msra.mxu0 %v686
    %1763 = vmatprep.subr.mxu0 %v663
    %1764 = vmatpush1.msra.mxu0 %v662
    %1765 = vmatprep.subr.mxu0 %v639
    %1766 = vmatpush1.msra.mxu0 %v638
    %1767 = vmatprep.subr.mxu0 %v615
    %1768 = vmatpush1.msra.mxu0 %v614
    %1769 = vmatprep.subr.mxu0 %v591
    %1770 = vmatpush1.msra.mxu0 %v590
    %1771 = vmatprep.subr.mxu0 %v567
    %1772 = vmatpush1.msra.mxu0 %v566
    %1773 = vmatprep.subr.mxu0 %v543
    %1774 = vmatpush1.msra.mxu0 %v542
    %1775 = vmatprep.subr.mxu0 %v519
    %1776 = vmatpush1.msra.mxu0 %v518
    %1777 = vmatprep.subr.mxu0 %v495
    %1778 = vmatpush1.msra.mxu0 %v494
    %1779 = vmatprep.subr.mxu0 %v471
    %1780 = vmatpush1.msra.mxu0 %v470
    %1781 = vmatprep.subr.mxu0 %v447
    %1782 = vmatpush1.msra.mxu0 %v446
    %1783 = vmatprep.subr.mxu0 %v423
    %1784 = vmatpush1.msra.mxu0 %v422
    %1785 = vmatprep.subr.mxu0 %v399
    %1786 = vmatpush1.msra.mxu0 %v398
    %1787 = vmatprep.subr.mxu0 %v375
    %1788 = vmatpush1.msra.mxu0 %v374
    %1789 = vmatprep.subr.mxu0 %v351
    %1790 = vmatpush1.msra.mxu0 %v350
    %1791 = vmatprep.subr.mxu0 %v327
    %1792 = vmatpush1.msra.mxu0 %v326
    %1793 = vmatprep.subr.mxu0 0.0
    %1794 = vmatpush2.msra.mxu0 0.0
    %1795 = vmatprep.subr.mxu0 0.0
    %1796 = vmatpush2.msra.mxu0 0.0
    %1797 = vmatprep.subr.mxu0 0.0
    %1798 = vmatpush2.msra.mxu0 0.0
    %1799 = vmatprep.subr.mxu0 0.0
    %1800 = vmatpush2.msra.mxu0 0.0
    %1801 = vmatprep.subr.mxu0 0.0
    %1802 = vmatpush2.msra.mxu0 0.0
    %1803 = vmatprep.subr.mxu0 0.0
    %1804 = vmatpush2.msra.mxu0 0.0
    %1805 = vmatprep.subr.mxu0 0.0
    %1806 = vmatpush2.msra.mxu0 0.0
    %1807 = vmatprep.subr.mxu0 0.0
    %1808 = vmatpush2.msra.mxu0 0.0
    %1809 = vmatprep.subr.mxu0 0.0
    %1810 = vmatpush2.msra.mxu0 0.0
    %1811 = vmatprep.subr.mxu0 0.0
    %1812 = vmatpush2.msra.mxu0 0.0
    %1813 = vmatprep.subr.mxu0 0.0
    %1814 = vmatpush2.msra.mxu0 0.0
    %1815 = vmatprep.subr.mxu0 0.0
    %1816 = vmatpush2.msra.mxu0 0.0
    %1817 = vmatprep.subr.mxu0 0.0
    %1818 = vmatpush2.msra.mxu0 0.0
    %1819 = vmatprep.subr.mxu0 0.0
    %1820 = vmatpush2.msra.mxu0 0.0
    %1821 = vmatprep.subr.mxu0 %v933
    %1822 = vmatpush2.msra.mxu0 %v930
    %1823 = vmatprep.subr.mxu0 %v711
    %1824 = vmatpush2.msra.mxu0 %v710
    %1825 = vmatprep.mubr.f32.mxu0 %v869
    %1826 = vmatmul.mubr.f32.gmra.mxu0 %v304
    %v1827 = vpop.f32.mrf.mxu0
    %v1828 = vadd.f32 %v815, %v1827
    %v1829 = vpop.f32.mrf.mxu0
    %v1830 = vadd.f32 %v819, %v1829
    %1831 = vmatprep.mubr.f32.mxu0 %v871
    %1832 = vmatmul.mubr.f32.gmra.mxu0 %v305
    %v1833 = vpop.f32.mrf.mxu0
    %v1834 = vadd.f32 %v815, %v1833
    %v1835 = vpop.f32.mrf.mxu0
    %v1836 = vadd.f32 %v819, %v1835
    %1837 = vmatprep.mubr.f32.mxu0 %v873
    %1838 = vmatmul.mubr.f32.gmra.mxu0 %v306
    %v1839 = vpop.f32.mrf.mxu0
    %v1840 = vadd.f32 %v815, %v1839
    %v1841 = vpop.f32.mrf.mxu0
    %v1842 = vadd.f32 %v819, %v1841
    %1843 = vmatprep.mubr.f32.mxu0 %v875
    %1844 = vmatmul.mubr.f32.gmra.mxu0 %v307
    %v1845 = vpop.f32.mrf.mxu0
    %v1846 = vadd.f32 %v815, %v1845
    %v1847 = vpop.f32.mrf.mxu0
    %v1848 = vadd.f32 %v819, %v1847
    %1849 = vmatprep.mubr.f32.mxu0 %v877
    %1850 = vmatmul.mubr.f32.gmra.mxu0 %v308
    %v1851 = vpop.f32.mrf.mxu0
    %v1852 = vadd.f32 %v815, %v1851
    %v1853 = vpop.f32.mrf.mxu0
    %v1854 = vadd.f32 %v819, %v1853
    %1855 = vmatprep.mubr.f32.mxu0 %v879
    %1856 = vmatmul.mubr.f32.gmra.mxu0 %v309
    %v1857 = vpop.f32.mrf.mxu0
    %v1858 = vadd.f32 %v815, %v1857
    %v1859 = vpop.f32.mrf.mxu0
    %v1860 = vadd.f32 %v819, %v1859
    %1861 = vdwg.mxu0
    %1862 = vmatprep.subr.mxu0 %v689
    %1863 = vmatpush1.msra.mxu0 %v688
    %1864 = vmatprep.subr.mxu0 %v665
    %1865 = vmatpush1.msra.mxu0 %v664
    %1866 = vmatprep.subr.mxu0 %v641
    %1867 = vmatpush1.msra.mxu0 %v640
    %1868 = vmatprep.subr.mxu0 %v617
    %1869 = vmatpush1.msra.mxu0 %v616
    %1870 = vmatprep.subr.mxu0 %v593
    %1871 = vmatpush1.msra.mxu0 %v592
    %1872 = vmatprep.subr.mxu0 %v569
    %1873 = vmatpush1.msra.mxu0 %v568
    %1874 = vmatprep.subr.mxu0 %v545
    %1875 = vmatpush1.msra.mxu0 %v544
    %1876 = vmatprep.subr.mxu0 %v521
    %1877 = vmatpush1.msra.mxu0 %v520
    %1878 = vmatprep.subr.mxu0 %v497
    %1879 = vmatpush1.msra.mxu0 %v496
    %1880 = vmatprep.subr.mxu0 %v473
    %1881 = vmatpush1.msra.mxu0 %v472
    %1882 = vmatprep.subr.mxu0 %v449
    %1883 = vmatpush1.msra.mxu0 %v448
    %1884 = vmatprep.subr.mxu0 %v425
    %1885 = vmatpush1.msra.mxu0 %v424
    %1886 = vmatprep.subr.mxu0 %v401
    %1887 = vmatpush1.msra.mxu0 %v400
    %1888 = vmatprep.subr.mxu0 %v377
    %1889 = vmatpush1.msra.mxu0 %v376
    %1890 = vmatprep.subr.mxu0 %v353
    %1891 = vmatpush1.msra.mxu0 %v352
    %1892 = vmatprep.subr.mxu0 %v329
    %1893 = vmatpush1.msra.mxu0 %v328
    %1894 = vmatprep.subr.mxu0 0.0
    %1895 = vmatpush2.msra.mxu0 0.0
    %1896 = vmatprep.subr.mxu0 0.0
    %1897 = vmatpush2.msra.mxu0 0.0
    %1898 = vmatprep.subr.mxu0 0.0
    %1899 = vmatpush2.msra.mxu0 0.0
    %1900 = vmatprep.subr.mxu0 0.0
    %1901 = vmatpush2.msra.mxu0 0.0
    %1902 = vmatprep.subr.mxu0 0.0
    %1903 = vmatpush2.msra.mxu0 0.0
    %1904 = vmatprep.subr.mxu0 0.0
    %1905 = vmatpush2.msra.mxu0 0.0
    %1906 = vmatprep.subr.mxu0 0.0
    %1907 = vmatpush2.msra.mxu0 0.0
    %1908 = vmatprep.subr.mxu0 0.0
    %1909 = vmatpush2.msra.mxu0 0.0
    %1910 = vmatprep.subr.mxu0 0.0
    %1911 = vmatpush2.msra.mxu0 0.0
    %1912 = vmatprep.subr.mxu0 0.0
    %1913 = vmatpush2.msra.mxu0 0.0
    %1914 = vmatprep.subr.mxu0 0.0
    %1915 = vmatpush2.msra.mxu0 0.0
    %1916 = vmatprep.subr.mxu0 0.0
    %1917 = vmatpush2.msra.mxu0 0.0
    %1918 = vmatprep.subr.mxu0 0.0
    %1919 = vmatpush2.msra.mxu0 0.0
    %1920 = vmatprep.subr.mxu0 0.0
    %1921 = vmatpush2.msra.mxu0 0.0
    %1922 = vmatprep.subr.mxu0 %v939
    %1923 = vmatpush2.msra.mxu0 %v936
    %1924 = vmatprep.subr.mxu0 %v713
    %1925 = vmatpush2.msra.mxu0 %v712
    %1926 = vmatprep.mubr.f32.mxu0 %v869
    %1927 = vmatmul.mubr.f32.gmra.mxu0 %v304
    %v1928 = vpop.f32.mrf.mxu0
    %v1929 = vadd.f32 %v823, %v1928
    %v1930 = vpop.f32.mrf.mxu0
    %v1931 = vadd.f32 %v827, %v1930
    %1932 = vmatprep.mubr.f32.mxu0 %v871
    %1933 = vmatmul.mubr.f32.gmra.mxu0 %v305
    %v1934 = vpop.f32.mrf.mxu0
    %v1935 = vadd.f32 %v823, %v1934
    %v1936 = vpop.f32.mrf.mxu0
    %v1937 = vadd.f32 %v827, %v1936
    %1938 = vmatprep.mubr.f32.mxu0 %v873
    %1939 = vmatmul.mubr.f32.gmra.mxu0 %v306
    %v1940 = vpop.f32.mrf.mxu0
    %v1941 = vadd.f32 %v823, %v1940
    %v1942 = vpop.f32.mrf.mxu0
    %v1943 = vadd.f32 %v827, %v1942
    %1944 = vmatprep.mubr.f32.mxu0 %v875
    %1945 = vmatmul.mubr.f32.gmra.mxu0 %v307
    %v1946 = vpop.f32.mrf.mxu0
    %v1947 = vadd.f32 %v823, %v1946
    %v1948 = vpop.f32.mrf.mxu0
    %v1949 = vadd.f32 %v827, %v1948
    %1950 = vmatprep.mubr.f32.mxu0 %v877
    %1951 = vmatmul.mubr.f32.gmra.mxu0 %v308
    %v1952 = vpop.f32.mrf.mxu0
    %v1953 = vadd.f32 %v823, %v1952
    %v1954 = vpop.f32.mrf.mxu0
    %v1955 = vadd.f32 %v827, %v1954
    %1956 = vmatprep.mubr.f32.mxu0 %v879
    %1957 = vmatmul.mubr.f32.gmra.mxu0 %v309
    %v1958 = vpop.f32.mrf.mxu0
    %v1959 = vadd.f32 %v823, %v1958
    %v1960 = vpop.f32.mrf.mxu0
    %v1961 = vadd.f32 %v827, %v1960
    %1962 = vdwg.mxu0
    %1963 = vmatprep.subr.mxu0 %v691
    %1964 = vmatpush1.msra.mxu0 %v690
    %1965 = vmatprep.subr.mxu0 %v667
    %1966 = vmatpush1.msra.mxu0 %v666
    %1967 = vmatprep.subr.mxu0 %v643
    %1968 = vmatpush1.msra.mxu0 %v642
    %1969 = vmatprep.subr.mxu0 %v619
    %1970 = vmatpush1.msra.mxu0 %v618
    %1971 = vmatprep.subr.mxu0 %v595
    %1972 = vmatpush1.msra.mxu0 %v594
    %1973 = vmatprep.subr.mxu0 %v571
    %1974 = vmatpush1.msra.mxu0 %v570
    %1975 = vmatprep.subr.mxu0 %v547
    %1976 = vmatpush1.msra.mxu0 %v546
    %1977 = vmatprep.subr.mxu0 %v523
    %1978 = vmatpush1.msra.mxu0 %v522
    %1979 = vmatprep.subr.mxu0 %v499
    %1980 = vmatpush1.msra.mxu0 %v498
    %1981 = vmatprep.subr.mxu0 %v475
    %1982 = vmatpush1.msra.mxu0 %v474
    %1983 = vmatprep.subr.mxu0 %v451
    %1984 = vmatpush1.msra.mxu0 %v450
    %1985 = vmatprep.subr.mxu0 %v427
    %1986 = vmatpush1.msra.mxu0 %v426
    %1987 = vmatprep.subr.mxu0 %v403
    %1988 = vmatpush1.msra.mxu0 %v402
    %1989 = vmatprep.subr.mxu0 %v379
    %1990 = vmatpush1.msra.mxu0 %v378
    %1991 = vmatprep.subr.mxu0 %v355
    %1992 = vmatpush1.msra.mxu0 %v354
    %1993 = vmatprep.subr.mxu0 %v331
    %1994 = vmatpush1.msra.mxu0 %v330
    %1995 = vmatprep.subr.mxu0 0.0
    %1996 = vmatpush2.msra.mxu0 0.0
    %1997 = vmatprep.subr.mxu0 0.0
    %1998 = vmatpush2.msra.mxu0 0.0
    %1999 = vmatprep.subr.mxu0 0.0
    %2000 = vmatpush2.msra.mxu0 0.0
    %2001 = vmatprep.subr.mxu0 0.0
    %2002 = vmatpush2.msra.mxu0 0.0
    %2003 = vmatprep.subr.mxu0 0.0
    %2004 = vmatpush2.msra.mxu0 0.0
    %2005 = vmatprep.subr.mxu0 0.0
    %2006 = vmatpush2.msra.mxu0 0.0
    %2007 = vmatprep.subr.mxu0 0.0
    %2008 = vmatpush2.msra.mxu0 0.0
    %2009 = vmatprep.subr.mxu0 0.0
    %2010 = vmatpush2.msra.mxu0 0.0
    %2011 = vmatprep.subr.mxu0 0.0
    %2012 = vmatpush2.msra.mxu0 0.0
    %2013 = vmatprep.subr.mxu0 0.0
    %2014 = vmatpush2.msra.mxu0 0.0
    %2015 = vmatprep.subr.mxu0 0.0
    %2016 = vmatpush2.msra.mxu0 0.0
    %2017 = vmatprep.subr.mxu0 0.0
    %2018 = vmatpush2.msra.mxu0 0.0
    %2019 = vmatprep.subr.mxu0 0.0
    %2020 = vmatpush2.msra.mxu0 0.0
    %2021 = vmatprep.subr.mxu0 0.0
    %2022 = vmatpush2.msra.mxu0 0.0
    %2023 = vmatprep.subr.mxu0 %v945
    %2024 = vmatpush2.msra.mxu0 %v942
    %2025 = vmatprep.subr.mxu0 %v715
    %2026 = vmatpush2.msra.mxu0 %v714
    %2027 = vmatprep.mubr.f32.mxu0 %v869
    %2028 = vmatmul.mubr.f32.gmra.mxu0 %v304
    %v2029 = vpop.f32.mrf.mxu0
    %v2030 = vadd.f32 %v831, %v2029
    %v2031 = vpop.f32.mrf.mxu0
    %v2032 = vadd.f32 %v835, %v2031
    %2033 = vmatprep.mubr.f32.mxu0 %v871
    %2034 = vmatmul.mubr.f32.gmra.mxu0 %v305
    %v2035 = vpop.f32.mrf.mxu0
    %v2036 = vadd.f32 %v831, %v2035
    %v2037 = vpop.f32.mrf.mxu0
    %v2038 = vadd.f32 %v835, %v2037
    %2039 = vmatprep.mubr.f32.mxu0 %v873
    %2040 = vmatmul.mubr.f32.gmra.mxu0 %v306
    %v2041 = vpop.f32.mrf.mxu0
    %v2042 = vadd.f32 %v831, %v2041
    %v2043 = vpop.f32.mrf.mxu0
    %v2044 = vadd.f32 %v835, %v2043
    %2045 = vmatprep.mubr.f32.mxu0 %v875
    %2046 = vmatmul.mubr.f32.gmra.mxu0 %v307
    %v2047 = vpop.f32.mrf.mxu0
    %v2048 = vadd.f32 %v831, %v2047
    %v2049 = vpop.f32.mrf.mxu0
    %v2050 = vadd.f32 %v835, %v2049
    %2051 = vmatprep.mubr.f32.mxu0 %v877
    %2052 = vmatmul.mubr.f32.gmra.mxu0 %v308
    %v2053 = vpop.f32.mrf.mxu0
    %v2054 = vadd.f32 %v831, %v2053
    %v2055 = vpop.f32.mrf.mxu0
    %v2056 = vadd.f32 %v835, %v2055
    %2057 = vmatprep.mubr.f32.mxu0 %v879
    %2058 = vmatmul.mubr.f32.gmra.mxu0 %v309
    %v2059 = vpop.f32.mrf.mxu0
    %v2060 = vadd.f32 %v831, %v2059
    %v2061 = vpop.f32.mrf.mxu0
    %v2062 = vadd.f32 %v835, %v2061
    %2063 = vdwg.mxu0
    %2064 = vmatprep.subr.mxu0 %v693
    %2065 = vmatpush1.msra.mxu0 %v692
    %2066 = vmatprep.subr.mxu0 %v669
    %2067 = vmatpush1.msra.mxu0 %v668
    %2068 = vmatprep.subr.mxu0 %v645
    %2069 = vmatpush1.msra.mxu0 %v644
    %2070 = vmatprep.subr.mxu0 %v621
    %2071 = vmatpush1.msra.mxu0 %v620
    %2072 = vmatprep.subr.mxu0 %v597
    %2073 = vmatpush1.msra.mxu0 %v596
    %2074 = vmatprep.subr.mxu0 %v573
    %2075 = vmatpush1.msra.mxu0 %v572
    %2076 = vmatprep.subr.mxu0 %v549
    %2077 = vmatpush1.msra.mxu0 %v548
    %2078 = vmatprep.subr.mxu0 %v525
    %2079 = vmatpush1.msra.mxu0 %v524
    %2080 = vmatprep.subr.mxu0 %v501
    %2081 = vmatpush1.msra.mxu0 %v500
    %2082 = vmatprep.subr.mxu0 %v477
    %2083 = vmatpush1.msra.mxu0 %v476
    %2084 = vmatprep.subr.mxu0 %v453
    %2085 = vmatpush1.msra.mxu0 %v452
    %2086 = vmatprep.subr.mxu0 %v429
    %2087 = vmatpush1.msra.mxu0 %v428
    %2088 = vmatprep.subr.mxu0 %v405
    %2089 = vmatpush1.msra.mxu0 %v404
    %2090 = vmatprep.subr.mxu0 %v381
    %2091 = vmatpush1.msra.mxu0 %v380
    %2092 = vmatprep.subr.mxu0 %v357
    %2093 = vmatpush1.msra.mxu0 %v356
    %2094 = vmatprep.subr.mxu0 %v333
    %2095 = vmatpush1.msra.mxu0 %v332
    %2096 = vmatprep.subr.mxu0 0.0
    %2097 = vmatpush2.msra.mxu0 0.0
    %2098 = vmatprep.subr.mxu0 0.0
    %2099 = vmatpush2.msra.mxu0 0.0
    %2100 = vmatprep.subr.mxu0 0.0
    %2101 = vmatpush2.msra.mxu0 0.0
    %2102 = vmatprep.subr.mxu0 0.0
    %2103 = vmatpush2.msra.mxu0 0.0
    %2104 = vmatprep.subr.mxu0 0.0
    %2105 = vmatpush2.msra.mxu0 0.0
    %2106 = vmatprep.subr.mxu0 0.0
    %2107 = vmatpush2.msra.mxu0 0.0
    %2108 = vmatprep.subr.mxu0 0.0
    %2109 = vmatpush2.msra.mxu0 0.0
    %2110 = vmatprep.subr.mxu0 0.0
    %2111 = vmatpush2.msra.mxu0 0.0
    %2112 = vmatprep.subr.mxu0 0.0
    %2113 = vmatpush2.msra.mxu0 0.0
    %2114 = vmatprep.subr.mxu0 0.0
    %2115 = vmatpush2.msra.mxu0 0.0
    %2116 = vmatprep.subr.mxu0 0.0
    %2117 = vmatpush2.msra.mxu0 0.0
    %2118 = vmatprep.subr.mxu0 0.0
    %2119 = vmatpush2.msra.mxu0 0.0
    %2120 = vmatprep.subr.mxu0 0.0
    %2121 = vmatpush2.msra.mxu0 0.0
    %2122 = vmatprep.subr.mxu0 0.0
    %2123 = vmatpush2.msra.mxu0 0.0
    %2124 = vmatprep.subr.mxu0 %v951
    %2125 = vmatpush2.msra.mxu0 %v948
    %2126 = vmatprep.subr.mxu0 %v717
    %2127 = vmatpush2.msra.mxu0 %v716
    %2128 = vmatprep.mubr.f32.mxu0 %v869
    %2129 = vmatmul.mubr.f32.gmra.mxu0 %v304
    %v2130 = vpop.f32.mrf.mxu0
    %v2131 = vadd.f32 %v839, %v2130
    %v2132 = vpop.f32.mrf.mxu0
    %v2133 = vadd.f32 %v843, %v2132
    %2134 = vmatprep.mubr.f32.mxu0 %v871
    %2135 = vmatmul.mubr.f32.gmra.mxu0 %v305
    %v2136 = vpop.f32.mrf.mxu0
    %v2137 = vadd.f32 %v839, %v2136
    %v2138 = vpop.f32.mrf.mxu0
    %v2139 = vadd.f32 %v843, %v2138
    %2140 = vmatprep.mubr.f32.mxu0 %v873
    %2141 = vmatmul.mubr.f32.gmra.mxu0 %v306
    %v2142 = vpop.f32.mrf.mxu0
    %v2143 = vadd.f32 %v839, %v2142
    %v2144 = vpop.f32.mrf.mxu0
    %v2145 = vadd.f32 %v843, %v2144
    %2146 = vmatprep.mubr.f32.mxu0 %v875
    %2147 = vmatmul.mubr.f32.gmra.mxu0 %v307
    %v2148 = vpop.f32.mrf.mxu0
    %v2149 = vadd.f32 %v839, %v2148
    %v2150 = vpop.f32.mrf.mxu0
    %v2151 = vadd.f32 %v843, %v2150
    %2152 = vmatprep.mubr.f32.mxu0 %v877
    %2153 = vmatmul.mubr.f32.gmra.mxu0 %v308
    %v2154 = vpop.f32.mrf.mxu0
    %v2155 = vadd.f32 %v839, %v2154
    %v2156 = vpop.f32.mrf.mxu0
    %v2157 = vadd.f32 %v843, %v2156
    %2158 = vmatprep.mubr.f32.mxu0 %v879
    %2159 = vmatmul.mubr.f32.gmra.mxu0 %v309
    %v2160 = vpop.f32.mrf.mxu0
    %v2161 = vadd.f32 %v839, %v2160
    %v2162 = vpop.f32.mrf.mxu0
    %v2163 = vadd.f32 %v843, %v2162
    %2164 = vdwg.mxu0
    %v2165 = vmax.f32 %v1020, 0.0
    %v2166 = vmax.f32 %v1022, 0.0
    %v2167 = vmax.f32 %v1121, 0.0
    %v2168 = vmax.f32 %v1123, 0.0
    %v2169 = vmax.f32 %v1222, 0.0
    %v2170 = vmax.f32 %v1224, 0.0
    %v2171 = vmax.f32 %v1323, 0.0
    %v2172 = vmax.f32 %v1325, 0.0
    %v2173 = vmax.f32 %v1424, 0.0
    %v2174 = vmax.f32 %v1426, 0.0
    %v2175 = vmax.f32 %v1525, 0.0
    %v2176 = vmax.f32 %v1527, 0.0
    %v2177 = vmax.f32 %v1626, 0.0
    %v2178 = vmax.f32 %v1628, 0.0
    %v2179 = vmax.f32 %v1727, 0.0
    %v2180 = vmax.f32 %v1729, 0.0
    %v2181 = vmax.f32 %v1828, 0.0
    %v2182 = vmax.f32 %v1830, 0.0
    %v2183 = vmax.f32 %v1929, 0.0
    %v2184 = vmax.f32 %v1931, 0.0
    %v2185 = vmax.f32 %v2030, 0.0
    %v2186 = vmax.f32 %v2032, 0.0
    %v2187 = vmax.f32 %v2131, 0.0
    %v2188 = vmax.f32 %v2133, 0.0
    %v2189 = vmax.f32 %v1026, 0.0
    %v2190 = vmax.f32 %v1028, 0.0
    %v2191 = vmax.f32 %v1127, 0.0
    %v2192 = vmax.f32 %v1129, 0.0
    %v2193 = vmax.f32 %v1228, 0.0
    %v2194 = vmax.f32 %v1230, 0.0
    %v2195 = vmax.f32 %v1329, 0.0
    %v2196 = vmax.f32 %v1331, 0.0
    %v2197 = vmax.f32 %v1430, 0.0
    %v2198 = vmax.f32 %v1432, 0.0
    %v2199 = vmax.f32 %v1531, 0.0
    %v2200 = vmax.f32 %v1533, 0.0
    %v2201 = vmax.f32 %v1632, 0.0
    %v2202 = vmax.f32 %v1634, 0.0
    %v2203 = vmax.f32 %v1733, 0.0
    %v2204 = vmax.f32 %v1735, 0.0
    %v2205 = vmax.f32 %v1834, 0.0
    %v2206 = vmax.f32 %v1836, 0.0
    %v2207 = vmax.f32 %v1935, 0.0
    %v2208 = vmax.f32 %v1937, 0.0
    %v2209 = vmax.f32 %v2036, 0.0
    %v2210 = vmax.f32 %v2038, 0.0
    %v2211 = vmax.f32 %v2137, 0.0
    %v2212 = vmax.f32 %v2139, 0.0
    %v2213 = vmax.f32 %v1032, 0.0
    %v2214 = vmax.f32 %v1034, 0.0
    %v2215 = vmax.f32 %v1133, 0.0
    %v2216 = vmax.f32 %v1135, 0.0
    %v2217 = vmax.f32 %v1234, 0.0
    %v2218 = vmax.f32 %v1236, 0.0
    %v2219 = vmax.f32 %v1335, 0.0
    %v2220 = vmax.f32 %v1337, 0.0
    %v2221 = vmax.f32 %v1436, 0.0
    %v2222 = vmax.f32 %v1438, 0.0
    %v2223 = vmax.f32 %v1537, 0.0
    %v2224 = vmax.f32 %v1539, 0.0
    %v2225 = vmax.f32 %v1638, 0.0
    %v2226 = vmax.f32 %v1640, 0.0
    %v2227 = vmax.f32 %v1739, 0.0
    %v2228 = vmax.f32 %v1741, 0.0
    %v2229 = vmax.f32 %v1840, 0.0
    %v2230 = vmax.f32 %v1842, 0.0
    %v2231 = vmax.f32 %v1941, 0.0
    %v2232 = vmax.f32 %v1943, 0.0
    %v2233 = vmax.f32 %v2042, 0.0
    %v2234 = vmax.f32 %v2044, 0.0
    %v2235 = vmax.f32 %v2143, 0.0
    %v2236 = vmax.f32 %v2145, 0.0
    %v2237 = vmax.f32 %v1038, 0.0
    %v2238 = vmax.f32 %v1040, 0.0
    %v2239 = vmax.f32 %v1139, 0.0
    %v2240 = vmax.f32 %v1141, 0.0
    %v2241 = vmax.f32 %v1240, 0.0
    %v2242 = vmax.f32 %v1242, 0.0
    %v2243 = vmax.f32 %v1341, 0.0
    %v2244 = vmax.f32 %v1343, 0.0
    %v2245 = vmax.f32 %v1442, 0.0
    %v2246 = vmax.f32 %v1444, 0.0
    %v2247 = vmax.f32 %v1543, 0.0
    %v2248 = vmax.f32 %v1545, 0.0
    %v2249 = vmax.f32 %v1644, 0.0
    %v2250 = vmax.f32 %v1646, 0.0
    %v2251 = vmax.f32 %v1745, 0.0
    %v2252 = vmax.f32 %v1747, 0.0
    %v2253 = vmax.f32 %v1846, 0.0
    %v2254 = vmax.f32 %v1848, 0.0
    %v2255 = vmax.f32 %v1947, 0.0
    %v2256 = vmax.f32 %v1949, 0.0
    %v2257 = vmax.f32 %v2048, 0.0
    %v2258 = vmax.f32 %v2050, 0.0
    %v2259 = vmax.f32 %v2149, 0.0
    %v2260 = vmax.f32 %v2151, 0.0
    %v2261 = vmax.f32 %v1044, 0.0
    %v2262 = vmax.f32 %v1046, 0.0
    %v2263 = vmax.f32 %v1145, 0.0
    %v2264 = vmax.f32 %v1147, 0.0
    %v2265 = vmax.f32 %v1246, 0.0
    %v2266 = vmax.f32 %v1248, 0.0
    %v2267 = vmax.f32 %v1347, 0.0
    %v2268 = vmax.f32 %v1349, 0.0
    %v2269 = vmax.f32 %v1448, 0.0
    %v2270 = vmax.f32 %v1450, 0.0
    %v2271 = vmax.f32 %v1549, 0.0
    %v2272 = vmax.f32 %v1551, 0.0
    %v2273 = vmax.f32 %v1650, 0.0
    %v2274 = vmax.f32 %v1652, 0.0
    %v2275 = vmax.f32 %v1751, 0.0
    %v2276 = vmax.f32 %v1753, 0.0
    %v2277 = vmax.f32 %v1852, 0.0
    %v2278 = vmax.f32 %v1854, 0.0
    %v2279 = vmax.f32 %v1953, 0.0
    %v2280 = vmax.f32 %v1955, 0.0
    %v2281 = vmax.f32 %v2054, 0.0
    %v2282 = vmax.f32 %v2056, 0.0
    %v2283 = vmax.f32 %v2155, 0.0
    %v2284 = vmax.f32 %v2157, 0.0
    %v2285 = vmax.f32 %v1050, 0.0
    %v2286 = vmax.f32 %v1052, 0.0
    %v2287 = vmax.f32 %v1151, 0.0
    %v2288 = vmax.f32 %v1153, 0.0
    %v2289 = vmax.f32 %v1252, 0.0
    %v2290 = vmax.f32 %v1254, 0.0
    %v2291 = vmax.f32 %v1353, 0.0
    %v2292 = vmax.f32 %v1355, 0.0
    %v2293 = vmax.f32 %v1454, 0.0
    %v2294 = vmax.f32 %v1456, 0.0
    %v2295 = vmax.f32 %v1555, 0.0
    %v2296 = vmax.f32 %v1557, 0.0
    %v2297 = vmax.f32 %v1656, 0.0
    %v2298 = vmax.f32 %v1658, 0.0
    %v2299 = vmax.f32 %v1757, 0.0
    %v2300 = vmax.f32 %v1759, 0.0
    %v2301 = vmax.f32 %v1858, 0.0
    %v2302 = vmax.f32 %v1860, 0.0
    %v2303 = vmax.f32 %v1959, 0.0
    %v2304 = vmax.f32 %v1961, 0.0
    %v2305 = vmax.f32 %v2060, 0.0
    %v2306 = vmax.f32 %v2062, 0.0
    %v2307 = vmax.f32 %v2161, 0.0
    %v2308 = vmax.f32 %v2163, 0.0
    %v2453 = vcombine.low %v2165, %v2166
    %v2454 = vcombine.high %v2165, %v2166
    %v2455 = vcombine.low %v2189, %v2190
    %v2456 = vcombine.high %v2189, %v2190
    %v2457 = vcombine.low %v2213, %v2214
    %v2458 = vcombine.high %v2213, %v2214
    %v2459 = vcombine.low %v2237, %v2238
    %v2460 = vcombine.high %v2237, %v2238
    %v2461 = vcombine.low %v2261, %v2262
    %v2462 = vcombine.high %v2261, %v2262
    %v2463 = vcombine.low %v2285, %v2286
    %v2464 = vcombine.high %v2285, %v2286
    %v2465 = vcombine.low %v2167, %v2168
    %v2466 = vcombine.high %v2167, %v2168
    %v2467 = vcombine.low %v2191, %v2192
    %v2468 = vcombine.high %v2191, %v2192
    %v2469 = vcombine.low %v2215, %v2216
    %v2470 = vcombine.high %v2215, %v2216
    %v2471 = vcombine.low %v2239, %v2240
    %v2472 = vcombine.high %v2239, %v2240
    %v2473 = vcombine.low %v2263, %v2264
    %v2474 = vcombine.high %v2263, %v2264
    %v2475 = vcombine.low %v2287, %v2288
    %v2476 = vcombine.high %v2287, %v2288
    %v2477 = vcombine.low %v2169, %v2170
    %v2478 = vcombine.high %v2169, %v2170
    %v2479 = vcombine.low %v2193, %v2194
    %v2480 = vcombine.high %v2193, %v2194
    %v2481 = vcombine.low %v2217, %v2218
    %v2482 = vcombine.high %v2217, %v2218
    %v2483 = vcombine.low %v2241, %v2242
    %v2484 = vcombine.high %v2241, %v2242
    %v2485 = vcombine.low %v2265, %v2266
    %v2486 = vcombine.high %v2265, %v2266
    %v2487 = vcombine.low %v2289, %v2290
    %v2488 = vcombine.high %v2289, %v2290
    %v2489 = vcombine.low %v2171, %v2172
    %v2490 = vcombine.high %v2171, %v2172
    %v2491 = vcombine.low %v2195, %v2196
    %v2492 = vcombine.high %v2195, %v2196
    %v2493 = vcombine.low %v2219, %v2220
    %v2494 = vcombine.high %v2219, %v2220
    %v2495 = vcombine.low %v2243, %v2244
    %v2496 = vcombine.high %v2243, %v2244
    %v2497 = vcombine.low %v2267, %v2268
    %v2498 = vcombine.high %v2267, %v2268
    %v2499 = vcombine.low %v2291, %v2292
    %v2500 = vcombine.high %v2291, %v2292
    %v2501 = vcombine.low %v2173, %v2174
    %v2502 = vcombine.high %v2173, %v2174
    %v2503 = vcombine.low %v2197, %v2198
    %v2504 = vcombine.high %v2197, %v2198
    %v2505 = vcombine.low %v2221, %v2222
    %v2506 = vcombine.high %v2221, %v2222
    %v2507 = vcombine.low %v2245, %v2246
    %v2508 = vcombine.high %v2245, %v2246
    %v2509 = vcombine.low %v2269, %v2270
    %v2510 = vcombine.high %v2269, %v2270
    %v2511 = vcombine.low %v2293, %v2294
    %v2512 = vcombine.high %v2293, %v2294
    %v2513 = vcombine.low %v2175, %v2176
    %v2514 = vcombine.high %v2175, %v2176
    %v2515 = vcombine.low %v2199, %v2200
    %v2516 = vcombine.high %v2199, %v2200
    %v2517 = vcombine.low %v2223, %v2224
    %v2518 = vcombine.high %v2223, %v2224
    %v2519 = vcombine.low %v2247, %v2248
    %v2520 = vcombine.high %v2247, %v2248
    %v2521 = vcombine.low %v2271, %v2272
    %v2522 = vcombine.high %v2271, %v2272
    %v2523 = vcombine.low %v2295, %v2296
    %v2524 = vcombine.high %v2295, %v2296
    %v2525 = vcombine.low %v2177, %v2178
    %v2526 = vcombine.high %v2177, %v2178
    %v2527 = vcombine.low %v2201, %v2202
    %v2528 = vcombine.high %v2201, %v2202
    %v2529 = vcombine.low %v2225, %v2226
    %v2530 = vcombine.high %v2225, %v2226
    %v2531 = vcombine.low %v2249, %v2250
    %v2532 = vcombine.high %v2249, %v2250
    %v2533 = vcombine.low %v2273, %v2274
    %v2534 = vcombine.high %v2273, %v2274
    %v2535 = vcombine.low %v2297, %v2298
    %v2536 = vcombine.high %v2297, %v2298
    %v2537 = vcombine.low %v2179, %v2180
    %v2538 = vcombine.high %v2179, %v2180
    %v2539 = vcombine.low %v2203, %v2204
    %v2540 = vcombine.high %v2203, %v2204
    %v2541 = vcombine.low %v2227, %v2228
    %v2542 = vcombine.high %v2227, %v2228
    %v2543 = vcombine.low %v2251, %v2252
    %v2544 = vcombine.high %v2251, %v2252
    %v2545 = vcombine.low %v2275, %v2276
    %v2546 = vcombine.high %v2275, %v2276
    %v2547 = vcombine.low %v2299, %v2300
    %v2548 = vcombine.high %v2299, %v2300
    %v2549 = vcombine.low %v2181, %v2182
    %v2550 = vcombine.high %v2181, %v2182
    %v2551 = vcombine.low %v2205, %v2206
    %v2552 = vcombine.high %v2205, %v2206
    %v2553 = vcombine.low %v2229, %v2230
    %v2554 = vcombine.high %v2229, %v2230
    %v2555 = vcombine.low %v2253, %v2254
    %v2556 = vcombine.high %v2253, %v2254
    %v2557 = vcombine.low %v2277, %v2278
    %v2558 = vcombine.high %v2277, %v2278
    %v2559 = vcombine.low %v2301, %v2302
    %v2560 = vcombine.high %v2301, %v2302
    %v2561 = vcombine.low %v2183, %v2184
    %v2562 = vcombine.high %v2183, %v2184
    %v2563 = vcombine.low %v2207, %v2208
    %v2564 = vcombine.high %v2207, %v2208
    %v2565 = vcombine.low %v2231, %v2232
    %v2566 = vcombine.high %v2231, %v2232
    %v2567 = vcombine.low %v2255, %v2256
    %v2568 = vcombine.high %v2255, %v2256
    %v2569 = vcombine.low %v2279, %v2280
    %v2570 = vcombine.high %v2279, %v2280
    %v2571 = vcombine.low %v2303, %v2304
    %v2572 = vcombine.high %v2303, %v2304
    %v2573 = vcombine.low %v2185, %v2186
    %v2574 = vcombine.high %v2185, %v2186
    %v2575 = vcombine.low %v2209, %v2210
    %v2576 = vcombine.high %v2209, %v2210
    %v2577 = vcombine.low %v2233, %v2234
    %v2578 = vcombine.high %v2233, %v2234
    %v2579 = vcombine.low %v2257, %v2258
    %v2580 = vcombine.high %v2257, %v2258
    %v2581 = vcombine.low %v2281, %v2282
    %v2582 = vcombine.high %v2281, %v2282
    %v2583 = vcombine.low %v2305, %v2306
    %v2584 = vcombine.high %v2305, %v2306
    %v2585 = vcombine.low %v2187, %v2188
    %v2586 = vcombine.high %v2187, %v2188
    %v2587 = vcombine.low %v2211, %v2212
    %v2588 = vcombine.high %v2211, %v2212
    %v2589 = vcombine.low %v2235, %v2236
    %v2590 = vcombine.high %v2235, %v2236
    %v2591 = vcombine.low %v2259, %v2260
    %v2592 = vcombine.high %v2259, %v2260
    %v2593 = vcombine.low %v2283, %v2284
    %v2594 = vcombine.high %v2283, %v2284
    %v2595 = vcombine.low %v2307, %v2308
    %v2596 = vcombine.high %v2307, %v2308
    %v2741 = vcombine.low %v2453, %v2477
    %v2742 = vcombine.high %v2453, %v2477
    %v2744 = vunpack.c.l.s4 1983009808
    %v2745 = vunpack.c.0.s8 %v2744
    %v2746 = vlaneseq
    %v2747 = vshrl.u32 %v2746, 7
    %v2748 = vsub.s32 %v2745, %v2747
    %v2749 = vrot.slane %v2741, %v2748
    %v2751 = vunpack.c.l.s4 1983009808
    %v2752 = vunpack.c.0.s8 %v2751
    %v2753 = vlaneseq
    %v2754 = vshrl.u32 %v2753, 7
    %v2755 = vsub.s32 %v2752, %v2754
    %v2756 = vrot.slane %v2742, %v2755
    %v2757 = vcombine.low %v2465, %v2489
    %v2758 = vcombine.high %v2465, %v2489
    %v2760 = vunpack.c.l.s4 1983009808
    %v2761 = vunpack.c.0.s8 %v2760
    %v2762 = vlaneseq
    %v2763 = vshrl.u32 %v2762, 7
    %v2764 = vsub.s32 %v2761, %v2763
    %v2765 = vrot.slane %v2757, %v2764
    %v2767 = vunpack.c.l.s4 1983009808
    %v2768 = vunpack.c.0.s8 %v2767
    %v2769 = vlaneseq
    %v2770 = vshrl.u32 %v2769, 7
    %v2771 = vsub.s32 %v2768, %v2770
    %v2772 = vrot.slane %v2758, %v2771
    %v2773 = vcombine.low %v2749, %v2765
    %v2774 = vcombine.high %v2749, %v2765
    %v2776 = vunpack.c.l.s4 1934713408
    %v2777 = vunpack.c.0.s8 %v2776
    %v2778 = vlaneseq
    %v2779 = vshrl.u32 %v2778, 7
    %v2780 = vsub.s32 %v2777, %v2779
    %v2781 = vrot.slane %v2773, %v2780
    %v2783 = vunpack.c.l.s4 1934713408
    %v2784 = vunpack.c.0.s8 %v2783
    %v2785 = vlaneseq
    %v2786 = vshrl.u32 %v2785, 7
    %v2787 = vsub.s32 %v2784, %v2786
    %v2788 = vrot.slane %v2774, %v2787
    %v2789 = vcombine.low %v2756, %v2772
    %v2790 = vcombine.high %v2756, %v2772
    %v2792 = vunpack.c.l.s4 1934713408
    %v2793 = vunpack.c.0.s8 %v2792
    %v2794 = vlaneseq
    %v2795 = vshrl.u32 %v2794, 7
    %v2796 = vsub.s32 %v2793, %v2795
    %v2797 = vrot.slane %v2789, %v2796
    %v2799 = vunpack.c.l.s4 1934713408
    %v2800 = vunpack.c.0.s8 %v2799
    %v2801 = vlaneseq
    %v2802 = vshrl.u32 %v2801, 7
    %v2803 = vsub.s32 %v2800, %v2802
    %v2804 = vrot.slane %v2790, %v2803
    %v2805 = vcombine.low %v2781, %v2797
    %v2806 = vcombine.high %v2781, %v2797
    %v2807 = vcombine.low %v2788, %v2804
    %v2808 = vcombine.high %v2788, %v2804
    %v2809 = vcombine.low %v2501, %v2525
    %v2810 = vcombine.high %v2501, %v2525
    %v2812 = vunpack.c.l.s4 1983009808
    %v2813 = vunpack.c.0.s8 %v2812
    %v2814 = vlaneseq
    %v2815 = vshrl.u32 %v2814, 7
    %v2816 = vsub.s32 %v2813, %v2815
    %v2817 = vrot.slane %v2809, %v2816
    %v2819 = vunpack.c.l.s4 1983009808
    %v2820 = vunpack.c.0.s8 %v2819
    %v2821 = vlaneseq
    %v2822 = vshrl.u32 %v2821, 7
    %v2823 = vsub.s32 %v2820, %v2822
    %v2824 = vrot.slane %v2810, %v2823
    %v2825 = vcombine.low %v2513, %v2537
    %v2826 = vcombine.high %v2513, %v2537
    %v2828 = vunpack.c.l.s4 1983009808
    %v2829 = vunpack.c.0.s8 %v2828
    %v2830 = vlaneseq
    %v2831 = vshrl.u32 %v2830, 7
    %v2832 = vsub.s32 %v2829, %v2831
    %v2833 = vrot.slane %v2825, %v2832
    %v2835 = vunpack.c.l.s4 1983009808
    %v2836 = vunpack.c.0.s8 %v2835
    %v2837 = vlaneseq
    %v2838 = vshrl.u32 %v2837, 7
    %v2839 = vsub.s32 %v2836, %v2838
    %v2840 = vrot.slane %v2826, %v2839
    %v2841 = vcombine.low %v2817, %v2833
    %v2842 = vcombine.high %v2817, %v2833
    %v2844 = vunpack.c.l.s4 1934713408
    %v2845 = vunpack.c.0.s8 %v2844
    %v2846 = vlaneseq
    %v2847 = vshrl.u32 %v2846, 7
    %v2848 = vsub.s32 %v2845, %v2847
    %v2849 = vrot.slane %v2841, %v2848
    %v2851 = vunpack.c.l.s4 1934713408
    %v2852 = vunpack.c.0.s8 %v2851
    %v2853 = vlaneseq
    %v2854 = vshrl.u32 %v2853, 7
    %v2855 = vsub.s32 %v2852, %v2854
    %v2856 = vrot.slane %v2842, %v2855
    %v2857 = vcombine.low %v2824, %v2840
    %v2858 = vcombine.high %v2824, %v2840
    %v2860 = vunpack.c.l.s4 1934713408
    %v2861 = vunpack.c.0.s8 %v2860
    %v2862 = vlaneseq
    %v2863 = vshrl.u32 %v2862, 7
    %v2864 = vsub.s32 %v2861, %v2863
    %v2865 = vrot.slane %v2857, %v2864
    %v2867 = vunpack.c.l.s4 1934713408
    %v2868 = vunpack.c.0.s8 %v2867
    %v2869 = vlaneseq
    %v2870 = vshrl.u32 %v2869, 7
    %v2871 = vsub.s32 %v2868, %v2870
    %v2872 = vrot.slane %v2858, %v2871
    %v2873 = vcombine.low %v2849, %v2865
    %v2874 = vcombine.high %v2849, %v2865
    %v2875 = vcombine.low %v2856, %v2872
    %v2876 = vcombine.high %v2856, %v2872
    %v2877 = vcombine.low %v2549, %v2573
    %v2878 = vcombine.high %v2549, %v2573
    %v2880 = vunpack.c.l.s4 1983009808
    %v2881 = vunpack.c.0.s8 %v2880
    %v2882 = vlaneseq
    %v2883 = vshrl.u32 %v2882, 7
    %v2884 = vsub.s32 %v2881, %v2883
    %v2885 = vrot.slane %v2877, %v2884
    %v2887 = vunpack.c.l.s4 1983009808
    %v2888 = vunpack.c.0.s8 %v2887
    %v2889 = vlaneseq
    %v2890 = vshrl.u32 %v2889, 7
    %v2891 = vsub.s32 %v2888, %v2890
    %v2892 = vrot.slane %v2878, %v2891
    %v2893 = vcombine.low %v2561, %v2585
    %v2894 = vcombine.high %v2561, %v2585
    %v2896 = vunpack.c.l.s4 1983009808
    %v2897 = vunpack.c.0.s8 %v2896
    %v2898 = vlaneseq
    %v2899 = vshrl.u32 %v2898, 7
    %v2900 = vsub.s32 %v2897, %v2899
    %v2901 = vrot.slane %v2893, %v2900
    %v2903 = vunpack.c.l.s4 1983009808
    %v2904 = vunpack.c.0.s8 %v2903
    %v2905 = vlaneseq
    %v2906 = vshrl.u32 %v2905, 7
    %v2907 = vsub.s32 %v2904, %v2906
    %v2908 = vrot.slane %v2894, %v2907
    %v2909 = vcombine.low %v2885, %v2901
    %v2910 = vcombine.high %v2885, %v2901
    %v2912 = vunpack.c.l.s4 1934713408
    %v2913 = vunpack.c.0.s8 %v2912
    %v2914 = vlaneseq
    %v2915 = vshrl.u32 %v2914, 7
    %v2916 = vsub.s32 %v2913, %v2915
    %v2917 = vrot.slane %v2909, %v2916
    %v2919 = vunpack.c.l.s4 1934713408
    %v2920 = vunpack.c.0.s8 %v2919
    %v2921 = vlaneseq
    %v2922 = vshrl.u32 %v2921, 7
    %v2923 = vsub.s32 %v2920, %v2922
    %v2924 = vrot.slane %v2910, %v2923
    %v2925 = vcombine.low %v2892, %v2908
    %v2926 = vcombine.high %v2892, %v2908
    %v2928 = vunpack.c.l.s4 1934713408
    %v2929 = vunpack.c.0.s8 %v2928
    %v2930 = vlaneseq
    %v2931 = vshrl.u32 %v2930, 7
    %v2932 = vsub.s32 %v2929, %v2931
    %v2933 = vrot.slane %v2925, %v2932
    %v2935 = vunpack.c.l.s4 1934713408
    %v2936 = vunpack.c.0.s8 %v2935
    %v2937 = vlaneseq
    %v2938 = vshrl.u32 %v2937, 7
    %v2939 = vsub.s32 %v2936, %v2938
    %v2940 = vrot.slane %v2926, %v2939
    %v2941 = vcombine.low %v2917, %v2933
    %v2942 = vcombine.high %v2917, %v2933
    %v2943 = vcombine.low %v2924, %v2940
    %v2944 = vcombine.high %v2924, %v2940
    %v2945 = vcombine.low %v2454, %v2478
    %v2946 = vcombine.high %v2454, %v2478
    %v2948 = vunpack.c.l.s4 1983009808
    %v2949 = vunpack.c.0.s8 %v2948
    %v2950 = vlaneseq
    %v2951 = vshrl.u32 %v2950, 7
    %v2952 = vsub.s32 %v2949, %v2951
    %v2953 = vrot.slane %v2945, %v2952
    %v2955 = vunpack.c.l.s4 1983009808
    %v2956 = vunpack.c.0.s8 %v2955
    %v2957 = vlaneseq
    %v2958 = vshrl.u32 %v2957, 7
    %v2959 = vsub.s32 %v2956, %v2958
    %v2960 = vrot.slane %v2946, %v2959
    %v2961 = vcombine.low %v2466, %v2490
    %v2962 = vcombine.high %v2466, %v2490
    %v2964 = vunpack.c.l.s4 1983009808
    %v2965 = vunpack.c.0.s8 %v2964
    %v2966 = vlaneseq
    %v2967 = vshrl.u32 %v2966, 7
    %v2968 = vsub.s32 %v2965, %v2967
    %v2969 = vrot.slane %v2961, %v2968
    %v2971 = vunpack.c.l.s4 1983009808
    %v2972 = vunpack.c.0.s8 %v2971
    %v2973 = vlaneseq
    %v2974 = vshrl.u32 %v2973, 7
    %v2975 = vsub.s32 %v2972, %v2974
    %v2976 = vrot.slane %v2962, %v2975
    %v2977 = vcombine.low %v2953, %v2969
    %v2978 = vcombine.high %v2953, %v2969
    %v2980 = vunpack.c.l.s4 1934713408
    %v2981 = vunpack.c.0.s8 %v2980
    %v2982 = vlaneseq
    %v2983 = vshrl.u32 %v2982, 7
    %v2984 = vsub.s32 %v2981, %v2983
    %v2985 = vrot.slane %v2977, %v2984
    %v2987 = vunpack.c.l.s4 1934713408
    %v2988 = vunpack.c.0.s8 %v2987
    %v2989 = vlaneseq
    %v2990 = vshrl.u32 %v2989, 7
    %v2991 = vsub.s32 %v2988, %v2990
    %v2992 = vrot.slane %v2978, %v2991
    %v2993 = vcombine.low %v2960, %v2976
    %v2994 = vcombine.high %v2960, %v2976
    %v2996 = vunpack.c.l.s4 1934713408
    %v2997 = vunpack.c.0.s8 %v2996
    %v2998 = vlaneseq
    %v2999 = vshrl.u32 %v2998, 7
    %v3000 = vsub.s32 %v2997, %v2999
    %v3001 = vrot.slane %v2993, %v3000
    %v3003 = vunpack.c.l.s4 1934713408
    %v3004 = vunpack.c.0.s8 %v3003
    %v3005 = vlaneseq
    %v3006 = vshrl.u32 %v3005, 7
    %v3007 = vsub.s32 %v3004, %v3006
    %v3008 = vrot.slane %v2994, %v3007
    %v3009 = vcombine.low %v2985, %v3001
    %v3010 = vcombine.high %v2985, %v3001
    %v3011 = vcombine.low %v2992, %v3008
    %v3012 = vcombine.high %v2992, %v3008
    %v3013 = vcombine.low %v2502, %v2526
    %v3014 = vcombine.high %v2502, %v2526
    %v3016 = vunpack.c.l.s4 1983009808
    %v3017 = vunpack.c.0.s8 %v3016
    %v3018 = vlaneseq
    %v3019 = vshrl.u32 %v3018, 7
    %v3020 = vsub.s32 %v3017, %v3019
    %v3021 = vrot.slane %v3013, %v3020
    %v3023 = vunpack.c.l.s4 1983009808
    %v3024 = vunpack.c.0.s8 %v3023
    %v3025 = vlaneseq
    %v3026 = vshrl.u32 %v3025, 7
    %v3027 = vsub.s32 %v3024, %v3026
    %v3028 = vrot.slane %v3014, %v3027
    %v3029 = vcombine.low %v2514, %v2538
    %v3030 = vcombine.high %v2514, %v2538
    %v3032 = vunpack.c.l.s4 1983009808
    %v3033 = vunpack.c.0.s8 %v3032
    %v3034 = vlaneseq
    %v3035 = vshrl.u32 %v3034, 7
    %v3036 = vsub.s32 %v3033, %v3035
    %v3037 = vrot.slane %v3029, %v3036
    %v3039 = vunpack.c.l.s4 1983009808
    %v3040 = vunpack.c.0.s8 %v3039
    %v3041 = vlaneseq
    %v3042 = vshrl.u32 %v3041, 7
    %v3043 = vsub.s32 %v3040, %v3042
    %v3044 = vrot.slane %v3030, %v3043
    %v3045 = vcombine.low %v3021, %v3037
    %v3046 = vcombine.high %v3021, %v3037
    %v3048 = vunpack.c.l.s4 1934713408
    %v3049 = vunpack.c.0.s8 %v3048
    %v3050 = vlaneseq
    %v3051 = vshrl.u32 %v3050, 7
    %v3052 = vsub.s32 %v3049, %v3051
    %v3053 = vrot.slane %v3045, %v3052
    %v3055 = vunpack.c.l.s4 1934713408
    %v3056 = vunpack.c.0.s8 %v3055
    %v3057 = vlaneseq
    %v3058 = vshrl.u32 %v3057, 7
    %v3059 = vsub.s32 %v3056, %v3058
    %v3060 = vrot.slane %v3046, %v3059
    %v3061 = vcombine.low %v3028, %v3044
    %v3062 = vcombine.high %v3028, %v3044
    %v3064 = vunpack.c.l.s4 1934713408
    %v3065 = vunpack.c.0.s8 %v3064
    %v3066 = vlaneseq
    %v3067 = vshrl.u32 %v3066, 7
    %v3068 = vsub.s32 %v3065, %v3067
    %v3069 = vrot.slane %v3061, %v3068
    %v3071 = vunpack.c.l.s4 1934713408
    %v3072 = vunpack.c.0.s8 %v3071
    %v3073 = vlaneseq
    %v3074 = vshrl.u32 %v3073, 7
    %v3075 = vsub.s32 %v3072, %v3074
    %v3076 = vrot.slane %v3062, %v3075
    %v3077 = vcombine.low %v3053, %v3069
    %v3078 = vcombine.high %v3053, %v3069
    %v3079 = vcombine.low %v3060, %v3076
    %v3080 = vcombine.high %v3060, %v3076
    %v3081 = vcombine.low %v2550, %v2574
    %v3082 = vcombine.high %v2550, %v2574
    %v3084 = vunpack.c.l.s4 1983009808
    %v3085 = vunpack.c.0.s8 %v3084
    %v3086 = vlaneseq
    %v3087 = vshrl.u32 %v3086, 7
    %v3088 = vsub.s32 %v3085, %v3087
    %v3089 = vrot.slane %v3081, %v3088
    %v3091 = vunpack.c.l.s4 1983009808
    %v3092 = vunpack.c.0.s8 %v3091
    %v3093 = vlaneseq
    %v3094 = vshrl.u32 %v3093, 7
    %v3095 = vsub.s32 %v3092, %v3094
    %v3096 = vrot.slane %v3082, %v3095
    %v3097 = vcombine.low %v2562, %v2586
    %v3098 = vcombine.high %v2562, %v2586
    %v3100 = vunpack.c.l.s4 1983009808
    %v3101 = vunpack.c.0.s8 %v3100
    %v3102 = vlaneseq
    %v3103 = vshrl.u32 %v3102, 7
    %v3104 = vsub.s32 %v3101, %v3103
    %v3105 = vrot.slane %v3097, %v3104
    %v3107 = vunpack.c.l.s4 1983009808
    %v3108 = vunpack.c.0.s8 %v3107
    %v3109 = vlaneseq
    %v3110 = vshrl.u32 %v3109, 7
    %v3111 = vsub.s32 %v3108, %v3110
    %v3112 = vrot.slane %v3098, %v3111
    %v3113 = vcombine.low %v3089, %v3105
    %v3114 = vcombine.high %v3089, %v3105
    %v3116 = vunpack.c.l.s4 1934713408
    %v3117 = vunpack.c.0.s8 %v3116
    %v3118 = vlaneseq
    %v3119 = vshrl.u32 %v3118, 7
    %v3120 = vsub.s32 %v3117, %v3119
    %v3121 = vrot.slane %v3113, %v3120
    %v3123 = vunpack.c.l.s4 1934713408
    %v3124 = vunpack.c.0.s8 %v3123
    %v3125 = vlaneseq
    %v3126 = vshrl.u32 %v3125, 7
    %v3127 = vsub.s32 %v3124, %v3126
    %v3128 = vrot.slane %v3114, %v3127
    %v3129 = vcombine.low %v3096, %v3112
    %v3130 = vcombine.high %v3096, %v3112
    %v3132 = vunpack.c.l.s4 1934713408
    %v3133 = vunpack.c.0.s8 %v3132
    %v3134 = vlaneseq
    %v3135 = vshrl.u32 %v3134, 7
    %v3136 = vsub.s32 %v3133, %v3135
    %v3137 = vrot.slane %v3129, %v3136
    %v3139 = vunpack.c.l.s4 1934713408
    %v3140 = vunpack.c.0.s8 %v3139
    %v3141 = vlaneseq
    %v3142 = vshrl.u32 %v3141, 7
    %v3143 = vsub.s32 %v3140, %v3142
    %v3144 = vrot.slane %v3130, %v3143
    %v3145 = vcombine.low %v3121, %v3137
    %v3146 = vcombine.high %v3121, %v3137
    %v3147 = vcombine.low %v3128, %v3144
    %v3148 = vcombine.high %v3128, %v3144
    %v3149 = vcombine.low %v2455, %v2479
    %v3150 = vcombine.high %v2455, %v2479
    %v3152 = vunpack.c.l.s4 1983009808
    %v3153 = vunpack.c.0.s8 %v3152
    %v3154 = vlaneseq
    %v3155 = vshrl.u32 %v3154, 7
    %v3156 = vsub.s32 %v3153, %v3155
    %v3157 = vrot.slane %v3149, %v3156
    %v3159 = vunpack.c.l.s4 1983009808
    %v3160 = vunpack.c.0.s8 %v3159
    %v3161 = vlaneseq
    %v3162 = vshrl.u32 %v3161, 7
    %v3163 = vsub.s32 %v3160, %v3162
    %v3164 = vrot.slane %v3150, %v3163
    %v3165 = vcombine.low %v2467, %v2491
    %v3166 = vcombine.high %v2467, %v2491
    %v3168 = vunpack.c.l.s4 1983009808
    %v3169 = vunpack.c.0.s8 %v3168
    %v3170 = vlaneseq
    %v3171 = vshrl.u32 %v3170, 7
    %v3172 = vsub.s32 %v3169, %v3171
    %v3173 = vrot.slane %v3165, %v3172
    %v3175 = vunpack.c.l.s4 1983009808
    %v3176 = vunpack.c.0.s8 %v3175
    %v3177 = vlaneseq
    %v3178 = vshrl.u32 %v3177, 7
    %v3179 = vsub.s32 %v3176, %v3178
    %v3180 = vrot.slane %v3166, %v3179
    %v3181 = vcombine.low %v3157, %v3173
    %v3182 = vcombine.high %v3157, %v3173
    %v3184 = vunpack.c.l.s4 1934713408
    %v3185 = vunpack.c.0.s8 %v3184
    %v3186 = vlaneseq
    %v3187 = vshrl.u32 %v3186, 7
    %v3188 = vsub.s32 %v3185, %v3187
    %v3189 = vrot.slane %v3181, %v3188
    %v3191 = vunpack.c.l.s4 1934713408
    %v3192 = vunpack.c.0.s8 %v3191
    %v3193 = vlaneseq
    %v3194 = vshrl.u32 %v3193, 7
    %v3195 = vsub.s32 %v3192, %v3194
    %v3196 = vrot.slane %v3182, %v3195
    %v3197 = vcombine.low %v3164, %v3180
    %v3198 = vcombine.high %v3164, %v3180
    %v3200 = vunpack.c.l.s4 1934713408
    %v3201 = vunpack.c.0.s8 %v3200
    %v3202 = vlaneseq
    %v3203 = vshrl.u32 %v3202, 7
    %v3204 = vsub.s32 %v3201, %v3203
    %v3205 = vrot.slane %v3197, %v3204
    %v3207 = vunpack.c.l.s4 1934713408
    %v3208 = vunpack.c.0.s8 %v3207
    %v3209 = vlaneseq
    %v3210 = vshrl.u32 %v3209, 7
    %v3211 = vsub.s32 %v3208, %v3210
    %v3212 = vrot.slane %v3198, %v3211
    %v3213 = vcombine.low %v3189, %v3205
    %v3214 = vcombine.high %v3189, %v3205
    %v3215 = vcombine.low %v3196, %v3212
    %v3216 = vcombine.high %v3196, %v3212
    %v3217 = vcombine.low %v2503, %v2527
    %v3218 = vcombine.high %v2503, %v2527
    %v3220 = vunpack.c.l.s4 1983009808
    %v3221 = vunpack.c.0.s8 %v3220
    %v3222 = vlaneseq
    %v3223 = vshrl.u32 %v3222, 7
    %v3224 = vsub.s32 %v3221, %v3223
    %v3225 = vrot.slane %v3217, %v3224
    %v3227 = vunpack.c.l.s4 1983009808
    %v3228 = vunpack.c.0.s8 %v3227
    %v3229 = vlaneseq
    %v3230 = vshrl.u32 %v3229, 7
    %v3231 = vsub.s32 %v3228, %v3230
    %v3232 = vrot.slane %v3218, %v3231
    %v3233 = vcombine.low %v2515, %v2539
    %v3234 = vcombine.high %v2515, %v2539
    %v3236 = vunpack.c.l.s4 1983009808
    %v3237 = vunpack.c.0.s8 %v3236
    %v3238 = vlaneseq
    %v3239 = vshrl.u32 %v3238, 7
    %v3240 = vsub.s32 %v3237, %v3239
    %v3241 = vrot.slane %v3233, %v3240
    %v3243 = vunpack.c.l.s4 1983009808
    %v3244 = vunpack.c.0.s8 %v3243
    %v3245 = vlaneseq
    %v3246 = vshrl.u32 %v3245, 7
    %v3247 = vsub.s32 %v3244, %v3246
    %v3248 = vrot.slane %v3234, %v3247
    %v3249 = vcombine.low %v3225, %v3241
    %v3250 = vcombine.high %v3225, %v3241
    %v3252 = vunpack.c.l.s4 1934713408
    %v3253 = vunpack.c.0.s8 %v3252
    %v3254 = vlaneseq
    %v3255 = vshrl.u32 %v3254, 7
    %v3256 = vsub.s32 %v3253, %v3255
    %v3257 = vrot.slane %v3249, %v3256
    %v3259 = vunpack.c.l.s4 1934713408
    %v3260 = vunpack.c.0.s8 %v3259
    %v3261 = vlaneseq
    %v3262 = vshrl.u32 %v3261, 7
    %v3263 = vsub.s32 %v3260, %v3262
    %v3264 = vrot.slane %v3250, %v3263
    %v3265 = vcombine.low %v3232, %v3248
    %v3266 = vcombine.high %v3232, %v3248
    %v3268 = vunpack.c.l.s4 1934713408
    %v3269 = vunpack.c.0.s8 %v3268
    %v3270 = vlaneseq
    %v3271 = vshrl.u32 %v3270, 7
    %v3272 = vsub.s32 %v3269, %v3271
    %v3273 = vrot.slane %v3265, %v3272
    %v3275 = vunpack.c.l.s4 1934713408
    %v3276 = vunpack.c.0.s8 %v3275
    %v3277 = vlaneseq
    %v3278 = vshrl.u32 %v3277, 7
    %v3279 = vsub.s32 %v3276, %v3278
    %v3280 = vrot.slane %v3266, %v3279
    %v3281 = vcombine.low %v3257, %v3273
    %v3282 = vcombine.high %v3257, %v3273
    %v3283 = vcombine.low %v3264, %v3280
    %v3284 = vcombine.high %v3264, %v3280
    %v3285 = vcombine.low %v2551, %v2575
    %v3286 = vcombine.high %v2551, %v2575
    %v3288 = vunpack.c.l.s4 1983009808
    %v3289 = vunpack.c.0.s8 %v3288
    %v3290 = vlaneseq
    %v3291 = vshrl.u32 %v3290, 7
    %v3292 = vsub.s32 %v3289, %v3291
    %v3293 = vrot.slane %v3285, %v3292
    %v3295 = vunpack.c.l.s4 1983009808
    %v3296 = vunpack.c.0.s8 %v3295
    %v3297 = vlaneseq
    %v3298 = vshrl.u32 %v3297, 7
    %v3299 = vsub.s32 %v3296, %v3298
    %v3300 = vrot.slane %v3286, %v3299
    %v3301 = vcombine.low %v2563, %v2587
    %v3302 = vcombine.high %v2563, %v2587
    %v3304 = vunpack.c.l.s4 1983009808
    %v3305 = vunpack.c.0.s8 %v3304
    %v3306 = vlaneseq
    %v3307 = vshrl.u32 %v3306, 7
    %v3308 = vsub.s32 %v3305, %v3307
    %v3309 = vrot.slane %v3301, %v3308
    %v3311 = vunpack.c.l.s4 1983009808
    %v3312 = vunpack.c.0.s8 %v3311
    %v3313 = vlaneseq
    %v3314 = vshrl.u32 %v3313, 7
    %v3315 = vsub.s32 %v3312, %v3314
    %v3316 = vrot.slane %v3302, %v3315
    %v3317 = vcombine.low %v3293, %v3309
    %v3318 = vcombine.high %v3293, %v3309
    %v3320 = vunpack.c.l.s4 1934713408
    %v3321 = vunpack.c.0.s8 %v3320
    %v3322 = vlaneseq
    %v3323 = vshrl.u32 %v3322, 7
    %v3324 = vsub.s32 %v3321, %v3323
    %v3325 = vrot.slane %v3317, %v3324
    %v3327 = vunpack.c.l.s4 1934713408
    %v3328 = vunpack.c.0.s8 %v3327
    %v3329 = vlaneseq
    %v3330 = vshrl.u32 %v3329, 7
    %v3331 = vsub.s32 %v3328, %v3330
    %v3332 = vrot.slane %v3318, %v3331
    %v3333 = vcombine.low %v3300, %v3316
    %v3334 = vcombine.high %v3300, %v3316
    %v3336 = vunpack.c.l.s4 1934713408
    %v3337 = vunpack.c.0.s8 %v3336
    %v3338 = vlaneseq
    %v3339 = vshrl.u32 %v3338, 7
    %v3340 = vsub.s32 %v3337, %v3339
    %v3341 = vrot.slane %v3333, %v3340
    %v3343 = vunpack.c.l.s4 1934713408
    %v3344 = vunpack.c.0.s8 %v3343
    %v3345 = vlaneseq
    %v3346 = vshrl.u32 %v3345, 7
    %v3347 = vsub.s32 %v3344, %v3346
    %v3348 = vrot.slane %v3334, %v3347
    %v3349 = vcombine.low %v3325, %v3341
    %v3350 = vcombine.high %v3325, %v3341
    %v3351 = vcombine.low %v3332, %v3348
    %v3352 = vcombine.high %v3332, %v3348
    %v3353 = vcombine.low %v2456, %v2480
    %v3354 = vcombine.high %v2456, %v2480
    %v3356 = vunpack.c.l.s4 1983009808
    %v3357 = vunpack.c.0.s8 %v3356
    %v3358 = vlaneseq
    %v3359 = vshrl.u32 %v3358, 7
    %v3360 = vsub.s32 %v3357, %v3359
    %v3361 = vrot.slane %v3353, %v3360
    %v3363 = vunpack.c.l.s4 1983009808
    %v3364 = vunpack.c.0.s8 %v3363
    %v3365 = vlaneseq
    %v3366 = vshrl.u32 %v3365, 7
    %v3367 = vsub.s32 %v3364, %v3366
    %v3368 = vrot.slane %v3354, %v3367
    %v3369 = vcombine.low %v2468, %v2492
    %v3370 = vcombine.high %v2468, %v2492
    %v3372 = vunpack.c.l.s4 1983009808
    %v3373 = vunpack.c.0.s8 %v3372
    %v3374 = vlaneseq
    %v3375 = vshrl.u32 %v3374, 7
    %v3376 = vsub.s32 %v3373, %v3375
    %v3377 = vrot.slane %v3369, %v3376
    %v3379 = vunpack.c.l.s4 1983009808
    %v3380 = vunpack.c.0.s8 %v3379
    %v3381 = vlaneseq
    %v3382 = vshrl.u32 %v3381, 7
    %v3383 = vsub.s32 %v3380, %v3382
    %v3384 = vrot.slane %v3370, %v3383
    %v3385 = vcombine.low %v3361, %v3377
    %v3386 = vcombine.high %v3361, %v3377
    %v3388 = vunpack.c.l.s4 1934713408
    %v3389 = vunpack.c.0.s8 %v3388
    %v3390 = vlaneseq
    %v3391 = vshrl.u32 %v3390, 7
    %v3392 = vsub.s32 %v3389, %v3391
    %v3393 = vrot.slane %v3385, %v3392
    %v3395 = vunpack.c.l.s4 1934713408
    %v3396 = vunpack.c.0.s8 %v3395
    %v3397 = vlaneseq
    %v3398 = vshrl.u32 %v3397, 7
    %v3399 = vsub.s32 %v3396, %v3398
    %v3400 = vrot.slane %v3386, %v3399
    %v3401 = vcombine.low %v3368, %v3384
    %v3402 = vcombine.high %v3368, %v3384
    %v3404 = vunpack.c.l.s4 1934713408
    %v3405 = vunpack.c.0.s8 %v3404
    %v3406 = vlaneseq
    %v3407 = vshrl.u32 %v3406, 7
    %v3408 = vsub.s32 %v3405, %v3407
    %v3409 = vrot.slane %v3401, %v3408
    %v3411 = vunpack.c.l.s4 1934713408
    %v3412 = vunpack.c.0.s8 %v3411
    %v3413 = vlaneseq
    %v3414 = vshrl.u32 %v3413, 7
    %v3415 = vsub.s32 %v3412, %v3414
    %v3416 = vrot.slane %v3402, %v3415
    %v3417 = vcombine.low %v3393, %v3409
    %v3418 = vcombine.high %v3393, %v3409
    %v3419 = vcombine.low %v3400, %v3416
    %v3420 = vcombine.high %v3400, %v3416
    %v3421 = vcombine.low %v2504, %v2528
    %v3422 = vcombine.high %v2504, %v2528
    %v3424 = vunpack.c.l.s4 1983009808
    %v3425 = vunpack.c.0.s8 %v3424
    %v3426 = vlaneseq
    %v3427 = vshrl.u32 %v3426, 7
    %v3428 = vsub.s32 %v3425, %v3427
    %v3429 = vrot.slane %v3421, %v3428
    %v3431 = vunpack.c.l.s4 1983009808
    %v3432 = vunpack.c.0.s8 %v3431
    %v3433 = vlaneseq
    %v3434 = vshrl.u32 %v3433, 7
    %v3435 = vsub.s32 %v3432, %v3434
    %v3436 = vrot.slane %v3422, %v3435
    %v3437 = vcombine.low %v2516, %v2540
    %v3438 = vcombine.high %v2516, %v2540
    %v3440 = vunpack.c.l.s4 1983009808
    %v3441 = vunpack.c.0.s8 %v3440
    %v3442 = vlaneseq
    %v3443 = vshrl.u32 %v3442, 7
    %v3444 = vsub.s32 %v3441, %v3443
    %v3445 = vrot.slane %v3437, %v3444
    %v3447 = vunpack.c.l.s4 1983009808
    %v3448 = vunpack.c.0.s8 %v3447
    %v3449 = vlaneseq
    %v3450 = vshrl.u32 %v3449, 7
    %v3451 = vsub.s32 %v3448, %v3450
    %v3452 = vrot.slane %v3438, %v3451
    %v3453 = vcombine.low %v3429, %v3445
    %v3454 = vcombine.high %v3429, %v3445
    %v3456 = vunpack.c.l.s4 1934713408
    %v3457 = vunpack.c.0.s8 %v3456
    %v3458 = vlaneseq
    %v3459 = vshrl.u32 %v3458, 7
    %v3460 = vsub.s32 %v3457, %v3459
    %v3461 = vrot.slane %v3453, %v3460
    %v3463 = vunpack.c.l.s4 1934713408
    %v3464 = vunpack.c.0.s8 %v3463
    %v3465 = vlaneseq
    %v3466 = vshrl.u32 %v3465, 7
    %v3467 = vsub.s32 %v3464, %v3466
    %v3468 = vrot.slane %v3454, %v3467
    %v3469 = vcombine.low %v3436, %v3452
    %v3470 = vcombine.high %v3436, %v3452
    %v3472 = vunpack.c.l.s4 1934713408
    %v3473 = vunpack.c.0.s8 %v3472
    %v3474 = vlaneseq
    %v3475 = vshrl.u32 %v3474, 7
    %v3476 = vsub.s32 %v3473, %v3475
    %v3477 = vrot.slane %v3469, %v3476
    %v3479 = vunpack.c.l.s4 1934713408
    %v3480 = vunpack.c.0.s8 %v3479
    %v3481 = vlaneseq
    %v3482 = vshrl.u32 %v3481, 7
    %v3483 = vsub.s32 %v3480, %v3482
    %v3484 = vrot.slane %v3470, %v3483
    %v3485 = vcombine.low %v3461, %v3477
    %v3486 = vcombine.high %v3461, %v3477
    %v3487 = vcombine.low %v3468, %v3484
    %v3488 = vcombine.high %v3468, %v3484
    %v3489 = vcombine.low %v2552, %v2576
    %v3490 = vcombine.high %v2552, %v2576
    %v3492 = vunpack.c.l.s4 1983009808
    %v3493 = vunpack.c.0.s8 %v3492
    %v3494 = vlaneseq
    %v3495 = vshrl.u32 %v3494, 7
    %v3496 = vsub.s32 %v3493, %v3495
    %v3497 = vrot.slane %v3489, %v3496
    %v3499 = vunpack.c.l.s4 1983009808
    %v3500 = vunpack.c.0.s8 %v3499
    %v3501 = vlaneseq
    %v3502 = vshrl.u32 %v3501, 7
    %v3503 = vsub.s32 %v3500, %v3502
    %v3504 = vrot.slane %v3490, %v3503
    %v3505 = vcombine.low %v2564, %v2588
    %v3506 = vcombine.high %v2564, %v2588
    %v3508 = vunpack.c.l.s4 1983009808
    %v3509 = vunpack.c.0.s8 %v3508
    %v3510 = vlaneseq
    %v3511 = vshrl.u32 %v3510, 7
    %v3512 = vsub.s32 %v3509, %v3511
    %v3513 = vrot.slane %v3505, %v3512
    %v3515 = vunpack.c.l.s4 1983009808
    %v3516 = vunpack.c.0.s8 %v3515
    %v3517 = vlaneseq
    %v3518 = vshrl.u32 %v3517, 7
    %v3519 = vsub.s32 %v3516, %v3518
    %v3520 = vrot.slane %v3506, %v3519
    %v3521 = vcombine.low %v3497, %v3513
    %v3522 = vcombine.high %v3497, %v3513
    %v3524 = vunpack.c.l.s4 1934713408
    %v3525 = vunpack.c.0.s8 %v3524
    %v3526 = vlaneseq
    %v3527 = vshrl.u32 %v3526, 7
    %v3528 = vsub.s32 %v3525, %v3527
    %v3529 = vrot.slane %v3521, %v3528
    %v3531 = vunpack.c.l.s4 1934713408
    %v3532 = vunpack.c.0.s8 %v3531
    %v3533 = vlaneseq
    %v3534 = vshrl.u32 %v3533, 7
    %v3535 = vsub.s32 %v3532, %v3534
    %v3536 = vrot.slane %v3522, %v3535
    %v3537 = vcombine.low %v3504, %v3520
    %v3538 = vcombine.high %v3504, %v3520
    %v3540 = vunpack.c.l.s4 1934713408
    %v3541 = vunpack.c.0.s8 %v3540
    %v3542 = vlaneseq
    %v3543 = vshrl.u32 %v3542, 7
    %v3544 = vsub.s32 %v3541, %v3543
    %v3545 = vrot.slane %v3537, %v3544
    %v3547 = vunpack.c.l.s4 1934713408
    %v3548 = vunpack.c.0.s8 %v3547
    %v3549 = vlaneseq
    %v3550 = vshrl.u32 %v3549, 7
    %v3551 = vsub.s32 %v3548, %v3550
    %v3552 = vrot.slane %v3538, %v3551
    %v3553 = vcombine.low %v3529, %v3545
    %v3554 = vcombine.high %v3529, %v3545
    %v3555 = vcombine.low %v3536, %v3552
    %v3556 = vcombine.high %v3536, %v3552
    %v3557 = vcombine.low %v2457, %v2481
    %v3558 = vcombine.high %v2457, %v2481
    %v3560 = vunpack.c.l.s4 1983009808
    %v3561 = vunpack.c.0.s8 %v3560
    %v3562 = vlaneseq
    %v3563 = vshrl.u32 %v3562, 7
    %v3564 = vsub.s32 %v3561, %v3563
    %v3565 = vrot.slane %v3557, %v3564
    %v3567 = vunpack.c.l.s4 1983009808
    %v3568 = vunpack.c.0.s8 %v3567
    %v3569 = vlaneseq
    %v3570 = vshrl.u32 %v3569, 7
    %v3571 = vsub.s32 %v3568, %v3570
    %v3572 = vrot.slane %v3558, %v3571
    %v3573 = vcombine.low %v2469, %v2493
    %v3574 = vcombine.high %v2469, %v2493
    %v3576 = vunpack.c.l.s4 1983009808
    %v3577 = vunpack.c.0.s8 %v3576
    %v3578 = vlaneseq
    %v3579 = vshrl.u32 %v3578, 7
    %v3580 = vsub.s32 %v3577, %v3579
    %v3581 = vrot.slane %v3573, %v3580
    %v3583 = vunpack.c.l.s4 1983009808
    %v3584 = vunpack.c.0.s8 %v3583
    %v3585 = vlaneseq
    %v3586 = vshrl.u32 %v3585, 7
    %v3587 = vsub.s32 %v3584, %v3586
    %v3588 = vrot.slane %v3574, %v3587
    %v3589 = vcombine.low %v3565, %v3581
    %v3590 = vcombine.high %v3565, %v3581
    %v3592 = vunpack.c.l.s4 1934713408
    %v3593 = vunpack.c.0.s8 %v3592
    %v3594 = vlaneseq
    %v3595 = vshrl.u32 %v3594, 7
    %v3596 = vsub.s32 %v3593, %v3595
    %v3597 = vrot.slane %v3589, %v3596
    %v3599 = vunpack.c.l.s4 1934713408
    %v3600 = vunpack.c.0.s8 %v3599
    %v3601 = vlaneseq
    %v3602 = vshrl.u32 %v3601, 7
    %v3603 = vsub.s32 %v3600, %v3602
    %v3604 = vrot.slane %v3590, %v3603
    %v3605 = vcombine.low %v3572, %v3588
    %v3606 = vcombine.high %v3572, %v3588
    %v3608 = vunpack.c.l.s4 1934713408
    %v3609 = vunpack.c.0.s8 %v3608
    %v3610 = vlaneseq
    %v3611 = vshrl.u32 %v3610, 7
    %v3612 = vsub.s32 %v3609, %v3611
    %v3613 = vrot.slane %v3605, %v3612
    %v3615 = vunpack.c.l.s4 1934713408
    %v3616 = vunpack.c.0.s8 %v3615
    %v3617 = vlaneseq
    %v3618 = vshrl.u32 %v3617, 7
    %v3619 = vsub.s32 %v3616, %v3618
    %v3620 = vrot.slane %v3606, %v3619
    %v3621 = vcombine.low %v3597, %v3613
    %v3622 = vcombine.high %v3597, %v3613
    %v3623 = vcombine.low %v3604, %v3620
    %v3624 = vcombine.high %v3604, %v3620
    %v3625 = vcombine.low %v2505, %v2529
    %v3626 = vcombine.high %v2505, %v2529
    %v3628 = vunpack.c.l.s4 1983009808
    %v3629 = vunpack.c.0.s8 %v3628
    %v3630 = vlaneseq
    %v3631 = vshrl.u32 %v3630, 7
    %v3632 = vsub.s32 %v3629, %v3631
    %v3633 = vrot.slane %v3625, %v3632
    %v3635 = vunpack.c.l.s4 1983009808
    %v3636 = vunpack.c.0.s8 %v3635
    %v3637 = vlaneseq
    %v3638 = vshrl.u32 %v3637, 7
    %v3639 = vsub.s32 %v3636, %v3638
    %v3640 = vrot.slane %v3626, %v3639
    %v3641 = vcombine.low %v2517, %v2541
    %v3642 = vcombine.high %v2517, %v2541
    %v3644 = vunpack.c.l.s4 1983009808
    %v3645 = vunpack.c.0.s8 %v3644
    %v3646 = vlaneseq
    %v3647 = vshrl.u32 %v3646, 7
    %v3648 = vsub.s32 %v3645, %v3647
    %v3649 = vrot.slane %v3641, %v3648
    %v3651 = vunpack.c.l.s4 1983009808
    %v3652 = vunpack.c.0.s8 %v3651
    %v3653 = vlaneseq
    %v3654 = vshrl.u32 %v3653, 7
    %v3655 = vsub.s32 %v3652, %v3654
    %v3656 = vrot.slane %v3642, %v3655
    %v3657 = vcombine.low %v3633, %v3649
    %v3658 = vcombine.high %v3633, %v3649
    %v3660 = vunpack.c.l.s4 1934713408
    %v3661 = vunpack.c.0.s8 %v3660
    %v3662 = vlaneseq
    %v3663 = vshrl.u32 %v3662, 7
    %v3664 = vsub.s32 %v3661, %v3663
    %v3665 = vrot.slane %v3657, %v3664
    %v3667 = vunpack.c.l.s4 1934713408
    %v3668 = vunpack.c.0.s8 %v3667
    %v3669 = vlaneseq
    %v3670 = vshrl.u32 %v3669, 7
    %v3671 = vsub.s32 %v3668, %v3670
    %v3672 = vrot.slane %v3658, %v3671
    %v3673 = vcombine.low %v3640, %v3656
    %v3674 = vcombine.high %v3640, %v3656
    %v3676 = vunpack.c.l.s4 1934713408
    %v3677 = vunpack.c.0.s8 %v3676
    %v3678 = vlaneseq
    %v3679 = vshrl.u32 %v3678, 7
    %v3680 = vsub.s32 %v3677, %v3679
    %v3681 = vrot.slane %v3673, %v3680
    %v3683 = vunpack.c.l.s4 1934713408
    %v3684 = vunpack.c.0.s8 %v3683
    %v3685 = vlaneseq
    %v3686 = vshrl.u32 %v3685, 7
    %v3687 = vsub.s32 %v3684, %v3686
    %v3688 = vrot.slane %v3674, %v3687
    %v3689 = vcombine.low %v3665, %v3681
    %v3690 = vcombine.high %v3665, %v3681
    %v3691 = vcombine.low %v3672, %v3688
    %v3692 = vcombine.high %v3672, %v3688
    %v3693 = vcombine.low %v2553, %v2577
    %v3694 = vcombine.high %v2553, %v2577
    %v3696 = vunpack.c.l.s4 1983009808
    %v3697 = vunpack.c.0.s8 %v3696
    %v3698 = vlaneseq
    %v3699 = vshrl.u32 %v3698, 7
    %v3700 = vsub.s32 %v3697, %v3699
    %v3701 = vrot.slane %v3693, %v3700
    %v3703 = vunpack.c.l.s4 1983009808
    %v3704 = vunpack.c.0.s8 %v3703
    %v3705 = vlaneseq
    %v3706 = vshrl.u32 %v3705, 7
    %v3707 = vsub.s32 %v3704, %v3706
    %v3708 = vrot.slane %v3694, %v3707
    %v3709 = vcombine.low %v2565, %v2589
    %v3710 = vcombine.high %v2565, %v2589
    %v3712 = vunpack.c.l.s4 1983009808
    %v3713 = vunpack.c.0.s8 %v3712
    %v3714 = vlaneseq
    %v3715 = vshrl.u32 %v3714, 7
    %v3716 = vsub.s32 %v3713, %v3715
    %v3717 = vrot.slane %v3709, %v3716
    %v3719 = vunpack.c.l.s4 1983009808
    %v3720 = vunpack.c.0.s8 %v3719
    %v3721 = vlaneseq
    %v3722 = vshrl.u32 %v3721, 7
    %v3723 = vsub.s32 %v3720, %v3722
    %v3724 = vrot.slane %v3710, %v3723
    %v3725 = vcombine.low %v3701, %v3717
    %v3726 = vcombine.high %v3701, %v3717
    %v3728 = vunpack.c.l.s4 1934713408
    %v3729 = vunpack.c.0.s8 %v3728
    %v3730 = vlaneseq
    %v3731 = vshrl.u32 %v3730, 7
    %v3732 = vsub.s32 %v3729, %v3731
    %v3733 = vrot.slane %v3725, %v3732
    %v3735 = vunpack.c.l.s4 1934713408
    %v3736 = vunpack.c.0.s8 %v3735
    %v3737 = vlaneseq
    %v3738 = vshrl.u32 %v3737, 7
    %v3739 = vsub.s32 %v3736, %v3738
    %v3740 = vrot.slane %v3726, %v3739
    %v3741 = vcombine.low %v3708, %v3724
    %v3742 = vcombine.high %v3708, %v3724
    %v3744 = vunpack.c.l.s4 1934713408
    %v3745 = vunpack.c.0.s8 %v3744
    %v3746 = vlaneseq
    %v3747 = vshrl.u32 %v3746, 7
    %v3748 = vsub.s32 %v3745, %v3747
    %v3749 = vrot.slane %v3741, %v3748
    %v3751 = vunpack.c.l.s4 1934713408
    %v3752 = vunpack.c.0.s8 %v3751
    %v3753 = vlaneseq
    %v3754 = vshrl.u32 %v3753, 7
    %v3755 = vsub.s32 %v3752, %v3754
    %v3756 = vrot.slane %v3742, %v3755
    %v3757 = vcombine.low %v3733, %v3749
    %v3758 = vcombine.high %v3733, %v3749
    %v3759 = vcombine.low %v3740, %v3756
    %v3760 = vcombine.high %v3740, %v3756
    %v3761 = vcombine.low %v2458, %v2482
    %v3762 = vcombine.high %v2458, %v2482
    %v3764 = vunpack.c.l.s4 1983009808
    %v3765 = vunpack.c.0.s8 %v3764
    %v3766 = vlaneseq
    %v3767 = vshrl.u32 %v3766, 7
    %v3768 = vsub.s32 %v3765, %v3767
    %v3769 = vrot.slane %v3761, %v3768
    %v3771 = vunpack.c.l.s4 1983009808
    %v3772 = vunpack.c.0.s8 %v3771
    %v3773 = vlaneseq
    %v3774 = vshrl.u32 %v3773, 7
    %v3775 = vsub.s32 %v3772, %v3774
    %v3776 = vrot.slane %v3762, %v3775
    %v3777 = vcombine.low %v2470, %v2494
    %v3778 = vcombine.high %v2470, %v2494
    %v3780 = vunpack.c.l.s4 1983009808
    %v3781 = vunpack.c.0.s8 %v3780
    %v3782 = vlaneseq
    %v3783 = vshrl.u32 %v3782, 7
    %v3784 = vsub.s32 %v3781, %v3783
    %v3785 = vrot.slane %v3777, %v3784
    %v3787 = vunpack.c.l.s4 1983009808
    %v3788 = vunpack.c.0.s8 %v3787
    %v3789 = vlaneseq
    %v3790 = vshrl.u32 %v3789, 7
    %v3791 = vsub.s32 %v3788, %v3790
    %v3792 = vrot.slane %v3778, %v3791
    %v3793 = vcombine.low %v3769, %v3785
    %v3794 = vcombine.high %v3769, %v3785
    %v3796 = vunpack.c.l.s4 1934713408
    %v3797 = vunpack.c.0.s8 %v3796
    %v3798 = vlaneseq
    %v3799 = vshrl.u32 %v3798, 7
    %v3800 = vsub.s32 %v3797, %v3799
    %v3801 = vrot.slane %v3793, %v3800
    %v3803 = vunpack.c.l.s4 1934713408
    %v3804 = vunpack.c.0.s8 %v3803
    %v3805 = vlaneseq
    %v3806 = vshrl.u32 %v3805, 7
    %v3807 = vsub.s32 %v3804, %v3806
    %v3808 = vrot.slane %v3794, %v3807
    %v3809 = vcombine.low %v3776, %v3792
    %v3810 = vcombine.high %v3776, %v3792
    %v3812 = vunpack.c.l.s4 1934713408
    %v3813 = vunpack.c.0.s8 %v3812
    %v3814 = vlaneseq
    %v3815 = vshrl.u32 %v3814, 7
    %v3816 = vsub.s32 %v3813, %v3815
    %v3817 = vrot.slane %v3809, %v3816
    %v3819 = vunpack.c.l.s4 1934713408
    %v3820 = vunpack.c.0.s8 %v3819
    %v3821 = vlaneseq
    %v3822 = vshrl.u32 %v3821, 7
    %v3823 = vsub.s32 %v3820, %v3822
    %v3824 = vrot.slane %v3810, %v3823
    %v3825 = vcombine.low %v3801, %v3817
    %v3826 = vcombine.high %v3801, %v3817
    %v3827 = vcombine.low %v3808, %v3824
    %v3828 = vcombine.high %v3808, %v3824
    %v3829 = vcombine.low %v2506, %v2530
    %v3830 = vcombine.high %v2506, %v2530
    %v3832 = vunpack.c.l.s4 1983009808
    %v3833 = vunpack.c.0.s8 %v3832
    %v3834 = vlaneseq
    %v3835 = vshrl.u32 %v3834, 7
    %v3836 = vsub.s32 %v3833, %v3835
    %v3837 = vrot.slane %v3829, %v3836
    %v3839 = vunpack.c.l.s4 1983009808
    %v3840 = vunpack.c.0.s8 %v3839
    %v3841 = vlaneseq
    %v3842 = vshrl.u32 %v3841, 7
    %v3843 = vsub.s32 %v3840, %v3842
    %v3844 = vrot.slane %v3830, %v3843
    %v3845 = vcombine.low %v2518, %v2542
    %v3846 = vcombine.high %v2518, %v2542
    %v3848 = vunpack.c.l.s4 1983009808
    %v3849 = vunpack.c.0.s8 %v3848
    %v3850 = vlaneseq
    %v3851 = vshrl.u32 %v3850, 7
    %v3852 = vsub.s32 %v3849, %v3851
    %v3853 = vrot.slane %v3845, %v3852
    %v3855 = vunpack.c.l.s4 1983009808
    %v3856 = vunpack.c.0.s8 %v3855
    %v3857 = vlaneseq
    %v3858 = vshrl.u32 %v3857, 7
    %v3859 = vsub.s32 %v3856, %v3858
    %v3860 = vrot.slane %v3846, %v3859
    %v3861 = vcombine.low %v3837, %v3853
    %v3862 = vcombine.high %v3837, %v3853
    %v3864 = vunpack.c.l.s4 1934713408
    %v3865 = vunpack.c.0.s8 %v3864
    %v3866 = vlaneseq
    %v3867 = vshrl.u32 %v3866, 7
    %v3868 = vsub.s32 %v3865, %v3867
    %v3869 = vrot.slane %v3861, %v3868
    %v3871 = vunpack.c.l.s4 1934713408
    %v3872 = vunpack.c.0.s8 %v3871
    %v3873 = vlaneseq
    %v3874 = vshrl.u32 %v3873, 7
    %v3875 = vsub.s32 %v3872, %v3874
    %v3876 = vrot.slane %v3862, %v3875
    %v3877 = vcombine.low %v3844, %v3860
    %v3878 = vcombine.high %v3844, %v3860
    %v3880 = vunpack.c.l.s4 1934713408
    %v3881 = vunpack.c.0.s8 %v3880
    %v3882 = vlaneseq
    %v3883 = vshrl.u32 %v3882, 7
    %v3884 = vsub.s32 %v3881, %v3883
    %v3885 = vrot.slane %v3877, %v3884
    %v3887 = vunpack.c.l.s4 1934713408
    %v3888 = vunpack.c.0.s8 %v3887
    %v3889 = vlaneseq
    %v3890 = vshrl.u32 %v3889, 7
    %v3891 = vsub.s32 %v3888, %v3890
    %v3892 = vrot.slane %v3878, %v3891
    %v3893 = vcombine.low %v3869, %v3885
    %v3894 = vcombine.high %v3869, %v3885
    %v3895 = vcombine.low %v3876, %v3892
    %v3896 = vcombine.high %v3876, %v3892
    %v3897 = vcombine.low %v2554, %v2578
    %v3898 = vcombine.high %v2554, %v2578
    %v3900 = vunpack.c.l.s4 1983009808
    %v3901 = vunpack.c.0.s8 %v3900
    %v3902 = vlaneseq
    %v3903 = vshrl.u32 %v3902, 7
    %v3904 = vsub.s32 %v3901, %v3903
    %v3905 = vrot.slane %v3897, %v3904
    %v3907 = vunpack.c.l.s4 1983009808
    %v3908 = vunpack.c.0.s8 %v3907
    %v3909 = vlaneseq
    %v3910 = vshrl.u32 %v3909, 7
    %v3911 = vsub.s32 %v3908, %v3910
    %v3912 = vrot.slane %v3898, %v3911
    %v3913 = vcombine.low %v2566, %v2590
    %v3914 = vcombine.high %v2566, %v2590
    %v3916 = vunpack.c.l.s4 1983009808
    %v3917 = vunpack.c.0.s8 %v3916
    %v3918 = vlaneseq
    %v3919 = vshrl.u32 %v3918, 7
    %v3920 = vsub.s32 %v3917, %v3919
    %v3921 = vrot.slane %v3913, %v3920
    %v3923 = vunpack.c.l.s4 1983009808
    %v3924 = vunpack.c.0.s8 %v3923
    %v3925 = vlaneseq
    %v3926 = vshrl.u32 %v3925, 7
    %v3927 = vsub.s32 %v3924, %v3926
    %v3928 = vrot.slane %v3914, %v3927
    %v3929 = vcombine.low %v3905, %v3921
    %v3930 = vcombine.high %v3905, %v3921
    %v3932 = vunpack.c.l.s4 1934713408
    %v3933 = vunpack.c.0.s8 %v3932
    %v3934 = vlaneseq
    %v3935 = vshrl.u32 %v3934, 7
    %v3936 = vsub.s32 %v3933, %v3935
    %v3937 = vrot.slane %v3929, %v3936
    %v3939 = vunpack.c.l.s4 1934713408
    %v3940 = vunpack.c.0.s8 %v3939
    %v3941 = vlaneseq
    %v3942 = vshrl.u32 %v3941, 7
    %v3943 = vsub.s32 %v3940, %v3942
    %v3944 = vrot.slane %v3930, %v3943
    %v3945 = vcombine.low %v3912, %v3928
    %v3946 = vcombine.high %v3912, %v3928
    %v3948 = vunpack.c.l.s4 1934713408
    %v3949 = vunpack.c.0.s8 %v3948
    %v3950 = vlaneseq
    %v3951 = vshrl.u32 %v3950, 7
    %v3952 = vsub.s32 %v3949, %v3951
    %v3953 = vrot.slane %v3945, %v3952
    %v3955 = vunpack.c.l.s4 1934713408
    %v3956 = vunpack.c.0.s8 %v3955
    %v3957 = vlaneseq
    %v3958 = vshrl.u32 %v3957, 7
    %v3959 = vsub.s32 %v3956, %v3958
    %v3960 = vrot.slane %v3946, %v3959
    %v3961 = vcombine.low %v3937, %v3953
    %v3962 = vcombine.high %v3937, %v3953
    %v3963 = vcombine.low %v3944, %v3960
    %v3964 = vcombine.high %v3944, %v3960
    %v3965 = vcombine.low %v2459, %v2483
    %v3966 = vcombine.high %v2459, %v2483
    %v3968 = vunpack.c.l.s4 1983009808
    %v3969 = vunpack.c.0.s8 %v3968
    %v3970 = vlaneseq
    %v3971 = vshrl.u32 %v3970, 7
    %v3972 = vsub.s32 %v3969, %v3971
    %v3973 = vrot.slane %v3965, %v3972
    %v3975 = vunpack.c.l.s4 1983009808
    %v3976 = vunpack.c.0.s8 %v3975
    %v3977 = vlaneseq
    %v3978 = vshrl.u32 %v3977, 7
    %v3979 = vsub.s32 %v3976, %v3978
    %v3980 = vrot.slane %v3966, %v3979
    %v3981 = vcombine.low %v2471, %v2495
    %v3982 = vcombine.high %v2471, %v2495
    %v3984 = vunpack.c.l.s4 1983009808
    %v3985 = vunpack.c.0.s8 %v3984
    %v3986 = vlaneseq
    %v3987 = vshrl.u32 %v3986, 7
    %v3988 = vsub.s32 %v3985, %v3987
    %v3989 = vrot.slane %v3981, %v3988
    %v3991 = vunpack.c.l.s4 1983009808
    %v3992 = vunpack.c.0.s8 %v3991
    %v3993 = vlaneseq
    %v3994 = vshrl.u32 %v3993, 7
    %v3995 = vsub.s32 %v3992, %v3994
    %v3996 = vrot.slane %v3982, %v3995
    %v3997 = vcombine.low %v3973, %v3989
    %v3998 = vcombine.high %v3973, %v3989
    %v4000 = vunpack.c.l.s4 1934713408
    %v4001 = vunpack.c.0.s8 %v4000
    %v4002 = vlaneseq
    %v4003 = vshrl.u32 %v4002, 7
    %v4004 = vsub.s32 %v4001, %v4003
    %v4005 = vrot.slane %v3997, %v4004
    %v4007 = vunpack.c.l.s4 1934713408
    %v4008 = vunpack.c.0.s8 %v4007
    %v4009 = vlaneseq
    %v4010 = vshrl.u32 %v4009, 7
    %v4011 = vsub.s32 %v4008, %v4010
    %v4012 = vrot.slane %v3998, %v4011
    %v4013 = vcombine.low %v3980, %v3996
    %v4014 = vcombine.high %v3980, %v3996
    %v4016 = vunpack.c.l.s4 1934713408
    %v4017 = vunpack.c.0.s8 %v4016
    %v4018 = vlaneseq
    %v4019 = vshrl.u32 %v4018, 7
    %v4020 = vsub.s32 %v4017, %v4019
    %v4021 = vrot.slane %v4013, %v4020
    %v4023 = vunpack.c.l.s4 1934713408
    %v4024 = vunpack.c.0.s8 %v4023
    %v4025 = vlaneseq
    %v4026 = vshrl.u32 %v4025, 7
    %v4027 = vsub.s32 %v4024, %v4026
    %v4028 = vrot.slane %v4014, %v4027
    %v4029 = vcombine.low %v4005, %v4021
    %v4030 = vcombine.high %v4005, %v4021
    %v4031 = vcombine.low %v4012, %v4028
    %v4032 = vcombine.high %v4012, %v4028
    %v4033 = vcombine.low %v2507, %v2531
    %v4034 = vcombine.high %v2507, %v2531
    %v4036 = vunpack.c.l.s4 1983009808
    %v4037 = vunpack.c.0.s8 %v4036
    %v4038 = vlaneseq
    %v4039 = vshrl.u32 %v4038, 7
    %v4040 = vsub.s32 %v4037, %v4039
    %v4041 = vrot.slane %v4033, %v4040
    %v4043 = vunpack.c.l.s4 1983009808
    %v4044 = vunpack.c.0.s8 %v4043
    %v4045 = vlaneseq
    %v4046 = vshrl.u32 %v4045, 7
    %v4047 = vsub.s32 %v4044, %v4046
    %v4048 = vrot.slane %v4034, %v4047
    %v4049 = vcombine.low %v2519, %v2543
    %v4050 = vcombine.high %v2519, %v2543
    %v4052 = vunpack.c.l.s4 1983009808
    %v4053 = vunpack.c.0.s8 %v4052
    %v4054 = vlaneseq
    %v4055 = vshrl.u32 %v4054, 7
    %v4056 = vsub.s32 %v4053, %v4055
    %v4057 = vrot.slane %v4049, %v4056
    %v4059 = vunpack.c.l.s4 1983009808
    %v4060 = vunpack.c.0.s8 %v4059
    %v4061 = vlaneseq
    %v4062 = vshrl.u32 %v4061, 7
    %v4063 = vsub.s32 %v4060, %v4062
    %v4064 = vrot.slane %v4050, %v4063
    %v4065 = vcombine.low %v4041, %v4057
    %v4066 = vcombine.high %v4041, %v4057
    %v4068 = vunpack.c.l.s4 1934713408
    %v4069 = vunpack.c.0.s8 %v4068
    %v4070 = vlaneseq
    %v4071 = vshrl.u32 %v4070, 7
    %v4072 = vsub.s32 %v4069, %v4071
    %v4073 = vrot.slane %v4065, %v4072
    %v4075 = vunpack.c.l.s4 1934713408
    %v4076 = vunpack.c.0.s8 %v4075
    %v4077 = vlaneseq
    %v4078 = vshrl.u32 %v4077, 7
    %v4079 = vsub.s32 %v4076, %v4078
    %v4080 = vrot.slane %v4066, %v4079
    %v4081 = vcombine.low %v4048, %v4064
    %v4082 = vcombine.high %v4048, %v4064
    %v4084 = vunpack.c.l.s4 1934713408
    %v4085 = vunpack.c.0.s8 %v4084
    %v4086 = vlaneseq
    %v4087 = vshrl.u32 %v4086, 7
    %v4088 = vsub.s32 %v4085, %v4087
    %v4089 = vrot.slane %v4081, %v4088
    %v4091 = vunpack.c.l.s4 1934713408
    %v4092 = vunpack.c.0.s8 %v4091
    %v4093 = vlaneseq
    %v4094 = vshrl.u32 %v4093, 7
    %v4095 = vsub.s32 %v4092, %v4094
    %v4096 = vrot.slane %v4082, %v4095
    %v4097 = vcombine.low %v4073, %v4089
    %v4098 = vcombine.high %v4073, %v4089
    %v4099 = vcombine.low %v4080, %v4096
    %v4100 = vcombine.high %v4080, %v4096
    %v4101 = vcombine.low %v2555, %v2579
    %v4102 = vcombine.high %v2555, %v2579
    %v4104 = vunpack.c.l.s4 1983009808
    %v4105 = vunpack.c.0.s8 %v4104
    %v4106 = vlaneseq
    %v4107 = vshrl.u32 %v4106, 7
    %v4108 = vsub.s32 %v4105, %v4107
    %v4109 = vrot.slane %v4101, %v4108
    %v4111 = vunpack.c.l.s4 1983009808
    %v4112 = vunpack.c.0.s8 %v4111
    %v4113 = vlaneseq
    %v4114 = vshrl.u32 %v4113, 7
    %v4115 = vsub.s32 %v4112, %v4114
    %v4116 = vrot.slane %v4102, %v4115
    %v4117 = vcombine.low %v2567, %v2591
    %v4118 = vcombine.high %v2567, %v2591
    %v4120 = vunpack.c.l.s4 1983009808
    %v4121 = vunpack.c.0.s8 %v4120
    %v4122 = vlaneseq
    %v4123 = vshrl.u32 %v4122, 7
    %v4124 = vsub.s32 %v4121, %v4123
    %v4125 = vrot.slane %v4117, %v4124
    %v4127 = vunpack.c.l.s4 1983009808
    %v4128 = vunpack.c.0.s8 %v4127
    %v4129 = vlaneseq
    %v4130 = vshrl.u32 %v4129, 7
    %v4131 = vsub.s32 %v4128, %v4130
    %v4132 = vrot.slane %v4118, %v4131
    %v4133 = vcombine.low %v4109, %v4125
    %v4134 = vcombine.high %v4109, %v4125
    %v4136 = vunpack.c.l.s4 1934713408
    %v4137 = vunpack.c.0.s8 %v4136
    %v4138 = vlaneseq
    %v4139 = vshrl.u32 %v4138, 7
    %v4140 = vsub.s32 %v4137, %v4139
    %v4141 = vrot.slane %v4133, %v4140
    %v4143 = vunpack.c.l.s4 1934713408
    %v4144 = vunpack.c.0.s8 %v4143
    %v4145 = vlaneseq
    %v4146 = vshrl.u32 %v4145, 7
    %v4147 = vsub.s32 %v4144, %v4146
    %v4148 = vrot.slane %v4134, %v4147
    %v4149 = vcombine.low %v4116, %v4132
    %v4150 = vcombine.high %v4116, %v4132
    %v4152 = vunpack.c.l.s4 1934713408
    %v4153 = vunpack.c.0.s8 %v4152
    %v4154 = vlaneseq
    %v4155 = vshrl.u32 %v4154, 7
    %v4156 = vsub.s32 %v4153, %v4155
    %v4157 = vrot.slane %v4149, %v4156
    %v4159 = vunpack.c.l.s4 1934713408
    %v4160 = vunpack.c.0.s8 %v4159
    %v4161 = vlaneseq
    %v4162 = vshrl.u32 %v4161, 7
    %v4163 = vsub.s32 %v4160, %v4162
    %v4164 = vrot.slane %v4150, %v4163
    %v4165 = vcombine.low %v4141, %v4157
    %v4166 = vcombine.high %v4141, %v4157
    %v4167 = vcombine.low %v4148, %v4164
    %v4168 = vcombine.high %v4148, %v4164
    %v4169 = vcombine.low %v2460, %v2484
    %v4170 = vcombine.high %v2460, %v2484
    %v4172 = vunpack.c.l.s4 1983009808
    %v4173 = vunpack.c.0.s8 %v4172
    %v4174 = vlaneseq
    %v4175 = vshrl.u32 %v4174, 7
    %v4176 = vsub.s32 %v4173, %v4175
    %v4177 = vrot.slane %v4169, %v4176
    %v4179 = vunpack.c.l.s4 1983009808
    %v4180 = vunpack.c.0.s8 %v4179
    %v4181 = vlaneseq
    %v4182 = vshrl.u32 %v4181, 7
    %v4183 = vsub.s32 %v4180, %v4182
    %v4184 = vrot.slane %v4170, %v4183
    %v4185 = vcombine.low %v2472, %v2496
    %v4186 = vcombine.high %v2472, %v2496
    %v4188 = vunpack.c.l.s4 1983009808
    %v4189 = vunpack.c.0.s8 %v4188
    %v4190 = vlaneseq
    %v4191 = vshrl.u32 %v4190, 7
    %v4192 = vsub.s32 %v4189, %v4191
    %v4193 = vrot.slane %v4185, %v4192
    %v4195 = vunpack.c.l.s4 1983009808
    %v4196 = vunpack.c.0.s8 %v4195
    %v4197 = vlaneseq
    %v4198 = vshrl.u32 %v4197, 7
    %v4199 = vsub.s32 %v4196, %v4198
    %v4200 = vrot.slane %v4186, %v4199
    %v4201 = vcombine.low %v4177, %v4193
    %v4202 = vcombine.high %v4177, %v4193
    %v4204 = vunpack.c.l.s4 1934713408
    %v4205 = vunpack.c.0.s8 %v4204
    %v4206 = vlaneseq
    %v4207 = vshrl.u32 %v4206, 7
    %v4208 = vsub.s32 %v4205, %v4207
    %v4209 = vrot.slane %v4201, %v4208
    %v4211 = vunpack.c.l.s4 1934713408
    %v4212 = vunpack.c.0.s8 %v4211
    %v4213 = vlaneseq
    %v4214 = vshrl.u32 %v4213, 7
    %v4215 = vsub.s32 %v4212, %v4214
    %v4216 = vrot.slane %v4202, %v4215
    %v4217 = vcombine.low %v4184, %v4200
    %v4218 = vcombine.high %v4184, %v4200
    %v4220 = vunpack.c.l.s4 1934713408
    %v4221 = vunpack.c.0.s8 %v4220
    %v4222 = vlaneseq
    %v4223 = vshrl.u32 %v4222, 7
    %v4224 = vsub.s32 %v4221, %v4223
    %v4225 = vrot.slane %v4217, %v4224
    %v4227 = vunpack.c.l.s4 1934713408
    %v4228 = vunpack.c.0.s8 %v4227
    %v4229 = vlaneseq
    %v4230 = vshrl.u32 %v4229, 7
    %v4231 = vsub.s32 %v4228, %v4230
    %v4232 = vrot.slane %v4218, %v4231
    %v4233 = vcombine.low %v4209, %v4225
    %v4234 = vcombine.high %v4209, %v4225
    %v4235 = vcombine.low %v4216, %v4232
    %v4236 = vcombine.high %v4216, %v4232
    %v4237 = vcombine.low %v2508, %v2532
    %v4238 = vcombine.high %v2508, %v2532
    %v4240 = vunpack.c.l.s4 1983009808
    %v4241 = vunpack.c.0.s8 %v4240
    %v4242 = vlaneseq
    %v4243 = vshrl.u32 %v4242, 7
    %v4244 = vsub.s32 %v4241, %v4243
    %v4245 = vrot.slane %v4237, %v4244
    %v4247 = vunpack.c.l.s4 1983009808
    %v4248 = vunpack.c.0.s8 %v4247
    %v4249 = vlaneseq
    %v4250 = vshrl.u32 %v4249, 7
    %v4251 = vsub.s32 %v4248, %v4250
    %v4252 = vrot.slane %v4238, %v4251
    %v4253 = vcombine.low %v2520, %v2544
    %v4254 = vcombine.high %v2520, %v2544
    %v4256 = vunpack.c.l.s4 1983009808
    %v4257 = vunpack.c.0.s8 %v4256
    %v4258 = vlaneseq
    %v4259 = vshrl.u32 %v4258, 7
    %v4260 = vsub.s32 %v4257, %v4259
    %v4261 = vrot.slane %v4253, %v4260
    %v4263 = vunpack.c.l.s4 1983009808
    %v4264 = vunpack.c.0.s8 %v4263
    %v4265 = vlaneseq
    %v4266 = vshrl.u32 %v4265, 7
    %v4267 = vsub.s32 %v4264, %v4266
    %v4268 = vrot.slane %v4254, %v4267
    %v4269 = vcombine.low %v4245, %v4261
    %v4270 = vcombine.high %v4245, %v4261
    %v4272 = vunpack.c.l.s4 1934713408
    %v4273 = vunpack.c.0.s8 %v4272
    %v4274 = vlaneseq
    %v4275 = vshrl.u32 %v4274, 7
    %v4276 = vsub.s32 %v4273, %v4275
    %v4277 = vrot.slane %v4269, %v4276
    %v4279 = vunpack.c.l.s4 1934713408
    %v4280 = vunpack.c.0.s8 %v4279
    %v4281 = vlaneseq
    %v4282 = vshrl.u32 %v4281, 7
    %v4283 = vsub.s32 %v4280, %v4282
    %v4284 = vrot.slane %v4270, %v4283
    %v4285 = vcombine.low %v4252, %v4268
    %v4286 = vcombine.high %v4252, %v4268
    %v4288 = vunpack.c.l.s4 1934713408
    %v4289 = vunpack.c.0.s8 %v4288
    %v4290 = vlaneseq
    %v4291 = vshrl.u32 %v4290, 7
    %v4292 = vsub.s32 %v4289, %v4291
    %v4293 = vrot.slane %v4285, %v4292
    %v4295 = vunpack.c.l.s4 1934713408
    %v4296 = vunpack.c.0.s8 %v4295
    %v4297 = vlaneseq
    %v4298 = vshrl.u32 %v4297, 7
    %v4299 = vsub.s32 %v4296, %v4298
    %v4300 = vrot.slane %v4286, %v4299
    %v4301 = vcombine.low %v4277, %v4293
    %v4302 = vcombine.high %v4277, %v4293
    %v4303 = vcombine.low %v4284, %v4300
    %v4304 = vcombine.high %v4284, %v4300
    %v4305 = vcombine.low %v2556, %v2580
    %v4306 = vcombine.high %v2556, %v2580
    %v4308 = vunpack.c.l.s4 1983009808
    %v4309 = vunpack.c.0.s8 %v4308
    %v4310 = vlaneseq
    %v4311 = vshrl.u32 %v4310, 7
    %v4312 = vsub.s32 %v4309, %v4311
    %v4313 = vrot.slane %v4305, %v4312
    %v4315 = vunpack.c.l.s4 1983009808
    %v4316 = vunpack.c.0.s8 %v4315
    %v4317 = vlaneseq
    %v4318 = vshrl.u32 %v4317, 7
    %v4319 = vsub.s32 %v4316, %v4318
    %v4320 = vrot.slane %v4306, %v4319
    %v4321 = vcombine.low %v2568, %v2592
    %v4322 = vcombine.high %v2568, %v2592
    %v4324 = vunpack.c.l.s4 1983009808
    %v4325 = vunpack.c.0.s8 %v4324
    %v4326 = vlaneseq
    %v4327 = vshrl.u32 %v4326, 7
    %v4328 = vsub.s32 %v4325, %v4327
    %v4329 = vrot.slane %v4321, %v4328
    %v4331 = vunpack.c.l.s4 1983009808
    %v4332 = vunpack.c.0.s8 %v4331
    %v4333 = vlaneseq
    %v4334 = vshrl.u32 %v4333, 7
    %v4335 = vsub.s32 %v4332, %v4334
    %v4336 = vrot.slane %v4322, %v4335
    %v4337 = vcombine.low %v4313, %v4329
    %v4338 = vcombine.high %v4313, %v4329
    %v4340 = vunpack.c.l.s4 1934713408
    %v4341 = vunpack.c.0.s8 %v4340
    %v4342 = vlaneseq
    %v4343 = vshrl.u32 %v4342, 7
    %v4344 = vsub.s32 %v4341, %v4343
    %v4345 = vrot.slane %v4337, %v4344
    %v4347 = vunpack.c.l.s4 1934713408
    %v4348 = vunpack.c.0.s8 %v4347
    %v4349 = vlaneseq
    %v4350 = vshrl.u32 %v4349, 7
    %v4351 = vsub.s32 %v4348, %v4350
    %v4352 = vrot.slane %v4338, %v4351
    %v4353 = vcombine.low %v4320, %v4336
    %v4354 = vcombine.high %v4320, %v4336
    %v4356 = vunpack.c.l.s4 1934713408
    %v4357 = vunpack.c.0.s8 %v4356
    %v4358 = vlaneseq
    %v4359 = vshrl.u32 %v4358, 7
    %v4360 = vsub.s32 %v4357, %v4359
    %v4361 = vrot.slane %v4353, %v4360
    %v4363 = vunpack.c.l.s4 1934713408
    %v4364 = vunpack.c.0.s8 %v4363
    %v4365 = vlaneseq
    %v4366 = vshrl.u32 %v4365, 7
    %v4367 = vsub.s32 %v4364, %v4366
    %v4368 = vrot.slane %v4354, %v4367
    %v4369 = vcombine.low %v4345, %v4361
    %v4370 = vcombine.high %v4345, %v4361
    %v4371 = vcombine.low %v4352, %v4368
    %v4372 = vcombine.high %v4352, %v4368
    %v4373 = vcombine.low %v2461, %v2485
    %v4374 = vcombine.high %v2461, %v2485
    %v4376 = vunpack.c.l.s4 1983009808
    %v4377 = vunpack.c.0.s8 %v4376
    %v4378 = vlaneseq
    %v4379 = vshrl.u32 %v4378, 7
    %v4380 = vsub.s32 %v4377, %v4379
    %v4381 = vrot.slane %v4373, %v4380
    %v4383 = vunpack.c.l.s4 1983009808
    %v4384 = vunpack.c.0.s8 %v4383
    %v4385 = vlaneseq
    %v4386 = vshrl.u32 %v4385, 7
    %v4387 = vsub.s32 %v4384, %v4386
    %v4388 = vrot.slane %v4374, %v4387
    %v4389 = vcombine.low %v2473, %v2497
    %v4390 = vcombine.high %v2473, %v2497
    %v4392 = vunpack.c.l.s4 1983009808
    %v4393 = vunpack.c.0.s8 %v4392
    %v4394 = vlaneseq
    %v4395 = vshrl.u32 %v4394, 7
    %v4396 = vsub.s32 %v4393, %v4395
    %v4397 = vrot.slane %v4389, %v4396
    %v4399 = vunpack.c.l.s4 1983009808
    %v4400 = vunpack.c.0.s8 %v4399
    %v4401 = vlaneseq
    %v4402 = vshrl.u32 %v4401, 7
    %v4403 = vsub.s32 %v4400, %v4402
    %v4404 = vrot.slane %v4390, %v4403
    %v4405 = vcombine.low %v4381, %v4397
    %v4406 = vcombine.high %v4381, %v4397
    %v4408 = vunpack.c.l.s4 1934713408
    %v4409 = vunpack.c.0.s8 %v4408
    %v4410 = vlaneseq
    %v4411 = vshrl.u32 %v4410, 7
    %v4412 = vsub.s32 %v4409, %v4411
    %v4413 = vrot.slane %v4405, %v4412
    %v4415 = vunpack.c.l.s4 1934713408
    %v4416 = vunpack.c.0.s8 %v4415
    %v4417 = vlaneseq
    %v4418 = vshrl.u32 %v4417, 7
    %v4419 = vsub.s32 %v4416, %v4418
    %v4420 = vrot.slane %v4406, %v4419
    %v4421 = vcombine.low %v4388, %v4404
    %v4422 = vcombine.high %v4388, %v4404
    %v4424 = vunpack.c.l.s4 1934713408
    %v4425 = vunpack.c.0.s8 %v4424
    %v4426 = vlaneseq
    %v4427 = vshrl.u32 %v4426, 7
    %v4428 = vsub.s32 %v4425, %v4427
    %v4429 = vrot.slane %v4421, %v4428
    %v4431 = vunpack.c.l.s4 1934713408
    %v4432 = vunpack.c.0.s8 %v4431
    %v4433 = vlaneseq
    %v4434 = vshrl.u32 %v4433, 7
    %v4435 = vsub.s32 %v4432, %v4434
    %v4436 = vrot.slane %v4422, %v4435
    %v4437 = vcombine.low %v4413, %v4429
    %v4438 = vcombine.high %v4413, %v4429
    %v4439 = vcombine.low %v4420, %v4436
    %v4440 = vcombine.high %v4420, %v4436
    %v4441 = vcombine.low %v2509, %v2533
    %v4442 = vcombine.high %v2509, %v2533
    %v4444 = vunpack.c.l.s4 1983009808
    %v4445 = vunpack.c.0.s8 %v4444
    %v4446 = vlaneseq
    %v4447 = vshrl.u32 %v4446, 7
    %v4448 = vsub.s32 %v4445, %v4447
    %v4449 = vrot.slane %v4441, %v4448
    %v4451 = vunpack.c.l.s4 1983009808
    %v4452 = vunpack.c.0.s8 %v4451
    %v4453 = vlaneseq
    %v4454 = vshrl.u32 %v4453, 7
    %v4455 = vsub.s32 %v4452, %v4454
    %v4456 = vrot.slane %v4442, %v4455
    %v4457 = vcombine.low %v2521, %v2545
    %v4458 = vcombine.high %v2521, %v2545
    %v4460 = vunpack.c.l.s4 1983009808
    %v4461 = vunpack.c.0.s8 %v4460
    %v4462 = vlaneseq
    %v4463 = vshrl.u32 %v4462, 7
    %v4464 = vsub.s32 %v4461, %v4463
    %v4465 = vrot.slane %v4457, %v4464
    %v4467 = vunpack.c.l.s4 1983009808
    %v4468 = vunpack.c.0.s8 %v4467
    %v4469 = vlaneseq
    %v4470 = vshrl.u32 %v4469, 7
    %v4471 = vsub.s32 %v4468, %v4470
    %v4472 = vrot.slane %v4458, %v4471
    %v4473 = vcombine.low %v4449, %v4465
    %v4474 = vcombine.high %v4449, %v4465
    %v4476 = vunpack.c.l.s4 1934713408
    %v4477 = vunpack.c.0.s8 %v4476
    %v4478 = vlaneseq
    %v4479 = vshrl.u32 %v4478, 7
    %v4480 = vsub.s32 %v4477, %v4479
    %v4481 = vrot.slane %v4473, %v4480
    %v4483 = vunpack.c.l.s4 1934713408
    %v4484 = vunpack.c.0.s8 %v4483
    %v4485 = vlaneseq
    %v4486 = vshrl.u32 %v4485, 7
    %v4487 = vsub.s32 %v4484, %v4486
    %v4488 = vrot.slane %v4474, %v4487
    %v4489 = vcombine.low %v4456, %v4472
    %v4490 = vcombine.high %v4456, %v4472
    %v4492 = vunpack.c.l.s4 1934713408
    %v4493 = vunpack.c.0.s8 %v4492
    %v4494 = vlaneseq
    %v4495 = vshrl.u32 %v4494, 7
    %v4496 = vsub.s32 %v4493, %v4495
    %v4497 = vrot.slane %v4489, %v4496
    %v4499 = vunpack.c.l.s4 1934713408
    %v4500 = vunpack.c.0.s8 %v4499
    %v4501 = vlaneseq
    %v4502 = vshrl.u32 %v4501, 7
    %v4503 = vsub.s32 %v4500, %v4502
    %v4504 = vrot.slane %v4490, %v4503
    %v4505 = vcombine.low %v4481, %v4497
    %v4506 = vcombine.high %v4481, %v4497
    %v4507 = vcombine.low %v4488, %v4504
    %v4508 = vcombine.high %v4488, %v4504
    %v4509 = vcombine.low %v2557, %v2581
    %v4510 = vcombine.high %v2557, %v2581
    %v4512 = vunpack.c.l.s4 1983009808
    %v4513 = vunpack.c.0.s8 %v4512
    %v4514 = vlaneseq
    %v4515 = vshrl.u32 %v4514, 7
    %v4516 = vsub.s32 %v4513, %v4515
    %v4517 = vrot.slane %v4509, %v4516
    %v4519 = vunpack.c.l.s4 1983009808
    %v4520 = vunpack.c.0.s8 %v4519
    %v4521 = vlaneseq
    %v4522 = vshrl.u32 %v4521, 7
    %v4523 = vsub.s32 %v4520, %v4522
    %v4524 = vrot.slane %v4510, %v4523
    %v4525 = vcombine.low %v2569, %v2593
    %v4526 = vcombine.high %v2569, %v2593
    %v4528 = vunpack.c.l.s4 1983009808
    %v4529 = vunpack.c.0.s8 %v4528
    %v4530 = vlaneseq
    %v4531 = vshrl.u32 %v4530, 7
    %v4532 = vsub.s32 %v4529, %v4531
    %v4533 = vrot.slane %v4525, %v4532
    %v4535 = vunpack.c.l.s4 1983009808
    %v4536 = vunpack.c.0.s8 %v4535
    %v4537 = vlaneseq
    %v4538 = vshrl.u32 %v4537, 7
    %v4539 = vsub.s32 %v4536, %v4538
    %v4540 = vrot.slane %v4526, %v4539
    %v4541 = vcombine.low %v4517, %v4533
    %v4542 = vcombine.high %v4517, %v4533
    %v4544 = vunpack.c.l.s4 1934713408
    %v4545 = vunpack.c.0.s8 %v4544
    %v4546 = vlaneseq
    %v4547 = vshrl.u32 %v4546, 7
    %v4548 = vsub.s32 %v4545, %v4547
    %v4549 = vrot.slane %v4541, %v4548
    %v4551 = vunpack.c.l.s4 1934713408
    %v4552 = vunpack.c.0.s8 %v4551
    %v4553 = vlaneseq
    %v4554 = vshrl.u32 %v4553, 7
    %v4555 = vsub.s32 %v4552, %v4554
    %v4556 = vrot.slane %v4542, %v4555
    %v4557 = vcombine.low %v4524, %v4540
    %v4558 = vcombine.high %v4524, %v4540
    %v4560 = vunpack.c.l.s4 1934713408
    %v4561 = vunpack.c.0.s8 %v4560
    %v4562 = vlaneseq
    %v4563 = vshrl.u32 %v4562, 7
    %v4564 = vsub.s32 %v4561, %v4563
    %v4565 = vrot.slane %v4557, %v4564
    %v4567 = vunpack.c.l.s4 1934713408
    %v4568 = vunpack.c.0.s8 %v4567
    %v4569 = vlaneseq
    %v4570 = vshrl.u32 %v4569, 7
    %v4571 = vsub.s32 %v4568, %v4570
    %v4572 = vrot.slane %v4558, %v4571
    %v4573 = vcombine.low %v4549, %v4565
    %v4574 = vcombine.high %v4549, %v4565
    %v4575 = vcombine.low %v4556, %v4572
    %v4576 = vcombine.high %v4556, %v4572
    %v4577 = vcombine.low %v2462, %v2486
    %v4578 = vcombine.high %v2462, %v2486
    %v4580 = vunpack.c.l.s4 1983009808
    %v4581 = vunpack.c.0.s8 %v4580
    %v4582 = vlaneseq
    %v4583 = vshrl.u32 %v4582, 7
    %v4584 = vsub.s32 %v4581, %v4583
    %v4585 = vrot.slane %v4577, %v4584
    %v4587 = vunpack.c.l.s4 1983009808
    %v4588 = vunpack.c.0.s8 %v4587
    %v4589 = vlaneseq
    %v4590 = vshrl.u32 %v4589, 7
    %v4591 = vsub.s32 %v4588, %v4590
    %v4592 = vrot.slane %v4578, %v4591
    %v4593 = vcombine.low %v2474, %v2498
    %v4594 = vcombine.high %v2474, %v2498
    %v4596 = vunpack.c.l.s4 1983009808
    %v4597 = vunpack.c.0.s8 %v4596
    %v4598 = vlaneseq
    %v4599 = vshrl.u32 %v4598, 7
    %v4600 = vsub.s32 %v4597, %v4599
    %v4601 = vrot.slane %v4593, %v4600
    %v4603 = vunpack.c.l.s4 1983009808
    %v4604 = vunpack.c.0.s8 %v4603
    %v4605 = vlaneseq
    %v4606 = vshrl.u32 %v4605, 7
    %v4607 = vsub.s32 %v4604, %v4606
    %v4608 = vrot.slane %v4594, %v4607
    %v4609 = vcombine.low %v4585, %v4601
    %v4610 = vcombine.high %v4585, %v4601
    %v4612 = vunpack.c.l.s4 1934713408
    %v4613 = vunpack.c.0.s8 %v4612
    %v4614 = vlaneseq
    %v4615 = vshrl.u32 %v4614, 7
    %v4616 = vsub.s32 %v4613, %v4615
    %v4617 = vrot.slane %v4609, %v4616
    %v4619 = vunpack.c.l.s4 1934713408
    %v4620 = vunpack.c.0.s8 %v4619
    %v4621 = vlaneseq
    %v4622 = vshrl.u32 %v4621, 7
    %v4623 = vsub.s32 %v4620, %v4622
    %v4624 = vrot.slane %v4610, %v4623
    %v4625 = vcombine.low %v4592, %v4608
    %v4626 = vcombine.high %v4592, %v4608
    %v4628 = vunpack.c.l.s4 1934713408
    %v4629 = vunpack.c.0.s8 %v4628
    %v4630 = vlaneseq
    %v4631 = vshrl.u32 %v4630, 7
    %v4632 = vsub.s32 %v4629, %v4631
    %v4633 = vrot.slane %v4625, %v4632
    %v4635 = vunpack.c.l.s4 1934713408
    %v4636 = vunpack.c.0.s8 %v4635
    %v4637 = vlaneseq
    %v4638 = vshrl.u32 %v4637, 7
    %v4639 = vsub.s32 %v4636, %v4638
    %v4640 = vrot.slane %v4626, %v4639
    %v4641 = vcombine.low %v4617, %v4633
    %v4642 = vcombine.high %v4617, %v4633
    %v4643 = vcombine.low %v4624, %v4640
    %v4644 = vcombine.high %v4624, %v4640
    %v4645 = vcombine.low %v2510, %v2534
    %v4646 = vcombine.high %v2510, %v2534
    %v4648 = vunpack.c.l.s4 1983009808
    %v4649 = vunpack.c.0.s8 %v4648
    %v4650 = vlaneseq
    %v4651 = vshrl.u32 %v4650, 7
    %v4652 = vsub.s32 %v4649, %v4651
    %v4653 = vrot.slane %v4645, %v4652
    %v4655 = vunpack.c.l.s4 1983009808
    %v4656 = vunpack.c.0.s8 %v4655
    %v4657 = vlaneseq
    %v4658 = vshrl.u32 %v4657, 7
    %v4659 = vsub.s32 %v4656, %v4658
    %v4660 = vrot.slane %v4646, %v4659
    %v4661 = vcombine.low %v2522, %v2546
    %v4662 = vcombine.high %v2522, %v2546
    %v4664 = vunpack.c.l.s4 1983009808
    %v4665 = vunpack.c.0.s8 %v4664
    %v4666 = vlaneseq
    %v4667 = vshrl.u32 %v4666, 7
    %v4668 = vsub.s32 %v4665, %v4667
    %v4669 = vrot.slane %v4661, %v4668
    %v4671 = vunpack.c.l.s4 1983009808
    %v4672 = vunpack.c.0.s8 %v4671
    %v4673 = vlaneseq
    %v4674 = vshrl.u32 %v4673, 7
    %v4675 = vsub.s32 %v4672, %v4674
    %v4676 = vrot.slane %v4662, %v4675
    %v4677 = vcombine.low %v4653, %v4669
    %v4678 = vcombine.high %v4653, %v4669
    %v4680 = vunpack.c.l.s4 1934713408
    %v4681 = vunpack.c.0.s8 %v4680
    %v4682 = vlaneseq
    %v4683 = vshrl.u32 %v4682, 7
    %v4684 = vsub.s32 %v4681, %v4683
    %v4685 = vrot.slane %v4677, %v4684
    %v4687 = vunpack.c.l.s4 1934713408
    %v4688 = vunpack.c.0.s8 %v4687
    %v4689 = vlaneseq
    %v4690 = vshrl.u32 %v4689, 7
    %v4691 = vsub.s32 %v4688, %v4690
    %v4692 = vrot.slane %v4678, %v4691
    %v4693 = vcombine.low %v4660, %v4676
    %v4694 = vcombine.high %v4660, %v4676
    %v4696 = vunpack.c.l.s4 1934713408
    %v4697 = vunpack.c.0.s8 %v4696
    %v4698 = vlaneseq
    %v4699 = vshrl.u32 %v4698, 7
    %v4700 = vsub.s32 %v4697, %v4699
    %v4701 = vrot.slane %v4693, %v4700
    %v4703 = vunpack.c.l.s4 1934713408
    %v4704 = vunpack.c.0.s8 %v4703
    %v4705 = vlaneseq
    %v4706 = vshrl.u32 %v4705, 7
    %v4707 = vsub.s32 %v4704, %v4706
    %v4708 = vrot.slane %v4694, %v4707
    %v4709 = vcombine.low %v4685, %v4701
    %v4710 = vcombine.high %v4685, %v4701
    %v4711 = vcombine.low %v4692, %v4708
    %v4712 = vcombine.high %v4692, %v4708
    %v4713 = vcombine.low %v2558, %v2582
    %v4714 = vcombine.high %v2558, %v2582
    %v4716 = vunpack.c.l.s4 1983009808
    %v4717 = vunpack.c.0.s8 %v4716
    %v4718 = vlaneseq
    %v4719 = vshrl.u32 %v4718, 7
    %v4720 = vsub.s32 %v4717, %v4719
    %v4721 = vrot.slane %v4713, %v4720
    %v4723 = vunpack.c.l.s4 1983009808
    %v4724 = vunpack.c.0.s8 %v4723
    %v4725 = vlaneseq
    %v4726 = vshrl.u32 %v4725, 7
    %v4727 = vsub.s32 %v4724, %v4726
    %v4728 = vrot.slane %v4714, %v4727
    %v4729 = vcombine.low %v2570, %v2594
    %v4730 = vcombine.high %v2570, %v2594
    %v4732 = vunpack.c.l.s4 1983009808
    %v4733 = vunpack.c.0.s8 %v4732
    %v4734 = vlaneseq
    %v4735 = vshrl.u32 %v4734, 7
    %v4736 = vsub.s32 %v4733, %v4735
    %v4737 = vrot.slane %v4729, %v4736
    %v4739 = vunpack.c.l.s4 1983009808
    %v4740 = vunpack.c.0.s8 %v4739
    %v4741 = vlaneseq
    %v4742 = vshrl.u32 %v4741, 7
    %v4743 = vsub.s32 %v4740, %v4742
    %v4744 = vrot.slane %v4730, %v4743
    %v4745 = vcombine.low %v4721, %v4737
    %v4746 = vcombine.high %v4721, %v4737
    %v4748 = vunpack.c.l.s4 1934713408
    %v4749 = vunpack.c.0.s8 %v4748
    %v4750 = vlaneseq
    %v4751 = vshrl.u32 %v4750, 7
    %v4752 = vsub.s32 %v4749, %v4751
    %v4753 = vrot.slane %v4745, %v4752
    %v4755 = vunpack.c.l.s4 1934713408
    %v4756 = vunpack.c.0.s8 %v4755
    %v4757 = vlaneseq
    %v4758 = vshrl.u32 %v4757, 7
    %v4759 = vsub.s32 %v4756, %v4758
    %v4760 = vrot.slane %v4746, %v4759
    %v4761 = vcombine.low %v4728, %v4744
    %v4762 = vcombine.high %v4728, %v4744
    %v4764 = vunpack.c.l.s4 1934713408
    %v4765 = vunpack.c.0.s8 %v4764
    %v4766 = vlaneseq
    %v4767 = vshrl.u32 %v4766, 7
    %v4768 = vsub.s32 %v4765, %v4767
    %v4769 = vrot.slane %v4761, %v4768
    %v4771 = vunpack.c.l.s4 1934713408
    %v4772 = vunpack.c.0.s8 %v4771
    %v4773 = vlaneseq
    %v4774 = vshrl.u32 %v4773, 7
    %v4775 = vsub.s32 %v4772, %v4774
    %v4776 = vrot.slane %v4762, %v4775
    %v4777 = vcombine.low %v4753, %v4769
    %v4778 = vcombine.high %v4753, %v4769
    %v4779 = vcombine.low %v4760, %v4776
    %v4780 = vcombine.high %v4760, %v4776
    %v4781 = vcombine.low %v2463, %v2487
    %v4782 = vcombine.high %v2463, %v2487
    %v4784 = vunpack.c.l.s4 1983009808
    %v4785 = vunpack.c.0.s8 %v4784
    %v4786 = vlaneseq
    %v4787 = vshrl.u32 %v4786, 7
    %v4788 = vsub.s32 %v4785, %v4787
    %v4789 = vrot.slane %v4781, %v4788
    %v4791 = vunpack.c.l.s4 1983009808
    %v4792 = vunpack.c.0.s8 %v4791
    %v4793 = vlaneseq
    %v4794 = vshrl.u32 %v4793, 7
    %v4795 = vsub.s32 %v4792, %v4794
    %v4796 = vrot.slane %v4782, %v4795
    %v4797 = vcombine.low %v2475, %v2499
    %v4798 = vcombine.high %v2475, %v2499
    %v4800 = vunpack.c.l.s4 1983009808
    %v4801 = vunpack.c.0.s8 %v4800
    %v4802 = vlaneseq
    %v4803 = vshrl.u32 %v4802, 7
    %v4804 = vsub.s32 %v4801, %v4803
    %v4805 = vrot.slane %v4797, %v4804
    %v4807 = vunpack.c.l.s4 1983009808
    %v4808 = vunpack.c.0.s8 %v4807
    %v4809 = vlaneseq
    %v4810 = vshrl.u32 %v4809, 7
    %v4811 = vsub.s32 %v4808, %v4810
    %v4812 = vrot.slane %v4798, %v4811
    %v4813 = vcombine.low %v4789, %v4805
    %v4814 = vcombine.high %v4789, %v4805
    %v4816 = vunpack.c.l.s4 1934713408
    %v4817 = vunpack.c.0.s8 %v4816
    %v4818 = vlaneseq
    %v4819 = vshrl.u32 %v4818, 7
    %v4820 = vsub.s32 %v4817, %v4819
    %v4821 = vrot.slane %v4813, %v4820
    %v4823 = vunpack.c.l.s4 1934713408
    %v4824 = vunpack.c.0.s8 %v4823
    %v4825 = vlaneseq
    %v4826 = vshrl.u32 %v4825, 7
    %v4827 = vsub.s32 %v4824, %v4826
    %v4828 = vrot.slane %v4814, %v4827
    %v4829 = vcombine.low %v4796, %v4812
    %v4830 = vcombine.high %v4796, %v4812
    %v4832 = vunpack.c.l.s4 1934713408
    %v4833 = vunpack.c.0.s8 %v4832
    %v4834 = vlaneseq
    %v4835 = vshrl.u32 %v4834, 7
    %v4836 = vsub.s32 %v4833, %v4835
    %v4837 = vrot.slane %v4829, %v4836
    %v4839 = vunpack.c.l.s4 1934713408
    %v4840 = vunpack.c.0.s8 %v4839
    %v4841 = vlaneseq
    %v4842 = vshrl.u32 %v4841, 7
    %v4843 = vsub.s32 %v4840, %v4842
    %v4844 = vrot.slane %v4830, %v4843
    %v4845 = vcombine.low %v4821, %v4837
    %v4846 = vcombine.high %v4821, %v4837
    %v4847 = vcombine.low %v4828, %v4844
    %v4848 = vcombine.high %v4828, %v4844
    %v4849 = vcombine.low %v2511, %v2535
    %v4850 = vcombine.high %v2511, %v2535
    %v4852 = vunpack.c.l.s4 1983009808
    %v4853 = vunpack.c.0.s8 %v4852
    %v4854 = vlaneseq
    %v4855 = vshrl.u32 %v4854, 7
    %v4856 = vsub.s32 %v4853, %v4855
    %v4857 = vrot.slane %v4849, %v4856
    %v4859 = vunpack.c.l.s4 1983009808
    %v4860 = vunpack.c.0.s8 %v4859
    %v4861 = vlaneseq
    %v4862 = vshrl.u32 %v4861, 7
    %v4863 = vsub.s32 %v4860, %v4862
    %v4864 = vrot.slane %v4850, %v4863
    %v4865 = vcombine.low %v2523, %v2547
    %v4866 = vcombine.high %v2523, %v2547
    %v4868 = vunpack.c.l.s4 1983009808
    %v4869 = vunpack.c.0.s8 %v4868
    %v4870 = vlaneseq
    %v4871 = vshrl.u32 %v4870, 7
    %v4872 = vsub.s32 %v4869, %v4871
    %v4873 = vrot.slane %v4865, %v4872
    %v4875 = vunpack.c.l.s4 1983009808
    %v4876 = vunpack.c.0.s8 %v4875
    %v4877 = vlaneseq
    %v4878 = vshrl.u32 %v4877, 7
    %v4879 = vsub.s32 %v4876, %v4878
    %v4880 = vrot.slane %v4866, %v4879
    %v4881 = vcombine.low %v4857, %v4873
    %v4882 = vcombine.high %v4857, %v4873
    %v4884 = vunpack.c.l.s4 1934713408
    %v4885 = vunpack.c.0.s8 %v4884
    %v4886 = vlaneseq
    %v4887 = vshrl.u32 %v4886, 7
    %v4888 = vsub.s32 %v4885, %v4887
    %v4889 = vrot.slane %v4881, %v4888
    %v4891 = vunpack.c.l.s4 1934713408
    %v4892 = vunpack.c.0.s8 %v4891
    %v4893 = vlaneseq
    %v4894 = vshrl.u32 %v4893, 7
    %v4895 = vsub.s32 %v4892, %v4894
    %v4896 = vrot.slane %v4882, %v4895
    %v4897 = vcombine.low %v4864, %v4880
    %v4898 = vcombine.high %v4864, %v4880
    %v4900 = vunpack.c.l.s4 1934713408
    %v4901 = vunpack.c.0.s8 %v4900
    %v4902 = vlaneseq
    %v4903 = vshrl.u32 %v4902, 7
    %v4904 = vsub.s32 %v4901, %v4903
    %v4905 = vrot.slane %v4897, %v4904
    %v4907 = vunpack.c.l.s4 1934713408
    %v4908 = vunpack.c.0.s8 %v4907
    %v4909 = vlaneseq
    %v4910 = vshrl.u32 %v4909, 7
    %v4911 = vsub.s32 %v4908, %v4910
    %v4912 = vrot.slane %v4898, %v4911
    %v4913 = vcombine.low %v4889, %v4905
    %v4914 = vcombine.high %v4889, %v4905
    %v4915 = vcombine.low %v4896, %v4912
    %v4916 = vcombine.high %v4896, %v4912
    %v4917 = vcombine.low %v2559, %v2583
    %v4918 = vcombine.high %v2559, %v2583
    %v4920 = vunpack.c.l.s4 1983009808
    %v4921 = vunpack.c.0.s8 %v4920
    %v4922 = vlaneseq
    %v4923 = vshrl.u32 %v4922, 7
    %v4924 = vsub.s32 %v4921, %v4923
    %v4925 = vrot.slane %v4917, %v4924
    %v4927 = vunpack.c.l.s4 1983009808
    %v4928 = vunpack.c.0.s8 %v4927
    %v4929 = vlaneseq
    %v4930 = vshrl.u32 %v4929, 7
    %v4931 = vsub.s32 %v4928, %v4930
    %v4932 = vrot.slane %v4918, %v4931
    %v4933 = vcombine.low %v2571, %v2595
    %v4934 = vcombine.high %v2571, %v2595
    %v4936 = vunpack.c.l.s4 1983009808
    %v4937 = vunpack.c.0.s8 %v4936
    %v4938 = vlaneseq
    %v4939 = vshrl.u32 %v4938, 7
    %v4940 = vsub.s32 %v4937, %v4939
    %v4941 = vrot.slane %v4933, %v4940
    %v4943 = vunpack.c.l.s4 1983009808
    %v4944 = vunpack.c.0.s8 %v4943
    %v4945 = vlaneseq
    %v4946 = vshrl.u32 %v4945, 7
    %v4947 = vsub.s32 %v4944, %v4946
    %v4948 = vrot.slane %v4934, %v4947
    %v4949 = vcombine.low %v4925, %v4941
    %v4950 = vcombine.high %v4925, %v4941
    %v4952 = vunpack.c.l.s4 1934713408
    %v4953 = vunpack.c.0.s8 %v4952
    %v4954 = vlaneseq
    %v4955 = vshrl.u32 %v4954, 7
    %v4956 = vsub.s32 %v4953, %v4955
    %v4957 = vrot.slane %v4949, %v4956
    %v4959 = vunpack.c.l.s4 1934713408
    %v4960 = vunpack.c.0.s8 %v4959
    %v4961 = vlaneseq
    %v4962 = vshrl.u32 %v4961, 7
    %v4963 = vsub.s32 %v4960, %v4962
    %v4964 = vrot.slane %v4950, %v4963
    %v4965 = vcombine.low %v4932, %v4948
    %v4966 = vcombine.high %v4932, %v4948
    %v4968 = vunpack.c.l.s4 1934713408
    %v4969 = vunpack.c.0.s8 %v4968
    %v4970 = vlaneseq
    %v4971 = vshrl.u32 %v4970, 7
    %v4972 = vsub.s32 %v4969, %v4971
    %v4973 = vrot.slane %v4965, %v4972
    %v4975 = vunpack.c.l.s4 1934713408
    %v4976 = vunpack.c.0.s8 %v4975
    %v4977 = vlaneseq
    %v4978 = vshrl.u32 %v4977, 7
    %v4979 = vsub.s32 %v4976, %v4978
    %v4980 = vrot.slane %v4966, %v4979
    %v4981 = vcombine.low %v4957, %v4973
    %v4982 = vcombine.high %v4957, %v4973
    %v4983 = vcombine.low %v4964, %v4980
    %v4984 = vcombine.high %v4964, %v4980
    %v4985 = vcombine.low %v2464, %v2488
    %v4986 = vcombine.high %v2464, %v2488
    %v4988 = vunpack.c.l.s4 1983009808
    %v4989 = vunpack.c.0.s8 %v4988
    %v4990 = vlaneseq
    %v4991 = vshrl.u32 %v4990, 7
    %v4992 = vsub.s32 %v4989, %v4991
    %v4993 = vrot.slane %v4985, %v4992
    %v4995 = vunpack.c.l.s4 1983009808
    %v4996 = vunpack.c.0.s8 %v4995
    %v4997 = vlaneseq
    %v4998 = vshrl.u32 %v4997, 7
    %v4999 = vsub.s32 %v4996, %v4998
    %v5000 = vrot.slane %v4986, %v4999
    %v5001 = vcombine.low %v2476, %v2500
    %v5002 = vcombine.high %v2476, %v2500
    %v5004 = vunpack.c.l.s4 1983009808
    %v5005 = vunpack.c.0.s8 %v5004
    %v5006 = vlaneseq
    %v5007 = vshrl.u32 %v5006, 7
    %v5008 = vsub.s32 %v5005, %v5007
    %v5009 = vrot.slane %v5001, %v5008
    %v5011 = vunpack.c.l.s4 1983009808
    %v5012 = vunpack.c.0.s8 %v5011
    %v5013 = vlaneseq
    %v5014 = vshrl.u32 %v5013, 7
    %v5015 = vsub.s32 %v5012, %v5014
    %v5016 = vrot.slane %v5002, %v5015
    %v5017 = vcombine.low %v4993, %v5009
    %v5018 = vcombine.high %v4993, %v5009
    %v5020 = vunpack.c.l.s4 1934713408
    %v5021 = vunpack.c.0.s8 %v5020
    %v5022 = vlaneseq
    %v5023 = vshrl.u32 %v5022, 7
    %v5024 = vsub.s32 %v5021, %v5023
    %v5025 = vrot.slane %v5017, %v5024
    %v5027 = vunpack.c.l.s4 1934713408
    %v5028 = vunpack.c.0.s8 %v5027
    %v5029 = vlaneseq
    %v5030 = vshrl.u32 %v5029, 7
    %v5031 = vsub.s32 %v5028, %v5030
    %v5032 = vrot.slane %v5018, %v5031
    %v5033 = vcombine.low %v5000, %v5016
    %v5034 = vcombine.high %v5000, %v5016
    %v5036 = vunpack.c.l.s4 1934713408
    %v5037 = vunpack.c.0.s8 %v5036
    %v5038 = vlaneseq
    %v5039 = vshrl.u32 %v5038, 7
    %v5040 = vsub.s32 %v5037, %v5039
    %v5041 = vrot.slane %v5033, %v5040
    %v5043 = vunpack.c.l.s4 1934713408
    %v5044 = vunpack.c.0.s8 %v5043
    %v5045 = vlaneseq
    %v5046 = vshrl.u32 %v5045, 7
    %v5047 = vsub.s32 %v5044, %v5046
    %v5048 = vrot.slane %v5034, %v5047
    %v5049 = vcombine.low %v5025, %v5041
    %v5050 = vcombine.high %v5025, %v5041
    %v5051 = vcombine.low %v5032, %v5048
    %v5052 = vcombine.high %v5032, %v5048
    %v5053 = vcombine.low %v2512, %v2536
    %v5054 = vcombine.high %v2512, %v2536
    %v5056 = vunpack.c.l.s4 1983009808
    %v5057 = vunpack.c.0.s8 %v5056
    %v5058 = vlaneseq
    %v5059 = vshrl.u32 %v5058, 7
    %v5060 = vsub.s32 %v5057, %v5059
    %v5061 = vrot.slane %v5053, %v5060
    %v5063 = vunpack.c.l.s4 1983009808
    %v5064 = vunpack.c.0.s8 %v5063
    %v5065 = vlaneseq
    %v5066 = vshrl.u32 %v5065, 7
    %v5067 = vsub.s32 %v5064, %v5066
    %v5068 = vrot.slane %v5054, %v5067
    %v5069 = vcombine.low %v2524, %v2548
    %v5070 = vcombine.high %v2524, %v2548
    %v5072 = vunpack.c.l.s4 1983009808
    %v5073 = vunpack.c.0.s8 %v5072
    %v5074 = vlaneseq
    %v5075 = vshrl.u32 %v5074, 7
    %v5076 = vsub.s32 %v5073, %v5075
    %v5077 = vrot.slane %v5069, %v5076
    %v5079 = vunpack.c.l.s4 1983009808
    %v5080 = vunpack.c.0.s8 %v5079
    %v5081 = vlaneseq
    %v5082 = vshrl.u32 %v5081, 7
    %v5083 = vsub.s32 %v5080, %v5082
    %v5084 = vrot.slane %v5070, %v5083
    %v5085 = vcombine.low %v5061, %v5077
    %v5086 = vcombine.high %v5061, %v5077
    %v5088 = vunpack.c.l.s4 1934713408
    %v5089 = vunpack.c.0.s8 %v5088
    %v5090 = vlaneseq
    %v5091 = vshrl.u32 %v5090, 7
    %v5092 = vsub.s32 %v5089, %v5091
    %v5093 = vrot.slane %v5085, %v5092
    %v5095 = vunpack.c.l.s4 1934713408
    %v5096 = vunpack.c.0.s8 %v5095
    %v5097 = vlaneseq
    %v5098 = vshrl.u32 %v5097, 7
    %v5099 = vsub.s32 %v5096, %v5098
    %v5100 = vrot.slane %v5086, %v5099
    %v5101 = vcombine.low %v5068, %v5084
    %v5102 = vcombine.high %v5068, %v5084
    %v5104 = vunpack.c.l.s4 1934713408
    %v5105 = vunpack.c.0.s8 %v5104
    %v5106 = vlaneseq
    %v5107 = vshrl.u32 %v5106, 7
    %v5108 = vsub.s32 %v5105, %v5107
    %v5109 = vrot.slane %v5101, %v5108
    %v5111 = vunpack.c.l.s4 1934713408
    %v5112 = vunpack.c.0.s8 %v5111
    %v5113 = vlaneseq
    %v5114 = vshrl.u32 %v5113, 7
    %v5115 = vsub.s32 %v5112, %v5114
    %v5116 = vrot.slane %v5102, %v5115
    %v5117 = vcombine.low %v5093, %v5109
    %v5118 = vcombine.high %v5093, %v5109
    %v5119 = vcombine.low %v5100, %v5116
    %v5120 = vcombine.high %v5100, %v5116
    %v5121 = vcombine.low %v2560, %v2584
    %v5122 = vcombine.high %v2560, %v2584
    %v5124 = vunpack.c.l.s4 1983009808
    %v5125 = vunpack.c.0.s8 %v5124
    %v5126 = vlaneseq
    %v5127 = vshrl.u32 %v5126, 7
    %v5128 = vsub.s32 %v5125, %v5127
    %v5129 = vrot.slane %v5121, %v5128
    %v5131 = vunpack.c.l.s4 1983009808
    %v5132 = vunpack.c.0.s8 %v5131
    %v5133 = vlaneseq
    %v5134 = vshrl.u32 %v5133, 7
    %v5135 = vsub.s32 %v5132, %v5134
    %v5136 = vrot.slane %v5122, %v5135
    %v5137 = vcombine.low %v2572, %v2596
    %v5138 = vcombine.high %v2572, %v2596
    %v5140 = vunpack.c.l.s4 1983009808
    %v5141 = vunpack.c.0.s8 %v5140
    %v5142 = vlaneseq
    %v5143 = vshrl.u32 %v5142, 7
    %v5144 = vsub.s32 %v5141, %v5143
    %v5145 = vrot.slane %v5137, %v5144
    %v5147 = vunpack.c.l.s4 1983009808
    %v5148 = vunpack.c.0.s8 %v5147
    %v5149 = vlaneseq
    %v5150 = vshrl.u32 %v5149, 7
    %v5151 = vsub.s32 %v5148, %v5150
    %v5152 = vrot.slane %v5138, %v5151
    %v5153 = vcombine.low %v5129, %v5145
    %v5154 = vcombine.high %v5129, %v5145
    %v5156 = vunpack.c.l.s4 1934713408
    %v5157 = vunpack.c.0.s8 %v5156
    %v5158 = vlaneseq
    %v5159 = vshrl.u32 %v5158, 7
    %v5160 = vsub.s32 %v5157, %v5159
    %v5161 = vrot.slane %v5153, %v5160
    %v5163 = vunpack.c.l.s4 1934713408
    %v5164 = vunpack.c.0.s8 %v5163
    %v5165 = vlaneseq
    %v5166 = vshrl.u32 %v5165, 7
    %v5167 = vsub.s32 %v5164, %v5166
    %v5168 = vrot.slane %v5154, %v5167
    %v5169 = vcombine.low %v5136, %v5152
    %v5170 = vcombine.high %v5136, %v5152
    %v5172 = vunpack.c.l.s4 1934713408
    %v5173 = vunpack.c.0.s8 %v5172
    %v5174 = vlaneseq
    %v5175 = vshrl.u32 %v5174, 7
    %v5176 = vsub.s32 %v5173, %v5175
    %v5177 = vrot.slane %v5169, %v5176
    %v5179 = vunpack.c.l.s4 1934713408
    %v5180 = vunpack.c.0.s8 %v5179
    %v5181 = vlaneseq
    %v5182 = vshrl.u32 %v5181, 7
    %v5183 = vsub.s32 %v5180, %v5182
    %v5184 = vrot.slane %v5170, %v5183
    %v5185 = vcombine.low %v5161, %v5177
    %v5186 = vcombine.high %v5161, %v5177
    %v5187 = vcombine.low %v5168, %v5184
    %v5188 = vcombine.high %v5168, %v5184
    %v5333 = vrot.slane %v2805, 4
    %v5334 = vrot.slane %v2873, 4
    %v5335 = vrot.slane %v2941, 4
    %v5336 = vrot.slane %v2806, 4
    %v5337 = vrot.slane %v2874, 4
    %v5338 = vrot.slane %v2942, 4
    %v5339 = vrot.slane %v2807, 4
    %v5340 = vrot.slane %v2875, 4
    %v5341 = vrot.slane %v2943, 4
    %v5342 = vrot.slane %v2808, 4
    %v5343 = vrot.slane %v2876, 4
    %v5344 = vrot.slane %v2944, 4
    %v5345 = vrot.slane %v3009, 4
    %v5346 = vrot.slane %v3077, 4
    %v5347 = vrot.slane %v3145, 4
    %v5348 = vrot.slane %v3010, 4
    %v5349 = vrot.slane %v3078, 4
    %v5350 = vrot.slane %v3146, 4
    %v5351 = vrot.slane %v3011, 4
    %v5352 = vrot.slane %v3079, 4
    %v5353 = vrot.slane %v3147, 4
    %v5354 = vrot.slane %v3012, 4
    %v5355 = vrot.slane %v3080, 4
    %v5356 = vrot.slane %v3148, 4
    %v5357 = vrot.slane %v3213, 4
    %v5358 = vrot.slane %v3281, 4
    %v5359 = vrot.slane %v3349, 4
    %v5360 = vrot.slane %v3214, 4
    %v5361 = vrot.slane %v3282, 4
    %v5362 = vrot.slane %v3350, 4
    %v5363 = vrot.slane %v3215, 4
    %v5364 = vrot.slane %v3283, 4
    %v5365 = vrot.slane %v3351, 4
    %v5366 = vrot.slane %v3216, 4
    %v5367 = vrot.slane %v3284, 4
    %v5368 = vrot.slane %v3352, 4
    %v5369 = vrot.slane %v3417, 4
    %v5370 = vrot.slane %v3485, 4
    %v5371 = vrot.slane %v3553, 4
    %v5372 = vrot.slane %v3418, 4
    %v5373 = vrot.slane %v3486, 4
    %v5374 = vrot.slane %v3554, 4
    %v5375 = vrot.slane %v3419, 4
    %v5376 = vrot.slane %v3487, 4
    %v5377 = vrot.slane %v3555, 4
    %v5378 = vrot.slane %v3420, 4
    %v5379 = vrot.slane %v3488, 4
    %v5380 = vrot.slane %v3556, 4
    %v5381 = vrot.slane %v3621, 4
    %v5382 = vrot.slane %v3689, 4
    %v5383 = vrot.slane %v3757, 4
    %v5384 = vrot.slane %v3622, 4
    %v5385 = vrot.slane %v3690, 4
    %v5386 = vrot.slane %v3758, 4
    %v5387 = vrot.slane %v3623, 4
    %v5388 = vrot.slane %v3691, 4
    %v5389 = vrot.slane %v3759, 4
    %v5390 = vrot.slane %v3624, 4
    %v5391 = vrot.slane %v3692, 4
    %v5392 = vrot.slane %v3760, 4
    %v5393 = vrot.slane %v3825, 4
    %v5394 = vrot.slane %v3893, 4
    %v5395 = vrot.slane %v3961, 4
    %v5396 = vrot.slane %v3826, 4
    %v5397 = vrot.slane %v3894, 4
    %v5398 = vrot.slane %v3962, 4
    %v5399 = vrot.slane %v3827, 4
    %v5400 = vrot.slane %v3895, 4
    %v5401 = vrot.slane %v3963, 4
    %v5402 = vrot.slane %v3828, 4
    %v5403 = vrot.slane %v3896, 4
    %v5404 = vrot.slane %v3964, 4
    %v5405 = vrot.slane %v4029, 4
    %v5406 = vrot.slane %v4097, 4
    %v5407 = vrot.slane %v4165, 4
    %v5408 = vrot.slane %v4030, 4
    %v5409 = vrot.slane %v4098, 4
    %v5410 = vrot.slane %v4166, 4
    %v5411 = vrot.slane %v4031, 4
    %v5412 = vrot.slane %v4099, 4
    %v5413 = vrot.slane %v4167, 4
    %v5414 = vrot.slane %v4032, 4
    %v5415 = vrot.slane %v4100, 4
    %v5416 = vrot.slane %v4168, 4
    %v5417 = vrot.slane %v4233, 4
    %v5418 = vrot.slane %v4301, 4
    %v5419 = vrot.slane %v4369, 4
    %v5420 = vrot.slane %v4234, 4
    %v5421 = vrot.slane %v4302, 4
    %v5422 = vrot.slane %v4370, 4
    %v5423 = vrot.slane %v4235, 4
    %v5424 = vrot.slane %v4303, 4
    %v5425 = vrot.slane %v4371, 4
    %v5426 = vrot.slane %v4236, 4
    %v5427 = vrot.slane %v4304, 4
    %v5428 = vrot.slane %v4372, 4
    %v5429 = vrot.slane %v4437, 4
    %v5430 = vrot.slane %v4505, 4
    %v5431 = vrot.slane %v4573, 4
    %v5432 = vrot.slane %v4438, 4
    %v5433 = vrot.slane %v4506, 4
    %v5434 = vrot.slane %v4574, 4
    %v5435 = vrot.slane %v4439, 4
    %v5436 = vrot.slane %v4507, 4
    %v5437 = vrot.slane %v4575, 4
    %v5438 = vrot.slane %v4440, 4
    %v5439 = vrot.slane %v4508, 4
    %v5440 = vrot.slane %v4576, 4
    %v5441 = vrot.slane %v4641, 4
    %v5442 = vrot.slane %v4709, 4
    %v5443 = vrot.slane %v4777, 4
    %v5444 = vrot.slane %v4642, 4
    %v5445 = vrot.slane %v4710, 4
    %v5446 = vrot.slane %v4778, 4
    %v5447 = vrot.slane %v4643, 4
    %v5448 = vrot.slane %v4711, 4
    %v5449 = vrot.slane %v4779, 4
    %v5450 = vrot.slane %v4644, 4
    %v5451 = vrot.slane %v4712, 4
    %v5452 = vrot.slane %v4780, 4
    %v5453 = vrot.slane %v4845, 4
    %v5454 = vrot.slane %v4913, 4
    %v5455 = vrot.slane %v4981, 4
    %v5456 = vrot.slane %v4846, 4
    %v5457 = vrot.slane %v4914, 4
    %v5458 = vrot.slane %v4982, 4
    %v5459 = vrot.slane %v4847, 4
    %v5460 = vrot.slane %v4915, 4
    %v5461 = vrot.slane %v4983, 4
    %v5462 = vrot.slane %v4848, 4
    %v5463 = vrot.slane %v4916, 4
    %v5464 = vrot.slane %v4984, 4
    %v5465 = vrot.slane %v5049, 4
    %v5466 = vrot.slane %v5117, 4
    %v5467 = vrot.slane %v5185, 4
    %v5468 = vrot.slane %v5050, 4
    %v5469 = vrot.slane %v5118, 4
    %v5470 = vrot.slane %v5186, 4
    %v5471 = vrot.slane %v5051, 4
    %v5472 = vrot.slane %v5119, 4
    %v5473 = vrot.slane %v5187, 4
    %v5474 = vrot.slane %v5052, 4
    %v5475 = vrot.slane %v5120, 4
    %v5476 = vrot.slane %v5188, 4
    %v5621 = vmax.f32 %v2805, %v5333
    %v5622 = vmax.f32 %v2873, %v5334
    %v5623 = vmax.f32 %v2941, %v5335
    %v5624 = vmax.f32 %v2806, %v5336
    %v5625 = vmax.f32 %v2874, %v5337
    %v5626 = vmax.f32 %v2942, %v5338
    %v5627 = vmax.f32 %v2807, %v5339
    %v5628 = vmax.f32 %v2875, %v5340
    %v5629 = vmax.f32 %v2943, %v5341
    %v5630 = vmax.f32 %v2808, %v5342
    %v5631 = vmax.f32 %v2876, %v5343
    %v5632 = vmax.f32 %v2944, %v5344
    %v5633 = vmax.f32 %v3009, %v5345
    %v5634 = vmax.f32 %v3077, %v5346
    %v5635 = vmax.f32 %v3145, %v5347
    %v5636 = vmax.f32 %v3010, %v5348
    %v5637 = vmax.f32 %v3078, %v5349
    %v5638 = vmax.f32 %v3146, %v5350
    %v5639 = vmax.f32 %v3011, %v5351
    %v5640 = vmax.f32 %v3079, %v5352
    %v5641 = vmax.f32 %v3147, %v5353
    %v5642 = vmax.f32 %v3012, %v5354
    %v5643 = vmax.f32 %v3080, %v5355
    %v5644 = vmax.f32 %v3148, %v5356
    %v5645 = vmax.f32 %v3213, %v5357
    %v5646 = vmax.f32 %v3281, %v5358
    %v5647 = vmax.f32 %v3349, %v5359
    %v5648 = vmax.f32 %v3214, %v5360
    %v5649 = vmax.f32 %v3282, %v5361
    %v5650 = vmax.f32 %v3350, %v5362
    %v5651 = vmax.f32 %v3215, %v5363
    %v5652 = vmax.f32 %v3283, %v5364
    %v5653 = vmax.f32 %v3351, %v5365
    %v5654 = vmax.f32 %v3216, %v5366
    %v5655 = vmax.f32 %v3284, %v5367
    %v5656 = vmax.f32 %v3352, %v5368
    %v5657 = vmax.f32 %v3417, %v5369
    %v5658 = vmax.f32 %v3485, %v5370
    %v5659 = vmax.f32 %v3553, %v5371
    %v5660 = vmax.f32 %v3418, %v5372
    %v5661 = vmax.f32 %v3486, %v5373
    %v5662 = vmax.f32 %v3554, %v5374
    %v5663 = vmax.f32 %v3419, %v5375
    %v5664 = vmax.f32 %v3487, %v5376
    %v5665 = vmax.f32 %v3555, %v5377
    %v5666 = vmax.f32 %v3420, %v5378
    %v5667 = vmax.f32 %v3488, %v5379
    %v5668 = vmax.f32 %v3556, %v5380
    %v5669 = vmax.f32 %v3621, %v5381
    %v5670 = vmax.f32 %v3689, %v5382
    %v5671 = vmax.f32 %v3757, %v5383
    %v5672 = vmax.f32 %v3622, %v5384
    %v5673 = vmax.f32 %v3690, %v5385
    %v5674 = vmax.f32 %v3758, %v5386
    %v5675 = vmax.f32 %v3623, %v5387
    %v5676 = vmax.f32 %v3691, %v5388
    %v5677 = vmax.f32 %v3759, %v5389
    %v5678 = vmax.f32 %v3624, %v5390
    %v5679 = vmax.f32 %v3692, %v5391
    %v5680 = vmax.f32 %v3760, %v5392
    %v5681 = vmax.f32 %v3825, %v5393
    %v5682 = vmax.f32 %v3893, %v5394
    %v5683 = vmax.f32 %v3961, %v5395
    %v5684 = vmax.f32 %v3826, %v5396
    %v5685 = vmax.f32 %v3894, %v5397
    %v5686 = vmax.f32 %v3962, %v5398
    %v5687 = vmax.f32 %v3827, %v5399
    %v5688 = vmax.f32 %v3895, %v5400
    %v5689 = vmax.f32 %v3963, %v5401
    %v5690 = vmax.f32 %v3828, %v5402
    %v5691 = vmax.f32 %v3896, %v5403
    %v5692 = vmax.f32 %v3964, %v5404
    %v5693 = vmax.f32 %v4029, %v5405
    %v5694 = vmax.f32 %v4097, %v5406
    %v5695 = vmax.f32 %v4165, %v5407
    %v5696 = vmax.f32 %v4030, %v5408
    %v5697 = vmax.f32 %v4098, %v5409
    %v5698 = vmax.f32 %v4166, %v5410
    %v5699 = vmax.f32 %v4031, %v5411
    %v5700 = vmax.f32 %v4099, %v5412
    %v5701 = vmax.f32 %v4167, %v5413
    %v5702 = vmax.f32 %v4032, %v5414
    %v5703 = vmax.f32 %v4100, %v5415
    %v5704 = vmax.f32 %v4168, %v5416
    %v5705 = vmax.f32 %v4233, %v5417
    %v5706 = vmax.f32 %v4301, %v5418
    %v5707 = vmax.f32 %v4369, %v5419
    %v5708 = vmax.f32 %v4234, %v5420
    %v5709 = vmax.f32 %v4302, %v5421
    %v5710 = vmax.f32 %v4370, %v5422
    %v5711 = vmax.f32 %v4235, %v5423
    %v5712 = vmax.f32 %v4303, %v5424
    %v5713 = vmax.f32 %v4371, %v5425
    %v5714 = vmax.f32 %v4236, %v5426
    %v5715 = vmax.f32 %v4304, %v5427
    %v5716 = vmax.f32 %v4372, %v5428
    %v5717 = vmax.f32 %v4437, %v5429
    %v5718 = vmax.f32 %v4505, %v5430
    %v5719 = vmax.f32 %v4573, %v5431
    %v5720 = vmax.f32 %v4438, %v5432
    %v5721 = vmax.f32 %v4506, %v5433
    %v5722 = vmax.f32 %v4574, %v5434
    %v5723 = vmax.f32 %v4439, %v5435
    %v5724 = vmax.f32 %v4507, %v5436
    %v5725 = vmax.f32 %v4575, %v5437
    %v5726 = vmax.f32 %v4440, %v5438
    %v5727 = vmax.f32 %v4508, %v5439
    %v5728 = vmax.f32 %v4576, %v5440
    %v5729 = vmax.f32 %v4641, %v5441
    %v5730 = vmax.f32 %v4709, %v5442
    %v5731 = vmax.f32 %v4777, %v5443
    %v5732 = vmax.f32 %v4642, %v5444
    %v5733 = vmax.f32 %v4710, %v5445
    %v5734 = vmax.f32 %v4778, %v5446
    %v5735 = vmax.f32 %v4643, %v5447
    %v5736 = vmax.f32 %v4711, %v5448
    %v5737 = vmax.f32 %v4779, %v5449
    %v5738 = vmax.f32 %v4644, %v5450
    %v5739 = vmax.f32 %v4712, %v5451
    %v5740 = vmax.f32 %v4780, %v5452
    %v5741 = vmax.f32 %v4845, %v5453
    %v5742 = vmax.f32 %v4913, %v5454
    %v5743 = vmax.f32 %v4981, %v5455
    %v5744 = vmax.f32 %v4846, %v5456
    %v5745 = vmax.f32 %v4914, %v5457
    %v5746 = vmax.f32 %v4982, %v5458
    %v5747 = vmax.f32 %v4847, %v5459
    %v5748 = vmax.f32 %v4915, %v5460
    %v5749 = vmax.f32 %v4983, %v5461
    %v5750 = vmax.f32 %v4848, %v5462
    %v5751 = vmax.f32 %v4916, %v5463
    %v5752 = vmax.f32 %v4984, %v5464
    %v5753 = vmax.f32 %v5049, %v5465
    %v5754 = vmax.f32 %v5117, %v5466
    %v5755 = vmax.f32 %v5185, %v5467
    %v5756 = vmax.f32 %v5050, %v5468
    %v5757 = vmax.f32 %v5118, %v5469
    %v5758 = vmax.f32 %v5186, %v5470
    %v5759 = vmax.f32 %v5051, %v5471
    %v5760 = vmax.f32 %v5119, %v5472
    %v5761 = vmax.f32 %v5187, %v5473
    %v5762 = vmax.f32 %v5052, %v5474
    %v5763 = vmax.f32 %v5120, %v5475
    %v5764 = vmax.f32 %v5188, %v5476
    %v5765 = vmax.f32 %v5621, %v5624
    %v5766 = vmax.f32 %v5622, %v5625
    %v5767 = vmax.f32 %v5623, %v5626
    %v5768 = vmax.f32 %v5627, %v5630
    %v5769 = vmax.f32 %v5628, %v5631
    %v5770 = vmax.f32 %v5629, %v5632
    %v5771 = vmax.f32 %v5633, %v5636
    %v5772 = vmax.f32 %v5634, %v5637
    %v5773 = vmax.f32 %v5635, %v5638
    %v5774 = vmax.f32 %v5639, %v5642
    %v5775 = vmax.f32 %v5640, %v5643
    %v5776 = vmax.f32 %v5641, %v5644
    %v5777 = vmax.f32 %v5645, %v5648
    %v5778 = vmax.f32 %v5646, %v5649
    %v5779 = vmax.f32 %v5647, %v5650
    %v5780 = vmax.f32 %v5651, %v5654
    %v5781 = vmax.f32 %v5652, %v5655
    %v5782 = vmax.f32 %v5653, %v5656
    %v5783 = vmax.f32 %v5657, %v5660
    %v5784 = vmax.f32 %v5658, %v5661
    %v5785 = vmax.f32 %v5659, %v5662
    %v5786 = vmax.f32 %v5663, %v5666
    %v5787 = vmax.f32 %v5664, %v5667
    %v5788 = vmax.f32 %v5665, %v5668
    %v5789 = vmax.f32 %v5669, %v5672
    %v5790 = vmax.f32 %v5670, %v5673
    %v5791 = vmax.f32 %v5671, %v5674
    %v5792 = vmax.f32 %v5675, %v5678
    %v5793 = vmax.f32 %v5676, %v5679
    %v5794 = vmax.f32 %v5677, %v5680
    %v5795 = vmax.f32 %v5681, %v5684
    %v5796 = vmax.f32 %v5682, %v5685
    %v5797 = vmax.f32 %v5683, %v5686
    %v5798 = vmax.f32 %v5687, %v5690
    %v5799 = vmax.f32 %v5688, %v5691
    %v5800 = vmax.f32 %v5689, %v5692
    %v5801 = vmax.f32 %v5693, %v5696
    %v5802 = vmax.f32 %v5694, %v5697
    %v5803 = vmax.f32 %v5695, %v5698
    %v5804 = vmax.f32 %v5699, %v5702
    %v5805 = vmax.f32 %v5700, %v5703
    %v5806 = vmax.f32 %v5701, %v5704
    %v5807 = vmax.f32 %v5705, %v5708
    %v5808 = vmax.f32 %v5706, %v5709
    %v5809 = vmax.f32 %v5707, %v5710
    %v5810 = vmax.f32 %v5711, %v5714
    %v5811 = vmax.f32 %v5712, %v5715
    %v5812 = vmax.f32 %v5713, %v5716
    %v5813 = vmax.f32 %v5717, %v5720
    %v5814 = vmax.f32 %v5718, %v5721
    %v5815 = vmax.f32 %v5719, %v5722
    %v5816 = vmax.f32 %v5723, %v5726
    %v5817 = vmax.f32 %v5724, %v5727
    %v5818 = vmax.f32 %v5725, %v5728
    %v5819 = vmax.f32 %v5729, %v5732
    %v5820 = vmax.f32 %v5730, %v5733
    %v5821 = vmax.f32 %v5731, %v5734
    %v5822 = vmax.f32 %v5735, %v5738
    %v5823 = vmax.f32 %v5736, %v5739
    %v5824 = vmax.f32 %v5737, %v5740
    %v5825 = vmax.f32 %v5741, %v5744
    %v5826 = vmax.f32 %v5742, %v5745
    %v5827 = vmax.f32 %v5743, %v5746
    %v5828 = vmax.f32 %v5747, %v5750
    %v5829 = vmax.f32 %v5748, %v5751
    %v5830 = vmax.f32 %v5749, %v5752
    %v5831 = vmax.f32 %v5753, %v5756
    %v5832 = vmax.f32 %v5754, %v5757
    %v5833 = vmax.f32 %v5755, %v5758
    %v5834 = vmax.f32 %v5759, %v5762
    %v5835 = vmax.f32 %v5760, %v5763
    %v5836 = vmax.f32 %v5761, %v5764
    %v5898 = vunpack.c.l.s4 1983009808
    %v5899 = vunpack.c.0.s8 %v5898
    %v5900 = vlaneseq
    %v5901 = vshrl.u32 %v5900, 7
    %v5902 = vsub.s32 %v5899, %v5901
    %v5903 = vrot.slane %v5765, %v5902
    %v5904 = vcombine.high %v5903, %v5903
    %v5906 = vunpack.c.l.s4 1983009808
    %v5907 = vunpack.c.0.s8 %v5906
    %v5908 = vlaneseq
    %v5909 = vshrl.u32 %v5908, 7
    %v5910 = vsub.s32 %v5907, %v5909
    %v5911 = vrot.slane %v5766, %v5910
    %v5912 = vcombine.high %v5911, %v5911
    %v5914 = vunpack.c.l.s4 1983009808
    %v5915 = vunpack.c.0.s8 %v5914
    %v5916 = vlaneseq
    %v5917 = vshrl.u32 %v5916, 7
    %v5918 = vsub.s32 %v5915, %v5917
    %v5919 = vrot.slane %v5767, %v5918
    %v5921 = vunpack.c.l.s4 1983009808
    %v5922 = vunpack.c.0.s8 %v5921
    %v5923 = vlaneseq
    %v5924 = vshrl.u32 %v5923, 7
    %v5925 = vsub.s32 %v5922, %v5924
    %v5926 = vrot.slane %v5768, %v5925
    %v5927 = vcombine.high %v5926, %v5926
    %v5929 = vunpack.c.l.s4 1983009808
    %v5930 = vunpack.c.0.s8 %v5929
    %v5931 = vlaneseq
    %v5932 = vshrl.u32 %v5931, 7
    %v5933 = vsub.s32 %v5930, %v5932
    %v5934 = vrot.slane %v5769, %v5933
    %v5935 = vcombine.high %v5934, %v5934
    %v5937 = vunpack.c.l.s4 1983009808
    %v5938 = vunpack.c.0.s8 %v5937
    %v5939 = vlaneseq
    %v5940 = vshrl.u32 %v5939, 7
    %v5941 = vsub.s32 %v5938, %v5940
    %v5942 = vrot.slane %v5770, %v5941
    %v5944 = vunpack.c.l.s4 1983009808
    %v5945 = vunpack.c.0.s8 %v5944
    %v5946 = vlaneseq
    %v5947 = vshrl.u32 %v5946, 7
    %v5948 = vsub.s32 %v5945, %v5947
    %v5949 = vrot.slane %v5771, %v5948
    %v5950 = vcombine.high %v5949, %v5949
    %v5952 = vunpack.c.l.s4 1983009808
    %v5953 = vunpack.c.0.s8 %v5952
    %v5954 = vlaneseq
    %v5955 = vshrl.u32 %v5954, 7
    %v5956 = vsub.s32 %v5953, %v5955
    %v5957 = vrot.slane %v5772, %v5956
    %v5958 = vcombine.high %v5957, %v5957
    %v5960 = vunpack.c.l.s4 1983009808
    %v5961 = vunpack.c.0.s8 %v5960
    %v5962 = vlaneseq
    %v5963 = vshrl.u32 %v5962, 7
    %v5964 = vsub.s32 %v5961, %v5963
    %v5965 = vrot.slane %v5773, %v5964
    %v5967 = vunpack.c.l.s4 1983009808
    %v5968 = vunpack.c.0.s8 %v5967
    %v5969 = vlaneseq
    %v5970 = vshrl.u32 %v5969, 7
    %v5971 = vsub.s32 %v5968, %v5970
    %v5972 = vrot.slane %v5774, %v5971
    %v5973 = vcombine.high %v5972, %v5972
    %v5975 = vunpack.c.l.s4 1983009808
    %v5976 = vunpack.c.0.s8 %v5975
    %v5977 = vlaneseq
    %v5978 = vshrl.u32 %v5977, 7
    %v5979 = vsub.s32 %v5976, %v5978
    %v5980 = vrot.slane %v5775, %v5979
    %v5981 = vcombine.high %v5980, %v5980
    %v5983 = vunpack.c.l.s4 1983009808
    %v5984 = vunpack.c.0.s8 %v5983
    %v5985 = vlaneseq
    %v5986 = vshrl.u32 %v5985, 7
    %v5987 = vsub.s32 %v5984, %v5986
    %v5988 = vrot.slane %v5776, %v5987
    %v5990 = vunpack.c.l.s4 1983009808
    %v5991 = vunpack.c.0.s8 %v5990
    %v5992 = vlaneseq
    %v5993 = vshrl.u32 %v5992, 7
    %v5994 = vsub.s32 %v5991, %v5993
    %v5995 = vrot.slane %v5777, %v5994
    %v5996 = vcombine.high %v5995, %v5995
    %v5998 = vunpack.c.l.s4 1983009808
    %v5999 = vunpack.c.0.s8 %v5998
    %v6000 = vlaneseq
    %v6001 = vshrl.u32 %v6000, 7
    %v6002 = vsub.s32 %v5999, %v6001
    %v6003 = vrot.slane %v5778, %v6002
    %v6004 = vcombine.high %v6003, %v6003
    %v6006 = vunpack.c.l.s4 1983009808
    %v6007 = vunpack.c.0.s8 %v6006
    %v6008 = vlaneseq
    %v6009 = vshrl.u32 %v6008, 7
    %v6010 = vsub.s32 %v6007, %v6009
    %v6011 = vrot.slane %v5779, %v6010
    %v6013 = vunpack.c.l.s4 1983009808
    %v6014 = vunpack.c.0.s8 %v6013
    %v6015 = vlaneseq
    %v6016 = vshrl.u32 %v6015, 7
    %v6017 = vsub.s32 %v6014, %v6016
    %v6018 = vrot.slane %v5780, %v6017
    %v6019 = vcombine.high %v6018, %v6018
    %v6021 = vunpack.c.l.s4 1983009808
    %v6022 = vunpack.c.0.s8 %v6021
    %v6023 = vlaneseq
    %v6024 = vshrl.u32 %v6023, 7
    %v6025 = vsub.s32 %v6022, %v6024
    %v6026 = vrot.slane %v5781, %v6025
    %v6027 = vcombine.high %v6026, %v6026
    %v6029 = vunpack.c.l.s4 1983009808
    %v6030 = vunpack.c.0.s8 %v6029
    %v6031 = vlaneseq
    %v6032 = vshrl.u32 %v6031, 7
    %v6033 = vsub.s32 %v6030, %v6032
    %v6034 = vrot.slane %v5782, %v6033
    %v6036 = vunpack.c.l.s4 1983009808
    %v6037 = vunpack.c.0.s8 %v6036
    %v6038 = vlaneseq
    %v6039 = vshrl.u32 %v6038, 7
    %v6040 = vsub.s32 %v6037, %v6039
    %v6041 = vrot.slane %v5783, %v6040
    %v6042 = vcombine.high %v6041, %v6041
    %v6044 = vunpack.c.l.s4 1983009808
    %v6045 = vunpack.c.0.s8 %v6044
    %v6046 = vlaneseq
    %v6047 = vshrl.u32 %v6046, 7
    %v6048 = vsub.s32 %v6045, %v6047
    %v6049 = vrot.slane %v5784, %v6048
    %v6050 = vcombine.high %v6049, %v6049
    %v6052 = vunpack.c.l.s4 1983009808
    %v6053 = vunpack.c.0.s8 %v6052
    %v6054 = vlaneseq
    %v6055 = vshrl.u32 %v6054, 7
    %v6056 = vsub.s32 %v6053, %v6055
    %v6057 = vrot.slane %v5785, %v6056
    %v6059 = vunpack.c.l.s4 1983009808
    %v6060 = vunpack.c.0.s8 %v6059
    %v6061 = vlaneseq
    %v6062 = vshrl.u32 %v6061, 7
    %v6063 = vsub.s32 %v6060, %v6062
    %v6064 = vrot.slane %v5786, %v6063
    %v6065 = vcombine.high %v6064, %v6064
    %v6067 = vunpack.c.l.s4 1983009808
    %v6068 = vunpack.c.0.s8 %v6067
    %v6069 = vlaneseq
    %v6070 = vshrl.u32 %v6069, 7
    %v6071 = vsub.s32 %v6068, %v6070
    %v6072 = vrot.slane %v5787, %v6071
    %v6073 = vcombine.high %v6072, %v6072
    %v6075 = vunpack.c.l.s4 1983009808
    %v6076 = vunpack.c.0.s8 %v6075
    %v6077 = vlaneseq
    %v6078 = vshrl.u32 %v6077, 7
    %v6079 = vsub.s32 %v6076, %v6078
    %v6080 = vrot.slane %v5788, %v6079
    %v6082 = vunpack.c.l.s4 1983009808
    %v6083 = vunpack.c.0.s8 %v6082
    %v6084 = vlaneseq
    %v6085 = vshrl.u32 %v6084, 7
    %v6086 = vsub.s32 %v6083, %v6085
    %v6087 = vrot.slane %v5789, %v6086
    %v6088 = vcombine.high %v6087, %v6087
    %v6090 = vunpack.c.l.s4 1983009808
    %v6091 = vunpack.c.0.s8 %v6090
    %v6092 = vlaneseq
    %v6093 = vshrl.u32 %v6092, 7
    %v6094 = vsub.s32 %v6091, %v6093
    %v6095 = vrot.slane %v5790, %v6094
    %v6096 = vcombine.high %v6095, %v6095
    %v6098 = vunpack.c.l.s4 1983009808
    %v6099 = vunpack.c.0.s8 %v6098
    %v6100 = vlaneseq
    %v6101 = vshrl.u32 %v6100, 7
    %v6102 = vsub.s32 %v6099, %v6101
    %v6103 = vrot.slane %v5791, %v6102
    %v6105 = vunpack.c.l.s4 1983009808
    %v6106 = vunpack.c.0.s8 %v6105
    %v6107 = vlaneseq
    %v6108 = vshrl.u32 %v6107, 7
    %v6109 = vsub.s32 %v6106, %v6108
    %v6110 = vrot.slane %v5792, %v6109
    %v6111 = vcombine.high %v6110, %v6110
    %v6113 = vunpack.c.l.s4 1983009808
    %v6114 = vunpack.c.0.s8 %v6113
    %v6115 = vlaneseq
    %v6116 = vshrl.u32 %v6115, 7
    %v6117 = vsub.s32 %v6114, %v6116
    %v6118 = vrot.slane %v5793, %v6117
    %v6119 = vcombine.high %v6118, %v6118
    %v6121 = vunpack.c.l.s4 1983009808
    %v6122 = vunpack.c.0.s8 %v6121
    %v6123 = vlaneseq
    %v6124 = vshrl.u32 %v6123, 7
    %v6125 = vsub.s32 %v6122, %v6124
    %v6126 = vrot.slane %v5794, %v6125
    %v6128 = vunpack.c.l.s4 1983009808
    %v6129 = vunpack.c.0.s8 %v6128
    %v6130 = vlaneseq
    %v6131 = vshrl.u32 %v6130, 7
    %v6132 = vsub.s32 %v6129, %v6131
    %v6133 = vrot.slane %v5801, %v6132
    %v6134 = vcombine.high %v6133, %v6133
    %v6136 = vunpack.c.l.s4 1983009808
    %v6137 = vunpack.c.0.s8 %v6136
    %v6138 = vlaneseq
    %v6139 = vshrl.u32 %v6138, 7
    %v6140 = vsub.s32 %v6137, %v6139
    %v6141 = vrot.slane %v5802, %v6140
    %v6142 = vcombine.high %v6141, %v6141
    %v6144 = vunpack.c.l.s4 1983009808
    %v6145 = vunpack.c.0.s8 %v6144
    %v6146 = vlaneseq
    %v6147 = vshrl.u32 %v6146, 7
    %v6148 = vsub.s32 %v6145, %v6147
    %v6149 = vrot.slane %v5803, %v6148
    %v6151 = vunpack.c.l.s4 1983009808
    %v6152 = vunpack.c.0.s8 %v6151
    %v6153 = vlaneseq
    %v6154 = vshrl.u32 %v6153, 7
    %v6155 = vsub.s32 %v6152, %v6154
    %v6156 = vrot.slane %v5804, %v6155
    %v6157 = vcombine.high %v6156, %v6156
    %v6159 = vunpack.c.l.s4 1983009808
    %v6160 = vunpack.c.0.s8 %v6159
    %v6161 = vlaneseq
    %v6162 = vshrl.u32 %v6161, 7
    %v6163 = vsub.s32 %v6160, %v6162
    %v6164 = vrot.slane %v5805, %v6163
    %v6165 = vcombine.high %v6164, %v6164
    %v6167 = vunpack.c.l.s4 1983009808
    %v6168 = vunpack.c.0.s8 %v6167
    %v6169 = vlaneseq
    %v6170 = vshrl.u32 %v6169, 7
    %v6171 = vsub.s32 %v6168, %v6170
    %v6172 = vrot.slane %v5806, %v6171
    %v6174 = vunpack.c.l.s4 1983009808
    %v6175 = vunpack.c.0.s8 %v6174
    %v6176 = vlaneseq
    %v6177 = vshrl.u32 %v6176, 7
    %v6178 = vsub.s32 %v6175, %v6177
    %v6179 = vrot.slane %v5807, %v6178
    %v6180 = vcombine.high %v6179, %v6179
    %v6182 = vunpack.c.l.s4 1983009808
    %v6183 = vunpack.c.0.s8 %v6182
    %v6184 = vlaneseq
    %v6185 = vshrl.u32 %v6184, 7
    %v6186 = vsub.s32 %v6183, %v6185
    %v6187 = vrot.slane %v5808, %v6186
    %v6188 = vcombine.high %v6187, %v6187
    %v6190 = vunpack.c.l.s4 1983009808
    %v6191 = vunpack.c.0.s8 %v6190
    %v6192 = vlaneseq
    %v6193 = vshrl.u32 %v6192, 7
    %v6194 = vsub.s32 %v6191, %v6193
    %v6195 = vrot.slane %v5809, %v6194
    %v6197 = vunpack.c.l.s4 1983009808
    %v6198 = vunpack.c.0.s8 %v6197
    %v6199 = vlaneseq
    %v6200 = vshrl.u32 %v6199, 7
    %v6201 = vsub.s32 %v6198, %v6200
    %v6202 = vrot.slane %v5810, %v6201
    %v6203 = vcombine.high %v6202, %v6202
    %v6205 = vunpack.c.l.s4 1983009808
    %v6206 = vunpack.c.0.s8 %v6205
    %v6207 = vlaneseq
    %v6208 = vshrl.u32 %v6207, 7
    %v6209 = vsub.s32 %v6206, %v6208
    %v6210 = vrot.slane %v5811, %v6209
    %v6211 = vcombine.high %v6210, %v6210
    %v6213 = vunpack.c.l.s4 1983009808
    %v6214 = vunpack.c.0.s8 %v6213
    %v6215 = vlaneseq
    %v6216 = vshrl.u32 %v6215, 7
    %v6217 = vsub.s32 %v6214, %v6216
    %v6218 = vrot.slane %v5812, %v6217
    %v6220 = vunpack.c.l.s4 1983009808
    %v6221 = vunpack.c.0.s8 %v6220
    %v6222 = vlaneseq
    %v6223 = vshrl.u32 %v6222, 7
    %v6224 = vsub.s32 %v6221, %v6223
    %v6225 = vrot.slane %v5813, %v6224
    %v6226 = vcombine.high %v6225, %v6225
    %v6228 = vunpack.c.l.s4 1983009808
    %v6229 = vunpack.c.0.s8 %v6228
    %v6230 = vlaneseq
    %v6231 = vshrl.u32 %v6230, 7
    %v6232 = vsub.s32 %v6229, %v6231
    %v6233 = vrot.slane %v5814, %v6232
    %v6234 = vcombine.high %v6233, %v6233
    %v6236 = vunpack.c.l.s4 1983009808
    %v6237 = vunpack.c.0.s8 %v6236
    %v6238 = vlaneseq
    %v6239 = vshrl.u32 %v6238, 7
    %v6240 = vsub.s32 %v6237, %v6239
    %v6241 = vrot.slane %v5815, %v6240
    %v6243 = vunpack.c.l.s4 1983009808
    %v6244 = vunpack.c.0.s8 %v6243
    %v6245 = vlaneseq
    %v6246 = vshrl.u32 %v6245, 7
    %v6247 = vsub.s32 %v6244, %v6246
    %v6248 = vrot.slane %v5816, %v6247
    %v6249 = vcombine.high %v6248, %v6248
    %v6251 = vunpack.c.l.s4 1983009808
    %v6252 = vunpack.c.0.s8 %v6251
    %v6253 = vlaneseq
    %v6254 = vshrl.u32 %v6253, 7
    %v6255 = vsub.s32 %v6252, %v6254
    %v6256 = vrot.slane %v5817, %v6255
    %v6257 = vcombine.high %v6256, %v6256
    %v6259 = vunpack.c.l.s4 1983009808
    %v6260 = vunpack.c.0.s8 %v6259
    %v6261 = vlaneseq
    %v6262 = vshrl.u32 %v6261, 7
    %v6263 = vsub.s32 %v6260, %v6262
    %v6264 = vrot.slane %v5818, %v6263
    %v6266 = vunpack.c.l.s4 1983009808
    %v6267 = vunpack.c.0.s8 %v6266
    %v6268 = vlaneseq
    %v6269 = vshrl.u32 %v6268, 7
    %v6270 = vsub.s32 %v6267, %v6269
    %v6271 = vrot.slane %v5819, %v6270
    %v6272 = vcombine.high %v6271, %v6271
    %v6274 = vunpack.c.l.s4 1983009808
    %v6275 = vunpack.c.0.s8 %v6274
    %v6276 = vlaneseq
    %v6277 = vshrl.u32 %v6276, 7
    %v6278 = vsub.s32 %v6275, %v6277
    %v6279 = vrot.slane %v5820, %v6278
    %v6280 = vcombine.high %v6279, %v6279
    %v6282 = vunpack.c.l.s4 1983009808
    %v6283 = vunpack.c.0.s8 %v6282
    %v6284 = vlaneseq
    %v6285 = vshrl.u32 %v6284, 7
    %v6286 = vsub.s32 %v6283, %v6285
    %v6287 = vrot.slane %v5821, %v6286
    %v6289 = vunpack.c.l.s4 1983009808
    %v6290 = vunpack.c.0.s8 %v6289
    %v6291 = vlaneseq
    %v6292 = vshrl.u32 %v6291, 7
    %v6293 = vsub.s32 %v6290, %v6292
    %v6294 = vrot.slane %v5822, %v6293
    %v6295 = vcombine.high %v6294, %v6294
    %v6297 = vunpack.c.l.s4 1983009808
    %v6298 = vunpack.c.0.s8 %v6297
    %v6299 = vlaneseq
    %v6300 = vshrl.u32 %v6299, 7
    %v6301 = vsub.s32 %v6298, %v6300
    %v6302 = vrot.slane %v5823, %v6301
    %v6303 = vcombine.high %v6302, %v6302
    %v6305 = vunpack.c.l.s4 1983009808
    %v6306 = vunpack.c.0.s8 %v6305
    %v6307 = vlaneseq
    %v6308 = vshrl.u32 %v6307, 7
    %v6309 = vsub.s32 %v6306, %v6308
    %v6310 = vrot.slane %v5824, %v6309
    %v6312 = vunpack.c.l.s4 1983009808
    %v6313 = vunpack.c.0.s8 %v6312
    %v6314 = vlaneseq
    %v6315 = vshrl.u32 %v6314, 7
    %v6316 = vsub.s32 %v6313, %v6315
    %v6317 = vrot.slane %v5825, %v6316
    %v6318 = vcombine.high %v6317, %v6317
    %v6320 = vunpack.c.l.s4 1983009808
    %v6321 = vunpack.c.0.s8 %v6320
    %v6322 = vlaneseq
    %v6323 = vshrl.u32 %v6322, 7
    %v6324 = vsub.s32 %v6321, %v6323
    %v6325 = vrot.slane %v5826, %v6324
    %v6326 = vcombine.high %v6325, %v6325
    %v6328 = vunpack.c.l.s4 1983009808
    %v6329 = vunpack.c.0.s8 %v6328
    %v6330 = vlaneseq
    %v6331 = vshrl.u32 %v6330, 7
    %v6332 = vsub.s32 %v6329, %v6331
    %v6333 = vrot.slane %v5827, %v6332
    %v6335 = vunpack.c.l.s4 1983009808
    %v6336 = vunpack.c.0.s8 %v6335
    %v6337 = vlaneseq
    %v6338 = vshrl.u32 %v6337, 7
    %v6339 = vsub.s32 %v6336, %v6338
    %v6340 = vrot.slane %v5828, %v6339
    %v6341 = vcombine.high %v6340, %v6340
    %v6343 = vunpack.c.l.s4 1983009808
    %v6344 = vunpack.c.0.s8 %v6343
    %v6345 = vlaneseq
    %v6346 = vshrl.u32 %v6345, 7
    %v6347 = vsub.s32 %v6344, %v6346
    %v6348 = vrot.slane %v5829, %v6347
    %v6349 = vcombine.high %v6348, %v6348
    %v6351 = vunpack.c.l.s4 1983009808
    %v6352 = vunpack.c.0.s8 %v6351
    %v6353 = vlaneseq
    %v6354 = vshrl.u32 %v6353, 7
    %v6355 = vsub.s32 %v6352, %v6354
    %v6356 = vrot.slane %v5830, %v6355
    %v6357 = vcombine.high %v5919, %v5919
    %v6358 = vcombine.high %v5942, %v5942
    %v6359 = vcombine.high %v5965, %v5965
    %v6360 = vcombine.high %v5988, %v5988
    %v6361 = vcombine.high %v6011, %v6011
    %v6362 = vcombine.high %v6034, %v6034
    %v6363 = vcombine.high %v6057, %v6057
    %v6364 = vcombine.high %v6080, %v6080
    %v6365 = vcombine.high %v6103, %v6103
    %v6366 = vcombine.high %v6126, %v6126
    %v6367 = vcombine.high %v6149, %v6149
    %v6368 = vcombine.high %v6172, %v6172
    %v6369 = vcombine.high %v6195, %v6195
    %v6370 = vcombine.high %v6218, %v6218
    %v6371 = vcombine.high %v6241, %v6241
    %v6372 = vcombine.high %v6264, %v6264
    %v6373 = vcombine.high %v6287, %v6287
    %v6374 = vcombine.high %v6310, %v6310
    %v6375 = vcombine.high %v6333, %v6333
    %v6376 = vcombine.high %v6356, %v6356
    %vm6377 = vcmask 1040384
    %vm6378 = vcmask 1042434
    %vm6379 = vmor %vm6377, %vm6378
    %vm6380 = vcmask 1044484
    %vm6381 = vmor %vm6379, %vm6380
    %vm6382 = vcmask 1046534
    %vm6383 = vmor %vm6381, %vm6382
    %v6384 = vrot.slane %v5903, 7
    %v6385 = vrot.slane %v6384, 2
    %v6386 = vrot.slane %v5904, 7
    %v6387 = vsel %vm6383, %v6385, %v6386
    %v6388 = vrot.slane %v6386, 2
    %v6389 = vrot.slane %v5911, 7
    %v6390 = vsel %vm6383, %v6388, %v6389
    %v6391 = vrot.slane %v6389, 2
    %v6392 = vrot.slane %v5912, 7
    %v6393 = vsel %vm6383, %v6391, %v6392
    %v6394 = vrot.slane %v6392, 2
    %v6395 = vrot.slane %v5919, 7
    %v6396 = vsel %vm6383, %v6394, %v6395
    %v6397 = vrot.slane %v6395, 2
    %v6398 = vrot.slane %v6357, 7
    %v6399 = vsel %vm6383, %v6397, %v6398
    %v6400 = vrot.slane %v5926, 7
    %v6401 = vrot.slane %v6400, 2
    %v6402 = vrot.slane %v5927, 7
    %v6403 = vsel %vm6383, %v6401, %v6402
    %v6404 = vrot.slane %v6402, 2
    %v6405 = vrot.slane %v5934, 7
    %v6406 = vsel %vm6383, %v6404, %v6405
    %v6407 = vrot.slane %v6405, 2
    %v6408 = vrot.slane %v5935, 7
    %v6409 = vsel %vm6383, %v6407, %v6408
    %v6410 = vrot.slane %v6408, 2
    %v6411 = vrot.slane %v5942, 7
    %v6412 = vsel %vm6383, %v6410, %v6411
    %v6413 = vrot.slane %v6411, 2
    %v6414 = vrot.slane %v6358, 7
    %v6415 = vsel %vm6383, %v6413, %v6414
    %v6416 = vrot.slane %v5949, 7
    %v6417 = vrot.slane %v6416, 2
    %v6418 = vrot.slane %v5950, 7
    %v6419 = vsel %vm6383, %v6417, %v6418
    %v6420 = vrot.slane %v6418, 2
    %v6421 = vrot.slane %v5957, 7
    %v6422 = vsel %vm6383, %v6420, %v6421
    %v6423 = vrot.slane %v6421, 2
    %v6424 = vrot.slane %v5958, 7
    %v6425 = vsel %vm6383, %v6423, %v6424
    %v6426 = vrot.slane %v6424, 2
    %v6427 = vrot.slane %v5965, 7
    %v6428 = vsel %vm6383, %v6426, %v6427
    %v6429 = vrot.slane %v6427, 2
    %v6430 = vrot.slane %v6359, 7
    %v6431 = vsel %vm6383, %v6429, %v6430
    %v6432 = vrot.slane %v5972, 7
    %v6433 = vrot.slane %v6432, 2
    %v6434 = vrot.slane %v5973, 7
    %v6435 = vsel %vm6383, %v6433, %v6434
    %v6436 = vrot.slane %v6434, 2
    %v6437 = vrot.slane %v5980, 7
    %v6438 = vsel %vm6383, %v6436, %v6437
    %v6439 = vrot.slane %v6437, 2
    %v6440 = vrot.slane %v5981, 7
    %v6441 = vsel %vm6383, %v6439, %v6440
    %v6442 = vrot.slane %v6440, 2
    %v6443 = vrot.slane %v5988, 7
    %v6444 = vsel %vm6383, %v6442, %v6443
    %v6445 = vrot.slane %v6443, 2
    %v6446 = vrot.slane %v6360, 7
    %v6447 = vsel %vm6383, %v6445, %v6446
    %v6448 = vrot.slane %v5995, 7
    %v6449 = vrot.slane %v6448, 2
    %v6450 = vrot.slane %v5996, 7
    %v6451 = vsel %vm6383, %v6449, %v6450
    %v6452 = vrot.slane %v6450, 2
    %v6453 = vrot.slane %v6003, 7
    %v6454 = vsel %vm6383, %v6452, %v6453
    %v6455 = vrot.slane %v6453, 2
    %v6456 = vrot.slane %v6004, 7
    %v6457 = vsel %vm6383, %v6455, %v6456
    %v6458 = vrot.slane %v6456, 2
    %v6459 = vrot.slane %v6011, 7
    %v6460 = vsel %vm6383, %v6458, %v6459
    %v6461 = vrot.slane %v6459, 2
    %v6462 = vrot.slane %v6361, 7
    %v6463 = vsel %vm6383, %v6461, %v6462
    %v6464 = vrot.slane %v6018, 7
    %v6465 = vrot.slane %v6464, 2
    %v6466 = vrot.slane %v6019, 7
    %v6467 = vsel %vm6383, %v6465, %v6466
    %v6468 = vrot.slane %v6466, 2
    %v6469 = vrot.slane %v6026, 7
    %v6470 = vsel %vm6383, %v6468, %v6469
    %v6471 = vrot.slane %v6469, 2
    %v6472 = vrot.slane %v6027, 7
    %v6473 = vsel %vm6383, %v6471, %v6472
    %v6474 = vrot.slane %v6472, 2
    %v6475 = vrot.slane %v6034, 7
    %v6476 = vsel %vm6383, %v6474, %v6475
    %v6477 = vrot.slane %v6475, 2
    %v6478 = vrot.slane %v6362, 7
    %v6479 = vsel %vm6383, %v6477, %v6478
    %v6480 = vrot.slane %v6041, 7
    %v6481 = vrot.slane %v6480, 2
    %v6482 = vrot.slane %v6042, 7
    %v6483 = vsel %vm6383, %v6481, %v6482
    %v6484 = vrot.slane %v6482, 2
    %v6485 = vrot.slane %v6049, 7
    %v6486 = vsel %vm6383, %v6484, %v6485
    %v6487 = vrot.slane %v6485, 2
    %v6488 = vrot.slane %v6050, 7
    %v6489 = vsel %vm6383, %v6487, %v6488
    %v6490 = vrot.slane %v6488, 2
    %v6491 = vrot.slane %v6057, 7
    %v6492 = vsel %vm6383, %v6490, %v6491
    %v6493 = vrot.slane %v6491, 2
    %v6494 = vrot.slane %v6363, 7
    %v6495 = vsel %vm6383, %v6493, %v6494
    %v6496 = vrot.slane %v6064, 7
    %v6497 = vrot.slane %v6496, 2
    %v6498 = vrot.slane %v6065, 7
    %v6499 = vsel %vm6383, %v6497, %v6498
    %v6500 = vrot.slane %v6498, 2
    %v6501 = vrot.slane %v6072, 7
    %v6502 = vsel %vm6383, %v6500, %v6501
    %v6503 = vrot.slane %v6501, 2
    %v6504 = vrot.slane %v6073, 7
    %v6505 = vsel %vm6383, %v6503, %v6504
    %v6506 = vrot.slane %v6504, 2
    %v6507 = vrot.slane %v6080, 7
    %v6508 = vsel %vm6383, %v6506, %v6507
    %v6509 = vrot.slane %v6507, 2
    %v6510 = vrot.slane %v6364, 7
    %v6511 = vsel %vm6383, %v6509, %v6510
    %v6512 = vrot.slane %v6087, 7
    %v6513 = vrot.slane %v6512, 2
    %v6514 = vrot.slane %v6088, 7
    %v6515 = vsel %vm6383, %v6513, %v6514
    %v6516 = vrot.slane %v6514, 2
    %v6517 = vrot.slane %v6095, 7
    %v6518 = vsel %vm6383, %v6516, %v6517
    %v6519 = vrot.slane %v6517, 2
    %v6520 = vrot.slane %v6096, 7
    %v6521 = vsel %vm6383, %v6519, %v6520
    %v6522 = vrot.slane %v6520, 2
    %v6523 = vrot.slane %v6103, 7
    %v6524 = vsel %vm6383, %v6522, %v6523
    %v6525 = vrot.slane %v6523, 2
    %v6526 = vrot.slane %v6365, 7
    %v6527 = vsel %vm6383, %v6525, %v6526
    %v6528 = vrot.slane %v6110, 7
    %v6529 = vrot.slane %v6528, 2
    %v6530 = vrot.slane %v6111, 7
    %v6531 = vsel %vm6383, %v6529, %v6530
    %v6532 = vrot.slane %v6530, 2
    %v6533 = vrot.slane %v6118, 7
    %v6534 = vsel %vm6383, %v6532, %v6533
    %v6535 = vrot.slane %v6533, 2
    %v6536 = vrot.slane %v6119, 7
    %v6537 = vsel %vm6383, %v6535, %v6536
    %v6538 = vrot.slane %v6536, 2
    %v6539 = vrot.slane %v6126, 7
    %v6540 = vsel %vm6383, %v6538, %v6539
    %v6541 = vrot.slane %v6539, 2
    %v6542 = vrot.slane %v6366, 7
    %v6543 = vsel %vm6383, %v6541, %v6542
    %v6544 = vrot.slane %v6133, 7
    %v6545 = vrot.slane %v6544, 2
    %v6546 = vrot.slane %v6134, 7
    %v6547 = vsel %vm6383, %v6545, %v6546
    %v6548 = vrot.slane %v6546, 2
    %v6549 = vrot.slane %v6141, 7
    %v6550 = vsel %vm6383, %v6548, %v6549
    %v6551 = vrot.slane %v6549, 2
    %v6552 = vrot.slane %v6142, 7
    %v6553 = vsel %vm6383, %v6551, %v6552
    %v6554 = vrot.slane %v6552, 2
    %v6555 = vrot.slane %v6149, 7
    %v6556 = vsel %vm6383, %v6554, %v6555
    %v6557 = vrot.slane %v6555, 2
    %v6558 = vrot.slane %v6367, 7
    %v6559 = vsel %vm6383, %v6557, %v6558
    %v6560 = vrot.slane %v6156, 7
    %v6561 = vrot.slane %v6560, 2
    %v6562 = vrot.slane %v6157, 7
    %v6563 = vsel %vm6383, %v6561, %v6562
    %v6564 = vrot.slane %v6562, 2
    %v6565 = vrot.slane %v6164, 7
    %v6566 = vsel %vm6383, %v6564, %v6565
    %v6567 = vrot.slane %v6565, 2
    %v6568 = vrot.slane %v6165, 7
    %v6569 = vsel %vm6383, %v6567, %v6568
    %v6570 = vrot.slane %v6568, 2
    %v6571 = vrot.slane %v6172, 7
    %v6572 = vsel %vm6383, %v6570, %v6571
    %v6573 = vrot.slane %v6571, 2
    %v6574 = vrot.slane %v6368, 7
    %v6575 = vsel %vm6383, %v6573, %v6574
    %v6576 = vrot.slane %v6179, 7
    %v6577 = vrot.slane %v6576, 2
    %v6578 = vrot.slane %v6180, 7
    %v6579 = vsel %vm6383, %v6577, %v6578
    %v6580 = vrot.slane %v6578, 2
    %v6581 = vrot.slane %v6187, 7
    %v6582 = vsel %vm6383, %v6580, %v6581
    %v6583 = vrot.slane %v6581, 2
    %v6584 = vrot.slane %v6188, 7
    %v6585 = vsel %vm6383, %v6583, %v6584
    %v6586 = vrot.slane %v6584, 2
    %v6587 = vrot.slane %v6195, 7
    %v6588 = vsel %vm6383, %v6586, %v6587
    %v6589 = vrot.slane %v6587, 2
    %v6590 = vrot.slane %v6369, 7
    %v6591 = vsel %vm6383, %v6589, %v6590
    %v6592 = vrot.slane %v6202, 7
    %v6593 = vrot.slane %v6592, 2
    %v6594 = vrot.slane %v6203, 7
    %v6595 = vsel %vm6383, %v6593, %v6594
    %v6596 = vrot.slane %v6594, 2
    %v6597 = vrot.slane %v6210, 7
    %v6598 = vsel %vm6383, %v6596, %v6597
    %v6599 = vrot.slane %v6597, 2
    %v6600 = vrot.slane %v6211, 7
    %v6601 = vsel %vm6383, %v6599, %v6600
    %v6602 = vrot.slane %v6600, 2
    %v6603 = vrot.slane %v6218, 7
    %v6604 = vsel %vm6383, %v6602, %v6603
    %v6605 = vrot.slane %v6603, 2
    %v6606 = vrot.slane %v6370, 7
    %v6607 = vsel %vm6383, %v6605, %v6606
    %v6608 = vrot.slane %v6225, 7
    %v6609 = vrot.slane %v6608, 2
    %v6610 = vrot.slane %v6226, 7
    %v6611 = vsel %vm6383, %v6609, %v6610
    %v6612 = vrot.slane %v6610, 2
    %v6613 = vrot.slane %v6233, 7
    %v6614 = vsel %vm6383, %v6612, %v6613
    %v6615 = vrot.slane %v6613, 2
    %v6616 = vrot.slane %v6234, 7
    %v6617 = vsel %vm6383, %v6615, %v6616
    %v6618 = vrot.slane %v6616, 2
    %v6619 = vrot.slane %v6241, 7
    %v6620 = vsel %vm6383, %v6618, %v6619
    %v6621 = vrot.slane %v6619, 2
    %v6622 = vrot.slane %v6371, 7
    %v6623 = vsel %vm6383, %v6621, %v6622
    %v6624 = vrot.slane %v6248, 7
    %v6625 = vrot.slane %v6624, 2
    %v6626 = vrot.slane %v6249, 7
    %v6627 = vsel %vm6383, %v6625, %v6626
    %v6628 = vrot.slane %v6626, 2
    %v6629 = vrot.slane %v6256, 7
    %v6630 = vsel %vm6383, %v6628, %v6629
    %v6631 = vrot.slane %v6629, 2
    %v6632 = vrot.slane %v6257, 7
    %v6633 = vsel %vm6383, %v6631, %v6632
    %v6634 = vrot.slane %v6632, 2
    %v6635 = vrot.slane %v6264, 7
    %v6636 = vsel %vm6383, %v6634, %v6635
    %v6637 = vrot.slane %v6635, 2
    %v6638 = vrot.slane %v6372, 7
    %v6639 = vsel %vm6383, %v6637, %v6638
    %v6640 = vrot.slane %v6271, 7
    %v6641 = vrot.slane %v6640, 2
    %v6642 = vrot.slane %v6272, 7
    %v6643 = vsel %vm6383, %v6641, %v6642
    %v6644 = vrot.slane %v6642, 2
    %v6645 = vrot.slane %v6279, 7
    %v6646 = vsel %vm6383, %v6644, %v6645
    %v6647 = vrot.slane %v6645, 2
    %v6648 = vrot.slane %v6280, 7
    %v6649 = vsel %vm6383, %v6647, %v6648
    %v6650 = vrot.slane %v6648, 2
    %v6651 = vrot.slane %v6287, 7
    %v6652 = vsel %vm6383, %v6650, %v6651
    %v6653 = vrot.slane %v6651, 2
    %v6654 = vrot.slane %v6373, 7
    %v6655 = vsel %vm6383, %v6653, %v6654
    %v6656 = vrot.slane %v6294, 7
    %v6657 = vrot.slane %v6656, 2
    %v6658 = vrot.slane %v6295, 7
    %v6659 = vsel %vm6383, %v6657, %v6658
    %v6660 = vrot.slane %v6658, 2
    %v6661 = vrot.slane %v6302, 7
    %v6662 = vsel %vm6383, %v6660, %v6661
    %v6663 = vrot.slane %v6661, 2
    %v6664 = vrot.slane %v6303, 7
    %v6665 = vsel %vm6383, %v6663, %v6664
    %v6666 = vrot.slane %v6664, 2
    %v6667 = vrot.slane %v6310, 7
    %v6668 = vsel %vm6383, %v6666, %v6667
    %v6669 = vrot.slane %v6667, 2
    %v6670 = vrot.slane %v6374, 7
    %v6671 = vsel %vm6383, %v6669, %v6670
    %v6672 = vrot.slane %v6317, 7
    %v6673 = vrot.slane %v6672, 2
    %v6674 = vrot.slane %v6318, 7
    %v6675 = vsel %vm6383, %v6673, %v6674
    %v6676 = vrot.slane %v6674, 2
    %v6677 = vrot.slane %v6325, 7
    %v6678 = vsel %vm6383, %v6676, %v6677
    %v6679 = vrot.slane %v6677, 2
    %v6680 = vrot.slane %v6326, 7
    %v6681 = vsel %vm6383, %v6679, %v6680
    %v6682 = vrot.slane %v6680, 2
    %v6683 = vrot.slane %v6333, 7
    %v6684 = vsel %vm6383, %v6682, %v6683
    %v6685 = vrot.slane %v6683, 2
    %v6686 = vrot.slane %v6375, 7
    %v6687 = vsel %vm6383, %v6685, %v6686
    %v6688 = vrot.slane %v6340, 7
    %v6689 = vrot.slane %v6688, 2
    %v6690 = vrot.slane %v6341, 7
    %v6691 = vsel %vm6383, %v6689, %v6690
    %v6692 = vrot.slane %v6690, 2
    %v6693 = vrot.slane %v6348, 7
    %v6694 = vsel %vm6383, %v6692, %v6693
    %v6695 = vrot.slane %v6693, 2
    %v6696 = vrot.slane %v6349, 7
    %v6697 = vsel %vm6383, %v6695, %v6696
    %v6698 = vrot.slane %v6696, 2
    %v6699 = vrot.slane %v6356, 7
    %v6700 = vsel %vm6383, %v6698, %v6699
    %v6701 = vrot.slane %v6699, 2
    %v6702 = vrot.slane %v6376, 7
    %v6703 = vsel %vm6383, %v6701, %v6702
    %v6711 = vunpack.c.l.s4 1983009808
    %v6712 = vunpack.c.0.s8 %v6711
    %v6713 = vlaneseq
    %v6714 = vshrl.u32 %v6713, 7
    %v6715 = vsub.s32 %v6712, %v6714
    %v6716 = vrot.slane %v5795, %v6715
    %v6717 = vcombine.high %v6716, %v6716
    %v6719 = vunpack.c.l.s4 1983009808
    %v6720 = vunpack.c.0.s8 %v6719
    %v6721 = vlaneseq
    %v6722 = vshrl.u32 %v6721, 7
    %v6723 = vsub.s32 %v6720, %v6722
    %v6724 = vrot.slane %v5796, %v6723
    %v6725 = vcombine.high %v6724, %v6724
    %v6727 = vunpack.c.l.s4 1983009808
    %v6728 = vunpack.c.0.s8 %v6727
    %v6729 = vlaneseq
    %v6730 = vshrl.u32 %v6729, 7
    %v6731 = vsub.s32 %v6728, %v6730
    %v6732 = vrot.slane %v5797, %v6731
    %v6734 = vunpack.c.l.s4 1983009808
    %v6735 = vunpack.c.0.s8 %v6734
    %v6736 = vlaneseq
    %v6737 = vshrl.u32 %v6736, 7
    %v6738 = vsub.s32 %v6735, %v6737
    %v6739 = vrot.slane %v5831, %v6738
    %v6740 = vcombine.high %v6739, %v6739
    %v6742 = vunpack.c.l.s4 1983009808
    %v6743 = vunpack.c.0.s8 %v6742
    %v6744 = vlaneseq
    %v6745 = vshrl.u32 %v6744, 7
    %v6746 = vsub.s32 %v6743, %v6745
    %v6747 = vrot.slane %v5832, %v6746
    %v6748 = vcombine.high %v6747, %v6747
    %v6750 = vunpack.c.l.s4 1983009808
    %v6751 = vunpack.c.0.s8 %v6750
    %v6752 = vlaneseq
    %v6753 = vshrl.u32 %v6752, 7
    %v6754 = vsub.s32 %v6751, %v6753
    %v6755 = vrot.slane %v5833, %v6754
    %v6756 = vcombine.high %v6732, %v6732
    %v6757 = vcombine.high %v6755, %v6755
    %v6758 = vrot.slane %v6716, 7
    %v6759 = vrot.slane %v6758, 2
    %v6760 = vrot.slane %v6717, 7
    %v6761 = vsel %vm6383, %v6759, %v6760
    %v6762 = vrot.slane %v6760, 2
    %v6763 = vrot.slane %v6724, 7
    %v6764 = vsel %vm6383, %v6762, %v6763
    %v6765 = vrot.slane %v6763, 2
    %v6766 = vrot.slane %v6725, 7
    %v6767 = vsel %vm6383, %v6765, %v6766
    %v6768 = vrot.slane %v6766, 2
    %v6769 = vrot.slane %v6732, 7
    %v6770 = vsel %vm6383, %v6768, %v6769
    %v6771 = vrot.slane %v6769, 2
    %v6772 = vrot.slane %v6756, 7
    %v6773 = vsel %vm6383, %v6771, %v6772
    %v6774 = vrot.slane %v6739, 7
    %v6775 = vrot.slane %v6774, 2
    %v6776 = vrot.slane %v6740, 7
    %v6777 = vsel %vm6383, %v6775, %v6776
    %v6778 = vrot.slane %v6776, 2
    %v6779 = vrot.slane %v6747, 7
    %v6780 = vsel %vm6383, %v6778, %v6779
    %v6781 = vrot.slane %v6779, 2
    %v6782 = vrot.slane %v6748, 7
    %v6783 = vsel %vm6383, %v6781, %v6782
    %v6784 = vrot.slane %v6782, 2
    %v6785 = vrot.slane %v6755, 7
    %v6786 = vsel %vm6383, %v6784, %v6785
    %v6787 = vrot.slane %v6785, 2
    %v6788 = vrot.slane %v6757, 7
    %v6789 = vsel %vm6383, %v6787, %v6788
    %v6797 = vunpack.c.l.s4 1983009808
    %v6798 = vunpack.c.0.s8 %v6797
    %v6799 = vlaneseq
    %v6800 = vshrl.u32 %v6799, 7
    %v6801 = vsub.s32 %v6798, %v6800
    %v6802 = vrot.slane %v5798, %v6801
    %v6803 = vcombine.high %v6802, %v6802
    %v6805 = vunpack.c.l.s4 1983009808
    %v6806 = vunpack.c.0.s8 %v6805
    %v6807 = vlaneseq
    %v6808 = vshrl.u32 %v6807, 7
    %v6809 = vsub.s32 %v6806, %v6808
    %v6810 = vrot.slane %v5799, %v6809
    %v6811 = vcombine.high %v6810, %v6810
    %v6813 = vunpack.c.l.s4 1983009808
    %v6814 = vunpack.c.0.s8 %v6813
    %v6815 = vlaneseq
    %v6816 = vshrl.u32 %v6815, 7
    %v6817 = vsub.s32 %v6814, %v6816
    %v6818 = vrot.slane %v5800, %v6817
    %v6820 = vunpack.c.l.s4 1983009808
    %v6821 = vunpack.c.0.s8 %v6820
    %v6822 = vlaneseq
    %v6823 = vshrl.u32 %v6822, 7
    %v6824 = vsub.s32 %v6821, %v6823
    %v6825 = vrot.slane %v5834, %v6824
    %v6826 = vcombine.high %v6825, %v6825
    %v6828 = vunpack.c.l.s4 1983009808
    %v6829 = vunpack.c.0.s8 %v6828
    %v6830 = vlaneseq
    %v6831 = vshrl.u32 %v6830, 7
    %v6832 = vsub.s32 %v6829, %v6831
    %v6833 = vrot.slane %v5835, %v6832
    %v6834 = vcombine.high %v6833, %v6833
    %v6836 = vunpack.c.l.s4 1983009808
    %v6837 = vunpack.c.0.s8 %v6836
    %v6838 = vlaneseq
    %v6839 = vshrl.u32 %v6838, 7
    %v6840 = vsub.s32 %v6837, %v6839
    %v6841 = vrot.slane %v5836, %v6840
    %v6842 = vcombine.high %v6818, %v6818
    %v6843 = vcombine.high %v6841, %v6841
    %v6844 = vrot.slane %v6802, 7
    %v6845 = vrot.slane %v6844, 2
    %v6846 = vrot.slane %v6803, 7
    %v6847 = vsel %vm6383, %v6845, %v6846
    %v6848 = vrot.slane %v6846, 2
    %v6849 = vrot.slane %v6810, 7
    %v6850 = vsel %vm6383, %v6848, %v6849
    %v6851 = vrot.slane %v6849, 2
    %v6852 = vrot.slane %v6811, 7
    %v6853 = vsel %vm6383, %v6851, %v6852
    %v6854 = vrot.slane %v6852, 2
    %v6855 = vrot.slane %v6818, 7
    %v6856 = vsel %vm6383, %v6854, %v6855
    %v6857 = vrot.slane %v6855, 2
    %v6858 = vrot.slane %v6842, 7
    %v6859 = vsel %vm6383, %v6857, %v6858
    %v6860 = vrot.slane %v6825, 7
    %v6861 = vrot.slane %v6860, 2
    %v6862 = vrot.slane %v6826, 7
    %v6863 = vsel %vm6383, %v6861, %v6862
    %v6864 = vrot.slane %v6862, 2
    %v6865 = vrot.slane %v6833, 7
    %v6866 = vsel %vm6383, %v6864, %v6865
    %v6867 = vrot.slane %v6865, 2
    %v6868 = vrot.slane %v6834, 7
    %v6869 = vsel %vm6383, %v6867, %v6868
    %v6870 = vrot.slane %v6868, 2
    %v6871 = vrot.slane %v6841, 7
    %v6872 = vsel %vm6383, %v6870, %v6871
    %v6873 = vrot.slane %v6871, 2
    %v6874 = vrot.slane %v6843, 7
    %v6875 = vsel %vm6383, %v6873, %v6874
    %v6876 = vcombine.low %v5903, %v5904
    %v6877 = vcombine.low %v5911, %v5912
    %v6879 = vunpack.c.l.s4 1983009808
    %v6880 = vunpack.c.0.s8 %v6879
    %v6881 = vlaneseq
    %v6882 = vshrl.u32 %v6881, 7
    %v6883 = vsub.s32 %v6880, %v6882
    %v6884 = vrot.slane %v6876, %v6883
    %v6886 = vunpack.c.l.s4 1983009808
    %v6887 = vunpack.c.0.s8 %v6886
    %v6888 = vlaneseq
    %v6889 = vshrl.u32 %v6888, 7
    %v6890 = vsub.s32 %v6887, %v6889
    %v6891 = vrot.slane %v6877, %v6890
    %v6892 = vcombine.low %v6884, %v6891
    %v6893 = vcombine.low %v5919, %v5926
    %v6894 = vcombine.low %v5927, %v5934
    %v6896 = vunpack.c.l.s4 1983009808
    %v6897 = vunpack.c.0.s8 %v6896
    %v6898 = vlaneseq
    %v6899 = vshrl.u32 %v6898, 7
    %v6900 = vsub.s32 %v6897, %v6899
    %v6901 = vrot.slane %v6893, %v6900
    %v6903 = vunpack.c.l.s4 1983009808
    %v6904 = vunpack.c.0.s8 %v6903
    %v6905 = vlaneseq
    %v6906 = vshrl.u32 %v6905, 7
    %v6907 = vsub.s32 %v6904, %v6906
    %v6908 = vrot.slane %v6894, %v6907
    %v6909 = vcombine.low %v6901, %v6908
    %v6910 = vcombine.low %v5935, %v5942
    %v6911 = vcombine.low %v5949, %v5950
    %v6913 = vunpack.c.l.s4 1983009808
    %v6914 = vunpack.c.0.s8 %v6913
    %v6915 = vlaneseq
    %v6916 = vshrl.u32 %v6915, 7
    %v6917 = vsub.s32 %v6914, %v6916
    %v6918 = vrot.slane %v6910, %v6917
    %v6920 = vunpack.c.l.s4 1983009808
    %v6921 = vunpack.c.0.s8 %v6920
    %v6922 = vlaneseq
    %v6923 = vshrl.u32 %v6922, 7
    %v6924 = vsub.s32 %v6921, %v6923
    %v6925 = vrot.slane %v6911, %v6924
    %v6926 = vcombine.low %v6918, %v6925
    %v6927 = vcombine.low %v5957, %v5958
    %v6928 = vcombine.low %v5965, %v5972
    %v6930 = vunpack.c.l.s4 1983009808
    %v6931 = vunpack.c.0.s8 %v6930
    %v6932 = vlaneseq
    %v6933 = vshrl.u32 %v6932, 7
    %v6934 = vsub.s32 %v6931, %v6933
    %v6935 = vrot.slane %v6927, %v6934
    %v6937 = vunpack.c.l.s4 1983009808
    %v6938 = vunpack.c.0.s8 %v6937
    %v6939 = vlaneseq
    %v6940 = vshrl.u32 %v6939, 7
    %v6941 = vsub.s32 %v6938, %v6940
    %v6942 = vrot.slane %v6928, %v6941
    %v6943 = vcombine.low %v6935, %v6942
    %v6944 = vcombine.low %v5973, %v5980
    %v6945 = vcombine.low %v5981, %v5988
    %v6947 = vunpack.c.l.s4 1983009808
    %v6948 = vunpack.c.0.s8 %v6947
    %v6949 = vlaneseq
    %v6950 = vshrl.u32 %v6949, 7
    %v6951 = vsub.s32 %v6948, %v6950
    %v6952 = vrot.slane %v6944, %v6951
    %v6954 = vunpack.c.l.s4 1983009808
    %v6955 = vunpack.c.0.s8 %v6954
    %v6956 = vlaneseq
    %v6957 = vshrl.u32 %v6956, 7
    %v6958 = vsub.s32 %v6955, %v6957
    %v6959 = vrot.slane %v6945, %v6958
    %v6960 = vcombine.low %v6952, %v6959
    %v6961 = vcombine.low %v5995, %v5996
    %v6962 = vcombine.low %v6003, %v6004
    %v6964 = vunpack.c.l.s4 1983009808
    %v6965 = vunpack.c.0.s8 %v6964
    %v6966 = vlaneseq
    %v6967 = vshrl.u32 %v6966, 7
    %v6968 = vsub.s32 %v6965, %v6967
    %v6969 = vrot.slane %v6961, %v6968
    %v6971 = vunpack.c.l.s4 1983009808
    %v6972 = vunpack.c.0.s8 %v6971
    %v6973 = vlaneseq
    %v6974 = vshrl.u32 %v6973, 7
    %v6975 = vsub.s32 %v6972, %v6974
    %v6976 = vrot.slane %v6962, %v6975
    %v6977 = vcombine.low %v6969, %v6976
    %v6978 = vcombine.low %v6011, %v6018
    %v6979 = vcombine.low %v6019, %v6026
    %v6981 = vunpack.c.l.s4 1983009808
    %v6982 = vunpack.c.0.s8 %v6981
    %v6983 = vlaneseq
    %v6984 = vshrl.u32 %v6983, 7
    %v6985 = vsub.s32 %v6982, %v6984
    %v6986 = vrot.slane %v6978, %v6985
    %v6988 = vunpack.c.l.s4 1983009808
    %v6989 = vunpack.c.0.s8 %v6988
    %v6990 = vlaneseq
    %v6991 = vshrl.u32 %v6990, 7
    %v6992 = vsub.s32 %v6989, %v6991
    %v6993 = vrot.slane %v6979, %v6992
    %v6994 = vcombine.low %v6986, %v6993
    %v6995 = vcombine.low %v6027, %v6034
    %v6996 = vcombine.low %v6041, %v6042
    %v6998 = vunpack.c.l.s4 1983009808
    %v6999 = vunpack.c.0.s8 %v6998
    %v7000 = vlaneseq
    %v7001 = vshrl.u32 %v7000, 7
    %v7002 = vsub.s32 %v6999, %v7001
    %v7003 = vrot.slane %v6995, %v7002
    %v7005 = vunpack.c.l.s4 1983009808
    %v7006 = vunpack.c.0.s8 %v7005
    %v7007 = vlaneseq
    %v7008 = vshrl.u32 %v7007, 7
    %v7009 = vsub.s32 %v7006, %v7008
    %v7010 = vrot.slane %v6996, %v7009
    %v7011 = vcombine.low %v7003, %v7010
    %v7012 = vcombine.low %v6049, %v6050
    %v7013 = vcombine.low %v6057, %v6064
    %v7015 = vunpack.c.l.s4 1983009808
    %v7016 = vunpack.c.0.s8 %v7015
    %v7017 = vlaneseq
    %v7018 = vshrl.u32 %v7017, 7
    %v7019 = vsub.s32 %v7016, %v7018
    %v7020 = vrot.slane %v7012, %v7019
    %v7022 = vunpack.c.l.s4 1983009808
    %v7023 = vunpack.c.0.s8 %v7022
    %v7024 = vlaneseq
    %v7025 = vshrl.u32 %v7024, 7
    %v7026 = vsub.s32 %v7023, %v7025
    %v7027 = vrot.slane %v7013, %v7026
    %v7028 = vcombine.low %v7020, %v7027
    %v7029 = vcombine.low %v6065, %v6072
    %v7030 = vcombine.low %v6073, %v6080
    %v7032 = vunpack.c.l.s4 1983009808
    %v7033 = vunpack.c.0.s8 %v7032
    %v7034 = vlaneseq
    %v7035 = vshrl.u32 %v7034, 7
    %v7036 = vsub.s32 %v7033, %v7035
    %v7037 = vrot.slane %v7029, %v7036
    %v7039 = vunpack.c.l.s4 1983009808
    %v7040 = vunpack.c.0.s8 %v7039
    %v7041 = vlaneseq
    %v7042 = vshrl.u32 %v7041, 7
    %v7043 = vsub.s32 %v7040, %v7042
    %v7044 = vrot.slane %v7030, %v7043
    %v7045 = vcombine.low %v7037, %v7044
    %v7046 = vcombine.low %v6087, %v6088
    %v7047 = vcombine.low %v6095, %v6096
    %v7049 = vunpack.c.l.s4 1983009808
    %v7050 = vunpack.c.0.s8 %v7049
    %v7051 = vlaneseq
    %v7052 = vshrl.u32 %v7051, 7
    %v7053 = vsub.s32 %v7050, %v7052
    %v7054 = vrot.slane %v7046, %v7053
    %v7056 = vunpack.c.l.s4 1983009808
    %v7057 = vunpack.c.0.s8 %v7056
    %v7058 = vlaneseq
    %v7059 = vshrl.u32 %v7058, 7
    %v7060 = vsub.s32 %v7057, %v7059
    %v7061 = vrot.slane %v7047, %v7060
    %v7062 = vcombine.low %v7054, %v7061
    %v7063 = vcombine.low %v6103, %v6110
    %v7064 = vcombine.low %v6111, %v6118
    %v7066 = vunpack.c.l.s4 1983009808
    %v7067 = vunpack.c.0.s8 %v7066
    %v7068 = vlaneseq
    %v7069 = vshrl.u32 %v7068, 7
    %v7070 = vsub.s32 %v7067, %v7069
    %v7071 = vrot.slane %v7063, %v7070
    %v7073 = vunpack.c.l.s4 1983009808
    %v7074 = vunpack.c.0.s8 %v7073
    %v7075 = vlaneseq
    %v7076 = vshrl.u32 %v7075, 7
    %v7077 = vsub.s32 %v7074, %v7076
    %v7078 = vrot.slane %v7064, %v7077
    %v7079 = vcombine.low %v7071, %v7078
    %v7080 = vcombine.low %v6119, %v6126
    %v7081 = vcombine.low %v6133, %v6134
    %v7083 = vunpack.c.l.s4 1983009808
    %v7084 = vunpack.c.0.s8 %v7083
    %v7085 = vlaneseq
    %v7086 = vshrl.u32 %v7085, 7
    %v7087 = vsub.s32 %v7084, %v7086
    %v7088 = vrot.slane %v7080, %v7087
    %v7090 = vunpack.c.l.s4 1983009808
    %v7091 = vunpack.c.0.s8 %v7090
    %v7092 = vlaneseq
    %v7093 = vshrl.u32 %v7092, 7
    %v7094 = vsub.s32 %v7091, %v7093
    %v7095 = vrot.slane %v7081, %v7094
    %v7096 = vcombine.low %v7088, %v7095
    %v7097 = vcombine.low %v6141, %v6142
    %v7098 = vcombine.low %v6149, %v6156
    %v7100 = vunpack.c.l.s4 1983009808
    %v7101 = vunpack.c.0.s8 %v7100
    %v7102 = vlaneseq
    %v7103 = vshrl.u32 %v7102, 7
    %v7104 = vsub.s32 %v7101, %v7103
    %v7105 = vrot.slane %v7097, %v7104
    %v7107 = vunpack.c.l.s4 1983009808
    %v7108 = vunpack.c.0.s8 %v7107
    %v7109 = vlaneseq
    %v7110 = vshrl.u32 %v7109, 7
    %v7111 = vsub.s32 %v7108, %v7110
    %v7112 = vrot.slane %v7098, %v7111
    %v7113 = vcombine.low %v7105, %v7112
    %v7114 = vcombine.low %v6157, %v6164
    %v7115 = vcombine.low %v6165, %v6172
    %v7117 = vunpack.c.l.s4 1983009808
    %v7118 = vunpack.c.0.s8 %v7117
    %v7119 = vlaneseq
    %v7120 = vshrl.u32 %v7119, 7
    %v7121 = vsub.s32 %v7118, %v7120
    %v7122 = vrot.slane %v7114, %v7121
    %v7124 = vunpack.c.l.s4 1983009808
    %v7125 = vunpack.c.0.s8 %v7124
    %v7126 = vlaneseq
    %v7127 = vshrl.u32 %v7126, 7
    %v7128 = vsub.s32 %v7125, %v7127
    %v7129 = vrot.slane %v7115, %v7128
    %v7130 = vcombine.low %v7122, %v7129
    %v7131 = vcombine.low %v6179, %v6180
    %v7132 = vcombine.low %v6187, %v6188
    %v7134 = vunpack.c.l.s4 1983009808
    %v7135 = vunpack.c.0.s8 %v7134
    %v7136 = vlaneseq
    %v7137 = vshrl.u32 %v7136, 7
    %v7138 = vsub.s32 %v7135, %v7137
    %v7139 = vrot.slane %v7131, %v7138
    %v7141 = vunpack.c.l.s4 1983009808
    %v7142 = vunpack.c.0.s8 %v7141
    %v7143 = vlaneseq
    %v7144 = vshrl.u32 %v7143, 7
    %v7145 = vsub.s32 %v7142, %v7144
    %v7146 = vrot.slane %v7132, %v7145
    %v7147 = vcombine.low %v7139, %v7146
    %v7148 = vcombine.low %v6195, %v6202
    %v7149 = vcombine.low %v6203, %v6210
    %v7151 = vunpack.c.l.s4 1983009808
    %v7152 = vunpack.c.0.s8 %v7151
    %v7153 = vlaneseq
    %v7154 = vshrl.u32 %v7153, 7
    %v7155 = vsub.s32 %v7152, %v7154
    %v7156 = vrot.slane %v7148, %v7155
    %v7158 = vunpack.c.l.s4 1983009808
    %v7159 = vunpack.c.0.s8 %v7158
    %v7160 = vlaneseq
    %v7161 = vshrl.u32 %v7160, 7
    %v7162 = vsub.s32 %v7159, %v7161
    %v7163 = vrot.slane %v7149, %v7162
    %v7164 = vcombine.low %v7156, %v7163
    %v7165 = vcombine.low %v6211, %v6218
    %v7166 = vcombine.low %v6225, %v6226
    %v7168 = vunpack.c.l.s4 1983009808
    %v7169 = vunpack.c.0.s8 %v7168
    %v7170 = vlaneseq
    %v7171 = vshrl.u32 %v7170, 7
    %v7172 = vsub.s32 %v7169, %v7171
    %v7173 = vrot.slane %v7165, %v7172
    %v7175 = vunpack.c.l.s4 1983009808
    %v7176 = vunpack.c.0.s8 %v7175
    %v7177 = vlaneseq
    %v7178 = vshrl.u32 %v7177, 7
    %v7179 = vsub.s32 %v7176, %v7178
    %v7180 = vrot.slane %v7166, %v7179
    %v7181 = vcombine.low %v7173, %v7180
    %v7182 = vcombine.low %v6233, %v6234
    %v7183 = vcombine.low %v6241, %v6248
    %v7185 = vunpack.c.l.s4 1983009808
    %v7186 = vunpack.c.0.s8 %v7185
    %v7187 = vlaneseq
    %v7188 = vshrl.u32 %v7187, 7
    %v7189 = vsub.s32 %v7186, %v7188
    %v7190 = vrot.slane %v7182, %v7189
    %v7192 = vunpack.c.l.s4 1983009808
    %v7193 = vunpack.c.0.s8 %v7192
    %v7194 = vlaneseq
    %v7195 = vshrl.u32 %v7194, 7
    %v7196 = vsub.s32 %v7193, %v7195
    %v7197 = vrot.slane %v7183, %v7196
    %v7198 = vcombine.low %v7190, %v7197
    %v7199 = vcombine.low %v6249, %v6256
    %v7200 = vcombine.low %v6257, %v6264
    %v7202 = vunpack.c.l.s4 1983009808
    %v7203 = vunpack.c.0.s8 %v7202
    %v7204 = vlaneseq
    %v7205 = vshrl.u32 %v7204, 7
    %v7206 = vsub.s32 %v7203, %v7205
    %v7207 = vrot.slane %v7199, %v7206
    %v7209 = vunpack.c.l.s4 1983009808
    %v7210 = vunpack.c.0.s8 %v7209
    %v7211 = vlaneseq
    %v7212 = vshrl.u32 %v7211, 7
    %v7213 = vsub.s32 %v7210, %v7212
    %v7214 = vrot.slane %v7200, %v7213
    %v7215 = vcombine.low %v7207, %v7214
    %v7216 = vcombine.low %v6271, %v6272
    %v7217 = vcombine.low %v6279, %v6280
    %v7219 = vunpack.c.l.s4 1983009808
    %v7220 = vunpack.c.0.s8 %v7219
    %v7221 = vlaneseq
    %v7222 = vshrl.u32 %v7221, 7
    %v7223 = vsub.s32 %v7220, %v7222
    %v7224 = vrot.slane %v7216, %v7223
    %v7226 = vunpack.c.l.s4 1983009808
    %v7227 = vunpack.c.0.s8 %v7226
    %v7228 = vlaneseq
    %v7229 = vshrl.u32 %v7228, 7
    %v7230 = vsub.s32 %v7227, %v7229
    %v7231 = vrot.slane %v7217, %v7230
    %v7232 = vcombine.low %v7224, %v7231
    %v7233 = vcombine.low %v6287, %v6294
    %v7234 = vcombine.low %v6295, %v6302
    %v7236 = vunpack.c.l.s4 1983009808
    %v7237 = vunpack.c.0.s8 %v7236
    %v7238 = vlaneseq
    %v7239 = vshrl.u32 %v7238, 7
    %v7240 = vsub.s32 %v7237, %v7239
    %v7241 = vrot.slane %v7233, %v7240
    %v7243 = vunpack.c.l.s4 1983009808
    %v7244 = vunpack.c.0.s8 %v7243
    %v7245 = vlaneseq
    %v7246 = vshrl.u32 %v7245, 7
    %v7247 = vsub.s32 %v7244, %v7246
    %v7248 = vrot.slane %v7234, %v7247
    %v7249 = vcombine.low %v7241, %v7248
    %v7250 = vcombine.low %v6303, %v6310
    %v7251 = vcombine.low %v6317, %v6318
    %v7253 = vunpack.c.l.s4 1983009808
    %v7254 = vunpack.c.0.s8 %v7253
    %v7255 = vlaneseq
    %v7256 = vshrl.u32 %v7255, 7
    %v7257 = vsub.s32 %v7254, %v7256
    %v7258 = vrot.slane %v7250, %v7257
    %v7260 = vunpack.c.l.s4 1983009808
    %v7261 = vunpack.c.0.s8 %v7260
    %v7262 = vlaneseq
    %v7263 = vshrl.u32 %v7262, 7
    %v7264 = vsub.s32 %v7261, %v7263
    %v7265 = vrot.slane %v7251, %v7264
    %v7266 = vcombine.low %v7258, %v7265
    %v7267 = vcombine.low %v6325, %v6326
    %v7268 = vcombine.low %v6333, %v6340
    %v7270 = vunpack.c.l.s4 1983009808
    %v7271 = vunpack.c.0.s8 %v7270
    %v7272 = vlaneseq
    %v7273 = vshrl.u32 %v7272, 7
    %v7274 = vsub.s32 %v7271, %v7273
    %v7275 = vrot.slane %v7267, %v7274
    %v7277 = vunpack.c.l.s4 1983009808
    %v7278 = vunpack.c.0.s8 %v7277
    %v7279 = vlaneseq
    %v7280 = vshrl.u32 %v7279, 7
    %v7281 = vsub.s32 %v7278, %v7280
    %v7282 = vrot.slane %v7268, %v7281
    %v7283 = vcombine.low %v7275, %v7282
    %v7284 = vcombine.low %v6341, %v6348
    %v7285 = vcombine.low %v6349, %v6356
    %v7287 = vunpack.c.l.s4 1983009808
    %v7288 = vunpack.c.0.s8 %v7287
    %v7289 = vlaneseq
    %v7290 = vshrl.u32 %v7289, 7
    %v7291 = vsub.s32 %v7288, %v7290
    %v7292 = vrot.slane %v7284, %v7291
    %v7294 = vunpack.c.l.s4 1983009808
    %v7295 = vunpack.c.0.s8 %v7294
    %v7296 = vlaneseq
    %v7297 = vshrl.u32 %v7296, 7
    %v7298 = vsub.s32 %v7295, %v7297
    %v7299 = vrot.slane %v7285, %v7298
    %v7300 = vcombine.low %v7292, %v7299
    %v7326 = vcombine.low %v6387, %v6390
    %v7327 = vcombine.low %v6393, %v6396
    %v7329 = vunpack.c.l.s4 1983009808
    %v7330 = vunpack.c.0.s8 %v7329
    %v7331 = vlaneseq
    %v7332 = vshrl.u32 %v7331, 7
    %v7333 = vsub.s32 %v7330, %v7332
    %v7334 = vrot.slane %v7326, %v7333
    %v7336 = vunpack.c.l.s4 1983009808
    %v7337 = vunpack.c.0.s8 %v7336
    %v7338 = vlaneseq
    %v7339 = vshrl.u32 %v7338, 7
    %v7340 = vsub.s32 %v7337, %v7339
    %v7341 = vrot.slane %v7327, %v7340
    %v7342 = vcombine.low %v7334, %v7341
    %v7343 = vcombine.low %v6399, %v6403
    %v7344 = vcombine.low %v6406, %v6409
    %v7346 = vunpack.c.l.s4 1983009808
    %v7347 = vunpack.c.0.s8 %v7346
    %v7348 = vlaneseq
    %v7349 = vshrl.u32 %v7348, 7
    %v7350 = vsub.s32 %v7347, %v7349
    %v7351 = vrot.slane %v7343, %v7350
    %v7353 = vunpack.c.l.s4 1983009808
    %v7354 = vunpack.c.0.s8 %v7353
    %v7355 = vlaneseq
    %v7356 = vshrl.u32 %v7355, 7
    %v7357 = vsub.s32 %v7354, %v7356
    %v7358 = vrot.slane %v7344, %v7357
    %v7359 = vcombine.low %v7351, %v7358
    %v7360 = vcombine.low %v6412, %v6415
    %v7361 = vcombine.low %v6419, %v6422
    %v7363 = vunpack.c.l.s4 1983009808
    %v7364 = vunpack.c.0.s8 %v7363
    %v7365 = vlaneseq
    %v7366 = vshrl.u32 %v7365, 7
    %v7367 = vsub.s32 %v7364, %v7366
    %v7368 = vrot.slane %v7360, %v7367
    %v7370 = vunpack.c.l.s4 1983009808
    %v7371 = vunpack.c.0.s8 %v7370
    %v7372 = vlaneseq
    %v7373 = vshrl.u32 %v7372, 7
    %v7374 = vsub.s32 %v7371, %v7373
    %v7375 = vrot.slane %v7361, %v7374
    %v7376 = vcombine.low %v7368, %v7375
    %v7377 = vcombine.low %v6425, %v6428
    %v7378 = vcombine.low %v6431, %v6435
    %v7380 = vunpack.c.l.s4 1983009808
    %v7381 = vunpack.c.0.s8 %v7380
    %v7382 = vlaneseq
    %v7383 = vshrl.u32 %v7382, 7
    %v7384 = vsub.s32 %v7381, %v7383
    %v7385 = vrot.slane %v7377, %v7384
    %v7387 = vunpack.c.l.s4 1983009808
    %v7388 = vunpack.c.0.s8 %v7387
    %v7389 = vlaneseq
    %v7390 = vshrl.u32 %v7389, 7
    %v7391 = vsub.s32 %v7388, %v7390
    %v7392 = vrot.slane %v7378, %v7391
    %v7393 = vcombine.low %v7385, %v7392
    %v7394 = vcombine.low %v6438, %v6441
    %v7395 = vcombine.low %v6444, %v6447
    %v7397 = vunpack.c.l.s4 1983009808
    %v7398 = vunpack.c.0.s8 %v7397
    %v7399 = vlaneseq
    %v7400 = vshrl.u32 %v7399, 7
    %v7401 = vsub.s32 %v7398, %v7400
    %v7402 = vrot.slane %v7394, %v7401
    %v7404 = vunpack.c.l.s4 1983009808
    %v7405 = vunpack.c.0.s8 %v7404
    %v7406 = vlaneseq
    %v7407 = vshrl.u32 %v7406, 7
    %v7408 = vsub.s32 %v7405, %v7407
    %v7409 = vrot.slane %v7395, %v7408
    %v7410 = vcombine.low %v7402, %v7409
    %v7411 = vcombine.low %v6451, %v6454
    %v7412 = vcombine.low %v6457, %v6460
    %v7414 = vunpack.c.l.s4 1983009808
    %v7415 = vunpack.c.0.s8 %v7414
    %v7416 = vlaneseq
    %v7417 = vshrl.u32 %v7416, 7
    %v7418 = vsub.s32 %v7415, %v7417
    %v7419 = vrot.slane %v7411, %v7418
    %v7421 = vunpack.c.l.s4 1983009808
    %v7422 = vunpack.c.0.s8 %v7421
    %v7423 = vlaneseq
    %v7424 = vshrl.u32 %v7423, 7
    %v7425 = vsub.s32 %v7422, %v7424
    %v7426 = vrot.slane %v7412, %v7425
    %v7427 = vcombine.low %v7419, %v7426
    %v7428 = vcombine.low %v6463, %v6467
    %v7429 = vcombine.low %v6470, %v6473
    %v7431 = vunpack.c.l.s4 1983009808
    %v7432 = vunpack.c.0.s8 %v7431
    %v7433 = vlaneseq
    %v7434 = vshrl.u32 %v7433, 7
    %v7435 = vsub.s32 %v7432, %v7434
    %v7436 = vrot.slane %v7428, %v7435
    %v7438 = vunpack.c.l.s4 1983009808
    %v7439 = vunpack.c.0.s8 %v7438
    %v7440 = vlaneseq
    %v7441 = vshrl.u32 %v7440, 7
    %v7442 = vsub.s32 %v7439, %v7441
    %v7443 = vrot.slane %v7429, %v7442
    %v7444 = vcombine.low %v7436, %v7443
    %v7445 = vcombine.low %v6476, %v6479
    %v7446 = vcombine.low %v6483, %v6486
    %v7448 = vunpack.c.l.s4 1983009808
    %v7449 = vunpack.c.0.s8 %v7448
    %v7450 = vlaneseq
    %v7451 = vshrl.u32 %v7450, 7
    %v7452 = vsub.s32 %v7449, %v7451
    %v7453 = vrot.slane %v7445, %v7452
    %v7455 = vunpack.c.l.s4 1983009808
    %v7456 = vunpack.c.0.s8 %v7455
    %v7457 = vlaneseq
    %v7458 = vshrl.u32 %v7457, 7
    %v7459 = vsub.s32 %v7456, %v7458
    %v7460 = vrot.slane %v7446, %v7459
    %v7461 = vcombine.low %v7453, %v7460
    %v7462 = vcombine.low %v6489, %v6492
    %v7463 = vcombine.low %v6495, %v6499
    %v7465 = vunpack.c.l.s4 1983009808
    %v7466 = vunpack.c.0.s8 %v7465
    %v7467 = vlaneseq
    %v7468 = vshrl.u32 %v7467, 7
    %v7469 = vsub.s32 %v7466, %v7468
    %v7470 = vrot.slane %v7462, %v7469
    %v7472 = vunpack.c.l.s4 1983009808
    %v7473 = vunpack.c.0.s8 %v7472
    %v7474 = vlaneseq
    %v7475 = vshrl.u32 %v7474, 7
    %v7476 = vsub.s32 %v7473, %v7475
    %v7477 = vrot.slane %v7463, %v7476
    %v7478 = vcombine.low %v7470, %v7477
    %v7479 = vcombine.low %v6502, %v6505
    %v7480 = vcombine.low %v6508, %v6511
    %v7482 = vunpack.c.l.s4 1983009808
    %v7483 = vunpack.c.0.s8 %v7482
    %v7484 = vlaneseq
    %v7485 = vshrl.u32 %v7484, 7
    %v7486 = vsub.s32 %v7483, %v7485
    %v7487 = vrot.slane %v7479, %v7486
    %v7489 = vunpack.c.l.s4 1983009808
    %v7490 = vunpack.c.0.s8 %v7489
    %v7491 = vlaneseq
    %v7492 = vshrl.u32 %v7491, 7
    %v7493 = vsub.s32 %v7490, %v7492
    %v7494 = vrot.slane %v7480, %v7493
    %v7495 = vcombine.low %v7487, %v7494
    %v7496 = vcombine.low %v6515, %v6518
    %v7497 = vcombine.low %v6521, %v6524
    %v7499 = vunpack.c.l.s4 1983009808
    %v7500 = vunpack.c.0.s8 %v7499
    %v7501 = vlaneseq
    %v7502 = vshrl.u32 %v7501, 7
    %v7503 = vsub.s32 %v7500, %v7502
    %v7504 = vrot.slane %v7496, %v7503
    %v7506 = vunpack.c.l.s4 1983009808
    %v7507 = vunpack.c.0.s8 %v7506
    %v7508 = vlaneseq
    %v7509 = vshrl.u32 %v7508, 7
    %v7510 = vsub.s32 %v7507, %v7509
    %v7511 = vrot.slane %v7497, %v7510
    %v7512 = vcombine.low %v7504, %v7511
    %v7513 = vcombine.low %v6527, %v6531
    %v7514 = vcombine.low %v6534, %v6537
    %v7516 = vunpack.c.l.s4 1983009808
    %v7517 = vunpack.c.0.s8 %v7516
    %v7518 = vlaneseq
    %v7519 = vshrl.u32 %v7518, 7
    %v7520 = vsub.s32 %v7517, %v7519
    %v7521 = vrot.slane %v7513, %v7520
    %v7523 = vunpack.c.l.s4 1983009808
    %v7524 = vunpack.c.0.s8 %v7523
    %v7525 = vlaneseq
    %v7526 = vshrl.u32 %v7525, 7
    %v7527 = vsub.s32 %v7524, %v7526
    %v7528 = vrot.slane %v7514, %v7527
    %v7529 = vcombine.low %v7521, %v7528
    %v7530 = vcombine.low %v6540, %v6543
    %v7531 = vcombine.low %v6547, %v6550
    %v7533 = vunpack.c.l.s4 1983009808
    %v7534 = vunpack.c.0.s8 %v7533
    %v7535 = vlaneseq
    %v7536 = vshrl.u32 %v7535, 7
    %v7537 = vsub.s32 %v7534, %v7536
    %v7538 = vrot.slane %v7530, %v7537
    %v7540 = vunpack.c.l.s4 1983009808
    %v7541 = vunpack.c.0.s8 %v7540
    %v7542 = vlaneseq
    %v7543 = vshrl.u32 %v7542, 7
    %v7544 = vsub.s32 %v7541, %v7543
    %v7545 = vrot.slane %v7531, %v7544
    %v7546 = vcombine.low %v7538, %v7545
    %v7547 = vcombine.low %v6553, %v6556
    %v7548 = vcombine.low %v6559, %v6563
    %v7550 = vunpack.c.l.s4 1983009808
    %v7551 = vunpack.c.0.s8 %v7550
    %v7552 = vlaneseq
    %v7553 = vshrl.u32 %v7552, 7
    %v7554 = vsub.s32 %v7551, %v7553
    %v7555 = vrot.slane %v7547, %v7554
    %v7557 = vunpack.c.l.s4 1983009808
    %v7558 = vunpack.c.0.s8 %v7557
    %v7559 = vlaneseq
    %v7560 = vshrl.u32 %v7559, 7
    %v7561 = vsub.s32 %v7558, %v7560
    %v7562 = vrot.slane %v7548, %v7561
    %v7563 = vcombine.low %v7555, %v7562
    %v7564 = vcombine.low %v6566, %v6569
    %v7565 = vcombine.low %v6572, %v6575
    %v7567 = vunpack.c.l.s4 1983009808
    %v7568 = vunpack.c.0.s8 %v7567
    %v7569 = vlaneseq
    %v7570 = vshrl.u32 %v7569, 7
    %v7571 = vsub.s32 %v7568, %v7570
    %v7572 = vrot.slane %v7564, %v7571
    %v7574 = vunpack.c.l.s4 1983009808
    %v7575 = vunpack.c.0.s8 %v7574
    %v7576 = vlaneseq
    %v7577 = vshrl.u32 %v7576, 7
    %v7578 = vsub.s32 %v7575, %v7577
    %v7579 = vrot.slane %v7565, %v7578
    %v7580 = vcombine.low %v7572, %v7579
    %v7581 = vcombine.low %v6579, %v6582
    %v7582 = vcombine.low %v6585, %v6588
    %v7584 = vunpack.c.l.s4 1983009808
    %v7585 = vunpack.c.0.s8 %v7584
    %v7586 = vlaneseq
    %v7587 = vshrl.u32 %v7586, 7
    %v7588 = vsub.s32 %v7585, %v7587
    %v7589 = vrot.slane %v7581, %v7588
    %v7591 = vunpack.c.l.s4 1983009808
    %v7592 = vunpack.c.0.s8 %v7591
    %v7593 = vlaneseq
    %v7594 = vshrl.u32 %v7593, 7
    %v7595 = vsub.s32 %v7592, %v7594
    %v7596 = vrot.slane %v7582, %v7595
    %v7597 = vcombine.low %v7589, %v7596
    %v7598 = vcombine.low %v6591, %v6595
    %v7599 = vcombine.low %v6598, %v6601
    %v7601 = vunpack.c.l.s4 1983009808
    %v7602 = vunpack.c.0.s8 %v7601
    %v7603 = vlaneseq
    %v7604 = vshrl.u32 %v7603, 7
    %v7605 = vsub.s32 %v7602, %v7604
    %v7606 = vrot.slane %v7598, %v7605
    %v7608 = vunpack.c.l.s4 1983009808
    %v7609 = vunpack.c.0.s8 %v7608
    %v7610 = vlaneseq
    %v7611 = vshrl.u32 %v7610, 7
    %v7612 = vsub.s32 %v7609, %v7611
    %v7613 = vrot.slane %v7599, %v7612
    %v7614 = vcombine.low %v7606, %v7613
    %v7615 = vcombine.low %v6604, %v6607
    %v7616 = vcombine.low %v6611, %v6614
    %v7618 = vunpack.c.l.s4 1983009808
    %v7619 = vunpack.c.0.s8 %v7618
    %v7620 = vlaneseq
    %v7621 = vshrl.u32 %v7620, 7
    %v7622 = vsub.s32 %v7619, %v7621
    %v7623 = vrot.slane %v7615, %v7622
    %v7625 = vunpack.c.l.s4 1983009808
    %v7626 = vunpack.c.0.s8 %v7625
    %v7627 = vlaneseq
    %v7628 = vshrl.u32 %v7627, 7
    %v7629 = vsub.s32 %v7626, %v7628
    %v7630 = vrot.slane %v7616, %v7629
    %v7631 = vcombine.low %v7623, %v7630
    %v7632 = vcombine.low %v6617, %v6620
    %v7633 = vcombine.low %v6623, %v6627
    %v7635 = vunpack.c.l.s4 1983009808
    %v7636 = vunpack.c.0.s8 %v7635
    %v7637 = vlaneseq
    %v7638 = vshrl.u32 %v7637, 7
    %v7639 = vsub.s32 %v7636, %v7638
    %v7640 = vrot.slane %v7632, %v7639
    %v7642 = vunpack.c.l.s4 1983009808
    %v7643 = vunpack.c.0.s8 %v7642
    %v7644 = vlaneseq
    %v7645 = vshrl.u32 %v7644, 7
    %v7646 = vsub.s32 %v7643, %v7645
    %v7647 = vrot.slane %v7633, %v7646
    %v7648 = vcombine.low %v7640, %v7647
    %v7649 = vcombine.low %v6630, %v6633
    %v7650 = vcombine.low %v6636, %v6639
    %v7652 = vunpack.c.l.s4 1983009808
    %v7653 = vunpack.c.0.s8 %v7652
    %v7654 = vlaneseq
    %v7655 = vshrl.u32 %v7654, 7
    %v7656 = vsub.s32 %v7653, %v7655
    %v7657 = vrot.slane %v7649, %v7656
    %v7659 = vunpack.c.l.s4 1983009808
    %v7660 = vunpack.c.0.s8 %v7659
    %v7661 = vlaneseq
    %v7662 = vshrl.u32 %v7661, 7
    %v7663 = vsub.s32 %v7660, %v7662
    %v7664 = vrot.slane %v7650, %v7663
    %v7665 = vcombine.low %v7657, %v7664
    %v7666 = vcombine.low %v6643, %v6646
    %v7667 = vcombine.low %v6649, %v6652
    %v7669 = vunpack.c.l.s4 1983009808
    %v7670 = vunpack.c.0.s8 %v7669
    %v7671 = vlaneseq
    %v7672 = vshrl.u32 %v7671, 7
    %v7673 = vsub.s32 %v7670, %v7672
    %v7674 = vrot.slane %v7666, %v7673
    %v7676 = vunpack.c.l.s4 1983009808
    %v7677 = vunpack.c.0.s8 %v7676
    %v7678 = vlaneseq
    %v7679 = vshrl.u32 %v7678, 7
    %v7680 = vsub.s32 %v7677, %v7679
    %v7681 = vrot.slane %v7667, %v7680
    %v7682 = vcombine.low %v7674, %v7681
    %v7683 = vcombine.low %v6655, %v6659
    %v7684 = vcombine.low %v6662, %v6665
    %v7686 = vunpack.c.l.s4 1983009808
    %v7687 = vunpack.c.0.s8 %v7686
    %v7688 = vlaneseq
    %v7689 = vshrl.u32 %v7688, 7
    %v7690 = vsub.s32 %v7687, %v7689
    %v7691 = vrot.slane %v7683, %v7690
    %v7693 = vunpack.c.l.s4 1983009808
    %v7694 = vunpack.c.0.s8 %v7693
    %v7695 = vlaneseq
    %v7696 = vshrl.u32 %v7695, 7
    %v7697 = vsub.s32 %v7694, %v7696
    %v7698 = vrot.slane %v7684, %v7697
    %v7699 = vcombine.low %v7691, %v7698
    %v7700 = vcombine.low %v6668, %v6671
    %v7701 = vcombine.low %v6675, %v6678
    %v7703 = vunpack.c.l.s4 1983009808
    %v7704 = vunpack.c.0.s8 %v7703
    %v7705 = vlaneseq
    %v7706 = vshrl.u32 %v7705, 7
    %v7707 = vsub.s32 %v7704, %v7706
    %v7708 = vrot.slane %v7700, %v7707
    %v7710 = vunpack.c.l.s4 1983009808
    %v7711 = vunpack.c.0.s8 %v7710
    %v7712 = vlaneseq
    %v7713 = vshrl.u32 %v7712, 7
    %v7714 = vsub.s32 %v7711, %v7713
    %v7715 = vrot.slane %v7701, %v7714
    %v7716 = vcombine.low %v7708, %v7715
    %v7717 = vcombine.low %v6681, %v6684
    %v7718 = vcombine.low %v6687, %v6691
    %v7720 = vunpack.c.l.s4 1983009808
    %v7721 = vunpack.c.0.s8 %v7720
    %v7722 = vlaneseq
    %v7723 = vshrl.u32 %v7722, 7
    %v7724 = vsub.s32 %v7721, %v7723
    %v7725 = vrot.slane %v7717, %v7724
    %v7727 = vunpack.c.l.s4 1983009808
    %v7728 = vunpack.c.0.s8 %v7727
    %v7729 = vlaneseq
    %v7730 = vshrl.u32 %v7729, 7
    %v7731 = vsub.s32 %v7728, %v7730
    %v7732 = vrot.slane %v7718, %v7731
    %v7733 = vcombine.low %v7725, %v7732
    %v7734 = vcombine.low %v6694, %v6697
    %v7735 = vcombine.low %v6700, %v6703
    %v7737 = vunpack.c.l.s4 1983009808
    %v7738 = vunpack.c.0.s8 %v7737
    %v7739 = vlaneseq
    %v7740 = vshrl.u32 %v7739, 7
    %v7741 = vsub.s32 %v7738, %v7740
    %v7742 = vrot.slane %v7734, %v7741
    %v7744 = vunpack.c.l.s4 1983009808
    %v7745 = vunpack.c.0.s8 %v7744
    %v7746 = vlaneseq
    %v7747 = vshrl.u32 %v7746, 7
    %v7748 = vsub.s32 %v7745, %v7747
    %v7749 = vrot.slane %v7735, %v7748
    %v7750 = vcombine.low %v7742, %v7749
    %v7776 = vcombine.low %v5904, %v5911
    %v7777 = vcombine.low %v5912, %v5919
    %v7779 = vunpack.c.l.s4 1983009808
    %v7780 = vunpack.c.0.s8 %v7779
    %v7781 = vlaneseq
    %v7782 = vshrl.u32 %v7781, 7
    %v7783 = vsub.s32 %v7780, %v7782
    %v7784 = vrot.slane %v7776, %v7783
    %v7786 = vunpack.c.l.s4 1983009808
    %v7787 = vunpack.c.0.s8 %v7786
    %v7788 = vlaneseq
    %v7789 = vshrl.u32 %v7788, 7
    %v7790 = vsub.s32 %v7787, %v7789
    %v7791 = vrot.slane %v7777, %v7790
    %v7792 = vcombine.low %v7784, %v7791
    %v7793 = vcombine.low %v6357, %v5927
    %v7794 = vcombine.low %v5934, %v5935
    %v7796 = vunpack.c.l.s4 1983009808
    %v7797 = vunpack.c.0.s8 %v7796
    %v7798 = vlaneseq
    %v7799 = vshrl.u32 %v7798, 7
    %v7800 = vsub.s32 %v7797, %v7799
    %v7801 = vrot.slane %v7793, %v7800
    %v7803 = vunpack.c.l.s4 1983009808
    %v7804 = vunpack.c.0.s8 %v7803
    %v7805 = vlaneseq
    %v7806 = vshrl.u32 %v7805, 7
    %v7807 = vsub.s32 %v7804, %v7806
    %v7808 = vrot.slane %v7794, %v7807
    %v7809 = vcombine.low %v7801, %v7808
    %v7810 = vcombine.low %v5942, %v6358
    %v7811 = vcombine.low %v5950, %v5957
    %v7813 = vunpack.c.l.s4 1983009808
    %v7814 = vunpack.c.0.s8 %v7813
    %v7815 = vlaneseq
    %v7816 = vshrl.u32 %v7815, 7
    %v7817 = vsub.s32 %v7814, %v7816
    %v7818 = vrot.slane %v7810, %v7817
    %v7820 = vunpack.c.l.s4 1983009808
    %v7821 = vunpack.c.0.s8 %v7820
    %v7822 = vlaneseq
    %v7823 = vshrl.u32 %v7822, 7
    %v7824 = vsub.s32 %v7821, %v7823
    %v7825 = vrot.slane %v7811, %v7824
    %v7826 = vcombine.low %v7818, %v7825
    %v7827 = vcombine.low %v5958, %v5965
    %v7828 = vcombine.low %v6359, %v5973
    %v7830 = vunpack.c.l.s4 1983009808
    %v7831 = vunpack.c.0.s8 %v7830
    %v7832 = vlaneseq
    %v7833 = vshrl.u32 %v7832, 7
    %v7834 = vsub.s32 %v7831, %v7833
    %v7835 = vrot.slane %v7827, %v7834
    %v7837 = vunpack.c.l.s4 1983009808
    %v7838 = vunpack.c.0.s8 %v7837
    %v7839 = vlaneseq
    %v7840 = vshrl.u32 %v7839, 7
    %v7841 = vsub.s32 %v7838, %v7840
    %v7842 = vrot.slane %v7828, %v7841
    %v7843 = vcombine.low %v7835, %v7842
    %v7844 = vcombine.low %v5980, %v5981
    %v7845 = vcombine.low %v5988, %v6360
    %v7847 = vunpack.c.l.s4 1983009808
    %v7848 = vunpack.c.0.s8 %v7847
    %v7849 = vlaneseq
    %v7850 = vshrl.u32 %v7849, 7
    %v7851 = vsub.s32 %v7848, %v7850
    %v7852 = vrot.slane %v7844, %v7851
    %v7854 = vunpack.c.l.s4 1983009808
    %v7855 = vunpack.c.0.s8 %v7854
    %v7856 = vlaneseq
    %v7857 = vshrl.u32 %v7856, 7
    %v7858 = vsub.s32 %v7855, %v7857
    %v7859 = vrot.slane %v7845, %v7858
    %v7860 = vcombine.low %v7852, %v7859
    %v7861 = vcombine.low %v5996, %v6003
    %v7862 = vcombine.low %v6004, %v6011
    %v7864 = vunpack.c.l.s4 1983009808
    %v7865 = vunpack.c.0.s8 %v7864
    %v7866 = vlaneseq
    %v7867 = vshrl.u32 %v7866, 7
    %v7868 = vsub.s32 %v7865, %v7867
    %v7869 = vrot.slane %v7861, %v7868
    %v7871 = vunpack.c.l.s4 1983009808
    %v7872 = vunpack.c.0.s8 %v7871
    %v7873 = vlaneseq
    %v7874 = vshrl.u32 %v7873, 7
    %v7875 = vsub.s32 %v7872, %v7874
    %v7876 = vrot.slane %v7862, %v7875
    %v7877 = vcombine.low %v7869, %v7876
    %v7878 = vcombine.low %v6361, %v6019
    %v7879 = vcombine.low %v6026, %v6027
    %v7881 = vunpack.c.l.s4 1983009808
    %v7882 = vunpack.c.0.s8 %v7881
    %v7883 = vlaneseq
    %v7884 = vshrl.u32 %v7883, 7
    %v7885 = vsub.s32 %v7882, %v7884
    %v7886 = vrot.slane %v7878, %v7885
    %v7888 = vunpack.c.l.s4 1983009808
    %v7889 = vunpack.c.0.s8 %v7888
    %v7890 = vlaneseq
    %v7891 = vshrl.u32 %v7890, 7
    %v7892 = vsub.s32 %v7889, %v7891
    %v7893 = vrot.slane %v7879, %v7892
    %v7894 = vcombine.low %v7886, %v7893
    %v7895 = vcombine.low %v6034, %v6362
    %v7896 = vcombine.low %v6042, %v6049
    %v7898 = vunpack.c.l.s4 1983009808
    %v7899 = vunpack.c.0.s8 %v7898
    %v7900 = vlaneseq
    %v7901 = vshrl.u32 %v7900, 7
    %v7902 = vsub.s32 %v7899, %v7901
    %v7903 = vrot.slane %v7895, %v7902
    %v7905 = vunpack.c.l.s4 1983009808
    %v7906 = vunpack.c.0.s8 %v7905
    %v7907 = vlaneseq
    %v7908 = vshrl.u32 %v7907, 7
    %v7909 = vsub.s32 %v7906, %v7908
    %v7910 = vrot.slane %v7896, %v7909
    %v7911 = vcombine.low %v7903, %v7910
    %v7912 = vcombine.low %v6050, %v6057
    %v7913 = vcombine.low %v6363, %v6065
    %v7915 = vunpack.c.l.s4 1983009808
    %v7916 = vunpack.c.0.s8 %v7915
    %v7917 = vlaneseq
    %v7918 = vshrl.u32 %v7917, 7
    %v7919 = vsub.s32 %v7916, %v7918
    %v7920 = vrot.slane %v7912, %v7919
    %v7922 = vunpack.c.l.s4 1983009808
    %v7923 = vunpack.c.0.s8 %v7922
    %v7924 = vlaneseq
    %v7925 = vshrl.u32 %v7924, 7
    %v7926 = vsub.s32 %v7923, %v7925
    %v7927 = vrot.slane %v7913, %v7926
    %v7928 = vcombine.low %v7920, %v7927
    %v7929 = vcombine.low %v6072, %v6073
    %v7930 = vcombine.low %v6080, %v6364
    %v7932 = vunpack.c.l.s4 1983009808
    %v7933 = vunpack.c.0.s8 %v7932
    %v7934 = vlaneseq
    %v7935 = vshrl.u32 %v7934, 7
    %v7936 = vsub.s32 %v7933, %v7935
    %v7937 = vrot.slane %v7929, %v7936
    %v7939 = vunpack.c.l.s4 1983009808
    %v7940 = vunpack.c.0.s8 %v7939
    %v7941 = vlaneseq
    %v7942 = vshrl.u32 %v7941, 7
    %v7943 = vsub.s32 %v7940, %v7942
    %v7944 = vrot.slane %v7930, %v7943
    %v7945 = vcombine.low %v7937, %v7944
    %v7946 = vcombine.low %v6088, %v6095
    %v7947 = vcombine.low %v6096, %v6103
    %v7949 = vunpack.c.l.s4 1983009808
    %v7950 = vunpack.c.0.s8 %v7949
    %v7951 = vlaneseq
    %v7952 = vshrl.u32 %v7951, 7
    %v7953 = vsub.s32 %v7950, %v7952
    %v7954 = vrot.slane %v7946, %v7953
    %v7956 = vunpack.c.l.s4 1983009808
    %v7957 = vunpack.c.0.s8 %v7956
    %v7958 = vlaneseq
    %v7959 = vshrl.u32 %v7958, 7
    %v7960 = vsub.s32 %v7957, %v7959
    %v7961 = vrot.slane %v7947, %v7960
    %v7962 = vcombine.low %v7954, %v7961
    %v7963 = vcombine.low %v6365, %v6111
    %v7964 = vcombine.low %v6118, %v6119
    %v7966 = vunpack.c.l.s4 1983009808
    %v7967 = vunpack.c.0.s8 %v7966
    %v7968 = vlaneseq
    %v7969 = vshrl.u32 %v7968, 7
    %v7970 = vsub.s32 %v7967, %v7969
    %v7971 = vrot.slane %v7963, %v7970
    %v7973 = vunpack.c.l.s4 1983009808
    %v7974 = vunpack.c.0.s8 %v7973
    %v7975 = vlaneseq
    %v7976 = vshrl.u32 %v7975, 7
    %v7977 = vsub.s32 %v7974, %v7976
    %v7978 = vrot.slane %v7964, %v7977
    %v7979 = vcombine.low %v7971, %v7978
    %v7980 = vcombine.low %v6126, %v6366
    %v7981 = vcombine.low %v6134, %v6141
    %v7983 = vunpack.c.l.s4 1983009808
    %v7984 = vunpack.c.0.s8 %v7983
    %v7985 = vlaneseq
    %v7986 = vshrl.u32 %v7985, 7
    %v7987 = vsub.s32 %v7984, %v7986
    %v7988 = vrot.slane %v7980, %v7987
    %v7990 = vunpack.c.l.s4 1983009808
    %v7991 = vunpack.c.0.s8 %v7990
    %v7992 = vlaneseq
    %v7993 = vshrl.u32 %v7992, 7
    %v7994 = vsub.s32 %v7991, %v7993
    %v7995 = vrot.slane %v7981, %v7994
    %v7996 = vcombine.low %v7988, %v7995
    %v7997 = vcombine.low %v6142, %v6149
    %v7998 = vcombine.low %v6367, %v6157
    %v8000 = vunpack.c.l.s4 1983009808
    %v8001 = vunpack.c.0.s8 %v8000
    %v8002 = vlaneseq
    %v8003 = vshrl.u32 %v8002, 7
    %v8004 = vsub.s32 %v8001, %v8003
    %v8005 = vrot.slane %v7997, %v8004
    %v8007 = vunpack.c.l.s4 1983009808
    %v8008 = vunpack.c.0.s8 %v8007
    %v8009 = vlaneseq
    %v8010 = vshrl.u32 %v8009, 7
    %v8011 = vsub.s32 %v8008, %v8010
    %v8012 = vrot.slane %v7998, %v8011
    %v8013 = vcombine.low %v8005, %v8012
    %v8014 = vcombine.low %v6164, %v6165
    %v8015 = vcombine.low %v6172, %v6368
    %v8017 = vunpack.c.l.s4 1983009808
    %v8018 = vunpack.c.0.s8 %v8017
    %v8019 = vlaneseq
    %v8020 = vshrl.u32 %v8019, 7
    %v8021 = vsub.s32 %v8018, %v8020
    %v8022 = vrot.slane %v8014, %v8021
    %v8024 = vunpack.c.l.s4 1983009808
    %v8025 = vunpack.c.0.s8 %v8024
    %v8026 = vlaneseq
    %v8027 = vshrl.u32 %v8026, 7
    %v8028 = vsub.s32 %v8025, %v8027
    %v8029 = vrot.slane %v8015, %v8028
    %v8030 = vcombine.low %v8022, %v8029
    %v8031 = vcombine.low %v6180, %v6187
    %v8032 = vcombine.low %v6188, %v6195
    %v8034 = vunpack.c.l.s4 1983009808
    %v8035 = vunpack.c.0.s8 %v8034
    %v8036 = vlaneseq
    %v8037 = vshrl.u32 %v8036, 7
    %v8038 = vsub.s32 %v8035, %v8037
    %v8039 = vrot.slane %v8031, %v8038
    %v8041 = vunpack.c.l.s4 1983009808
    %v8042 = vunpack.c.0.s8 %v8041
    %v8043 = vlaneseq
    %v8044 = vshrl.u32 %v8043, 7
    %v8045 = vsub.s32 %v8042, %v8044
    %v8046 = vrot.slane %v8032, %v8045
    %v8047 = vcombine.low %v8039, %v8046
    %v8048 = vcombine.low %v6369, %v6203
    %v8049 = vcombine.low %v6210, %v6211
    %v8051 = vunpack.c.l.s4 1983009808
    %v8052 = vunpack.c.0.s8 %v8051
    %v8053 = vlaneseq
    %v8054 = vshrl.u32 %v8053, 7
    %v8055 = vsub.s32 %v8052, %v8054
    %v8056 = vrot.slane %v8048, %v8055
    %v8058 = vunpack.c.l.s4 1983009808
    %v8059 = vunpack.c.0.s8 %v8058
    %v8060 = vlaneseq
    %v8061 = vshrl.u32 %v8060, 7
    %v8062 = vsub.s32 %v8059, %v8061
    %v8063 = vrot.slane %v8049, %v8062
    %v8064 = vcombine.low %v8056, %v8063
    %v8065 = vcombine.low %v6218, %v6370
    %v8066 = vcombine.low %v6226, %v6233
    %v8068 = vunpack.c.l.s4 1983009808
    %v8069 = vunpack.c.0.s8 %v8068
    %v8070 = vlaneseq
    %v8071 = vshrl.u32 %v8070, 7
    %v8072 = vsub.s32 %v8069, %v8071
    %v8073 = vrot.slane %v8065, %v8072
    %v8075 = vunpack.c.l.s4 1983009808
    %v8076 = vunpack.c.0.s8 %v8075
    %v8077 = vlaneseq
    %v8078 = vshrl.u32 %v8077, 7
    %v8079 = vsub.s32 %v8076, %v8078
    %v8080 = vrot.slane %v8066, %v8079
    %v8081 = vcombine.low %v8073, %v8080
    %v8082 = vcombine.low %v6234, %v6241
    %v8083 = vcombine.low %v6371, %v6249
    %v8085 = vunpack.c.l.s4 1983009808
    %v8086 = vunpack.c.0.s8 %v8085
    %v8087 = vlaneseq
    %v8088 = vshrl.u32 %v8087, 7
    %v8089 = vsub.s32 %v8086, %v8088
    %v8090 = vrot.slane %v8082, %v8089
    %v8092 = vunpack.c.l.s4 1983009808
    %v8093 = vunpack.c.0.s8 %v8092
    %v8094 = vlaneseq
    %v8095 = vshrl.u32 %v8094, 7
    %v8096 = vsub.s32 %v8093, %v8095
    %v8097 = vrot.slane %v8083, %v8096
    %v8098 = vcombine.low %v8090, %v8097
    %v8099 = vcombine.low %v6256, %v6257
    %v8100 = vcombine.low %v6264, %v6372
    %v8102 = vunpack.c.l.s4 1983009808
    %v8103 = vunpack.c.0.s8 %v8102
    %v8104 = vlaneseq
    %v8105 = vshrl.u32 %v8104, 7
    %v8106 = vsub.s32 %v8103, %v8105
    %v8107 = vrot.slane %v8099, %v8106
    %v8109 = vunpack.c.l.s4 1983009808
    %v8110 = vunpack.c.0.s8 %v8109
    %v8111 = vlaneseq
    %v8112 = vshrl.u32 %v8111, 7
    %v8113 = vsub.s32 %v8110, %v8112
    %v8114 = vrot.slane %v8100, %v8113
    %v8115 = vcombine.low %v8107, %v8114
    %v8116 = vcombine.low %v6272, %v6279
    %v8117 = vcombine.low %v6280, %v6287
    %v8119 = vunpack.c.l.s4 1983009808
    %v8120 = vunpack.c.0.s8 %v8119
    %v8121 = vlaneseq
    %v8122 = vshrl.u32 %v8121, 7
    %v8123 = vsub.s32 %v8120, %v8122
    %v8124 = vrot.slane %v8116, %v8123
    %v8126 = vunpack.c.l.s4 1983009808
    %v8127 = vunpack.c.0.s8 %v8126
    %v8128 = vlaneseq
    %v8129 = vshrl.u32 %v8128, 7
    %v8130 = vsub.s32 %v8127, %v8129
    %v8131 = vrot.slane %v8117, %v8130
    %v8132 = vcombine.low %v8124, %v8131
    %v8133 = vcombine.low %v6373, %v6295
    %v8134 = vcombine.low %v6302, %v6303
    %v8136 = vunpack.c.l.s4 1983009808
    %v8137 = vunpack.c.0.s8 %v8136
    %v8138 = vlaneseq
    %v8139 = vshrl.u32 %v8138, 7
    %v8140 = vsub.s32 %v8137, %v8139
    %v8141 = vrot.slane %v8133, %v8140
    %v8143 = vunpack.c.l.s4 1983009808
    %v8144 = vunpack.c.0.s8 %v8143
    %v8145 = vlaneseq
    %v8146 = vshrl.u32 %v8145, 7
    %v8147 = vsub.s32 %v8144, %v8146
    %v8148 = vrot.slane %v8134, %v8147
    %v8149 = vcombine.low %v8141, %v8148
    %v8150 = vcombine.low %v6310, %v6374
    %v8151 = vcombine.low %v6318, %v6325
    %v8153 = vunpack.c.l.s4 1983009808
    %v8154 = vunpack.c.0.s8 %v8153
    %v8155 = vlaneseq
    %v8156 = vshrl.u32 %v8155, 7
    %v8157 = vsub.s32 %v8154, %v8156
    %v8158 = vrot.slane %v8150, %v8157
    %v8160 = vunpack.c.l.s4 1983009808
    %v8161 = vunpack.c.0.s8 %v8160
    %v8162 = vlaneseq
    %v8163 = vshrl.u32 %v8162, 7
    %v8164 = vsub.s32 %v8161, %v8163
    %v8165 = vrot.slane %v8151, %v8164
    %v8166 = vcombine.low %v8158, %v8165
    %v8167 = vcombine.low %v6326, %v6333
    %v8168 = vcombine.low %v6375, %v6341
    %v8170 = vunpack.c.l.s4 1983009808
    %v8171 = vunpack.c.0.s8 %v8170
    %v8172 = vlaneseq
    %v8173 = vshrl.u32 %v8172, 7
    %v8174 = vsub.s32 %v8171, %v8173
    %v8175 = vrot.slane %v8167, %v8174
    %v8177 = vunpack.c.l.s4 1983009808
    %v8178 = vunpack.c.0.s8 %v8177
    %v8179 = vlaneseq
    %v8180 = vshrl.u32 %v8179, 7
    %v8181 = vsub.s32 %v8178, %v8180
    %v8182 = vrot.slane %v8168, %v8181
    %v8183 = vcombine.low %v8175, %v8182
    %v8184 = vcombine.low %v6348, %v6349
    %v8185 = vcombine.low %v6356, %v6376
    %v8187 = vunpack.c.l.s4 1983009808
    %v8188 = vunpack.c.0.s8 %v8187
    %v8189 = vlaneseq
    %v8190 = vshrl.u32 %v8189, 7
    %v8191 = vsub.s32 %v8188, %v8190
    %v8192 = vrot.slane %v8184, %v8191
    %v8194 = vunpack.c.l.s4 1983009808
    %v8195 = vunpack.c.0.s8 %v8194
    %v8196 = vlaneseq
    %v8197 = vshrl.u32 %v8196, 7
    %v8198 = vsub.s32 %v8195, %v8197
    %v8199 = vrot.slane %v8185, %v8198
    %v8200 = vcombine.low %v8192, %v8199
    %v8226 = vcombine.low %v5926, %v5927
    %v8228 = vunpack.c.l.s4 1983009808
    %v8229 = vunpack.c.0.s8 %v8228
    %v8230 = vlaneseq
    %v8231 = vshrl.u32 %v8230, 7
    %v8232 = vsub.s32 %v8229, %v8231
    %v8233 = vrot.slane %v8226, %v8232
    %v8234 = vcombine.low %v8233, %v7808
    %v8235 = vcombine.low %v5942, %v5949
    %v8237 = vunpack.c.l.s4 1983009808
    %v8238 = vunpack.c.0.s8 %v8237
    %v8239 = vlaneseq
    %v8240 = vshrl.u32 %v8239, 7
    %v8241 = vsub.s32 %v8238, %v8240
    %v8242 = vrot.slane %v8235, %v8241
    %v8243 = vcombine.low %v8242, %v7825
    %v8244 = vcombine.low %v5972, %v5973
    %v8246 = vunpack.c.l.s4 1983009808
    %v8247 = vunpack.c.0.s8 %v8246
    %v8248 = vlaneseq
    %v8249 = vshrl.u32 %v8248, 7
    %v8250 = vsub.s32 %v8247, %v8249
    %v8251 = vrot.slane %v8244, %v8250
    %v8252 = vcombine.low %v7835, %v8251
    %v8253 = vcombine.low %v5988, %v5995
    %v8255 = vunpack.c.l.s4 1983009808
    %v8256 = vunpack.c.0.s8 %v8255
    %v8257 = vlaneseq
    %v8258 = vshrl.u32 %v8257, 7
    %v8259 = vsub.s32 %v8256, %v8258
    %v8260 = vrot.slane %v8253, %v8259
    %v8261 = vcombine.low %v7852, %v8260
    %v8262 = vcombine.low %v6018, %v6019
    %v8264 = vunpack.c.l.s4 1983009808
    %v8265 = vunpack.c.0.s8 %v8264
    %v8266 = vlaneseq
    %v8267 = vshrl.u32 %v8266, 7
    %v8268 = vsub.s32 %v8265, %v8267
    %v8269 = vrot.slane %v8262, %v8268
    %v8270 = vcombine.low %v8269, %v7893
    %v8271 = vcombine.low %v6034, %v6041
    %v8273 = vunpack.c.l.s4 1983009808
    %v8274 = vunpack.c.0.s8 %v8273
    %v8275 = vlaneseq
    %v8276 = vshrl.u32 %v8275, 7
    %v8277 = vsub.s32 %v8274, %v8276
    %v8278 = vrot.slane %v8271, %v8277
    %v8279 = vcombine.low %v8278, %v7910
    %v8280 = vcombine.low %v6064, %v6065
    %v8282 = vunpack.c.l.s4 1983009808
    %v8283 = vunpack.c.0.s8 %v8282
    %v8284 = vlaneseq
    %v8285 = vshrl.u32 %v8284, 7
    %v8286 = vsub.s32 %v8283, %v8285
    %v8287 = vrot.slane %v8280, %v8286
    %v8288 = vcombine.low %v7920, %v8287
    %v8289 = vcombine.low %v6080, %v6087
    %v8291 = vunpack.c.l.s4 1983009808
    %v8292 = vunpack.c.0.s8 %v8291
    %v8293 = vlaneseq
    %v8294 = vshrl.u32 %v8293, 7
    %v8295 = vsub.s32 %v8292, %v8294
    %v8296 = vrot.slane %v8289, %v8295
    %v8297 = vcombine.low %v7937, %v8296
    %v8298 = vcombine.low %v6110, %v6111
    %v8300 = vunpack.c.l.s4 1983009808
    %v8301 = vunpack.c.0.s8 %v8300
    %v8302 = vlaneseq
    %v8303 = vshrl.u32 %v8302, 7
    %v8304 = vsub.s32 %v8301, %v8303
    %v8305 = vrot.slane %v8298, %v8304
    %v8306 = vcombine.low %v8305, %v7978
    %v8307 = vcombine.low %v6126, %v6716
    %v8308 = vcombine.low %v6717, %v6724
    %v8310 = vunpack.c.l.s4 1983009808
    %v8311 = vunpack.c.0.s8 %v8310
    %v8312 = vlaneseq
    %v8313 = vshrl.u32 %v8312, 7
    %v8314 = vsub.s32 %v8311, %v8313
    %v8315 = vrot.slane %v8307, %v8314
    %v8317 = vunpack.c.l.s4 1983009808
    %v8318 = vunpack.c.0.s8 %v8317
    %v8319 = vlaneseq
    %v8320 = vshrl.u32 %v8319, 7
    %v8321 = vsub.s32 %v8318, %v8320
    %v8322 = vrot.slane %v8308, %v8321
    %v8323 = vcombine.low %v8315, %v8322
    %v8324 = vcombine.low %v6725, %v6732
    %v8325 = vcombine.low %v6156, %v6157
    %v8327 = vunpack.c.l.s4 1983009808
    %v8328 = vunpack.c.0.s8 %v8327
    %v8329 = vlaneseq
    %v8330 = vshrl.u32 %v8329, 7
    %v8331 = vsub.s32 %v8328, %v8330
    %v8332 = vrot.slane %v8324, %v8331
    %v8334 = vunpack.c.l.s4 1983009808
    %v8335 = vunpack.c.0.s8 %v8334
    %v8336 = vlaneseq
    %v8337 = vshrl.u32 %v8336, 7
    %v8338 = vsub.s32 %v8335, %v8337
    %v8339 = vrot.slane %v8325, %v8338
    %v8340 = vcombine.low %v8332, %v8339
    %v8341 = vcombine.low %v6172, %v6179
    %v8343 = vunpack.c.l.s4 1983009808
    %v8344 = vunpack.c.0.s8 %v8343
    %v8345 = vlaneseq
    %v8346 = vshrl.u32 %v8345, 7
    %v8347 = vsub.s32 %v8344, %v8346
    %v8348 = vrot.slane %v8341, %v8347
    %v8349 = vcombine.low %v8022, %v8348
    %v8350 = vcombine.low %v6202, %v6203
    %v8352 = vunpack.c.l.s4 1983009808
    %v8353 = vunpack.c.0.s8 %v8352
    %v8354 = vlaneseq
    %v8355 = vshrl.u32 %v8354, 7
    %v8356 = vsub.s32 %v8353, %v8355
    %v8357 = vrot.slane %v8350, %v8356
    %v8358 = vcombine.low %v8357, %v8063
    %v8359 = vcombine.low %v6218, %v6225
    %v8361 = vunpack.c.l.s4 1983009808
    %v8362 = vunpack.c.0.s8 %v8361
    %v8363 = vlaneseq
    %v8364 = vshrl.u32 %v8363, 7
    %v8365 = vsub.s32 %v8362, %v8364
    %v8366 = vrot.slane %v8359, %v8365
    %v8367 = vcombine.low %v8366, %v8080
    %v8368 = vcombine.low %v6248, %v6249
    %v8370 = vunpack.c.l.s4 1983009808
    %v8371 = vunpack.c.0.s8 %v8370
    %v8372 = vlaneseq
    %v8373 = vshrl.u32 %v8372, 7
    %v8374 = vsub.s32 %v8371, %v8373
    %v8375 = vrot.slane %v8368, %v8374
    %v8376 = vcombine.low %v8090, %v8375
    %v8377 = vcombine.low %v6264, %v6271
    %v8379 = vunpack.c.l.s4 1983009808
    %v8380 = vunpack.c.0.s8 %v8379
    %v8381 = vlaneseq
    %v8382 = vshrl.u32 %v8381, 7
    %v8383 = vsub.s32 %v8380, %v8382
    %v8384 = vrot.slane %v8377, %v8383
    %v8385 = vcombine.low %v8107, %v8384
    %v8386 = vcombine.low %v6294, %v6295
    %v8388 = vunpack.c.l.s4 1983009808
    %v8389 = vunpack.c.0.s8 %v8388
    %v8390 = vlaneseq
    %v8391 = vshrl.u32 %v8390, 7
    %v8392 = vsub.s32 %v8389, %v8391
    %v8393 = vrot.slane %v8386, %v8392
    %v8394 = vcombine.low %v8393, %v8148
    %v8395 = vcombine.low %v6310, %v6317
    %v8397 = vunpack.c.l.s4 1983009808
    %v8398 = vunpack.c.0.s8 %v8397
    %v8399 = vlaneseq
    %v8400 = vshrl.u32 %v8399, 7
    %v8401 = vsub.s32 %v8398, %v8400
    %v8402 = vrot.slane %v8395, %v8401
    %v8403 = vcombine.low %v8402, %v8165
    %v8404 = vcombine.low %v6340, %v6341
    %v8406 = vunpack.c.l.s4 1983009808
    %v8407 = vunpack.c.0.s8 %v8406
    %v8408 = vlaneseq
    %v8409 = vshrl.u32 %v8408, 7
    %v8410 = vsub.s32 %v8407, %v8409
    %v8411 = vrot.slane %v8404, %v8410
    %v8412 = vcombine.low %v8175, %v8411
    %v8413 = vcombine.low %v6356, %v6739
    %v8415 = vunpack.c.l.s4 1983009808
    %v8416 = vunpack.c.0.s8 %v8415
    %v8417 = vlaneseq
    %v8418 = vshrl.u32 %v8417, 7
    %v8419 = vsub.s32 %v8416, %v8418
    %v8420 = vrot.slane %v8413, %v8419
    %v8421 = vcombine.low %v8192, %v8420
    %v8422 = vcombine.low %v6740, %v6747
    %v8423 = vcombine.low %v6748, %v6755
    %v8425 = vunpack.c.l.s4 1983009808
    %v8426 = vunpack.c.0.s8 %v8425
    %v8427 = vlaneseq
    %v8428 = vshrl.u32 %v8427, 7
    %v8429 = vsub.s32 %v8426, %v8428
    %v8430 = vrot.slane %v8422, %v8429
    %v8432 = vunpack.c.l.s4 1983009808
    %v8433 = vunpack.c.0.s8 %v8432
    %v8434 = vlaneseq
    %v8435 = vshrl.u32 %v8434, 7
    %v8436 = vsub.s32 %v8433, %v8435
    %v8437 = vrot.slane %v8423, %v8436
    %v8438 = vcombine.low %v8430, %v8437
    %v8460 = vcombine.low %v6403, %v6406
    %v8461 = vcombine.low %v6409, %v6412
    %v8463 = vunpack.c.l.s4 1983009808
    %v8464 = vunpack.c.0.s8 %v8463
    %v8465 = vlaneseq
    %v8466 = vshrl.u32 %v8465, 7
    %v8467 = vsub.s32 %v8464, %v8466
    %v8468 = vrot.slane %v8460, %v8467
    %v8470 = vunpack.c.l.s4 1983009808
    %v8471 = vunpack.c.0.s8 %v8470
    %v8472 = vlaneseq
    %v8473 = vshrl.u32 %v8472, 7
    %v8474 = vsub.s32 %v8471, %v8473
    %v8475 = vrot.slane %v8461, %v8474
    %v8476 = vcombine.low %v8468, %v8475
    %v8477 = vcombine.low %v6415, %v6419
    %v8478 = vcombine.low %v6422, %v6425
    %v8480 = vunpack.c.l.s4 1983009808
    %v8481 = vunpack.c.0.s8 %v8480
    %v8482 = vlaneseq
    %v8483 = vshrl.u32 %v8482, 7
    %v8484 = vsub.s32 %v8481, %v8483
    %v8485 = vrot.slane %v8477, %v8484
    %v8487 = vunpack.c.l.s4 1983009808
    %v8488 = vunpack.c.0.s8 %v8487
    %v8489 = vlaneseq
    %v8490 = vshrl.u32 %v8489, 7
    %v8491 = vsub.s32 %v8488, %v8490
    %v8492 = vrot.slane %v8478, %v8491
    %v8493 = vcombine.low %v8485, %v8492
    %v8494 = vcombine.low %v6428, %v6431
    %v8495 = vcombine.low %v6435, %v6438
    %v8497 = vunpack.c.l.s4 1983009808
    %v8498 = vunpack.c.0.s8 %v8497
    %v8499 = vlaneseq
    %v8500 = vshrl.u32 %v8499, 7
    %v8501 = vsub.s32 %v8498, %v8500
    %v8502 = vrot.slane %v8494, %v8501
    %v8504 = vunpack.c.l.s4 1983009808
    %v8505 = vunpack.c.0.s8 %v8504
    %v8506 = vlaneseq
    %v8507 = vshrl.u32 %v8506, 7
    %v8508 = vsub.s32 %v8505, %v8507
    %v8509 = vrot.slane %v8495, %v8508
    %v8510 = vcombine.low %v8502, %v8509
    %v8511 = vcombine.low %v6441, %v6444
    %v8512 = vcombine.low %v6447, %v6451
    %v8514 = vunpack.c.l.s4 1983009808
    %v8515 = vunpack.c.0.s8 %v8514
    %v8516 = vlaneseq
    %v8517 = vshrl.u32 %v8516, 7
    %v8518 = vsub.s32 %v8515, %v8517
    %v8519 = vrot.slane %v8511, %v8518
    %v8521 = vunpack.c.l.s4 1983009808
    %v8522 = vunpack.c.0.s8 %v8521
    %v8523 = vlaneseq
    %v8524 = vshrl.u32 %v8523, 7
    %v8525 = vsub.s32 %v8522, %v8524
    %v8526 = vrot.slane %v8512, %v8525
    %v8527 = vcombine.low %v8519, %v8526
    %v8528 = vcombine.low %v6454, %v6457
    %v8529 = vcombine.low %v6460, %v6463
    %v8531 = vunpack.c.l.s4 1983009808
    %v8532 = vunpack.c.0.s8 %v8531
    %v8533 = vlaneseq
    %v8534 = vshrl.u32 %v8533, 7
    %v8535 = vsub.s32 %v8532, %v8534
    %v8536 = vrot.slane %v8528, %v8535
    %v8538 = vunpack.c.l.s4 1983009808
    %v8539 = vunpack.c.0.s8 %v8538
    %v8540 = vlaneseq
    %v8541 = vshrl.u32 %v8540, 7
    %v8542 = vsub.s32 %v8539, %v8541
    %v8543 = vrot.slane %v8529, %v8542
    %v8544 = vcombine.low %v8536, %v8543
    %v8545 = vcombine.low %v6467, %v6470
    %v8546 = vcombine.low %v6473, %v6476
    %v8548 = vunpack.c.l.s4 1983009808
    %v8549 = vunpack.c.0.s8 %v8548
    %v8550 = vlaneseq
    %v8551 = vshrl.u32 %v8550, 7
    %v8552 = vsub.s32 %v8549, %v8551
    %v8553 = vrot.slane %v8545, %v8552
    %v8555 = vunpack.c.l.s4 1983009808
    %v8556 = vunpack.c.0.s8 %v8555
    %v8557 = vlaneseq
    %v8558 = vshrl.u32 %v8557, 7
    %v8559 = vsub.s32 %v8556, %v8558
    %v8560 = vrot.slane %v8546, %v8559
    %v8561 = vcombine.low %v8553, %v8560
    %v8562 = vcombine.low %v6479, %v6483
    %v8563 = vcombine.low %v6486, %v6489
    %v8565 = vunpack.c.l.s4 1983009808
    %v8566 = vunpack.c.0.s8 %v8565
    %v8567 = vlaneseq
    %v8568 = vshrl.u32 %v8567, 7
    %v8569 = vsub.s32 %v8566, %v8568
    %v8570 = vrot.slane %v8562, %v8569
    %v8572 = vunpack.c.l.s4 1983009808
    %v8573 = vunpack.c.0.s8 %v8572
    %v8574 = vlaneseq
    %v8575 = vshrl.u32 %v8574, 7
    %v8576 = vsub.s32 %v8573, %v8575
    %v8577 = vrot.slane %v8563, %v8576
    %v8578 = vcombine.low %v8570, %v8577
    %v8579 = vcombine.low %v6492, %v6495
    %v8580 = vcombine.low %v6499, %v6502
    %v8582 = vunpack.c.l.s4 1983009808
    %v8583 = vunpack.c.0.s8 %v8582
    %v8584 = vlaneseq
    %v8585 = vshrl.u32 %v8584, 7
    %v8586 = vsub.s32 %v8583, %v8585
    %v8587 = vrot.slane %v8579, %v8586
    %v8589 = vunpack.c.l.s4 1983009808
    %v8590 = vunpack.c.0.s8 %v8589
    %v8591 = vlaneseq
    %v8592 = vshrl.u32 %v8591, 7
    %v8593 = vsub.s32 %v8590, %v8592
    %v8594 = vrot.slane %v8580, %v8593
    %v8595 = vcombine.low %v8587, %v8594
    %v8596 = vcombine.low %v6505, %v6508
    %v8597 = vcombine.low %v6511, %v6515
    %v8599 = vunpack.c.l.s4 1983009808
    %v8600 = vunpack.c.0.s8 %v8599
    %v8601 = vlaneseq
    %v8602 = vshrl.u32 %v8601, 7
    %v8603 = vsub.s32 %v8600, %v8602
    %v8604 = vrot.slane %v8596, %v8603
    %v8606 = vunpack.c.l.s4 1983009808
    %v8607 = vunpack.c.0.s8 %v8606
    %v8608 = vlaneseq
    %v8609 = vshrl.u32 %v8608, 7
    %v8610 = vsub.s32 %v8607, %v8609
    %v8611 = vrot.slane %v8597, %v8610
    %v8612 = vcombine.low %v8604, %v8611
    %v8613 = vcombine.low %v6518, %v6521
    %v8614 = vcombine.low %v6524, %v6527
    %v8616 = vunpack.c.l.s4 1983009808
    %v8617 = vunpack.c.0.s8 %v8616
    %v8618 = vlaneseq
    %v8619 = vshrl.u32 %v8618, 7
    %v8620 = vsub.s32 %v8617, %v8619
    %v8621 = vrot.slane %v8613, %v8620
    %v8623 = vunpack.c.l.s4 1983009808
    %v8624 = vunpack.c.0.s8 %v8623
    %v8625 = vlaneseq
    %v8626 = vshrl.u32 %v8625, 7
    %v8627 = vsub.s32 %v8624, %v8626
    %v8628 = vrot.slane %v8614, %v8627
    %v8629 = vcombine.low %v8621, %v8628
    %v8630 = vcombine.low %v6531, %v6534
    %v8631 = vcombine.low %v6537, %v6540
    %v8633 = vunpack.c.l.s4 1983009808
    %v8634 = vunpack.c.0.s8 %v8633
    %v8635 = vlaneseq
    %v8636 = vshrl.u32 %v8635, 7
    %v8637 = vsub.s32 %v8634, %v8636
    %v8638 = vrot.slane %v8630, %v8637
    %v8640 = vunpack.c.l.s4 1983009808
    %v8641 = vunpack.c.0.s8 %v8640
    %v8642 = vlaneseq
    %v8643 = vshrl.u32 %v8642, 7
    %v8644 = vsub.s32 %v8641, %v8643
    %v8645 = vrot.slane %v8631, %v8644
    %v8646 = vcombine.low %v8638, %v8645
    %v8647 = vcombine.low %v6543, %v6761
    %v8648 = vcombine.low %v6764, %v6767
    %v8650 = vunpack.c.l.s4 1983009808
    %v8651 = vunpack.c.0.s8 %v8650
    %v8652 = vlaneseq
    %v8653 = vshrl.u32 %v8652, 7
    %v8654 = vsub.s32 %v8651, %v8653
    %v8655 = vrot.slane %v8647, %v8654
    %v8657 = vunpack.c.l.s4 1983009808
    %v8658 = vunpack.c.0.s8 %v8657
    %v8659 = vlaneseq
    %v8660 = vshrl.u32 %v8659, 7
    %v8661 = vsub.s32 %v8658, %v8660
    %v8662 = vrot.slane %v8648, %v8661
    %v8663 = vcombine.low %v8655, %v8662
    %v8664 = vcombine.low %v6770, %v6773
    %v8665 = vcombine.low %v6563, %v6566
    %v8667 = vunpack.c.l.s4 1983009808
    %v8668 = vunpack.c.0.s8 %v8667
    %v8669 = vlaneseq
    %v8670 = vshrl.u32 %v8669, 7
    %v8671 = vsub.s32 %v8668, %v8670
    %v8672 = vrot.slane %v8664, %v8671
    %v8674 = vunpack.c.l.s4 1983009808
    %v8675 = vunpack.c.0.s8 %v8674
    %v8676 = vlaneseq
    %v8677 = vshrl.u32 %v8676, 7
    %v8678 = vsub.s32 %v8675, %v8677
    %v8679 = vrot.slane %v8665, %v8678
    %v8680 = vcombine.low %v8672, %v8679
    %v8681 = vcombine.low %v6569, %v6572
    %v8682 = vcombine.low %v6575, %v6579
    %v8684 = vunpack.c.l.s4 1983009808
    %v8685 = vunpack.c.0.s8 %v8684
    %v8686 = vlaneseq
    %v8687 = vshrl.u32 %v8686, 7
    %v8688 = vsub.s32 %v8685, %v8687
    %v8689 = vrot.slane %v8681, %v8688
    %v8691 = vunpack.c.l.s4 1983009808
    %v8692 = vunpack.c.0.s8 %v8691
    %v8693 = vlaneseq
    %v8694 = vshrl.u32 %v8693, 7
    %v8695 = vsub.s32 %v8692, %v8694
    %v8696 = vrot.slane %v8682, %v8695
    %v8697 = vcombine.low %v8689, %v8696
    %v8698 = vcombine.low %v6582, %v6585
    %v8699 = vcombine.low %v6588, %v6591
    %v8701 = vunpack.c.l.s4 1983009808
    %v8702 = vunpack.c.0.s8 %v8701
    %v8703 = vlaneseq
    %v8704 = vshrl.u32 %v8703, 7
    %v8705 = vsub.s32 %v8702, %v8704
    %v8706 = vrot.slane %v8698, %v8705
    %v8708 = vunpack.c.l.s4 1983009808
    %v8709 = vunpack.c.0.s8 %v8708
    %v8710 = vlaneseq
    %v8711 = vshrl.u32 %v8710, 7
    %v8712 = vsub.s32 %v8709, %v8711
    %v8713 = vrot.slane %v8699, %v8712
    %v8714 = vcombine.low %v8706, %v8713
    %v8715 = vcombine.low %v6595, %v6598
    %v8716 = vcombine.low %v6601, %v6604
    %v8718 = vunpack.c.l.s4 1983009808
    %v8719 = vunpack.c.0.s8 %v8718
    %v8720 = vlaneseq
    %v8721 = vshrl.u32 %v8720, 7
    %v8722 = vsub.s32 %v8719, %v8721
    %v8723 = vrot.slane %v8715, %v8722
    %v8725 = vunpack.c.l.s4 1983009808
    %v8726 = vunpack.c.0.s8 %v8725
    %v8727 = vlaneseq
    %v8728 = vshrl.u32 %v8727, 7
    %v8729 = vsub.s32 %v8726, %v8728
    %v8730 = vrot.slane %v8716, %v8729
    %v8731 = vcombine.low %v8723, %v8730
    %v8732 = vcombine.low %v6607, %v6611
    %v8733 = vcombine.low %v6614, %v6617
    %v8735 = vunpack.c.l.s4 1983009808
    %v8736 = vunpack.c.0.s8 %v8735
    %v8737 = vlaneseq
    %v8738 = vshrl.u32 %v8737, 7
    %v8739 = vsub.s32 %v8736, %v8738
    %v8740 = vrot.slane %v8732, %v8739
    %v8742 = vunpack.c.l.s4 1983009808
    %v8743 = vunpack.c.0.s8 %v8742
    %v8744 = vlaneseq
    %v8745 = vshrl.u32 %v8744, 7
    %v8746 = vsub.s32 %v8743, %v8745
    %v8747 = vrot.slane %v8733, %v8746
    %v8748 = vcombine.low %v8740, %v8747
    %v8749 = vcombine.low %v6620, %v6623
    %v8750 = vcombine.low %v6627, %v6630
    %v8752 = vunpack.c.l.s4 1983009808
    %v8753 = vunpack.c.0.s8 %v8752
    %v8754 = vlaneseq
    %v8755 = vshrl.u32 %v8754, 7
    %v8756 = vsub.s32 %v8753, %v8755
    %v8757 = vrot.slane %v8749, %v8756
    %v8759 = vunpack.c.l.s4 1983009808
    %v8760 = vunpack.c.0.s8 %v8759
    %v8761 = vlaneseq
    %v8762 = vshrl.u32 %v8761, 7
    %v8763 = vsub.s32 %v8760, %v8762
    %v8764 = vrot.slane %v8750, %v8763
    %v8765 = vcombine.low %v8757, %v8764
    %v8766 = vcombine.low %v6633, %v6636
    %v8767 = vcombine.low %v6639, %v6643
    %v8769 = vunpack.c.l.s4 1983009808
    %v8770 = vunpack.c.0.s8 %v8769
    %v8771 = vlaneseq
    %v8772 = vshrl.u32 %v8771, 7
    %v8773 = vsub.s32 %v8770, %v8772
    %v8774 = vrot.slane %v8766, %v8773
    %v8776 = vunpack.c.l.s4 1983009808
    %v8777 = vunpack.c.0.s8 %v8776
    %v8778 = vlaneseq
    %v8779 = vshrl.u32 %v8778, 7
    %v8780 = vsub.s32 %v8777, %v8779
    %v8781 = vrot.slane %v8767, %v8780
    %v8782 = vcombine.low %v8774, %v8781
    %v8783 = vcombine.low %v6646, %v6649
    %v8784 = vcombine.low %v6652, %v6655
    %v8786 = vunpack.c.l.s4 1983009808
    %v8787 = vunpack.c.0.s8 %v8786
    %v8788 = vlaneseq
    %v8789 = vshrl.u32 %v8788, 7
    %v8790 = vsub.s32 %v8787, %v8789
    %v8791 = vrot.slane %v8783, %v8790
    %v8793 = vunpack.c.l.s4 1983009808
    %v8794 = vunpack.c.0.s8 %v8793
    %v8795 = vlaneseq
    %v8796 = vshrl.u32 %v8795, 7
    %v8797 = vsub.s32 %v8794, %v8796
    %v8798 = vrot.slane %v8784, %v8797
    %v8799 = vcombine.low %v8791, %v8798
    %v8800 = vcombine.low %v6659, %v6662
    %v8801 = vcombine.low %v6665, %v6668
    %v8803 = vunpack.c.l.s4 1983009808
    %v8804 = vunpack.c.0.s8 %v8803
    %v8805 = vlaneseq
    %v8806 = vshrl.u32 %v8805, 7
    %v8807 = vsub.s32 %v8804, %v8806
    %v8808 = vrot.slane %v8800, %v8807
    %v8810 = vunpack.c.l.s4 1983009808
    %v8811 = vunpack.c.0.s8 %v8810
    %v8812 = vlaneseq
    %v8813 = vshrl.u32 %v8812, 7
    %v8814 = vsub.s32 %v8811, %v8813
    %v8815 = vrot.slane %v8801, %v8814
    %v8816 = vcombine.low %v8808, %v8815
    %v8817 = vcombine.low %v6671, %v6675
    %v8818 = vcombine.low %v6678, %v6681
    %v8820 = vunpack.c.l.s4 1983009808
    %v8821 = vunpack.c.0.s8 %v8820
    %v8822 = vlaneseq
    %v8823 = vshrl.u32 %v8822, 7
    %v8824 = vsub.s32 %v8821, %v8823
    %v8825 = vrot.slane %v8817, %v8824
    %v8827 = vunpack.c.l.s4 1983009808
    %v8828 = vunpack.c.0.s8 %v8827
    %v8829 = vlaneseq
    %v8830 = vshrl.u32 %v8829, 7
    %v8831 = vsub.s32 %v8828, %v8830
    %v8832 = vrot.slane %v8818, %v8831
    %v8833 = vcombine.low %v8825, %v8832
    %v8834 = vcombine.low %v6684, %v6687
    %v8835 = vcombine.low %v6691, %v6694
    %v8837 = vunpack.c.l.s4 1983009808
    %v8838 = vunpack.c.0.s8 %v8837
    %v8839 = vlaneseq
    %v8840 = vshrl.u32 %v8839, 7
    %v8841 = vsub.s32 %v8838, %v8840
    %v8842 = vrot.slane %v8834, %v8841
    %v8844 = vunpack.c.l.s4 1983009808
    %v8845 = vunpack.c.0.s8 %v8844
    %v8846 = vlaneseq
    %v8847 = vshrl.u32 %v8846, 7
    %v8848 = vsub.s32 %v8845, %v8847
    %v8849 = vrot.slane %v8835, %v8848
    %v8850 = vcombine.low %v8842, %v8849
    %v8851 = vcombine.low %v6697, %v6700
    %v8852 = vcombine.low %v6703, %v6777
    %v8854 = vunpack.c.l.s4 1983009808
    %v8855 = vunpack.c.0.s8 %v8854
    %v8856 = vlaneseq
    %v8857 = vshrl.u32 %v8856, 7
    %v8858 = vsub.s32 %v8855, %v8857
    %v8859 = vrot.slane %v8851, %v8858
    %v8861 = vunpack.c.l.s4 1983009808
    %v8862 = vunpack.c.0.s8 %v8861
    %v8863 = vlaneseq
    %v8864 = vshrl.u32 %v8863, 7
    %v8865 = vsub.s32 %v8862, %v8864
    %v8866 = vrot.slane %v8852, %v8865
    %v8867 = vcombine.low %v8859, %v8866
    %v8868 = vcombine.low %v6780, %v6783
    %v8869 = vcombine.low %v6786, %v6789
    %v8871 = vunpack.c.l.s4 1983009808
    %v8872 = vunpack.c.0.s8 %v8871
    %v8873 = vlaneseq
    %v8874 = vshrl.u32 %v8873, 7
    %v8875 = vsub.s32 %v8872, %v8874
    %v8876 = vrot.slane %v8868, %v8875
    %v8878 = vunpack.c.l.s4 1983009808
    %v8879 = vunpack.c.0.s8 %v8878
    %v8880 = vlaneseq
    %v8881 = vshrl.u32 %v8880, 7
    %v8882 = vsub.s32 %v8879, %v8881
    %v8883 = vrot.slane %v8869, %v8882
    %v8884 = vcombine.low %v8876, %v8883
    %v8910 = vcombine.low %v6908, %v6918
    %v8911 = vcombine.low %v6358, %v5950
    %v8913 = vunpack.c.l.s4 1983009808
    %v8914 = vunpack.c.0.s8 %v8913
    %v8915 = vlaneseq
    %v8916 = vshrl.u32 %v8915, 7
    %v8917 = vsub.s32 %v8914, %v8916
    %v8918 = vrot.slane %v8911, %v8917
    %v8919 = vcombine.low %v8918, %v6935
    %v8920 = vcombine.low %v5965, %v6359
    %v8922 = vunpack.c.l.s4 1983009808
    %v8923 = vunpack.c.0.s8 %v8922
    %v8924 = vlaneseq
    %v8925 = vshrl.u32 %v8924, 7
    %v8926 = vsub.s32 %v8923, %v8925
    %v8927 = vrot.slane %v8920, %v8926
    %v8928 = vcombine.low %v8927, %v6952
    %v8929 = vcombine.low %v6360, %v5996
    %v8931 = vunpack.c.l.s4 1983009808
    %v8932 = vunpack.c.0.s8 %v8931
    %v8933 = vlaneseq
    %v8934 = vshrl.u32 %v8933, 7
    %v8935 = vsub.s32 %v8932, %v8934
    %v8936 = vrot.slane %v8929, %v8935
    %v8937 = vcombine.low %v6959, %v8936
    %v8938 = vcombine.low %v6011, %v6361
    %v8940 = vunpack.c.l.s4 1983009808
    %v8941 = vunpack.c.0.s8 %v8940
    %v8942 = vlaneseq
    %v8943 = vshrl.u32 %v8942, 7
    %v8944 = vsub.s32 %v8941, %v8943
    %v8945 = vrot.slane %v8938, %v8944
    %v8946 = vcombine.low %v6976, %v8945
    %v8947 = vcombine.low %v6993, %v7003
    %v8948 = vcombine.low %v6362, %v6042
    %v8950 = vunpack.c.l.s4 1983009808
    %v8951 = vunpack.c.0.s8 %v8950
    %v8952 = vlaneseq
    %v8953 = vshrl.u32 %v8952, 7
    %v8954 = vsub.s32 %v8951, %v8953
    %v8955 = vrot.slane %v8948, %v8954
    %v8956 = vcombine.low %v8955, %v7020
    %v8957 = vcombine.low %v6057, %v6363
    %v8959 = vunpack.c.l.s4 1983009808
    %v8960 = vunpack.c.0.s8 %v8959
    %v8961 = vlaneseq
    %v8962 = vshrl.u32 %v8961, 7
    %v8963 = vsub.s32 %v8960, %v8962
    %v8964 = vrot.slane %v8957, %v8963
    %v8965 = vcombine.low %v8964, %v7037
    %v8966 = vcombine.low %v6364, %v6088
    %v8968 = vunpack.c.l.s4 1983009808
    %v8969 = vunpack.c.0.s8 %v8968
    %v8970 = vlaneseq
    %v8971 = vshrl.u32 %v8970, 7
    %v8972 = vsub.s32 %v8969, %v8971
    %v8973 = vrot.slane %v8966, %v8972
    %v8974 = vcombine.low %v7044, %v8973
    %v8975 = vcombine.low %v6103, %v6365
    %v8977 = vunpack.c.l.s4 1983009808
    %v8978 = vunpack.c.0.s8 %v8977
    %v8979 = vlaneseq
    %v8980 = vshrl.u32 %v8979, 7
    %v8981 = vsub.s32 %v8978, %v8980
    %v8982 = vrot.slane %v8975, %v8981
    %v8983 = vcombine.low %v7061, %v8982
    %v8984 = vcombine.low %v7078, %v7088
    %v8985 = vcombine.low %v6366, %v6717
    %v8986 = vcombine.low %v6724, %v6725
    %v8988 = vunpack.c.l.s4 1983009808
    %v8989 = vunpack.c.0.s8 %v8988
    %v8990 = vlaneseq
    %v8991 = vshrl.u32 %v8990, 7
    %v8992 = vsub.s32 %v8989, %v8991
    %v8993 = vrot.slane %v8985, %v8992
    %v8995 = vunpack.c.l.s4 1983009808
    %v8996 = vunpack.c.0.s8 %v8995
    %v8997 = vlaneseq
    %v8998 = vshrl.u32 %v8997, 7
    %v8999 = vsub.s32 %v8996, %v8998
    %v9000 = vrot.slane %v8986, %v8999
    %v9001 = vcombine.low %v8993, %v9000
    %v9002 = vcombine.low %v6732, %v6756
    %v9004 = vunpack.c.l.s4 1983009808
    %v9005 = vunpack.c.0.s8 %v9004
    %v9006 = vlaneseq
    %v9007 = vshrl.u32 %v9006, 7
    %v9008 = vsub.s32 %v9005, %v9007
    %v9009 = vrot.slane %v9002, %v9008
    %v9010 = vcombine.low %v9009, %v7122
    %v9011 = vcombine.low %v6368, %v6180
    %v9013 = vunpack.c.l.s4 1983009808
    %v9014 = vunpack.c.0.s8 %v9013
    %v9015 = vlaneseq
    %v9016 = vshrl.u32 %v9015, 7
    %v9017 = vsub.s32 %v9014, %v9016
    %v9018 = vrot.slane %v9011, %v9017
    %v9019 = vcombine.low %v7129, %v9018
    %v9020 = vcombine.low %v6195, %v6369
    %v9022 = vunpack.c.l.s4 1983009808
    %v9023 = vunpack.c.0.s8 %v9022
    %v9024 = vlaneseq
    %v9025 = vshrl.u32 %v9024, 7
    %v9026 = vsub.s32 %v9023, %v9025
    %v9027 = vrot.slane %v9020, %v9026
    %v9028 = vcombine.low %v7146, %v9027
    %v9029 = vcombine.low %v7163, %v7173
    %v9030 = vcombine.low %v6370, %v6226
    %v9032 = vunpack.c.l.s4 1983009808
    %v9033 = vunpack.c.0.s8 %v9032
    %v9034 = vlaneseq
    %v9035 = vshrl.u32 %v9034, 7
    %v9036 = vsub.s32 %v9033, %v9035
    %v9037 = vrot.slane %v9030, %v9036
    %v9038 = vcombine.low %v9037, %v7190
    %v9039 = vcombine.low %v6241, %v6371
    %v9041 = vunpack.c.l.s4 1983009808
    %v9042 = vunpack.c.0.s8 %v9041
    %v9043 = vlaneseq
    %v9044 = vshrl.u32 %v9043, 7
    %v9045 = vsub.s32 %v9042, %v9044
    %v9046 = vrot.slane %v9039, %v9045
    %v9047 = vcombine.low %v9046, %v7207
    %v9048 = vcombine.low %v6372, %v6272
    %v9050 = vunpack.c.l.s4 1983009808
    %v9051 = vunpack.c.0.s8 %v9050
    %v9052 = vlaneseq
    %v9053 = vshrl.u32 %v9052, 7
    %v9054 = vsub.s32 %v9051, %v9053
    %v9055 = vrot.slane %v9048, %v9054
    %v9056 = vcombine.low %v7214, %v9055
    %v9057 = vcombine.low %v6287, %v6373
    %v9059 = vunpack.c.l.s4 1983009808
    %v9060 = vunpack.c.0.s8 %v9059
    %v9061 = vlaneseq
    %v9062 = vshrl.u32 %v9061, 7
    %v9063 = vsub.s32 %v9060, %v9062
    %v9064 = vrot.slane %v9057, %v9063
    %v9065 = vcombine.low %v7231, %v9064
    %v9066 = vcombine.low %v7248, %v7258
    %v9067 = vcombine.low %v6374, %v6318
    %v9069 = vunpack.c.l.s4 1983009808
    %v9070 = vunpack.c.0.s8 %v9069
    %v9071 = vlaneseq
    %v9072 = vshrl.u32 %v9071, 7
    %v9073 = vsub.s32 %v9070, %v9072
    %v9074 = vrot.slane %v9067, %v9073
    %v9075 = vcombine.low %v9074, %v7275
    %v9076 = vcombine.low %v6333, %v6375
    %v9078 = vunpack.c.l.s4 1983009808
    %v9079 = vunpack.c.0.s8 %v9078
    %v9080 = vlaneseq
    %v9081 = vshrl.u32 %v9080, 7
    %v9082 = vsub.s32 %v9079, %v9081
    %v9083 = vrot.slane %v9076, %v9082
    %v9084 = vcombine.low %v9083, %v7292
    %v9085 = vcombine.low %v6376, %v6740
    %v9087 = vunpack.c.l.s4 1983009808
    %v9088 = vunpack.c.0.s8 %v9087
    %v9089 = vlaneseq
    %v9090 = vshrl.u32 %v9089, 7
    %v9091 = vsub.s32 %v9088, %v9090
    %v9092 = vrot.slane %v9085, %v9091
    %v9093 = vcombine.low %v7299, %v9092
    %v9094 = vcombine.low %v6747, %v6748
    %v9095 = vcombine.low %v6755, %v6757
    %v9097 = vunpack.c.l.s4 1983009808
    %v9098 = vunpack.c.0.s8 %v9097
    %v9099 = vlaneseq
    %v9100 = vshrl.u32 %v9099, 7
    %v9101 = vsub.s32 %v9098, %v9100
    %v9102 = vrot.slane %v9094, %v9101
    %v9104 = vunpack.c.l.s4 1983009808
    %v9105 = vunpack.c.0.s8 %v9104
    %v9106 = vlaneseq
    %v9107 = vshrl.u32 %v9106, 7
    %v9108 = vsub.s32 %v9105, %v9107
    %v9109 = vrot.slane %v9095, %v9108
    %v9110 = vcombine.low %v9102, %v9109
    %v9136 = vcombine.low %v6925, %v6935
    %v9137 = vcombine.low %v6942, %v6952
    %v9138 = vcombine.low %v6959, %v6969
    %v9139 = vcombine.low %v6976, %v6986
    %v9140 = vcombine.low %v7010, %v7020
    %v9141 = vcombine.low %v7027, %v7037
    %v9142 = vcombine.low %v7044, %v7054
    %v9143 = vcombine.low %v7061, %v7071
    %v9144 = vcombine.low %v6716, %v6717
    %v9146 = vunpack.c.l.s4 1983009808
    %v9147 = vunpack.c.0.s8 %v9146
    %v9148 = vlaneseq
    %v9149 = vshrl.u32 %v9148, 7
    %v9150 = vsub.s32 %v9147, %v9149
    %v9151 = vrot.slane %v9144, %v9150
    %v9152 = vcombine.low %v9151, %v9000
    %v9153 = vcombine.low %v6732, %v6802
    %v9154 = vcombine.low %v6803, %v6810
    %v9156 = vunpack.c.l.s4 1983009808
    %v9157 = vunpack.c.0.s8 %v9156
    %v9158 = vlaneseq
    %v9159 = vshrl.u32 %v9158, 7
    %v9160 = vsub.s32 %v9157, %v9159
    %v9161 = vrot.slane %v9153, %v9160
    %v9163 = vunpack.c.l.s4 1983009808
    %v9164 = vunpack.c.0.s8 %v9163
    %v9165 = vlaneseq
    %v9166 = vshrl.u32 %v9165, 7
    %v9167 = vsub.s32 %v9164, %v9166
    %v9168 = vrot.slane %v9154, %v9167
    %v9169 = vcombine.low %v9161, %v9168
    %v9170 = vcombine.low %v6811, %v6818
    %v9172 = vunpack.c.l.s4 1983009808
    %v9173 = vunpack.c.0.s8 %v9172
    %v9174 = vlaneseq
    %v9175 = vshrl.u32 %v9174, 7
    %v9176 = vsub.s32 %v9173, %v9175
    %v9177 = vrot.slane %v9170, %v9176
    %v9178 = vcombine.low %v9177, %v7139
    %v9179 = vcombine.low %v7146, %v7156
    %v9180 = vcombine.low %v7180, %v7190
    %v9181 = vcombine.low %v7197, %v7207
    %v9182 = vcombine.low %v7214, %v7224
    %v9183 = vcombine.low %v7231, %v7241
    %v9184 = vcombine.low %v7265, %v7275
    %v9185 = vcombine.low %v7282, %v7292
    %v9186 = vcombine.low %v6739, %v6740
    %v9188 = vunpack.c.l.s4 1983009808
    %v9189 = vunpack.c.0.s8 %v9188
    %v9190 = vlaneseq
    %v9191 = vshrl.u32 %v9190, 7
    %v9192 = vsub.s32 %v9189, %v9191
    %v9193 = vrot.slane %v9186, %v9192
    %v9194 = vcombine.low %v7299, %v9193
    %v9195 = vcombine.low %v6755, %v6825
    %v9197 = vunpack.c.l.s4 1983009808
    %v9198 = vunpack.c.0.s8 %v9197
    %v9199 = vlaneseq
    %v9200 = vshrl.u32 %v9199, 7
    %v9201 = vsub.s32 %v9198, %v9200
    %v9202 = vrot.slane %v9195, %v9201
    %v9203 = vcombine.low %v9102, %v9202
    %v9204 = vcombine.low %v6826, %v6833
    %v9205 = vcombine.low %v6834, %v6841
    %v9207 = vunpack.c.l.s4 1983009808
    %v9208 = vunpack.c.0.s8 %v9207
    %v9209 = vlaneseq
    %v9210 = vshrl.u32 %v9209, 7
    %v9211 = vsub.s32 %v9208, %v9210
    %v9212 = vrot.slane %v9204, %v9211
    %v9214 = vunpack.c.l.s4 1983009808
    %v9215 = vunpack.c.0.s8 %v9214
    %v9216 = vlaneseq
    %v9217 = vshrl.u32 %v9216, 7
    %v9218 = vsub.s32 %v9215, %v9217
    %v9219 = vrot.slane %v9205, %v9218
    %v9220 = vcombine.low %v9212, %v9219
    %v9242 = vcombine.low %v7375, %v7385
    %v9243 = vcombine.low %v7392, %v7402
    %v9244 = vcombine.low %v7409, %v7419
    %v9245 = vcombine.low %v7426, %v7436
    %v9246 = vcombine.low %v7443, %v7453
    %v9247 = vcombine.low %v7460, %v7470
    %v9248 = vcombine.low %v7477, %v7487
    %v9249 = vcombine.low %v7494, %v7504
    %v9250 = vcombine.low %v7511, %v7521
    %v9251 = vcombine.low %v7528, %v7538
    %v9252 = vcombine.low %v6761, %v6764
    %v9253 = vcombine.low %v6767, %v6770
    %v9255 = vunpack.c.l.s4 1983009808
    %v9256 = vunpack.c.0.s8 %v9255
    %v9257 = vlaneseq
    %v9258 = vshrl.u32 %v9257, 7
    %v9259 = vsub.s32 %v9256, %v9258
    %v9260 = vrot.slane %v9252, %v9259
    %v9262 = vunpack.c.l.s4 1983009808
    %v9263 = vunpack.c.0.s8 %v9262
    %v9264 = vlaneseq
    %v9265 = vshrl.u32 %v9264, 7
    %v9266 = vsub.s32 %v9263, %v9265
    %v9267 = vrot.slane %v9253, %v9266
    %v9268 = vcombine.low %v9260, %v9267
    %v9269 = vcombine.low %v6773, %v6847
    %v9270 = vcombine.low %v6850, %v6853
    %v9272 = vunpack.c.l.s4 1983009808
    %v9273 = vunpack.c.0.s8 %v9272
    %v9274 = vlaneseq
    %v9275 = vshrl.u32 %v9274, 7
    %v9276 = vsub.s32 %v9273, %v9275
    %v9277 = vrot.slane %v9269, %v9276
    %v9279 = vunpack.c.l.s4 1983009808
    %v9280 = vunpack.c.0.s8 %v9279
    %v9281 = vlaneseq
    %v9282 = vshrl.u32 %v9281, 7
    %v9283 = vsub.s32 %v9280, %v9282
    %v9284 = vrot.slane %v9270, %v9283
    %v9285 = vcombine.low %v9277, %v9284
    %v9286 = vcombine.low %v6856, %v6859
    %v9288 = vunpack.c.l.s4 1983009808
    %v9289 = vunpack.c.0.s8 %v9288
    %v9290 = vlaneseq
    %v9291 = vshrl.u32 %v9290, 7
    %v9292 = vsub.s32 %v9289, %v9291
    %v9293 = vrot.slane %v9286, %v9292
    %v9294 = vcombine.low %v9293, %v7589
    %v9295 = vcombine.low %v7596, %v7606
    %v9296 = vcombine.low %v7613, %v7623
    %v9297 = vcombine.low %v7630, %v7640
    %v9298 = vcombine.low %v7647, %v7657
    %v9299 = vcombine.low %v7664, %v7674
    %v9300 = vcombine.low %v7681, %v7691
    %v9301 = vcombine.low %v7698, %v7708
    %v9302 = vcombine.low %v7715, %v7725
    %v9303 = vcombine.low %v7732, %v7742
    %v9304 = vcombine.low %v6777, %v6780
    %v9306 = vunpack.c.l.s4 1983009808
    %v9307 = vunpack.c.0.s8 %v9306
    %v9308 = vlaneseq
    %v9309 = vshrl.u32 %v9308, 7
    %v9310 = vsub.s32 %v9307, %v9309
    %v9311 = vrot.slane %v9304, %v9310
    %v9312 = vcombine.low %v7749, %v9311
    %v9313 = vcombine.low %v6783, %v6786
    %v9314 = vcombine.low %v6789, %v6863
    %v9316 = vunpack.c.l.s4 1983009808
    %v9317 = vunpack.c.0.s8 %v9316
    %v9318 = vlaneseq
    %v9319 = vshrl.u32 %v9318, 7
    %v9320 = vsub.s32 %v9317, %v9319
    %v9321 = vrot.slane %v9313, %v9320
    %v9323 = vunpack.c.l.s4 1983009808
    %v9324 = vunpack.c.0.s8 %v9323
    %v9325 = vlaneseq
    %v9326 = vshrl.u32 %v9325, 7
    %v9327 = vsub.s32 %v9324, %v9326
    %v9328 = vrot.slane %v9314, %v9327
    %v9329 = vcombine.low %v9321, %v9328
    %v9330 = vcombine.low %v6866, %v6869
    %v9331 = vcombine.low %v6872, %v6875
    %v9333 = vunpack.c.l.s4 1983009808
    %v9334 = vunpack.c.0.s8 %v9333
    %v9335 = vlaneseq
    %v9336 = vshrl.u32 %v9335, 7
    %v9337 = vsub.s32 %v9334, %v9336
    %v9338 = vrot.slane %v9330, %v9337
    %v9340 = vunpack.c.l.s4 1983009808
    %v9341 = vunpack.c.0.s8 %v9340
    %v9342 = vlaneseq
    %v9343 = vshrl.u32 %v9342, 7
    %v9344 = vsub.s32 %v9341, %v9343
    %v9345 = vrot.slane %v9331, %v9344
    %v9346 = vcombine.low %v9338, %v9345
    %v9372 = vcombine.low %v7825, %v7835
    %v9373 = vcombine.low %v7842, %v7852
    %v9374 = vcombine.low %v7859, %v7869
    %v9375 = vcombine.low %v7876, %v7886
    %v9376 = vcombine.low %v7893, %v7903
    %v9377 = vcombine.low %v7910, %v7920
    %v9378 = vcombine.low %v7927, %v7937
    %v9379 = vcombine.low %v7944, %v7954
    %v9380 = vcombine.low %v7961, %v7971
    %v9381 = vcombine.low %v7978, %v7988
    %v9382 = vcombine.low %v8322, %v8332
    %v9383 = vcombine.low %v6756, %v6803
    %v9384 = vcombine.low %v6810, %v6811
    %v9386 = vunpack.c.l.s4 1983009808
    %v9387 = vunpack.c.0.s8 %v9386
    %v9388 = vlaneseq
    %v9389 = vshrl.u32 %v9388, 7
    %v9390 = vsub.s32 %v9387, %v9389
    %v9391 = vrot.slane %v9383, %v9390
    %v9393 = vunpack.c.l.s4 1983009808
    %v9394 = vunpack.c.0.s8 %v9393
    %v9395 = vlaneseq
    %v9396 = vshrl.u32 %v9395, 7
    %v9397 = vsub.s32 %v9394, %v9396
    %v9398 = vrot.slane %v9384, %v9397
    %v9399 = vcombine.low %v9391, %v9398
    %v9400 = vcombine.low %v6818, %v6842
    %v9402 = vunpack.c.l.s4 1983009808
    %v9403 = vunpack.c.0.s8 %v9402
    %v9404 = vlaneseq
    %v9405 = vshrl.u32 %v9404, 7
    %v9406 = vsub.s32 %v9403, %v9405
    %v9407 = vrot.slane %v9400, %v9406
    %v9408 = vcombine.low %v9407, %v8039
    %v9409 = vcombine.low %v8046, %v8056
    %v9410 = vcombine.low %v8063, %v8073
    %v9411 = vcombine.low %v8080, %v8090
    %v9412 = vcombine.low %v8097, %v8107
    %v9413 = vcombine.low %v8114, %v8124
    %v9414 = vcombine.low %v8131, %v8141
    %v9415 = vcombine.low %v8148, %v8158
    %v9416 = vcombine.low %v8165, %v8175
    %v9417 = vcombine.low %v8182, %v8192
    %v9418 = vcombine.low %v8199, %v8430
    %v9419 = vcombine.low %v6757, %v6826
    %v9421 = vunpack.c.l.s4 1983009808
    %v9422 = vunpack.c.0.s8 %v9421
    %v9423 = vlaneseq
    %v9424 = vshrl.u32 %v9423, 7
    %v9425 = vsub.s32 %v9422, %v9424
    %v9426 = vrot.slane %v9419, %v9425
    %v9427 = vcombine.low %v8437, %v9426
    %v9428 = vcombine.low %v6833, %v6834
    %v9429 = vcombine.low %v6841, %v6843
    %v9431 = vunpack.c.l.s4 1983009808
    %v9432 = vunpack.c.0.s8 %v9431
    %v9433 = vlaneseq
    %v9434 = vshrl.u32 %v9433, 7
    %v9435 = vsub.s32 %v9432, %v9434
    %v9436 = vrot.slane %v9428, %v9435
    %v9438 = vunpack.c.l.s4 1983009808
    %v9439 = vunpack.c.0.s8 %v9438
    %v9440 = vlaneseq
    %v9441 = vshrl.u32 %v9440, 7
    %v9442 = vsub.s32 %v9439, %v9441
    %v9443 = vrot.slane %v9429, %v9442
    %v9444 = vcombine.low %v9436, %v9443
    %v9470 = vld [vmem:[#allocation7] sm:$0xff]
    %v9471 = vld [vmem:[#allocation7 + $0x8] sm:$0xff]
    %v9472 = vld [vmem:[#allocation7 + $0x10] sm:$0xff]
    %v9473 = vld [vmem:[#allocation7 + $0x18] sm:$0xff]
    %v9474 = vld [vmem:[#allocation7 + $0x20] sm:$0xff]
    %v9475 = vld [vmem:[#allocation7 + $0x28] sm:$0xff]
    %v9476 = vld [vmem:[#allocation7 + $0x30] sm:$0xff]
    %v9477 = vld [vmem:[#allocation7 + $0x38] sm:$0xff]
    %v9478 = vld [vmem:[#allocation7 + $0x40] sm:$0xff]
    %v9479 = vld [vmem:[#allocation7 + $0x48] sm:$0xff]
    %v9480 = vld [vmem:[#allocation7 + $0x50] sm:$0xff]
    %v9481 = vld [vmem:[#allocation7 + $0x58] sm:$0xff]
    %v9482 = vld [vmem:[#allocation7 + $0x60] sm:$0xff]
    %v9483 = vld [vmem:[#allocation7 + $0x68] sm:$0xff]
    %v9484 = vld [vmem:[#allocation7 + $0x70] sm:$0xff]
    %v9485 = vld [vmem:[#allocation7 + $0x78] sm:$0xff]
    %v9486 = vld [vmem:[#allocation7 + $0x80] sm:$0xff]
    %v9487 = vld [vmem:[#allocation7 + $0x88] sm:$0xff]
    %v9488 = vld [vmem:[#allocation7 + $0x90] sm:$0xff]
    %v9489 = vld [vmem:[#allocation7 + $0x98] sm:$0xff]
    %v9490 = vld [vmem:[#allocation7 + $0xa0] sm:$0xff]
    %v9491 = vld [vmem:[#allocation7 + $0xa8] sm:$0xff]
    %v9492 = vld [vmem:[#allocation7 + $0xb0] sm:$0xff]
    %v9493 = vld [vmem:[#allocation7 + $0xb8] sm:$0xff]
    %v9494 = vld [vmem:[#allocation7 + $0xc0] sm:$0xff]
    %v9495 = vld [vmem:[#allocation7 + $0xc8] sm:$0xff]
    %v9496 = vld [vmem:[#allocation7 + $0xd0] sm:$0xff]
    %v9497 = vld [vmem:[#allocation7 + $0xd8] sm:$0xff]
    %v9498 = vld [vmem:[#allocation7 + $0xe0] sm:$0xff]
    %v9499 = vld [vmem:[#allocation7 + $0xe8] sm:$0xff]
    %v9500 = vld [vmem:[#allocation7 + $0xf0] sm:$0xff]
    %v9501 = vld [vmem:[#allocation7 + $0xf8] sm:$0xff]
    %v9502 = vld [vmem:[#allocation7 + $0x100] sm:$0xff]
    %v9503 = vld [vmem:[#allocation7 + $0x108] sm:$0xff]
    %v9504 = vld [vmem:[#allocation7 + $0x110] sm:$0xff]
    %v9505 = vld [vmem:[#allocation7 + $0x118] sm:$0xff]
    %v9506 = vld [vmem:[#allocation7 + $0x120] sm:$0xff]
    %v9507 = vld [vmem:[#allocation7 + $0x128] sm:$0xff]
    %v9508 = vld [vmem:[#allocation7 + $0x130] sm:$0xff]
    %v9509 = vld [vmem:[#allocation7 + $0x138] sm:$0xff]
    %v9510 = vld [vmem:[#allocation7 + $0x140] sm:$0xff]
    %v9511 = vld [vmem:[#allocation7 + $0x148] sm:$0xff]
    %v9512 = vld [vmem:[#allocation7 + $0x150] sm:$0xff]
    %v9513 = vld [vmem:[#allocation7 + $0x158] sm:$0xff]
    %v9514 = vld [vmem:[#allocation7 + $0x160] sm:$0xff]
    %v9515 = vld [vmem:[#allocation7 + $0x168] sm:$0xff]
    %v9516 = vld [vmem:[#allocation7 + $0x170] sm:$0xff]
    %v9517 = vld [vmem:[#allocation7 + $0x178] sm:$0xff]
    %v9518 = vld [vmem:[#allocation7 + $0x180] sm:$0xff]
    %v9519 = vld [vmem:[#allocation7 + $0x188] sm:$0xff]
    %v9520 = vld [vmem:[#allocation7 + $0x190] sm:$0xff]
    %v9521 = vld [vmem:[#allocation7 + $0x198] sm:$0xff]
    %v9522 = vld [vmem:[#allocation7 + $0x1a0] sm:$0xff]
    %v9523 = vld [vmem:[#allocation7 + $0x1a8] sm:$0xff]
    %v9524 = vld [vmem:[#allocation7 + $0x1b0] sm:$0xff]
    %v9525 = vld [vmem:[#allocation7 + $0x1b8] sm:$0xff]
    %v9526 = vld [vmem:[#allocation7 + $0x1c0] sm:$0xff]
    %v9527 = vld [vmem:[#allocation7 + $0x1c8] sm:$0xff]
    %v9528 = vld [vmem:[#allocation7 + $0x1d0] sm:$0xff]
    %v9529 = vld [vmem:[#allocation7 + $0x1d8] sm:$0xff]
    %v9530 = vld [vmem:[#allocation7 + $0x1e0] sm:$0xff]
    %v9531 = vld [vmem:[#allocation7 + $0x1e8] sm:$0xff]
    %v9532 = vld [vmem:[#allocation7 + $0x1f0] sm:$0xff]
    %v9533 = vld [vmem:[#allocation7 + $0x1f8] sm:$0xff]
    %v9534 = vld [vmem:[#allocation7 + $0x200] sm:$0xff]
    %v9535 = vld [vmem:[#allocation7 + $0x208] sm:$0xff]
    %v9536 = vld [vmem:[#allocation7 + $0x210] sm:$0xff]
    %v9537 = vld [vmem:[#allocation7 + $0x218] sm:$0xff]
    %v9538 = vld [vmem:[#allocation7 + $0x220] sm:$0xff]
    %v9539 = vld [vmem:[#allocation7 + $0x228] sm:$0xff]
    %v9540 = vld [vmem:[#allocation7 + $0x230] sm:$0xff]
    %v9541 = vld [vmem:[#allocation7 + $0x238] sm:$0xff]
    %v9542 = vld [vmem:[#allocation7 + $0x240] sm:$0xff]
    %v9543 = vld [vmem:[#allocation7 + $0x248] sm:$0xff]
    %v9544 = vld [vmem:[#allocation7 + $0x250] sm:$0xff]
    %v9545 = vld [vmem:[#allocation7 + $0x258] sm:$0xff]
    %v9546 = vld [vmem:[#allocation7 + $0x260] sm:$0xff]
    %v9547 = vld [vmem:[#allocation7 + $0x268] sm:$0xff]
    %v9548 = vld [vmem:[#allocation7 + $0x270] sm:$0xff]
    %v9549 = vld [vmem:[#allocation7 + $0x278] sm:$0xff]
    %v9550 = vld [vmem:[#allocation7 + $0x280] sm:$0xff]
    %v9551 = vld [vmem:[#allocation7 + $0x288] sm:$0xff]
    %v9552 = vld [vmem:[#allocation7 + $0x290] sm:$0xff]
    %v9553 = vld [vmem:[#allocation7 + $0x298] sm:$0xff]
    %v9554 = vld [vmem:[#allocation7 + $0x2a0] sm:$0xff]
    %v9555 = vld [vmem:[#allocation7 + $0x2a8] sm:$0xff]
    %v9556 = vld [vmem:[#allocation7 + $0x2b0] sm:$0xff]
    %v9557 = vld [vmem:[#allocation7 + $0x2b8] sm:$0xff]
    %v9558 = vld [vmem:[#allocation7 + $0x2c0] sm:$0xff]
    %v9559 = vld [vmem:[#allocation7 + $0x2c8] sm:$0xff]
    %v9560 = vld [vmem:[#allocation7 + $0x2d0] sm:$0xff]
    %v9561 = vld [vmem:[#allocation7 + $0x2d8] sm:$0xff]
    %v9562 = vld [vmem:[#allocation7 + $0x2e0] sm:$0xff]
    %v9563 = vld [vmem:[#allocation7 + $0x2e8] sm:$0xff]
    %v9564 = vld [vmem:[#allocation7 + $0x2f0] sm:$0xff]
    %v9565 = vld [vmem:[#allocation7 + $0x2f8] sm:$0xff]
    %v9566 = vld [vmem:[#allocation7 + $0x300] sm:$0xff]
    %v9567 = vld [vmem:[#allocation7 + $0x308] sm:$0xff]
    %v9568 = vld [vmem:[#allocation7 + $0x310] sm:$0xff]
    %v9569 = vld [vmem:[#allocation7 + $0x318] sm:$0xff]
    %v9570 = vld [vmem:[#allocation7 + $0x320] sm:$0xff]
    %v9571 = vld [vmem:[#allocation7 + $0x328] sm:$0xff]
    %v9572 = vld [vmem:[#allocation7 + $0x330] sm:$0xff]
    %v9573 = vld [vmem:[#allocation7 + $0x338] sm:$0xff]
    %v9574 = vld [vmem:[#allocation7 + $0x340] sm:$0xff]
    %v9575 = vld [vmem:[#allocation7 + $0x348] sm:$0xff]
    %v9576 = vld [vmem:[#allocation7 + $0x350] sm:$0xff]
    %v9577 = vld [vmem:[#allocation7 + $0x358] sm:$0xff]
    %v9578 = vld [vmem:[#allocation7 + $0x360] sm:$0xff]
    %v9579 = vld [vmem:[#allocation7 + $0x368] sm:$0xff]
    %v9580 = vld [vmem:[#allocation7 + $0x370] sm:$0xff]
    %v9581 = vld [vmem:[#allocation7 + $0x378] sm:$0xff]
    %v9582 = vld [vmem:[#allocation7 + $0x380] sm:$0xff]
    %v9583 = vld [vmem:[#allocation7 + $0x388] sm:$0xff]
    %v9584 = vld [vmem:[#allocation7 + $0x390] sm:$0xff]
    %v9585 = vld [vmem:[#allocation7 + $0x398] sm:$0xff]
    %v9586 = vld [vmem:[#allocation7 + $0x3a0] sm:$0xff]
    %v9587 = vld [vmem:[#allocation7 + $0x3a8] sm:$0xff]
    %v9588 = vld [vmem:[#allocation7 + $0x3b0] sm:$0xff]
    %v9589 = vld [vmem:[#allocation7 + $0x3b8] sm:$0xff]
    %v9590 = vld [vmem:[#allocation7 + $0x3c0] sm:$0xff]
    %v9591 = vld [vmem:[#allocation7 + $0x3c8] sm:$0xff]
    %v9592 = vld [vmem:[#allocation7 + $0x3d0] sm:$0xff]
    %v9593 = vld [vmem:[#allocation7 + $0x3d8] sm:$0xff]
    %v9594 = vld [vmem:[#allocation7 + $0x3e0] sm:$0xff]
    %v9595 = vld [vmem:[#allocation7 + $0x3e8] sm:$0xff]
    %v9596 = vld [vmem:[#allocation7 + $0x3f0] sm:$0xff]
    %v9597 = vld [vmem:[#allocation7 + $0x3f8] sm:$0xff]
    %v9598 = vld [vmem:[#allocation7 + $0x400] sm:$0xff]
    %v9599 = vld [vmem:[#allocation7 + $0x408] sm:$0xff]
    %v9600 = vld [vmem:[#allocation7 + $0x410] sm:$0xff]
    %v9601 = vld [vmem:[#allocation7 + $0x418] sm:$0xff]
    %v9602 = vld [vmem:[#allocation7 + $0x420] sm:$0xff]
    %v9603 = vld [vmem:[#allocation7 + $0x428] sm:$0xff]
    %v9604 = vld [vmem:[#allocation7 + $0x430] sm:$0xff]
    %v9605 = vld [vmem:[#allocation7 + $0x438] sm:$0xff]
    %v9606 = vld [vmem:[#allocation7 + $0x440] sm:$0xff]
    %v9607 = vld [vmem:[#allocation7 + $0x448] sm:$0xff]
    %v9608 = vld [vmem:[#allocation7 + $0x450] sm:$0xff]
    %v9609 = vld [vmem:[#allocation7 + $0x458] sm:$0xff]
    %v9610 = vld [vmem:[#allocation7 + $0x460] sm:$0xff]
    %v9611 = vld [vmem:[#allocation7 + $0x468] sm:$0xff]
    %v9612 = vld [vmem:[#allocation7 + $0x470] sm:$0xff]
    %v9613 = vld [vmem:[#allocation7 + $0x478] sm:$0xff]
    %v9614 = vld [vmem:[#allocation8] sm:$0x1]
    %v9616 = vlaneseq
    %v9617 = vshrl.u32 %v9616, 7
    %v9618 = vsub.s32 0, %v9617
    %v9619 = vrot.slane %v9614, %v9618
    %9621 = vmatprep.subr.mxu0 0.0
    %9622 = vmatpush1.msra.mxu0 %v9485
    %9623 = vmatprep.subr.mxu0 0.0
    %9624 = vmatpush1.msra.mxu0 %v9484
    %9625 = vmatprep.subr.mxu0 0.0
    %9626 = vmatpush1.msra.mxu0 %v9483
    %9627 = vmatprep.subr.mxu0 0.0
    %9628 = vmatpush1.msra.mxu0 %v9482
    %9629 = vmatprep.subr.mxu0 0.0
    %9630 = vmatpush1.msra.mxu0 %v9481
    %9631 = vmatprep.subr.mxu0 0.0
    %9632 = vmatpush1.msra.mxu0 %v9480
    %9633 = vmatprep.subr.mxu0 0.0
    %9634 = vmatpush1.msra.mxu0 %v9479
    %9635 = vmatprep.subr.mxu0 0.0
    %9636 = vmatpush1.msra.mxu0 %v9478
    %9637 = vmatprep.subr.mxu0 0.0
    %9638 = vmatpush1.msra.mxu0 %v9477
    %9639 = vmatprep.subr.mxu0 0.0
    %9640 = vmatpush1.msra.mxu0 %v9476
    %9641 = vmatprep.subr.mxu0 0.0
    %9642 = vmatpush1.msra.mxu0 %v9475
    %9643 = vmatprep.subr.mxu0 0.0
    %9644 = vmatpush1.msra.mxu0 %v9474
    %9645 = vmatprep.subr.mxu0 0.0
    %9646 = vmatpush1.msra.mxu0 %v9473
    %9647 = vmatprep.subr.mxu0 0.0
    %9648 = vmatpush1.msra.mxu0 %v9472
    %9649 = vmatprep.subr.mxu0 0.0
    %9650 = vmatpush1.msra.mxu0 %v9471
    %9651 = vmatprep.subr.mxu0 0.0
    %9652 = vmatpush1.msra.mxu0 %v9470
    %9653 = vmatprep.subr.mxu0 0.0
    %9654 = vmatpush2.msra.mxu0 %v9501
    %9655 = vmatprep.subr.mxu0 0.0
    %9656 = vmatpush2.msra.mxu0 %v9500
    %9657 = vmatprep.subr.mxu0 0.0
    %9658 = vmatpush2.msra.mxu0 %v9499
    %9659 = vmatprep.subr.mxu0 0.0
    %9660 = vmatpush2.msra.mxu0 %v9498
    %9661 = vmatprep.subr.mxu0 0.0
    %9662 = vmatpush2.msra.mxu0 %v9497
    %9663 = vmatprep.subr.mxu0 0.0
    %9664 = vmatpush2.msra.mxu0 %v9496
    %9665 = vmatprep.subr.mxu0 0.0
    %9666 = vmatpush2.msra.mxu0 %v9495
    %9667 = vmatprep.subr.mxu0 0.0
    %9668 = vmatpush2.msra.mxu0 %v9494
    %9669 = vmatprep.subr.mxu0 0.0
    %9670 = vmatpush2.msra.mxu0 %v9493
    %9671 = vmatprep.subr.mxu0 0.0
    %9672 = vmatpush2.msra.mxu0 %v9492
    %9673 = vmatprep.subr.mxu0 0.0
    %9674 = vmatpush2.msra.mxu0 %v9491
    %9675 = vmatprep.subr.mxu0 0.0
    %9676 = vmatpush2.msra.mxu0 %v9490
    %9677 = vmatprep.subr.mxu0 0.0
    %9678 = vmatpush2.msra.mxu0 %v9489
    %9679 = vmatprep.subr.mxu0 0.0
    %9680 = vmatpush2.msra.mxu0 %v9488
    %9681 = vmatprep.subr.mxu0 0.0
    %9682 = vmatpush2.msra.mxu0 %v9487
    %9683 = vmatprep.subr.mxu0 0.0
    %9684 = vmatpush2.msra.mxu0 %v9486
    %9685 = vmatprep.mubr.f32.mxu0 %v7342
    %9686 = vmatmul.mubr.f32.gmra.mxu0 %v6892
    %v9687 = vpop.f32.mrf.mxu0
    %v9688 = vadd.f32 %v9619, %v9687
    %v9689 = vpop.f32.mrf.mxu0
    %9690 = vmatprep.mubr.f32.mxu0 %v7359
    %9691 = vmatmul.mubr.f32.gmra.mxu0 %v6909
    %v9692 = vpop.f32.mrf.mxu0
    %v9693 = vadd.f32 %v9619, %v9692
    %v9694 = vpop.f32.mrf.mxu0
    %9695 = vmatprep.mubr.f32.mxu0 %v7376
    %9696 = vmatmul.mubr.f32.gmra.mxu0 %v6926
    %v9697 = vpop.f32.mrf.mxu0
    %v9698 = vadd.f32 %v9619, %v9697
    %v9699 = vpop.f32.mrf.mxu0
    %9700 = vmatprep.mubr.f32.mxu0 %v7393
    %9701 = vmatmul.mubr.f32.gmra.mxu0 %v6943
    %v9702 = vpop.f32.mrf.mxu0
    %v9703 = vadd.f32 %v9619, %v9702
    %v9704 = vpop.f32.mrf.mxu0
    %9705 = vmatprep.mubr.f32.mxu0 %v7410
    %9706 = vmatmul.mubr.f32.gmra.mxu0 %v6960
    %v9707 = vpop.f32.mrf.mxu0
    %v9708 = vadd.f32 %v9619, %v9707
    %v9709 = vpop.f32.mrf.mxu0
    %9710 = vmatprep.mubr.f32.mxu0 %v7427
    %9711 = vmatmul.mubr.f32.gmra.mxu0 %v6977
    %v9712 = vpop.f32.mrf.mxu0
    %v9713 = vadd.f32 %v9619, %v9712
    %v9714 = vpop.f32.mrf.mxu0
    %9715 = vmatprep.mubr.f32.mxu0 %v7444
    %9716 = vmatmul.mubr.f32.gmra.mxu0 %v6994
    %v9717 = vpop.f32.mrf.mxu0
    %v9718 = vadd.f32 %v9619, %v9717
    %v9719 = vpop.f32.mrf.mxu0
    %9720 = vmatprep.mubr.f32.mxu0 %v7461
    %9721 = vmatmul.mubr.f32.gmra.mxu0 %v7011
    %v9722 = vpop.f32.mrf.mxu0
    %v9723 = vadd.f32 %v9619, %v9722
    %v9724 = vpop.f32.mrf.mxu0
    %9725 = vmatprep.mubr.f32.mxu0 %v7478
    %9726 = vmatmul.mubr.f32.gmra.mxu0 %v7028
    %v9727 = vpop.f32.mrf.mxu0
    %v9728 = vadd.f32 %v9619, %v9727
    %v9729 = vpop.f32.mrf.mxu0
    %9730 = vmatprep.mubr.f32.mxu0 %v7495
    %9731 = vmatmul.mubr.f32.gmra.mxu0 %v7045
    %v9732 = vpop.f32.mrf.mxu0
    %v9733 = vadd.f32 %v9619, %v9732
    %v9734 = vpop.f32.mrf.mxu0
    %9735 = vmatprep.mubr.f32.mxu0 %v7512
    %9736 = vmatmul.mubr.f32.gmra.mxu0 %v7062
    %v9737 = vpop.f32.mrf.mxu0
    %v9738 = vadd.f32 %v9619, %v9737
    %v9739 = vpop.f32.mrf.mxu0
    %9740 = vmatprep.mubr.f32.mxu0 %v7529
    %9741 = vmatmul.mubr.f32.gmra.mxu0 %v7079
    %v9742 = vpop.f32.mrf.mxu0
    %v9743 = vadd.f32 %v9619, %v9742
    %v9744 = vpop.f32.mrf.mxu0
    %9745 = vmatprep.mubr.f32.mxu0 %v7546
    %9746 = vmatmul.mubr.f32.gmra.mxu0 %v7096
    %v9747 = vpop.f32.mrf.mxu0
    %v9748 = vadd.f32 %v9619, %v9747
    %v9749 = vpop.f32.mrf.mxu0
    %9750 = vmatprep.mubr.f32.mxu0 %v7563
    %9751 = vmatmul.mubr.f32.gmra.mxu0 %v7113
    %v9752 = vpop.f32.mrf.mxu0
    %v9753 = vadd.f32 %v9619, %v9752
    %v9754 = vpop.f32.mrf.mxu0
    %9755 = vmatprep.mubr.f32.mxu0 %v7580
    %9756 = vmatmul.mubr.f32.gmra.mxu0 %v7130
    %v9757 = vpop.f32.mrf.mxu0
    %v9758 = vadd.f32 %v9619, %v9757
    %v9759 = vpop.f32.mrf.mxu0
    %9760 = vmatprep.mubr.f32.mxu0 %v7597
    %9761 = vmatmul.mubr.f32.gmra.mxu0 %v7147
    %v9762 = vpop.f32.mrf.mxu0
    %v9763 = vadd.f32 %v9619, %v9762
    %v9764 = vpop.f32.mrf.mxu0
    %9765 = vmatprep.mubr.f32.mxu0 %v7614
    %9766 = vmatmul.mubr.f32.gmra.mxu0 %v7164
    %v9767 = vpop.f32.mrf.mxu0
    %v9768 = vadd.f32 %v9619, %v9767
    %v9769 = vpop.f32.mrf.mxu0
    %9770 = vmatprep.mubr.f32.mxu0 %v7631
    %9771 = vmatmul.mubr.f32.gmra.mxu0 %v7181
    %v9772 = vpop.f32.mrf.mxu0
    %v9773 = vadd.f32 %v9619, %v9772
    %v9774 = vpop.f32.mrf.mxu0
    %9775 = vmatprep.mubr.f32.mxu0 %v7648
    %9776 = vmatmul.mubr.f32.gmra.mxu0 %v7198
    %v9777 = vpop.f32.mrf.mxu0
    %v9778 = vadd.f32 %v9619, %v9777
    %v9779 = vpop.f32.mrf.mxu0
    %9780 = vmatprep.mubr.f32.mxu0 %v7665
    %9781 = vmatmul.mubr.f32.gmra.mxu0 %v7215
    %v9782 = vpop.f32.mrf.mxu0
    %v9783 = vadd.f32 %v9619, %v9782
    %v9784 = vpop.f32.mrf.mxu0
    %9785 = vmatprep.mubr.f32.mxu0 %v7682
    %9786 = vmatmul.mubr.f32.gmra.mxu0 %v7232
    %v9787 = vpop.f32.mrf.mxu0
    %v9788 = vadd.f32 %v9619, %v9787
    %v9789 = vpop.f32.mrf.mxu0
    %9790 = vmatprep.mubr.f32.mxu0 %v7699
    %9791 = vmatmul.mubr.f32.gmra.mxu0 %v7249
    %v9792 = vpop.f32.mrf.mxu0
    %v9793 = vadd.f32 %v9619, %v9792
    %v9794 = vpop.f32.mrf.mxu0
    %9795 = vmatprep.mubr.f32.mxu0 %v7716
    %9796 = vmatmul.mubr.f32.gmra.mxu0 %v7266
    %v9797 = vpop.f32.mrf.mxu0
    %v9798 = vadd.f32 %v9619, %v9797
    %v9799 = vpop.f32.mrf.mxu0
    %9800 = vmatprep.mubr.f32.mxu0 %v7733
    %9801 = vmatmul.mubr.f32.gmra.mxu0 %v7283
    %v9802 = vpop.f32.mrf.mxu0
    %v9803 = vadd.f32 %v9619, %v9802
    %v9804 = vpop.f32.mrf.mxu0
    %9805 = vmatprep.mubr.f32.mxu0 %v7750
    %9806 = vmatmul.mubr.f32.gmra.mxu0 %v7300
    %v9807 = vpop.f32.mrf.mxu0
    %v9808 = vadd.f32 %v9619, %v9807
    %v9809 = vpop.f32.mrf.mxu0
    %9810 = vdwg.mxu0
    %9811 = vmatprep.subr.mxu0 0.0
    %9812 = vmatpush1.msra.mxu0 %v9517
    %9813 = vmatprep.subr.mxu0 0.0
    %9814 = vmatpush1.msra.mxu0 %v9516
    %9815 = vmatprep.subr.mxu0 0.0
    %9816 = vmatpush1.msra.mxu0 %v9515
    %9817 = vmatprep.subr.mxu0 0.0
    %9818 = vmatpush1.msra.mxu0 %v9514
    %9819 = vmatprep.subr.mxu0 0.0
    %9820 = vmatpush1.msra.mxu0 %v9513
    %9821 = vmatprep.subr.mxu0 0.0
    %9822 = vmatpush1.msra.mxu0 %v9512
    %9823 = vmatprep.subr.mxu0 0.0
    %9824 = vmatpush1.msra.mxu0 %v9511
    %9825 = vmatprep.subr.mxu0 0.0
    %9826 = vmatpush1.msra.mxu0 %v9510
    %9827 = vmatprep.subr.mxu0 0.0
    %9828 = vmatpush1.msra.mxu0 %v9509
    %9829 = vmatprep.subr.mxu0 0.0
    %9830 = vmatpush1.msra.mxu0 %v9508
    %9831 = vmatprep.subr.mxu0 0.0
    %9832 = vmatpush1.msra.mxu0 %v9507
    %9833 = vmatprep.subr.mxu0 0.0
    %9834 = vmatpush1.msra.mxu0 %v9506
    %9835 = vmatprep.subr.mxu0 0.0
    %9836 = vmatpush1.msra.mxu0 %v9505
    %9837 = vmatprep.subr.mxu0 0.0
    %9838 = vmatpush1.msra.mxu0 %v9504
    %9839 = vmatprep.subr.mxu0 0.0
    %9840 = vmatpush1.msra.mxu0 %v9503
    %9841 = vmatprep.subr.mxu0 0.0
    %9842 = vmatpush1.msra.mxu0 %v9502
    %9843 = vmatprep.subr.mxu0 0.0
    %9844 = vmatpush2.msra.mxu0 %v9533
    %9845 = vmatprep.subr.mxu0 0.0
    %9846 = vmatpush2.msra.mxu0 %v9532
    %9847 = vmatprep.subr.mxu0 0.0
    %9848 = vmatpush2.msra.mxu0 %v9531
    %9849 = vmatprep.subr.mxu0 0.0
    %9850 = vmatpush2.msra.mxu0 %v9530
    %9851 = vmatprep.subr.mxu0 0.0
    %9852 = vmatpush2.msra.mxu0 %v9529
    %9853 = vmatprep.subr.mxu0 0.0
    %9854 = vmatpush2.msra.mxu0 %v9528
    %9855 = vmatprep.subr.mxu0 0.0
    %9856 = vmatpush2.msra.mxu0 %v9527
    %9857 = vmatprep.subr.mxu0 0.0
    %9858 = vmatpush2.msra.mxu0 %v9526
    %9859 = vmatprep.subr.mxu0 0.0
    %9860 = vmatpush2.msra.mxu0 %v9525
    %9861 = vmatprep.subr.mxu0 0.0
    %9862 = vmatpush2.msra.mxu0 %v9524
    %9863 = vmatprep.subr.mxu0 0.0
    %9864 = vmatpush2.msra.mxu0 %v9523
    %9865 = vmatprep.subr.mxu0 0.0
    %9866 = vmatpush2.msra.mxu0 %v9522
    %9867 = vmatprep.subr.mxu0 0.0
    %9868 = vmatpush2.msra.mxu0 %v9521
    %9869 = vmatprep.subr.mxu0 0.0
    %9870 = vmatpush2.msra.mxu0 %v9520
    %9871 = vmatprep.subr.mxu0 0.0
    %9872 = vmatpush2.msra.mxu0 %v9519
    %9873 = vmatprep.subr.mxu0 0.0
    %9874 = vmatpush2.msra.mxu0 %v9518
    %9875 = vmatprep.mubr.f32.mxu0 %v8234
    %9876 = vmatmul.mubr.f32.gmra.mxu0 %v7792
    %v9877 = vpop.f32.mrf.mxu0
    %v9878 = vadd.f32 %v9688, %v9877
    %v9879 = vpop.f32.mrf.mxu0
    %9880 = vmatprep.mubr.f32.mxu0 %v8243
    %9881 = vmatmul.mubr.f32.gmra.mxu0 %v7809
    %v9882 = vpop.f32.mrf.mxu0
    %v9883 = vadd.f32 %v9693, %v9882
    %v9884 = vpop.f32.mrf.mxu0
    %9885 = vmatprep.mubr.f32.mxu0 %v8252
    %9886 = vmatmul.mubr.f32.gmra.mxu0 %v7826
    %v9887 = vpop.f32.mrf.mxu0
    %v9888 = vadd.f32 %v9698, %v9887
    %v9889 = vpop.f32.mrf.mxu0
    %9890 = vmatprep.mubr.f32.mxu0 %v8261
    %9891 = vmatmul.mubr.f32.gmra.mxu0 %v7843
    %v9892 = vpop.f32.mrf.mxu0
    %v9893 = vadd.f32 %v9703, %v9892
    %v9894 = vpop.f32.mrf.mxu0
    %9895 = vmatprep.mubr.f32.mxu0 %v7877
    %9896 = vmatmul.mubr.f32.gmra.mxu0 %v7860
    %v9897 = vpop.f32.mrf.mxu0
    %v9898 = vadd.f32 %v9708, %v9897
    %v9899 = vpop.f32.mrf.mxu0
    %9900 = vmatprep.mubr.f32.mxu0 %v8270
    %9901 = vmatmul.mubr.f32.gmra.mxu0 %v7877
    %v9902 = vpop.f32.mrf.mxu0
    %v9903 = vadd.f32 %v9713, %v9902
    %v9904 = vpop.f32.mrf.mxu0
    %9905 = vmatprep.mubr.f32.mxu0 %v8279
    %9906 = vmatmul.mubr.f32.gmra.mxu0 %v7894
    %v9907 = vpop.f32.mrf.mxu0
    %v9908 = vadd.f32 %v9718, %v9907
    %v9909 = vpop.f32.mrf.mxu0
    %9910 = vmatprep.mubr.f32.mxu0 %v8288
    %9911 = vmatmul.mubr.f32.gmra.mxu0 %v7911
    %v9912 = vpop.f32.mrf.mxu0
    %v9913 = vadd.f32 %v9723, %v9912
    %v9914 = vpop.f32.mrf.mxu0
    %9915 = vmatprep.mubr.f32.mxu0 %v8297
    %9916 = vmatmul.mubr.f32.gmra.mxu0 %v7928
    %v9917 = vpop.f32.mrf.mxu0
    %v9918 = vadd.f32 %v9728, %v9917
    %v9919 = vpop.f32.mrf.mxu0
    %9920 = vmatprep.mubr.f32.mxu0 %v7962
    %9921 = vmatmul.mubr.f32.gmra.mxu0 %v7945
    %v9922 = vpop.f32.mrf.mxu0
    %v9923 = vadd.f32 %v9733, %v9922
    %v9924 = vpop.f32.mrf.mxu0
    %9925 = vmatprep.mubr.f32.mxu0 %v8306
    %9926 = vmatmul.mubr.f32.gmra.mxu0 %v7962
    %v9927 = vpop.f32.mrf.mxu0
    %v9928 = vadd.f32 %v9738, %v9927
    %v9929 = vpop.f32.mrf.mxu0
    %9930 = vmatprep.mubr.f32.mxu0 %v8323
    %9931 = vmatmul.mubr.f32.gmra.mxu0 %v7979
    %v9932 = vpop.f32.mrf.mxu0
    %v9933 = vadd.f32 %v9743, %v9932
    %v9934 = vpop.f32.mrf.mxu0
    %9935 = vmatprep.mubr.f32.mxu0 %v8340
    %9936 = vmatmul.mubr.f32.gmra.mxu0 %v7996
    %v9937 = vpop.f32.mrf.mxu0
    %v9938 = vadd.f32 %v9748, %v9937
    %v9939 = vpop.f32.mrf.mxu0
    %9940 = vmatprep.mubr.f32.mxu0 %v8349
    %9941 = vmatmul.mubr.f32.gmra.mxu0 %v8013
    %v9942 = vpop.f32.mrf.mxu0
    %v9943 = vadd.f32 %v9753, %v9942
    %v9944 = vpop.f32.mrf.mxu0
    %9945 = vmatprep.mubr.f32.mxu0 %v8047
    %9946 = vmatmul.mubr.f32.gmra.mxu0 %v8030
    %v9947 = vpop.f32.mrf.mxu0
    %v9948 = vadd.f32 %v9758, %v9947
    %v9949 = vpop.f32.mrf.mxu0
    %9950 = vmatprep.mubr.f32.mxu0 %v8358
    %9951 = vmatmul.mubr.f32.gmra.mxu0 %v8047
    %v9952 = vpop.f32.mrf.mxu0
    %v9953 = vadd.f32 %v9763, %v9952
    %v9954 = vpop.f32.mrf.mxu0
    %9955 = vmatprep.mubr.f32.mxu0 %v8367
    %9956 = vmatmul.mubr.f32.gmra.mxu0 %v8064
    %v9957 = vpop.f32.mrf.mxu0
    %v9958 = vadd.f32 %v9768, %v9957
    %v9959 = vpop.f32.mrf.mxu0
    %9960 = vmatprep.mubr.f32.mxu0 %v8376
    %9961 = vmatmul.mubr.f32.gmra.mxu0 %v8081
    %v9962 = vpop.f32.mrf.mxu0
    %v9963 = vadd.f32 %v9773, %v9962
    %v9964 = vpop.f32.mrf.mxu0
    %9965 = vmatprep.mubr.f32.mxu0 %v8385
    %9966 = vmatmul.mubr.f32.gmra.mxu0 %v8098
    %v9967 = vpop.f32.mrf.mxu0
    %v9968 = vadd.f32 %v9778, %v9967
    %v9969 = vpop.f32.mrf.mxu0
    %9970 = vmatprep.mubr.f32.mxu0 %v8132
    %9971 = vmatmul.mubr.f32.gmra.mxu0 %v8115
    %v9972 = vpop.f32.mrf.mxu0
    %v9973 = vadd.f32 %v9783, %v9972
    %v9974 = vpop.f32.mrf.mxu0
    %9975 = vmatprep.mubr.f32.mxu0 %v8394
    %9976 = vmatmul.mubr.f32.gmra.mxu0 %v8132
    %v9977 = vpop.f32.mrf.mxu0
    %v9978 = vadd.f32 %v9788, %v9977
    %v9979 = vpop.f32.mrf.mxu0
    %9980 = vmatprep.mubr.f32.mxu0 %v8403
    %9981 = vmatmul.mubr.f32.gmra.mxu0 %v8149
    %v9982 = vpop.f32.mrf.mxu0
    %v9983 = vadd.f32 %v9793, %v9982
    %v9984 = vpop.f32.mrf.mxu0
    %9985 = vmatprep.mubr.f32.mxu0 %v8412
    %9986 = vmatmul.mubr.f32.gmra.mxu0 %v8166
    %v9987 = vpop.f32.mrf.mxu0
    %v9988 = vadd.f32 %v9798, %v9987
    %v9989 = vpop.f32.mrf.mxu0
    %9990 = vmatprep.mubr.f32.mxu0 %v8421
    %9991 = vmatmul.mubr.f32.gmra.mxu0 %v8183
    %v9992 = vpop.f32.mrf.mxu0
    %v9993 = vadd.f32 %v9803, %v9992
    %v9994 = vpop.f32.mrf.mxu0
    %9995 = vmatprep.mubr.f32.mxu0 %v8438
    %9996 = vmatmul.mubr.f32.gmra.mxu0 %v8200
    %v9997 = vpop.f32.mrf.mxu0
    %v9998 = vadd.f32 %v9808, %v9997
    %v9999 = vpop.f32.mrf.mxu0
    %10000 = vdwg.mxu0
    %10001 = vmatprep.subr.mxu0 0.0
    %10002 = vmatpush1.msra.mxu0 %v9549
    %10003 = vmatprep.subr.mxu0 0.0
    %10004 = vmatpush1.msra.mxu0 %v9548
    %10005 = vmatprep.subr.mxu0 0.0
    %10006 = vmatpush1.msra.mxu0 %v9547
    %10007 = vmatprep.subr.mxu0 0.0
    %10008 = vmatpush1.msra.mxu0 %v9546
    %10009 = vmatprep.subr.mxu0 0.0
    %10010 = vmatpush1.msra.mxu0 %v9545
    %10011 = vmatprep.subr.mxu0 0.0
    %10012 = vmatpush1.msra.mxu0 %v9544
    %10013 = vmatprep.subr.mxu0 0.0
    %10014 = vmatpush1.msra.mxu0 %v9543
    %10015 = vmatprep.subr.mxu0 0.0
    %10016 = vmatpush1.msra.mxu0 %v9542
    %10017 = vmatprep.subr.mxu0 0.0
    %10018 = vmatpush1.msra.mxu0 %v9541
    %10019 = vmatprep.subr.mxu0 0.0
    %10020 = vmatpush1.msra.mxu0 %v9540
    %10021 = vmatprep.subr.mxu0 0.0
    %10022 = vmatpush1.msra.mxu0 %v9539
    %10023 = vmatprep.subr.mxu0 0.0
    %10024 = vmatpush1.msra.mxu0 %v9538
    %10025 = vmatprep.subr.mxu0 0.0
    %10026 = vmatpush1.msra.mxu0 %v9537
    %10027 = vmatprep.subr.mxu0 0.0
    %10028 = vmatpush1.msra.mxu0 %v9536
    %10029 = vmatprep.subr.mxu0 0.0
    %10030 = vmatpush1.msra.mxu0 %v9535
    %10031 = vmatprep.subr.mxu0 0.0
    %10032 = vmatpush1.msra.mxu0 %v9534
    %10033 = vmatprep.subr.mxu0 0.0
    %10034 = vmatpush2.msra.mxu0 %v9565
    %10035 = vmatprep.subr.mxu0 0.0
    %10036 = vmatpush2.msra.mxu0 %v9564
    %10037 = vmatprep.subr.mxu0 0.0
    %10038 = vmatpush2.msra.mxu0 %v9563
    %10039 = vmatprep.subr.mxu0 0.0
    %10040 = vmatpush2.msra.mxu0 %v9562
    %10041 = vmatprep.subr.mxu0 0.0
    %10042 = vmatpush2.msra.mxu0 %v9561
    %10043 = vmatprep.subr.mxu0 0.0
    %10044 = vmatpush2.msra.mxu0 %v9560
    %10045 = vmatprep.subr.mxu0 0.0
    %10046 = vmatpush2.msra.mxu0 %v9559
    %10047 = vmatprep.subr.mxu0 0.0
    %10048 = vmatpush2.msra.mxu0 %v9558
    %10049 = vmatprep.subr.mxu0 0.0
    %10050 = vmatpush2.msra.mxu0 %v9557
    %10051 = vmatprep.subr.mxu0 0.0
    %10052 = vmatpush2.msra.mxu0 %v9556
    %10053 = vmatprep.subr.mxu0 0.0
    %10054 = vmatpush2.msra.mxu0 %v9555
    %10055 = vmatprep.subr.mxu0 0.0
    %10056 = vmatpush2.msra.mxu0 %v9554
    %10057 = vmatprep.subr.mxu0 0.0
    %10058 = vmatpush2.msra.mxu0 %v9553
    %10059 = vmatprep.subr.mxu0 0.0
    %10060 = vmatpush2.msra.mxu0 %v9552
    %10061 = vmatprep.subr.mxu0 0.0
    %10062 = vmatpush2.msra.mxu0 %v9551
    %10063 = vmatprep.subr.mxu0 0.0
    %10064 = vmatpush2.msra.mxu0 %v9550
    %10065 = vmatprep.mubr.f32.mxu0 %v8910
    %10066 = vmatmul.mubr.f32.gmra.mxu0 %v8476
    %v10067 = vpop.f32.mrf.mxu0
    %v10068 = vadd.f32 %v9878, %v10067
    %v10069 = vpop.f32.mrf.mxu0
    %10070 = vmatprep.mubr.f32.mxu0 %v8919
    %10071 = vmatmul.mubr.f32.gmra.mxu0 %v8493
    %v10072 = vpop.f32.mrf.mxu0
    %v10073 = vadd.f32 %v9883, %v10072
    %v10074 = vpop.f32.mrf.mxu0
    %10075 = vmatprep.mubr.f32.mxu0 %v8928
    %10076 = vmatmul.mubr.f32.gmra.mxu0 %v8510
    %v10077 = vpop.f32.mrf.mxu0
    %v10078 = vadd.f32 %v9888, %v10077
    %v10079 = vpop.f32.mrf.mxu0
    %10080 = vmatprep.mubr.f32.mxu0 %v8937
    %10081 = vmatmul.mubr.f32.gmra.mxu0 %v8527
    %v10082 = vpop.f32.mrf.mxu0
    %v10083 = vadd.f32 %v9893, %v10082
    %v10084 = vpop.f32.mrf.mxu0
    %10085 = vmatprep.mubr.f32.mxu0 %v8946
    %10086 = vmatmul.mubr.f32.gmra.mxu0 %v8544
    %v10087 = vpop.f32.mrf.mxu0
    %v10088 = vadd.f32 %v9898, %v10087
    %v10089 = vpop.f32.mrf.mxu0
    %10090 = vmatprep.mubr.f32.mxu0 %v8947
    %10091 = vmatmul.mubr.f32.gmra.mxu0 %v8561
    %v10092 = vpop.f32.mrf.mxu0
    %v10093 = vadd.f32 %v9903, %v10092
    %v10094 = vpop.f32.mrf.mxu0
    %10095 = vmatprep.mubr.f32.mxu0 %v8956
    %10096 = vmatmul.mubr.f32.gmra.mxu0 %v8578
    %v10097 = vpop.f32.mrf.mxu0
    %v10098 = vadd.f32 %v9908, %v10097
    %v10099 = vpop.f32.mrf.mxu0
    %10100 = vmatprep.mubr.f32.mxu0 %v8965
    %10101 = vmatmul.mubr.f32.gmra.mxu0 %v8595
    %v10102 = vpop.f32.mrf.mxu0
    %v10103 = vadd.f32 %v9913, %v10102
    %v10104 = vpop.f32.mrf.mxu0
    %10105 = vmatprep.mubr.f32.mxu0 %v8974
    %10106 = vmatmul.mubr.f32.gmra.mxu0 %v8612
    %v10107 = vpop.f32.mrf.mxu0
    %v10108 = vadd.f32 %v9918, %v10107
    %v10109 = vpop.f32.mrf.mxu0
    %10110 = vmatprep.mubr.f32.mxu0 %v8983
    %10111 = vmatmul.mubr.f32.gmra.mxu0 %v8629
    %v10112 = vpop.f32.mrf.mxu0
    %v10113 = vadd.f32 %v9923, %v10112
    %v10114 = vpop.f32.mrf.mxu0
    %10115 = vmatprep.mubr.f32.mxu0 %v8984
    %10116 = vmatmul.mubr.f32.gmra.mxu0 %v8646
    %v10117 = vpop.f32.mrf.mxu0
    %v10118 = vadd.f32 %v9928, %v10117
    %v10119 = vpop.f32.mrf.mxu0
    %10120 = vmatprep.mubr.f32.mxu0 %v9001
    %10121 = vmatmul.mubr.f32.gmra.mxu0 %v8663
    %v10122 = vpop.f32.mrf.mxu0
    %v10123 = vadd.f32 %v9933, %v10122
    %v10124 = vpop.f32.mrf.mxu0
    %10125 = vmatprep.mubr.f32.mxu0 %v9010
    %10126 = vmatmul.mubr.f32.gmra.mxu0 %v8680
    %v10127 = vpop.f32.mrf.mxu0
    %v10128 = vadd.f32 %v9938, %v10127
    %v10129 = vpop.f32.mrf.mxu0
    %10130 = vmatprep.mubr.f32.mxu0 %v9019
    %10131 = vmatmul.mubr.f32.gmra.mxu0 %v8697
    %v10132 = vpop.f32.mrf.mxu0
    %v10133 = vadd.f32 %v9943, %v10132
    %v10134 = vpop.f32.mrf.mxu0
    %10135 = vmatprep.mubr.f32.mxu0 %v9028
    %10136 = vmatmul.mubr.f32.gmra.mxu0 %v8714
    %v10137 = vpop.f32.mrf.mxu0
    %v10138 = vadd.f32 %v9948, %v10137
    %v10139 = vpop.f32.mrf.mxu0
    %10140 = vmatprep.mubr.f32.mxu0 %v9029
    %10141 = vmatmul.mubr.f32.gmra.mxu0 %v8731
    %v10142 = vpop.f32.mrf.mxu0
    %v10143 = vadd.f32 %v9953, %v10142
    %v10144 = vpop.f32.mrf.mxu0
    %10145 = vmatprep.mubr.f32.mxu0 %v9038
    %10146 = vmatmul.mubr.f32.gmra.mxu0 %v8748
    %v10147 = vpop.f32.mrf.mxu0
    %v10148 = vadd.f32 %v9958, %v10147
    %v10149 = vpop.f32.mrf.mxu0
    %10150 = vmatprep.mubr.f32.mxu0 %v9047
    %10151 = vmatmul.mubr.f32.gmra.mxu0 %v8765
    %v10152 = vpop.f32.mrf.mxu0
    %v10153 = vadd.f32 %v9963, %v10152
    %v10154 = vpop.f32.mrf.mxu0
    %10155 = vmatprep.mubr.f32.mxu0 %v9056
    %10156 = vmatmul.mubr.f32.gmra.mxu0 %v8782
    %v10157 = vpop.f32.mrf.mxu0
    %v10158 = vadd.f32 %v9968, %v10157
    %v10159 = vpop.f32.mrf.mxu0
    %10160 = vmatprep.mubr.f32.mxu0 %v9065
    %10161 = vmatmul.mubr.f32.gmra.mxu0 %v8799
    %v10162 = vpop.f32.mrf.mxu0
    %v10163 = vadd.f32 %v9973, %v10162
    %v10164 = vpop.f32.mrf.mxu0
    %10165 = vmatprep.mubr.f32.mxu0 %v9066
    %10166 = vmatmul.mubr.f32.gmra.mxu0 %v8816
    %v10167 = vpop.f32.mrf.mxu0
    %v10168 = vadd.f32 %v9978, %v10167
    %v10169 = vpop.f32.mrf.mxu0
    %10170 = vmatprep.mubr.f32.mxu0 %v9075
    %10171 = vmatmul.mubr.f32.gmra.mxu0 %v8833
    %v10172 = vpop.f32.mrf.mxu0
    %v10173 = vadd.f32 %v9983, %v10172
    %v10174 = vpop.f32.mrf.mxu0
    %10175 = vmatprep.mubr.f32.mxu0 %v9084
    %10176 = vmatmul.mubr.f32.gmra.mxu0 %v8850
    %v10177 = vpop.f32.mrf.mxu0
    %v10178 = vadd.f32 %v9988, %v10177
    %v10179 = vpop.f32.mrf.mxu0
    %10180 = vmatprep.mubr.f32.mxu0 %v9093
    %10181 = vmatmul.mubr.f32.gmra.mxu0 %v8867
    %v10182 = vpop.f32.mrf.mxu0
    %v10183 = vadd.f32 %v9993, %v10182
    %v10184 = vpop.f32.mrf.mxu0
    %10185 = vmatprep.mubr.f32.mxu0 %v9110
    %10186 = vmatmul.mubr.f32.gmra.mxu0 %v8884
    %v10187 = vpop.f32.mrf.mxu0
    %v10188 = vadd.f32 %v9998, %v10187
    %v10189 = vpop.f32.mrf.mxu0
    %10190 = vdwg.mxu0
    %10191 = vmatprep.subr.mxu0 0.0
    %10192 = vmatpush1.msra.mxu0 %v9581
    %10193 = vmatprep.subr.mxu0 0.0
    %10194 = vmatpush1.msra.mxu0 %v9580
    %10195 = vmatprep.subr.mxu0 0.0
    %10196 = vmatpush1.msra.mxu0 %v9579
    %10197 = vmatprep.subr.mxu0 0.0
    %10198 = vmatpush1.msra.mxu0 %v9578
    %10199 = vmatprep.subr.mxu0 0.0
    %10200 = vmatpush1.msra.mxu0 %v9577
    %10201 = vmatprep.subr.mxu0 0.0
    %10202 = vmatpush1.msra.mxu0 %v9576
    %10203 = vmatprep.subr.mxu0 0.0
    %10204 = vmatpush1.msra.mxu0 %v9575
    %10205 = vmatprep.subr.mxu0 0.0
    %10206 = vmatpush1.msra.mxu0 %v9574
    %10207 = vmatprep.subr.mxu0 0.0
    %10208 = vmatpush1.msra.mxu0 %v9573
    %10209 = vmatprep.subr.mxu0 0.0
    %10210 = vmatpush1.msra.mxu0 %v9572
    %10211 = vmatprep.subr.mxu0 0.0
    %10212 = vmatpush1.msra.mxu0 %v9571
    %10213 = vmatprep.subr.mxu0 0.0
    %10214 = vmatpush1.msra.mxu0 %v9570
    %10215 = vmatprep.subr.mxu0 0.0
    %10216 = vmatpush1.msra.mxu0 %v9569
    %10217 = vmatprep.subr.mxu0 0.0
    %10218 = vmatpush1.msra.mxu0 %v9568
    %10219 = vmatprep.subr.mxu0 0.0
    %10220 = vmatpush1.msra.mxu0 %v9567
    %10221 = vmatprep.subr.mxu0 0.0
    %10222 = vmatpush1.msra.mxu0 %v9566
    %10223 = vmatprep.subr.mxu0 0.0
    %10224 = vmatpush2.msra.mxu0 %v9597
    %10225 = vmatprep.subr.mxu0 0.0
    %10226 = vmatpush2.msra.mxu0 %v9596
    %10227 = vmatprep.subr.mxu0 0.0
    %10228 = vmatpush2.msra.mxu0 %v9595
    %10229 = vmatprep.subr.mxu0 0.0
    %10230 = vmatpush2.msra.mxu0 %v9594
    %10231 = vmatprep.subr.mxu0 0.0
    %10232 = vmatpush2.msra.mxu0 %v9593
    %10233 = vmatprep.subr.mxu0 0.0
    %10234 = vmatpush2.msra.mxu0 %v9592
    %10235 = vmatprep.subr.mxu0 0.0
    %10236 = vmatpush2.msra.mxu0 %v9591
    %10237 = vmatprep.subr.mxu0 0.0
    %10238 = vmatpush2.msra.mxu0 %v9590
    %10239 = vmatprep.subr.mxu0 0.0
    %10240 = vmatpush2.msra.mxu0 %v9589
    %10241 = vmatprep.subr.mxu0 0.0
    %10242 = vmatpush2.msra.mxu0 %v9588
    %10243 = vmatprep.subr.mxu0 0.0
    %10244 = vmatpush2.msra.mxu0 %v9587
    %10245 = vmatprep.subr.mxu0 0.0
    %10246 = vmatpush2.msra.mxu0 %v9586
    %10247 = vmatprep.subr.mxu0 0.0
    %10248 = vmatpush2.msra.mxu0 %v9585
    %10249 = vmatprep.subr.mxu0 0.0
    %10250 = vmatpush2.msra.mxu0 %v9584
    %10251 = vmatprep.subr.mxu0 0.0
    %10252 = vmatpush2.msra.mxu0 %v9583
    %10253 = vmatprep.subr.mxu0 0.0
    %10254 = vmatpush2.msra.mxu0 %v9582
    %10255 = vmatprep.mubr.f32.mxu0 %v9242
    %10256 = vmatmul.mubr.f32.gmra.mxu0 %v9136
    %v10257 = vpop.f32.mrf.mxu0
    %v10258 = vadd.f32 %v10068, %v10257
    %v10259 = vpop.f32.mrf.mxu0
    %10260 = vmatprep.mubr.f32.mxu0 %v9243
    %10261 = vmatmul.mubr.f32.gmra.mxu0 %v9137
    %v10262 = vpop.f32.mrf.mxu0
    %v10263 = vadd.f32 %v10073, %v10262
    %v10264 = vpop.f32.mrf.mxu0
    %10265 = vmatprep.mubr.f32.mxu0 %v9244
    %10266 = vmatmul.mubr.f32.gmra.mxu0 %v9138
    %v10267 = vpop.f32.mrf.mxu0
    %v10268 = vadd.f32 %v10078, %v10267
    %v10269 = vpop.f32.mrf.mxu0
    %10270 = vmatprep.mubr.f32.mxu0 %v9245
    %10271 = vmatmul.mubr.f32.gmra.mxu0 %v9139
    %v10272 = vpop.f32.mrf.mxu0
    %v10273 = vadd.f32 %v10083, %v10272
    %v10274 = vpop.f32.mrf.mxu0
    %10275 = vmatprep.mubr.f32.mxu0 %v9246
    %10276 = vmatmul.mubr.f32.gmra.mxu0 %v8947
    %v10277 = vpop.f32.mrf.mxu0
    %v10278 = vadd.f32 %v10088, %v10277
    %v10279 = vpop.f32.mrf.mxu0
    %10280 = vmatprep.mubr.f32.mxu0 %v9247
    %10281 = vmatmul.mubr.f32.gmra.mxu0 %v9140
    %v10282 = vpop.f32.mrf.mxu0
    %v10283 = vadd.f32 %v10093, %v10282
    %v10284 = vpop.f32.mrf.mxu0
    %10285 = vmatprep.mubr.f32.mxu0 %v9248
    %10286 = vmatmul.mubr.f32.gmra.mxu0 %v9141
    %v10287 = vpop.f32.mrf.mxu0
    %v10288 = vadd.f32 %v10098, %v10287
    %v10289 = vpop.f32.mrf.mxu0
    %10290 = vmatprep.mubr.f32.mxu0 %v9249
    %10291 = vmatmul.mubr.f32.gmra.mxu0 %v9142
    %v10292 = vpop.f32.mrf.mxu0
    %v10293 = vadd.f32 %v10103, %v10292
    %v10294 = vpop.f32.mrf.mxu0
    %10295 = vmatprep.mubr.f32.mxu0 %v9250
    %10296 = vmatmul.mubr.f32.gmra.mxu0 %v9143
    %v10297 = vpop.f32.mrf.mxu0
    %v10298 = vadd.f32 %v10108, %v10297
    %v10299 = vpop.f32.mrf.mxu0
    %10300 = vmatprep.mubr.f32.mxu0 %v9251
    %10301 = vmatmul.mubr.f32.gmra.mxu0 %v8984
    %v10302 = vpop.f32.mrf.mxu0
    %v10303 = vadd.f32 %v10113, %v10302
    %v10304 = vpop.f32.mrf.mxu0
    %10305 = vmatprep.mubr.f32.mxu0 %v9268
    %10306 = vmatmul.mubr.f32.gmra.mxu0 %v9152
    %v10307 = vpop.f32.mrf.mxu0
    %v10308 = vadd.f32 %v10118, %v10307
    %v10309 = vpop.f32.mrf.mxu0
    %10310 = vmatprep.mubr.f32.mxu0 %v9285
    %10311 = vmatmul.mubr.f32.gmra.mxu0 %v9169
    %v10312 = vpop.f32.mrf.mxu0
    %v10313 = vadd.f32 %v10123, %v10312
    %v10314 = vpop.f32.mrf.mxu0
    %10315 = vmatprep.mubr.f32.mxu0 %v9294
    %10316 = vmatmul.mubr.f32.gmra.mxu0 %v9178
    %v10317 = vpop.f32.mrf.mxu0
    %v10318 = vadd.f32 %v10128, %v10317
    %v10319 = vpop.f32.mrf.mxu0
    %10320 = vmatprep.mubr.f32.mxu0 %v9295
    %10321 = vmatmul.mubr.f32.gmra.mxu0 %v9179
    %v10322 = vpop.f32.mrf.mxu0
    %v10323 = vadd.f32 %v10133, %v10322
    %v10324 = vpop.f32.mrf.mxu0
    %10325 = vmatprep.mubr.f32.mxu0 %v9296
    %10326 = vmatmul.mubr.f32.gmra.mxu0 %v9029
    %v10327 = vpop.f32.mrf.mxu0
    %v10328 = vadd.f32 %v10138, %v10327
    %v10329 = vpop.f32.mrf.mxu0
    %10330 = vmatprep.mubr.f32.mxu0 %v9297
    %10331 = vmatmul.mubr.f32.gmra.mxu0 %v9180
    %v10332 = vpop.f32.mrf.mxu0
    %v10333 = vadd.f32 %v10143, %v10332
    %v10334 = vpop.f32.mrf.mxu0
    %10335 = vmatprep.mubr.f32.mxu0 %v9298
    %10336 = vmatmul.mubr.f32.gmra.mxu0 %v9181
    %v10337 = vpop.f32.mrf.mxu0
    %v10338 = vadd.f32 %v10148, %v10337
    %v10339 = vpop.f32.mrf.mxu0
    %10340 = vmatprep.mubr.f32.mxu0 %v9299
    %10341 = vmatmul.mubr.f32.gmra.mxu0 %v9182
    %v10342 = vpop.f32.mrf.mxu0
    %v10343 = vadd.f32 %v10153, %v10342
    %v10344 = vpop.f32.mrf.mxu0
    %10345 = vmatprep.mubr.f32.mxu0 %v9300
    %10346 = vmatmul.mubr.f32.gmra.mxu0 %v9183
    %v10347 = vpop.f32.mrf.mxu0
    %v10348 = vadd.f32 %v10158, %v10347
    %v10349 = vpop.f32.mrf.mxu0
    %10350 = vmatprep.mubr.f32.mxu0 %v9301
    %10351 = vmatmul.mubr.f32.gmra.mxu0 %v9066
    %v10352 = vpop.f32.mrf.mxu0
    %v10353 = vadd.f32 %v10163, %v10352
    %v10354 = vpop.f32.mrf.mxu0
    %10355 = vmatprep.mubr.f32.mxu0 %v9302
    %10356 = vmatmul.mubr.f32.gmra.mxu0 %v9184
    %v10357 = vpop.f32.mrf.mxu0
    %v10358 = vadd.f32 %v10168, %v10357
    %v10359 = vpop.f32.mrf.mxu0
    %10360 = vmatprep.mubr.f32.mxu0 %v9303
    %10361 = vmatmul.mubr.f32.gmra.mxu0 %v9185
    %v10362 = vpop.f32.mrf.mxu0
    %v10363 = vadd.f32 %v10173, %v10362
    %v10364 = vpop.f32.mrf.mxu0
    %10365 = vmatprep.mubr.f32.mxu0 %v9312
    %10366 = vmatmul.mubr.f32.gmra.mxu0 %v9194
    %v10367 = vpop.f32.mrf.mxu0
    %v10368 = vadd.f32 %v10178, %v10367
    %v10369 = vpop.f32.mrf.mxu0
    %10370 = vmatprep.mubr.f32.mxu0 %v9329
    %10371 = vmatmul.mubr.f32.gmra.mxu0 %v9203
    %v10372 = vpop.f32.mrf.mxu0
    %v10373 = vadd.f32 %v10183, %v10372
    %v10374 = vpop.f32.mrf.mxu0
    %10375 = vmatprep.mubr.f32.mxu0 %v9346
    %10376 = vmatmul.mubr.f32.gmra.mxu0 %v9220
    %v10377 = vpop.f32.mrf.mxu0
    %v10378 = vadd.f32 %v10188, %v10377
    %v10379 = vpop.f32.mrf.mxu0
    %10380 = vdwg.mxu0
    %10381 = vmatprep.subr.mxu0 0.0
    %10382 = vmatpush1.msra.mxu0 %v9613
    %10383 = vmatprep.subr.mxu0 0.0
    %10384 = vmatpush1.msra.mxu0 %v9612
    %10385 = vmatprep.subr.mxu0 0.0
    %10386 = vmatpush1.msra.mxu0 %v9611
    %10387 = vmatprep.subr.mxu0 0.0
    %10388 = vmatpush1.msra.mxu0 %v9610
    %10389 = vmatprep.subr.mxu0 0.0
    %10390 = vmatpush1.msra.mxu0 %v9609
    %10391 = vmatprep.subr.mxu0 0.0
    %10392 = vmatpush1.msra.mxu0 %v9608
    %10393 = vmatprep.subr.mxu0 0.0
    %10394 = vmatpush1.msra.mxu0 %v9607
    %10395 = vmatprep.subr.mxu0 0.0
    %10396 = vmatpush1.msra.mxu0 %v9606
    %10397 = vmatprep.subr.mxu0 0.0
    %10398 = vmatpush1.msra.mxu0 %v9605
    %10399 = vmatprep.subr.mxu0 0.0
    %10400 = vmatpush1.msra.mxu0 %v9604
    %10401 = vmatprep.subr.mxu0 0.0
    %10402 = vmatpush1.msra.mxu0 %v9603
    %10403 = vmatprep.subr.mxu0 0.0
    %10404 = vmatpush1.msra.mxu0 %v9602
    %10405 = vmatprep.subr.mxu0 0.0
    %10406 = vmatpush1.msra.mxu0 %v9601
    %10407 = vmatprep.subr.mxu0 0.0
    %10408 = vmatpush1.msra.mxu0 %v9600
    %10409 = vmatprep.subr.mxu0 0.0
    %10410 = vmatpush1.msra.mxu0 %v9599
    %10411 = vmatprep.subr.mxu0 0.0
    %10412 = vmatpush1.msra.mxu0 %v9598
    %10413 = vmatprep.subr.mxu0 0.0
    %10414 = vmatpush2.msra.mxu0 0.0
    %10415 = vmatprep.subr.mxu0 0.0
    %10416 = vmatpush2.msra.mxu0 0.0
    %10417 = vmatprep.subr.mxu0 0.0
    %10418 = vmatpush2.msra.mxu0 0.0
    %10419 = vmatprep.subr.mxu0 0.0
    %10420 = vmatpush2.msra.mxu0 0.0
    %10421 = vmatprep.subr.mxu0 0.0
    %10422 = vmatpush2.msra.mxu0 0.0
    %10423 = vmatprep.subr.mxu0 0.0
    %10424 = vmatpush2.msra.mxu0 0.0
    %10425 = vmatprep.subr.mxu0 0.0
    %10426 = vmatpush2.msra.mxu0 0.0
    %10427 = vmatprep.subr.mxu0 0.0
    %10428 = vmatpush2.msra.mxu0 0.0
    %10429 = vmatprep.subr.mxu0 0.0
    %10430 = vmatpush2.msra.mxu0 0.0
    %10431 = vmatprep.subr.mxu0 0.0
    %10432 = vmatpush2.msra.mxu0 0.0
    %10433 = vmatprep.subr.mxu0 0.0
    %10434 = vmatpush2.msra.mxu0 0.0
    %10435 = vmatprep.subr.mxu0 0.0
    %10436 = vmatpush2.msra.mxu0 0.0
    %10437 = vmatprep.subr.mxu0 0.0
    %10438 = vmatpush2.msra.mxu0 0.0
    %10439 = vmatprep.subr.mxu0 0.0
    %10440 = vmatpush2.msra.mxu0 0.0
    %10441 = vmatprep.subr.mxu0 0.0
    %10442 = vmatpush2.msra.mxu0 0.0
    %10443 = vmatprep.subr.mxu0 0.0
    %10444 = vmatpush2.msra.mxu0 0.0
    %10445 = vmatprep.mubr.f32.mxu0 0.0
    %10446 = vmatmul.mubr.f32.gmra.mxu0 %v9372
    %v10447 = vpop.f32.mrf.mxu0
    %v10448 = vadd.f32 %v10258, %v10447
    %v10449 = vpop.f32.mrf.mxu0
    %10450 = vmatprep.mubr.f32.mxu0 0.0
    %10451 = vmatmul.mubr.f32.gmra.mxu0 %v9373
    %v10452 = vpop.f32.mrf.mxu0
    %v10453 = vadd.f32 %v10263, %v10452
    %v10454 = vpop.f32.mrf.mxu0
    %10455 = vmatprep.mubr.f32.mxu0 0.0
    %10456 = vmatmul.mubr.f32.gmra.mxu0 %v9374
    %v10457 = vpop.f32.mrf.mxu0
    %v10458 = vadd.f32 %v10268, %v10457
    %v10459 = vpop.f32.mrf.mxu0
    %10460 = vmatprep.mubr.f32.mxu0 0.0
    %10461 = vmatmul.mubr.f32.gmra.mxu0 %v9375
    %v10462 = vpop.f32.mrf.mxu0
    %v10463 = vadd.f32 %v10273, %v10462
    %v10464 = vpop.f32.mrf.mxu0
    %10465 = vmatprep.mubr.f32.mxu0 0.0
    %10466 = vmatmul.mubr.f32.gmra.mxu0 %v9376
    %v10467 = vpop.f32.mrf.mxu0
    %v10468 = vadd.f32 %v10278, %v10467
    %v10469 = vpop.f32.mrf.mxu0
    %10470 = vmatprep.mubr.f32.mxu0 0.0
    %10471 = vmatmul.mubr.f32.gmra.mxu0 %v9377
    %v10472 = vpop.f32.mrf.mxu0
    %v10473 = vadd.f32 %v10283, %v10472
    %v10474 = vpop.f32.mrf.mxu0
    %10475 = vmatprep.mubr.f32.mxu0 0.0
    %10476 = vmatmul.mubr.f32.gmra.mxu0 %v9378
    %v10477 = vpop.f32.mrf.mxu0
    %v10478 = vadd.f32 %v10288, %v10477
    %v10479 = vpop.f32.mrf.mxu0
    %10480 = vmatprep.mubr.f32.mxu0 0.0
    %10481 = vmatmul.mubr.f32.gmra.mxu0 %v9379
    %v10482 = vpop.f32.mrf.mxu0
    %v10483 = vadd.f32 %v10293, %v10482
    %v10484 = vpop.f32.mrf.mxu0
    %10485 = vmatprep.mubr.f32.mxu0 0.0
    %10486 = vmatmul.mubr.f32.gmra.mxu0 %v9380
    %v10487 = vpop.f32.mrf.mxu0
    %v10488 = vadd.f32 %v10298, %v10487
    %v10489 = vpop.f32.mrf.mxu0
    %10490 = vmatprep.mubr.f32.mxu0 0.0
    %10491 = vmatmul.mubr.f32.gmra.mxu0 %v9381
    %v10492 = vpop.f32.mrf.mxu0
    %v10493 = vadd.f32 %v10303, %v10492
    %v10494 = vpop.f32.mrf.mxu0
    %10495 = vmatprep.mubr.f32.mxu0 0.0
    %10496 = vmatmul.mubr.f32.gmra.mxu0 %v9382
    %v10497 = vpop.f32.mrf.mxu0
    %v10498 = vadd.f32 %v10308, %v10497
    %v10499 = vpop.f32.mrf.mxu0
    %10500 = vmatprep.mubr.f32.mxu0 0.0
    %10501 = vmatmul.mubr.f32.gmra.mxu0 %v9399
    %v10502 = vpop.f32.mrf.mxu0
    %v10503 = vadd.f32 %v10313, %v10502
    %v10504 = vpop.f32.mrf.mxu0
    %10505 = vmatprep.mubr.f32.mxu0 0.0
    %10506 = vmatmul.mubr.f32.gmra.mxu0 %v9408
    %v10507 = vpop.f32.mrf.mxu0
    %v10508 = vadd.f32 %v10318, %v10507
    %v10509 = vpop.f32.mrf.mxu0
    %10510 = vmatprep.mubr.f32.mxu0 0.0
    %10511 = vmatmul.mubr.f32.gmra.mxu0 %v9409
    %v10512 = vpop.f32.mrf.mxu0
    %v10513 = vadd.f32 %v10323, %v10512
    %v10514 = vpop.f32.mrf.mxu0
    %10515 = vmatprep.mubr.f32.mxu0 0.0
    %10516 = vmatmul.mubr.f32.gmra.mxu0 %v9410
    %v10517 = vpop.f32.mrf.mxu0
    %v10518 = vadd.f32 %v10328, %v10517
    %v10519 = vpop.f32.mrf.mxu0
    %10520 = vmatprep.mubr.f32.mxu0 0.0
    %10521 = vmatmul.mubr.f32.gmra.mxu0 %v9411
    %v10522 = vpop.f32.mrf.mxu0
    %v10523 = vadd.f32 %v10333, %v10522
    %v10524 = vpop.f32.mrf.mxu0
    %10525 = vmatprep.mubr.f32.mxu0 0.0
    %10526 = vmatmul.mubr.f32.gmra.mxu0 %v9412
    %v10527 = vpop.f32.mrf.mxu0
    %v10528 = vadd.f32 %v10338, %v10527
    %v10529 = vpop.f32.mrf.mxu0
    %10530 = vmatprep.mubr.f32.mxu0 0.0
    %10531 = vmatmul.mubr.f32.gmra.mxu0 %v9413
    %v10532 = vpop.f32.mrf.mxu0
    %v10533 = vadd.f32 %v10343, %v10532
    %v10534 = vpop.f32.mrf.mxu0
    %10535 = vmatprep.mubr.f32.mxu0 0.0
    %10536 = vmatmul.mubr.f32.gmra.mxu0 %v9414
    %v10537 = vpop.f32.mrf.mxu0
    %v10538 = vadd.f32 %v10348, %v10537
    %v10539 = vpop.f32.mrf.mxu0
    %10540 = vmatprep.mubr.f32.mxu0 0.0
    %10541 = vmatmul.mubr.f32.gmra.mxu0 %v9415
    %v10542 = vpop.f32.mrf.mxu0
    %v10543 = vadd.f32 %v10353, %v10542
    %v10544 = vpop.f32.mrf.mxu0
    %10545 = vmatprep.mubr.f32.mxu0 0.0
    %10546 = vmatmul.mubr.f32.gmra.mxu0 %v9416
    %v10547 = vpop.f32.mrf.mxu0
    %v10548 = vadd.f32 %v10358, %v10547
    %v10549 = vpop.f32.mrf.mxu0
    %10550 = vmatprep.mubr.f32.mxu0 0.0
    %10551 = vmatmul.mubr.f32.gmra.mxu0 %v9417
    %v10552 = vpop.f32.mrf.mxu0
    %v10553 = vadd.f32 %v10363, %v10552
    %v10554 = vpop.f32.mrf.mxu0
    %10555 = vmatprep.mubr.f32.mxu0 0.0
    %10556 = vmatmul.mubr.f32.gmra.mxu0 %v9418
    %v10557 = vpop.f32.mrf.mxu0
    %v10558 = vadd.f32 %v10368, %v10557
    %v10559 = vpop.f32.mrf.mxu0
    %10560 = vmatprep.mubr.f32.mxu0 0.0
    %10561 = vmatmul.mubr.f32.gmra.mxu0 %v9427
    %v10562 = vpop.f32.mrf.mxu0
    %v10563 = vadd.f32 %v10373, %v10562
    %v10564 = vpop.f32.mrf.mxu0
    %10565 = vmatprep.mubr.f32.mxu0 0.0
    %10566 = vmatmul.mubr.f32.gmra.mxu0 %v9444
    %v10567 = vpop.f32.mrf.mxu0
    %v10568 = vadd.f32 %v10378, %v10567
    %v10569 = vpop.f32.mrf.mxu0
    %10570 = vdwg.mxu0
    %v10571 = vmax.f32 %v10448, 0.0
    %v10572 = vmax.f32 %v10453, 0.0
    %v10573 = vmax.f32 %v10458, 0.0
    %v10574 = vmax.f32 %v10463, 0.0
    %v10575 = vmax.f32 %v10468, 0.0
    %v10576 = vmax.f32 %v10473, 0.0
    %v10577 = vmax.f32 %v10478, 0.0
    %v10578 = vmax.f32 %v10483, 0.0
    %v10579 = vmax.f32 %v10488, 0.0
    %v10580 = vmax.f32 %v10493, 0.0
    %v10581 = vmax.f32 %v10498, 0.0
    %v10582 = vmax.f32 %v10503, 0.0
    %v10583 = vmax.f32 %v10508, 0.0
    %v10584 = vmax.f32 %v10513, 0.0
    %v10585 = vmax.f32 %v10518, 0.0
    %v10586 = vmax.f32 %v10523, 0.0
    %v10587 = vmax.f32 %v10528, 0.0
    %v10588 = vmax.f32 %v10533, 0.0
    %v10589 = vmax.f32 %v10538, 0.0
    %v10590 = vmax.f32 %v10543, 0.0
    %v10591 = vmax.f32 %v10548, 0.0
    %v10592 = vmax.f32 %v10553, 0.0
    %v10593 = vmax.f32 %v10558, 0.0
    %v10594 = vmax.f32 %v10563, 0.0
    %v10595 = vmax.f32 %v10568, 0.0
    %v10621 = vcombine.high %v10571, %v10571
    %v10623 = vunpack.c.l.s4 1983009808
    %v10624 = vunpack.c.0.s8 %v10623
    %v10625 = vlaneseq
    %v10626 = vshrl.u32 %v10625, 7
    %v10627 = vsub.s32 %v10624, %v10626
    %v10628 = vrot.slane %v10571, %v10627
    %v10630 = vunpack.c.l.s4 1983009808
    %v10631 = vunpack.c.0.s8 %v10630
    %v10632 = vlaneseq
    %v10633 = vshrl.u32 %v10632, 7
    %v10634 = vsub.s32 %v10631, %v10633
    %v10635 = vrot.slane %v10621, %v10634
    %v10636 = vcombine.high %v10628, %v10628
    %v10637 = vcombine.high %v10635, %v10635
    %v10638 = vcombine.high %v10572, %v10572
    %v10640 = vunpack.c.l.s4 1983009808
    %v10641 = vunpack.c.0.s8 %v10640
    %v10642 = vlaneseq
    %v10643 = vshrl.u32 %v10642, 7
    %v10644 = vsub.s32 %v10641, %v10643
    %v10645 = vrot.slane %v10572, %v10644
    %v10647 = vunpack.c.l.s4 1983009808
    %v10648 = vunpack.c.0.s8 %v10647
    %v10649 = vlaneseq
    %v10650 = vshrl.u32 %v10649, 7
    %v10651 = vsub.s32 %v10648, %v10650
    %v10652 = vrot.slane %v10638, %v10651
    %v10653 = vcombine.high %v10645, %v10645
    %v10654 = vcombine.high %v10652, %v10652
    %v10655 = vcombine.high %v10573, %v10573
    %v10657 = vunpack.c.l.s4 1983009808
    %v10658 = vunpack.c.0.s8 %v10657
    %v10659 = vlaneseq
    %v10660 = vshrl.u32 %v10659, 7
    %v10661 = vsub.s32 %v10658, %v10660
    %v10662 = vrot.slane %v10573, %v10661
    %v10664 = vunpack.c.l.s4 1983009808
    %v10665 = vunpack.c.0.s8 %v10664
    %v10666 = vlaneseq
    %v10667 = vshrl.u32 %v10666, 7
    %v10668 = vsub.s32 %v10665, %v10667
    %v10669 = vrot.slane %v10655, %v10668
    %v10670 = vcombine.high %v10662, %v10662
    %v10671 = vcombine.high %v10669, %v10669
    %v10672 = vcombine.high %v10574, %v10574
    %v10674 = vunpack.c.l.s4 1983009808
    %v10675 = vunpack.c.0.s8 %v10674
    %v10676 = vlaneseq
    %v10677 = vshrl.u32 %v10676, 7
    %v10678 = vsub.s32 %v10675, %v10677
    %v10679 = vrot.slane %v10574, %v10678
    %v10681 = vunpack.c.l.s4 1983009808
    %v10682 = vunpack.c.0.s8 %v10681
    %v10683 = vlaneseq
    %v10684 = vshrl.u32 %v10683, 7
    %v10685 = vsub.s32 %v10682, %v10684
    %v10686 = vrot.slane %v10672, %v10685
    %v10687 = vcombine.high %v10679, %v10679
    %v10688 = vcombine.high %v10686, %v10686
    %v10689 = vcombine.high %v10575, %v10575
    %v10691 = vunpack.c.l.s4 1983009808
    %v10692 = vunpack.c.0.s8 %v10691
    %v10693 = vlaneseq
    %v10694 = vshrl.u32 %v10693, 7
    %v10695 = vsub.s32 %v10692, %v10694
    %v10696 = vrot.slane %v10575, %v10695
    %v10698 = vunpack.c.l.s4 1983009808
    %v10699 = vunpack.c.0.s8 %v10698
    %v10700 = vlaneseq
    %v10701 = vshrl.u32 %v10700, 7
    %v10702 = vsub.s32 %v10699, %v10701
    %v10703 = vrot.slane %v10689, %v10702
    %v10704 = vcombine.high %v10696, %v10696
    %v10705 = vcombine.high %v10703, %v10703
    %v10706 = vcombine.high %v10576, %v10576
    %v10708 = vunpack.c.l.s4 1983009808
    %v10709 = vunpack.c.0.s8 %v10708
    %v10710 = vlaneseq
    %v10711 = vshrl.u32 %v10710, 7
    %v10712 = vsub.s32 %v10709, %v10711
    %v10713 = vrot.slane %v10576, %v10712
    %v10715 = vunpack.c.l.s4 1983009808
    %v10716 = vunpack.c.0.s8 %v10715
    %v10717 = vlaneseq
    %v10718 = vshrl.u32 %v10717, 7
    %v10719 = vsub.s32 %v10716, %v10718
    %v10720 = vrot.slane %v10706, %v10719
    %v10721 = vcombine.high %v10713, %v10713
    %v10722 = vcombine.high %v10720, %v10720
    %v10723 = vcombine.high %v10577, %v10577
    %v10725 = vunpack.c.l.s4 1983009808
    %v10726 = vunpack.c.0.s8 %v10725
    %v10727 = vlaneseq
    %v10728 = vshrl.u32 %v10727, 7
    %v10729 = vsub.s32 %v10726, %v10728
    %v10730 = vrot.slane %v10577, %v10729
    %v10732 = vunpack.c.l.s4 1983009808
    %v10733 = vunpack.c.0.s8 %v10732
    %v10734 = vlaneseq
    %v10735 = vshrl.u32 %v10734, 7
    %v10736 = vsub.s32 %v10733, %v10735
    %v10737 = vrot.slane %v10723, %v10736
    %v10738 = vcombine.high %v10730, %v10730
    %v10739 = vcombine.high %v10737, %v10737
    %v10740 = vcombine.high %v10578, %v10578
    %v10742 = vunpack.c.l.s4 1983009808
    %v10743 = vunpack.c.0.s8 %v10742
    %v10744 = vlaneseq
    %v10745 = vshrl.u32 %v10744, 7
    %v10746 = vsub.s32 %v10743, %v10745
    %v10747 = vrot.slane %v10578, %v10746
    %v10749 = vunpack.c.l.s4 1983009808
    %v10750 = vunpack.c.0.s8 %v10749
    %v10751 = vlaneseq
    %v10752 = vshrl.u32 %v10751, 7
    %v10753 = vsub.s32 %v10750, %v10752
    %v10754 = vrot.slane %v10740, %v10753
    %v10755 = vcombine.high %v10747, %v10747
    %v10756 = vcombine.high %v10754, %v10754
    %v10757 = vcombine.high %v10579, %v10579
    %v10759 = vunpack.c.l.s4 1983009808
    %v10760 = vunpack.c.0.s8 %v10759
    %v10761 = vlaneseq
    %v10762 = vshrl.u32 %v10761, 7
    %v10763 = vsub.s32 %v10760, %v10762
    %v10764 = vrot.slane %v10579, %v10763
    %v10766 = vunpack.c.l.s4 1983009808
    %v10767 = vunpack.c.0.s8 %v10766
    %v10768 = vlaneseq
    %v10769 = vshrl.u32 %v10768, 7
    %v10770 = vsub.s32 %v10767, %v10769
    %v10771 = vrot.slane %v10757, %v10770
    %v10772 = vcombine.high %v10764, %v10764
    %v10773 = vcombine.high %v10771, %v10771
    %v10774 = vcombine.high %v10580, %v10580
    %v10776 = vunpack.c.l.s4 1983009808
    %v10777 = vunpack.c.0.s8 %v10776
    %v10778 = vlaneseq
    %v10779 = vshrl.u32 %v10778, 7
    %v10780 = vsub.s32 %v10777, %v10779
    %v10781 = vrot.slane %v10580, %v10780
    %v10783 = vunpack.c.l.s4 1983009808
    %v10784 = vunpack.c.0.s8 %v10783
    %v10785 = vlaneseq
    %v10786 = vshrl.u32 %v10785, 7
    %v10787 = vsub.s32 %v10784, %v10786
    %v10788 = vrot.slane %v10774, %v10787
    %v10789 = vcombine.high %v10781, %v10781
    %v10790 = vcombine.high %v10788, %v10788
    %v10791 = vcombine.high %v10581, %v10581
    %v10793 = vunpack.c.l.s4 1983009808
    %v10794 = vunpack.c.0.s8 %v10793
    %v10795 = vlaneseq
    %v10796 = vshrl.u32 %v10795, 7
    %v10797 = vsub.s32 %v10794, %v10796
    %v10798 = vrot.slane %v10581, %v10797
    %v10800 = vunpack.c.l.s4 1983009808
    %v10801 = vunpack.c.0.s8 %v10800
    %v10802 = vlaneseq
    %v10803 = vshrl.u32 %v10802, 7
    %v10804 = vsub.s32 %v10801, %v10803
    %v10805 = vrot.slane %v10791, %v10804
    %v10806 = vcombine.high %v10798, %v10798
    %v10807 = vcombine.high %v10805, %v10805
    %v10808 = vcombine.high %v10582, %v10582
    %v10810 = vunpack.c.l.s4 1983009808
    %v10811 = vunpack.c.0.s8 %v10810
    %v10812 = vlaneseq
    %v10813 = vshrl.u32 %v10812, 7
    %v10814 = vsub.s32 %v10811, %v10813
    %v10815 = vrot.slane %v10582, %v10814
    %v10817 = vunpack.c.l.s4 1983009808
    %v10818 = vunpack.c.0.s8 %v10817
    %v10819 = vlaneseq
    %v10820 = vshrl.u32 %v10819, 7
    %v10821 = vsub.s32 %v10818, %v10820
    %v10822 = vrot.slane %v10808, %v10821
    %v10823 = vcombine.high %v10815, %v10815
    %v10824 = vcombine.high %v10822, %v10822
    %v10825 = vcombine.high %v10583, %v10583
    %v10827 = vunpack.c.l.s4 1983009808
    %v10828 = vunpack.c.0.s8 %v10827
    %v10829 = vlaneseq
    %v10830 = vshrl.u32 %v10829, 7
    %v10831 = vsub.s32 %v10828, %v10830
    %v10832 = vrot.slane %v10583, %v10831
    %v10834 = vunpack.c.l.s4 1983009808
    %v10835 = vunpack.c.0.s8 %v10834
    %v10836 = vlaneseq
    %v10837 = vshrl.u32 %v10836, 7
    %v10838 = vsub.s32 %v10835, %v10837
    %v10839 = vrot.slane %v10825, %v10838
    %v10840 = vcombine.high %v10832, %v10832
    %v10841 = vcombine.high %v10839, %v10839
    %v10842 = vcombine.high %v10584, %v10584
    %v10844 = vunpack.c.l.s4 1983009808
    %v10845 = vunpack.c.0.s8 %v10844
    %v10846 = vlaneseq
    %v10847 = vshrl.u32 %v10846, 7
    %v10848 = vsub.s32 %v10845, %v10847
    %v10849 = vrot.slane %v10584, %v10848
    %v10851 = vunpack.c.l.s4 1983009808
    %v10852 = vunpack.c.0.s8 %v10851
    %v10853 = vlaneseq
    %v10854 = vshrl.u32 %v10853, 7
    %v10855 = vsub.s32 %v10852, %v10854
    %v10856 = vrot.slane %v10842, %v10855
    %v10857 = vcombine.high %v10849, %v10849
    %v10858 = vcombine.high %v10856, %v10856
    %v10859 = vcombine.high %v10585, %v10585
    %v10861 = vunpack.c.l.s4 1983009808
    %v10862 = vunpack.c.0.s8 %v10861
    %v10863 = vlaneseq
    %v10864 = vshrl.u32 %v10863, 7
    %v10865 = vsub.s32 %v10862, %v10864
    %v10866 = vrot.slane %v10585, %v10865
    %v10868 = vunpack.c.l.s4 1983009808
    %v10869 = vunpack.c.0.s8 %v10868
    %v10870 = vlaneseq
    %v10871 = vshrl.u32 %v10870, 7
    %v10872 = vsub.s32 %v10869, %v10871
    %v10873 = vrot.slane %v10859, %v10872
    %v10874 = vcombine.high %v10866, %v10866
    %v10875 = vcombine.high %v10873, %v10873
    %v10876 = vcombine.high %v10586, %v10586
    %v10878 = vunpack.c.l.s4 1983009808
    %v10879 = vunpack.c.0.s8 %v10878
    %v10880 = vlaneseq
    %v10881 = vshrl.u32 %v10880, 7
    %v10882 = vsub.s32 %v10879, %v10881
    %v10883 = vrot.slane %v10586, %v10882
    %v10885 = vunpack.c.l.s4 1983009808
    %v10886 = vunpack.c.0.s8 %v10885
    %v10887 = vlaneseq
    %v10888 = vshrl.u32 %v10887, 7
    %v10889 = vsub.s32 %v10886, %v10888
    %v10890 = vrot.slane %v10876, %v10889
    %v10891 = vcombine.high %v10883, %v10883
    %v10892 = vcombine.high %v10890, %v10890
    %v10893 = vcombine.high %v10587, %v10587
    %v10895 = vunpack.c.l.s4 1983009808
    %v10896 = vunpack.c.0.s8 %v10895
    %v10897 = vlaneseq
    %v10898 = vshrl.u32 %v10897, 7
    %v10899 = vsub.s32 %v10896, %v10898
    %v10900 = vrot.slane %v10587, %v10899
    %v10902 = vunpack.c.l.s4 1983009808
    %v10903 = vunpack.c.0.s8 %v10902
    %v10904 = vlaneseq
    %v10905 = vshrl.u32 %v10904, 7
    %v10906 = vsub.s32 %v10903, %v10905
    %v10907 = vrot.slane %v10893, %v10906
    %v10908 = vcombine.high %v10900, %v10900
    %v10909 = vcombine.high %v10907, %v10907
    %v10910 = vcombine.high %v10588, %v10588
    %v10912 = vunpack.c.l.s4 1983009808
    %v10913 = vunpack.c.0.s8 %v10912
    %v10914 = vlaneseq
    %v10915 = vshrl.u32 %v10914, 7
    %v10916 = vsub.s32 %v10913, %v10915
    %v10917 = vrot.slane %v10588, %v10916
    %v10919 = vunpack.c.l.s4 1983009808
    %v10920 = vunpack.c.0.s8 %v10919
    %v10921 = vlaneseq
    %v10922 = vshrl.u32 %v10921, 7
    %v10923 = vsub.s32 %v10920, %v10922
    %v10924 = vrot.slane %v10910, %v10923
    %v10925 = vcombine.high %v10917, %v10917
    %v10926 = vcombine.high %v10924, %v10924
    %v10927 = vcombine.high %v10589, %v10589
    %v10929 = vunpack.c.l.s4 1983009808
    %v10930 = vunpack.c.0.s8 %v10929
    %v10931 = vlaneseq
    %v10932 = vshrl.u32 %v10931, 7
    %v10933 = vsub.s32 %v10930, %v10932
    %v10934 = vrot.slane %v10589, %v10933
    %v10936 = vunpack.c.l.s4 1983009808
    %v10937 = vunpack.c.0.s8 %v10936
    %v10938 = vlaneseq
    %v10939 = vshrl.u32 %v10938, 7
    %v10940 = vsub.s32 %v10937, %v10939
    %v10941 = vrot.slane %v10927, %v10940
    %v10942 = vcombine.high %v10934, %v10934
    %v10943 = vcombine.high %v10941, %v10941
    %v10944 = vcombine.high %v10590, %v10590
    %v10946 = vunpack.c.l.s4 1983009808
    %v10947 = vunpack.c.0.s8 %v10946
    %v10948 = vlaneseq
    %v10949 = vshrl.u32 %v10948, 7
    %v10950 = vsub.s32 %v10947, %v10949
    %v10951 = vrot.slane %v10590, %v10950
    %v10953 = vunpack.c.l.s4 1983009808
    %v10954 = vunpack.c.0.s8 %v10953
    %v10955 = vlaneseq
    %v10956 = vshrl.u32 %v10955, 7
    %v10957 = vsub.s32 %v10954, %v10956
    %v10958 = vrot.slane %v10944, %v10957
    %v10959 = vcombine.high %v10951, %v10951
    %v10960 = vcombine.high %v10958, %v10958
    %v10961 = vcombine.high %v10591, %v10591
    %v10963 = vunpack.c.l.s4 1983009808
    %v10964 = vunpack.c.0.s8 %v10963
    %v10965 = vlaneseq
    %v10966 = vshrl.u32 %v10965, 7
    %v10967 = vsub.s32 %v10964, %v10966
    %v10968 = vrot.slane %v10591, %v10967
    %v10970 = vunpack.c.l.s4 1983009808
    %v10971 = vunpack.c.0.s8 %v10970
    %v10972 = vlaneseq
    %v10973 = vshrl.u32 %v10972, 7
    %v10974 = vsub.s32 %v10971, %v10973
    %v10975 = vrot.slane %v10961, %v10974
    %v10976 = vcombine.high %v10968, %v10968
    %v10977 = vcombine.high %v10975, %v10975
    %v10978 = vcombine.high %v10592, %v10592
    %v10980 = vunpack.c.l.s4 1983009808
    %v10981 = vunpack.c.0.s8 %v10980
    %v10982 = vlaneseq
    %v10983 = vshrl.u32 %v10982, 7
    %v10984 = vsub.s32 %v10981, %v10983
    %v10985 = vrot.slane %v10592, %v10984
    %v10987 = vunpack.c.l.s4 1983009808
    %v10988 = vunpack.c.0.s8 %v10987
    %v10989 = vlaneseq
    %v10990 = vshrl.u32 %v10989, 7
    %v10991 = vsub.s32 %v10988, %v10990
    %v10992 = vrot.slane %v10978, %v10991
    %v10993 = vcombine.high %v10985, %v10985
    %v10994 = vcombine.high %v10992, %v10992
    %v10995 = vcombine.high %v10593, %v10593
    %v10997 = vunpack.c.l.s4 1983009808
    %v10998 = vunpack.c.0.s8 %v10997
    %v10999 = vlaneseq
    %v11000 = vshrl.u32 %v10999, 7
    %v11001 = vsub.s32 %v10998, %v11000
    %v11002 = vrot.slane %v10593, %v11001
    %v11004 = vunpack.c.l.s4 1983009808
    %v11005 = vunpack.c.0.s8 %v11004
    %v11006 = vlaneseq
    %v11007 = vshrl.u32 %v11006, 7
    %v11008 = vsub.s32 %v11005, %v11007
    %v11009 = vrot.slane %v10995, %v11008
    %v11010 = vcombine.high %v11002, %v11002
    %v11011 = vcombine.high %v11009, %v11009
    %v11012 = vcombine.high %v10594, %v10594
    %v11014 = vunpack.c.l.s4 1983009808
    %v11015 = vunpack.c.0.s8 %v11014
    %v11016 = vlaneseq
    %v11017 = vshrl.u32 %v11016, 7
    %v11018 = vsub.s32 %v11015, %v11017
    %v11019 = vrot.slane %v10594, %v11018
    %v11021 = vunpack.c.l.s4 1983009808
    %v11022 = vunpack.c.0.s8 %v11021
    %v11023 = vlaneseq
    %v11024 = vshrl.u32 %v11023, 7
    %v11025 = vsub.s32 %v11022, %v11024
    %v11026 = vrot.slane %v11012, %v11025
    %v11027 = vcombine.high %v11019, %v11019
    %v11028 = vcombine.high %v11026, %v11026
    %v11029 = vcombine.high %v10595, %v10595
    %v11031 = vunpack.c.l.s4 1983009808
    %v11032 = vunpack.c.0.s8 %v11031
    %v11033 = vlaneseq
    %v11034 = vshrl.u32 %v11033, 7
    %v11035 = vsub.s32 %v11032, %v11034
    %v11036 = vrot.slane %v10595, %v11035
    %v11038 = vunpack.c.l.s4 1983009808
    %v11039 = vunpack.c.0.s8 %v11038
    %v11040 = vlaneseq
    %v11041 = vshrl.u32 %v11040, 7
    %v11042 = vsub.s32 %v11039, %v11041
    %v11043 = vrot.slane %v11029, %v11042
    %v11044 = vcombine.high %v11036, %v11036
    %v11045 = vcombine.high %v11043, %v11043
    %v11146 = vmax.f32 %v10628, %v10653
    %v11147 = vmax.f32 %v10636, %v10652
    %v11148 = vmax.f32 %v10635, %v10654
    %v11149 = vmax.f32 %v10637, %v10662
    %v11150 = vmax.f32 %v10645, %v10670
    %v11151 = vmax.f32 %v10669, %v10688
    %v11152 = vmax.f32 %v10671, %v10696
    %v11153 = vmax.f32 %v10679, %v10704
    %v11154 = vmax.f32 %v10687, %v10703
    %v11155 = vmax.f32 %v10686, %v10705
    %v11156 = vmax.f32 %v10713, %v10738
    %v11157 = vmax.f32 %v10721, %v10737
    %v11158 = vmax.f32 %v10720, %v10739
    %v11159 = vmax.f32 %v10722, %v10747
    %v11160 = vmax.f32 %v10730, %v10755
    %v11161 = vmax.f32 %v10754, %v10773
    %v11162 = vmax.f32 %v10756, %v10781
    %v11163 = vmax.f32 %v10764, %v10789
    %v11164 = vmax.f32 %v10772, %v10788
    %v11165 = vmax.f32 %v10771, %v10790
    %v11166 = vmax.f32 %v10798, %v10823
    %v11167 = vmax.f32 %v10806, %v10822
    %v11168 = vmax.f32 %v10805, %v10824
    %v11169 = vmax.f32 %v10807, %v10832
    %v11170 = vmax.f32 %v10815, %v10840
    %v11171 = vmax.f32 %v10839, %v10858
    %v11172 = vmax.f32 %v10841, %v10866
    %v11173 = vmax.f32 %v10849, %v10874
    %v11174 = vmax.f32 %v10857, %v10873
    %v11175 = vmax.f32 %v10856, %v10875
    %v11176 = vmax.f32 %v10883, %v10908
    %v11177 = vmax.f32 %v10891, %v10907
    %v11178 = vmax.f32 %v10890, %v10909
    %v11179 = vmax.f32 %v10892, %v10917
    %v11180 = vmax.f32 %v10900, %v10925
    %v11181 = vmax.f32 %v10924, %v10943
    %v11182 = vmax.f32 %v10926, %v10951
    %v11183 = vmax.f32 %v10934, %v10959
    %v11184 = vmax.f32 %v10942, %v10958
    %v11185 = vmax.f32 %v10941, %v10960
    %v11186 = vmax.f32 %v10968, %v10993
    %v11187 = vmax.f32 %v10976, %v10992
    %v11188 = vmax.f32 %v10975, %v10994
    %v11189 = vmax.f32 %v10977, %v11002
    %v11190 = vmax.f32 %v10985, %v11010
    %v11191 = vmax.f32 %v11009, %v11028
    %v11192 = vmax.f32 %v11011, %v11036
    %v11193 = vmax.f32 %v11019, %v11044
    %v11194 = vmax.f32 %v11027, %v11043
    %v11195 = vmax.f32 %v11026, %v11045
    %v11246 = vcombine.low %v11146, %v11147
    %v11247 = vcombine.low %v11148, %v11149
    %v11249 = vunpack.c.l.s4 1983009808
    %v11250 = vunpack.c.0.s8 %v11249
    %v11251 = vlaneseq
    %v11252 = vshrl.u32 %v11251, 7
    %v11253 = vsub.s32 %v11250, %v11252
    %v11254 = vrot.slane %v11246, %v11253
    %v11256 = vunpack.c.l.s4 1983009808
    %v11257 = vunpack.c.0.s8 %v11256
    %v11258 = vlaneseq
    %v11259 = vshrl.u32 %v11258, 7
    %v11260 = vsub.s32 %v11257, %v11259
    %v11261 = vrot.slane %v11247, %v11260
    %v11262 = vcombine.low %v11254, %v11261
    %v11264 = vunpack.c.l.s4 1983009808
    %v11265 = vunpack.c.0.s8 %v11264
    %v11266 = vlaneseq
    %v11267 = vshrl.u32 %v11266, 7
    %v11268 = vsub.s32 %v11265, %v11267
    %v11269 = vrot.slane %v11150, %v11268
    %v11270 = vcombine.low %v11151, %v11152
    %v11271 = vcombine.low %v11153, %v11154
    %v11273 = vunpack.c.l.s4 1983009808
    %v11274 = vunpack.c.0.s8 %v11273
    %v11275 = vlaneseq
    %v11276 = vshrl.u32 %v11275, 7
    %v11277 = vsub.s32 %v11274, %v11276
    %v11278 = vrot.slane %v11270, %v11277
    %v11280 = vunpack.c.l.s4 1983009808
    %v11281 = vunpack.c.0.s8 %v11280
    %v11282 = vlaneseq
    %v11283 = vshrl.u32 %v11282, 7
    %v11284 = vsub.s32 %v11281, %v11283
    %v11285 = vrot.slane %v11271, %v11284
    %v11286 = vcombine.low %v11278, %v11285
    %v11288 = vunpack.c.l.s4 1983009808
    %v11289 = vunpack.c.0.s8 %v11288
    %v11290 = vlaneseq
    %v11291 = vshrl.u32 %v11290, 7
    %v11292 = vsub.s32 %v11289, %v11291
    %v11293 = vrot.slane %v11155, %v11292
    %v11294 = vcombine.low %v11156, %v11157
    %v11295 = vcombine.low %v11158, %v11159
    %v11297 = vunpack.c.l.s4 1983009808
    %v11298 = vunpack.c.0.s8 %v11297
    %v11299 = vlaneseq
    %v11300 = vshrl.u32 %v11299, 7
    %v11301 = vsub.s32 %v11298, %v11300
    %v11302 = vrot.slane %v11294, %v11301
    %v11304 = vunpack.c.l.s4 1983009808
    %v11305 = vunpack.c.0.s8 %v11304
    %v11306 = vlaneseq
    %v11307 = vshrl.u32 %v11306, 7
    %v11308 = vsub.s32 %v11305, %v11307
    %v11309 = vrot.slane %v11295, %v11308
    %v11310 = vcombine.low %v11302, %v11309
    %v11312 = vunpack.c.l.s4 1983009808
    %v11313 = vunpack.c.0.s8 %v11312
    %v11314 = vlaneseq
    %v11315 = vshrl.u32 %v11314, 7
    %v11316 = vsub.s32 %v11313, %v11315
    %v11317 = vrot.slane %v11160, %v11316
    %v11318 = vcombine.low %v11161, %v11162
    %v11319 = vcombine.low %v11163, %v11164
    %v11321 = vunpack.c.l.s4 1983009808
    %v11322 = vunpack.c.0.s8 %v11321
    %v11323 = vlaneseq
    %v11324 = vshrl.u32 %v11323, 7
    %v11325 = vsub.s32 %v11322, %v11324
    %v11326 = vrot.slane %v11318, %v11325
    %v11328 = vunpack.c.l.s4 1983009808
    %v11329 = vunpack.c.0.s8 %v11328
    %v11330 = vlaneseq
    %v11331 = vshrl.u32 %v11330, 7
    %v11332 = vsub.s32 %v11329, %v11331
    %v11333 = vrot.slane %v11319, %v11332
    %v11334 = vcombine.low %v11326, %v11333
    %v11336 = vunpack.c.l.s4 1983009808
    %v11337 = vunpack.c.0.s8 %v11336
    %v11338 = vlaneseq
    %v11339 = vshrl.u32 %v11338, 7
    %v11340 = vsub.s32 %v11337, %v11339
    %v11341 = vrot.slane %v11165, %v11340
    %v11342 = vcombine.low %v11166, %v11167
    %v11343 = vcombine.low %v11168, %v11169
    %v11345 = vunpack.c.l.s4 1983009808
    %v11346 = vunpack.c.0.s8 %v11345
    %v11347 = vlaneseq
    %v11348 = vshrl.u32 %v11347, 7
    %v11349 = vsub.s32 %v11346, %v11348
    %v11350 = vrot.slane %v11342, %v11349
    %v11352 = vunpack.c.l.s4 1983009808
    %v11353 = vunpack.c.0.s8 %v11352
    %v11354 = vlaneseq
    %v11355 = vshrl.u32 %v11354, 7
    %v11356 = vsub.s32 %v11353, %v11355
    %v11357 = vrot.slane %v11343, %v11356
    %v11358 = vcombine.low %v11350, %v11357
    %v11360 = vunpack.c.l.s4 1983009808
    %v11361 = vunpack.c.0.s8 %v11360
    %v11362 = vlaneseq
    %v11363 = vshrl.u32 %v11362, 7
    %v11364 = vsub.s32 %v11361, %v11363
    %v11365 = vrot.slane %v11170, %v11364
    %v11366 = vcombine.low %v11171, %v11172
    %v11367 = vcombine.low %v11173, %v11174
    %v11369 = vunpack.c.l.s4 1983009808
    %v11370 = vunpack.c.0.s8 %v11369
    %v11371 = vlaneseq
    %v11372 = vshrl.u32 %v11371, 7
    %v11373 = vsub.s32 %v11370, %v11372
    %v11374 = vrot.slane %v11366, %v11373
    %v11376 = vunpack.c.l.s4 1983009808
    %v11377 = vunpack.c.0.s8 %v11376
    %v11378 = vlaneseq
    %v11379 = vshrl.u32 %v11378, 7
    %v11380 = vsub.s32 %v11377, %v11379
    %v11381 = vrot.slane %v11367, %v11380
    %v11382 = vcombine.low %v11374, %v11381
    %v11384 = vunpack.c.l.s4 1983009808
    %v11385 = vunpack.c.0.s8 %v11384
    %v11386 = vlaneseq
    %v11387 = vshrl.u32 %v11386, 7
    %v11388 = vsub.s32 %v11385, %v11387
    %v11389 = vrot.slane %v11175, %v11388
    %v11390 = vcombine.low %v11176, %v11177
    %v11391 = vcombine.low %v11178, %v11179
    %v11393 = vunpack.c.l.s4 1983009808
    %v11394 = vunpack.c.0.s8 %v11393
    %v11395 = vlaneseq
    %v11396 = vshrl.u32 %v11395, 7
    %v11397 = vsub.s32 %v11394, %v11396
    %v11398 = vrot.slane %v11390, %v11397
    %v11400 = vunpack.c.l.s4 1983009808
    %v11401 = vunpack.c.0.s8 %v11400
    %v11402 = vlaneseq
    %v11403 = vshrl.u32 %v11402, 7
    %v11404 = vsub.s32 %v11401, %v11403
    %v11405 = vrot.slane %v11391, %v11404
    %v11406 = vcombine.low %v11398, %v11405
    %v11408 = vunpack.c.l.s4 1983009808
    %v11409 = vunpack.c.0.s8 %v11408
    %v11410 = vlaneseq
    %v11411 = vshrl.u32 %v11410, 7
    %v11412 = vsub.s32 %v11409, %v11411
    %v11413 = vrot.slane %v11180, %v11412
    %v11414 = vcombine.low %v11181, %v11182
    %v11415 = vcombine.low %v11183, %v11184
    %v11417 = vunpack.c.l.s4 1983009808
    %v11418 = vunpack.c.0.s8 %v11417
    %v11419 = vlaneseq
    %v11420 = vshrl.u32 %v11419, 7
    %v11421 = vsub.s32 %v11418, %v11420
    %v11422 = vrot.slane %v11414, %v11421
    %v11424 = vunpack.c.l.s4 1983009808
    %v11425 = vunpack.c.0.s8 %v11424
    %v11426 = vlaneseq
    %v11427 = vshrl.u32 %v11426, 7
    %v11428 = vsub.s32 %v11425, %v11427
    %v11429 = vrot.slane %v11415, %v11428
    %v11430 = vcombine.low %v11422, %v11429
    %v11432 = vunpack.c.l.s4 1983009808
    %v11433 = vunpack.c.0.s8 %v11432
    %v11434 = vlaneseq
    %v11435 = vshrl.u32 %v11434, 7
    %v11436 = vsub.s32 %v11433, %v11435
    %v11437 = vrot.slane %v11185, %v11436
    %v11438 = vcombine.low %v11186, %v11187
    %v11439 = vcombine.low %v11188, %v11189
    %v11441 = vunpack.c.l.s4 1983009808
    %v11442 = vunpack.c.0.s8 %v11441
    %v11443 = vlaneseq
    %v11444 = vshrl.u32 %v11443, 7
    %v11445 = vsub.s32 %v11442, %v11444
    %v11446 = vrot.slane %v11438, %v11445
    %v11448 = vunpack.c.l.s4 1983009808
    %v11449 = vunpack.c.0.s8 %v11448
    %v11450 = vlaneseq
    %v11451 = vshrl.u32 %v11450, 7
    %v11452 = vsub.s32 %v11449, %v11451
    %v11453 = vrot.slane %v11439, %v11452
    %v11454 = vcombine.low %v11446, %v11453
    %v11456 = vunpack.c.l.s4 1983009808
    %v11457 = vunpack.c.0.s8 %v11456
    %v11458 = vlaneseq
    %v11459 = vshrl.u32 %v11458, 7
    %v11460 = vsub.s32 %v11457, %v11459
    %v11461 = vrot.slane %v11190, %v11460
    %v11462 = vcombine.low %v11191, %v11192
    %v11463 = vcombine.low %v11193, %v11194
    %v11465 = vunpack.c.l.s4 1983009808
    %v11466 = vunpack.c.0.s8 %v11465
    %v11467 = vlaneseq
    %v11468 = vshrl.u32 %v11467, 7
    %v11469 = vsub.s32 %v11466, %v11468
    %v11470 = vrot.slane %v11462, %v11469
    %v11472 = vunpack.c.l.s4 1983009808
    %v11473 = vunpack.c.0.s8 %v11472
    %v11474 = vlaneseq
    %v11475 = vshrl.u32 %v11474, 7
    %v11476 = vsub.s32 %v11473, %v11475
    %v11477 = vrot.slane %v11463, %v11476
    %v11478 = vcombine.low %v11470, %v11477
    %v11480 = vunpack.c.l.s4 1983009808
    %v11481 = vunpack.c.0.s8 %v11480
    %v11482 = vlaneseq
    %v11483 = vshrl.u32 %v11482, 7
    %v11484 = vsub.s32 %v11481, %v11483
    %v11485 = vrot.slane %v11195, %v11484
    %v11507 = vunpack.c.l.s4 1966171168
    %v11508 = vunpack.c.0.s8 %v11507
    %v11509 = vlaneseq
    %v11510 = vshrl.u32 %v11509, 7
    %v11511 = vsub.s32 %v11508, %v11510
    %v11512 = vrot.slane %v11262, %v11511
    %v11514 = vunpack.c.l.s4 1966171168
    %v11515 = vunpack.c.0.s8 %v11514
    %v11516 = vlaneseq
    %v11517 = vshrl.u32 %v11516, 7
    %v11518 = vsub.s32 %v11515, %v11517
    %v11519 = vrot.slane %v11269, %v11518
    %v11521 = vunpack.c.l.s4 1966171168
    %v11522 = vunpack.c.0.s8 %v11521
    %v11523 = vlaneseq
    %v11524 = vshrl.u32 %v11523, 7
    %v11525 = vsub.s32 %v11522, %v11524
    %v11526 = vrot.slane %v11286, %v11525
    %v11528 = vunpack.c.l.s4 1966171168
    %v11529 = vunpack.c.0.s8 %v11528
    %v11530 = vlaneseq
    %v11531 = vshrl.u32 %v11530, 7
    %v11532 = vsub.s32 %v11529, %v11531
    %v11533 = vrot.slane %v11293, %v11532
    %v11535 = vunpack.c.l.s4 1966171168
    %v11536 = vunpack.c.0.s8 %v11535
    %v11537 = vlaneseq
    %v11538 = vshrl.u32 %v11537, 7
    %v11539 = vsub.s32 %v11536, %v11538
    %v11540 = vrot.slane %v11310, %v11539
    %v11542 = vunpack.c.l.s4 1966171168
    %v11543 = vunpack.c.0.s8 %v11542
    %v11544 = vlaneseq
    %v11545 = vshrl.u32 %v11544, 7
    %v11546 = vsub.s32 %v11543, %v11545
    %v11547 = vrot.slane %v11317, %v11546
    %v11549 = vunpack.c.l.s4 1966171168
    %v11550 = vunpack.c.0.s8 %v11549
    %v11551 = vlaneseq
    %v11552 = vshrl.u32 %v11551, 7
    %v11553 = vsub.s32 %v11550, %v11552
    %v11554 = vrot.slane %v11334, %v11553
    %v11556 = vunpack.c.l.s4 1966171168
    %v11557 = vunpack.c.0.s8 %v11556
    %v11558 = vlaneseq
    %v11559 = vshrl.u32 %v11558, 7
    %v11560 = vsub.s32 %v11557, %v11559
    %v11561 = vrot.slane %v11341, %v11560
    %v11563 = vunpack.c.l.s4 1966171168
    %v11564 = vunpack.c.0.s8 %v11563
    %v11565 = vlaneseq
    %v11566 = vshrl.u32 %v11565, 7
    %v11567 = vsub.s32 %v11564, %v11566
    %v11568 = vrot.slane %v11358, %v11567
    %v11570 = vunpack.c.l.s4 1966171168
    %v11571 = vunpack.c.0.s8 %v11570
    %v11572 = vlaneseq
    %v11573 = vshrl.u32 %v11572, 7
    %v11574 = vsub.s32 %v11571, %v11573
    %v11575 = vrot.slane %v11365, %v11574
    %v11577 = vunpack.c.l.s4 1966171168
    %v11578 = vunpack.c.0.s8 %v11577
    %v11579 = vlaneseq
    %v11580 = vshrl.u32 %v11579, 7
    %v11581 = vsub.s32 %v11578, %v11580
    %v11582 = vrot.slane %v11382, %v11581
    %v11584 = vunpack.c.l.s4 1966171168
    %v11585 = vunpack.c.0.s8 %v11584
    %v11586 = vlaneseq
    %v11587 = vshrl.u32 %v11586, 7
    %v11588 = vsub.s32 %v11585, %v11587
    %v11589 = vrot.slane %v11389, %v11588
    %v11591 = vunpack.c.l.s4 1966171168
    %v11592 = vunpack.c.0.s8 %v11591
    %v11593 = vlaneseq
    %v11594 = vshrl.u32 %v11593, 7
    %v11595 = vsub.s32 %v11592, %v11594
    %v11596 = vrot.slane %v11406, %v11595
    %v11598 = vunpack.c.l.s4 1966171168
    %v11599 = vunpack.c.0.s8 %v11598
    %v11600 = vlaneseq
    %v11601 = vshrl.u32 %v11600, 7
    %v11602 = vsub.s32 %v11599, %v11601
    %v11603 = vrot.slane %v11413, %v11602
    %v11605 = vunpack.c.l.s4 1966171168
    %v11606 = vunpack.c.0.s8 %v11605
    %v11607 = vlaneseq
    %v11608 = vshrl.u32 %v11607, 7
    %v11609 = vsub.s32 %v11606, %v11608
    %v11610 = vrot.slane %v11430, %v11609
    %v11612 = vunpack.c.l.s4 1966171168
    %v11613 = vunpack.c.0.s8 %v11612
    %v11614 = vlaneseq
    %v11615 = vshrl.u32 %v11614, 7
    %v11616 = vsub.s32 %v11613, %v11615
    %v11617 = vrot.slane %v11437, %v11616
    %v11619 = vunpack.c.l.s4 1966171168
    %v11620 = vunpack.c.0.s8 %v11619
    %v11621 = vlaneseq
    %v11622 = vshrl.u32 %v11621, 7
    %v11623 = vsub.s32 %v11620, %v11622
    %v11624 = vrot.slane %v11454, %v11623
    %v11626 = vunpack.c.l.s4 1966171168
    %v11627 = vunpack.c.0.s8 %v11626
    %v11628 = vlaneseq
    %v11629 = vshrl.u32 %v11628, 7
    %v11630 = vsub.s32 %v11627, %v11629
    %v11631 = vrot.slane %v11461, %v11630
    %v11633 = vunpack.c.l.s4 1966171168
    %v11634 = vunpack.c.0.s8 %v11633
    %v11635 = vlaneseq
    %v11636 = vshrl.u32 %v11635, 7
    %v11637 = vsub.s32 %v11634, %v11636
    %v11638 = vrot.slane %v11478, %v11637
    %v11640 = vunpack.c.l.s4 1966171168
    %v11641 = vunpack.c.0.s8 %v11640
    %v11642 = vlaneseq
    %v11643 = vshrl.u32 %v11642, 7
    %v11644 = vsub.s32 %v11641, %v11643
    %v11645 = vrot.slane %v11485, %v11644
    %v11666 = vrot.slane %v11512, 4
    %v11667 = vrot.slane %v11519, 4
    %v11668 = vrot.slane %v11526, 4
    %v11669 = vrot.slane %v11533, 4
    %v11670 = vrot.slane %v11540, 4
    %v11671 = vrot.slane %v11547, 4
    %v11672 = vrot.slane %v11554, 4
    %v11673 = vrot.slane %v11561, 4
    %v11674 = vrot.slane %v11568, 4
    %v11675 = vrot.slane %v11575, 4
    %v11676 = vrot.slane %v11582, 4
    %v11677 = vrot.slane %v11589, 4
    %v11678 = vrot.slane %v11596, 4
    %v11679 = vrot.slane %v11603, 4
    %v11680 = vrot.slane %v11610, 4
    %v11681 = vrot.slane %v11617, 4
    %v11682 = vrot.slane %v11624, 4
    %v11683 = vrot.slane %v11631, 4
    %v11684 = vrot.slane %v11638, 4
    %v11685 = vrot.slane %v11645, 4
    %v11706 = vmax.f32 %v11512, %v11666
    %v11707 = vmax.f32 %v11519, %v11667
    %v11708 = vmax.f32 %v11526, %v11668
    %v11709 = vmax.f32 %v11533, %v11669
    %v11710 = vmax.f32 %v11540, %v11670
    %v11711 = vmax.f32 %v11547, %v11671
    %v11712 = vmax.f32 %v11554, %v11672
    %v11713 = vmax.f32 %v11561, %v11673
    %v11714 = vmax.f32 %v11568, %v11674
    %v11715 = vmax.f32 %v11575, %v11675
    %v11716 = vmax.f32 %v11582, %v11676
    %v11717 = vmax.f32 %v11589, %v11677
    %v11718 = vmax.f32 %v11596, %v11678
    %v11719 = vmax.f32 %v11603, %v11679
    %v11720 = vmax.f32 %v11610, %v11680
    %v11721 = vmax.f32 %v11617, %v11681
    %v11722 = vmax.f32 %v11624, %v11682
    %v11723 = vmax.f32 %v11631, %v11683
    %v11724 = vmax.f32 %v11638, %v11684
    %v11725 = vmax.f32 %v11645, %v11685
    %v11746 = vcombine.low %v11706, %v11707
    %v11747 = vcombine.low %v11708, %v11709
    %v11748 = vcombine.low %v11710, %v11711
    %v11749 = vcombine.low %v11712, %v11713
    %v11750 = vcombine.low %v11714, %v11715
    %v11751 = vcombine.low %v11716, %v11717
    %v11752 = vcombine.low %v11718, %v11719
    %v11753 = vcombine.low %v11720, %v11721
    %v11754 = vcombine.low %v11722, %v11723
    %v11755 = vcombine.low %v11724, %v11725
    %v11766 = vsel %vm6377, %v11746, 0.0
    %v11767 = vrot.slane %v11751, 7
    %vm11768 = vcmask 1041409
    %v11769 = vsel %vm11768, %v11767, %v11766
    %v11770 = vrot.slane %v11746, 1
    %v11771 = vsel %vm6377, %v11770, 0.0
    %v11772 = vsel %vm11768, %v11751, %v11771
    %v11773 = vrot.slane %v11746, 2
    %v11774 = vsel %vm6377, %v11773, 0.0
    %v11775 = vrot.slane %v11751, 1
    %v11776 = vsel %vm11768, %v11775, %v11774
    %v11777 = vrot.slane %v11746, 3
    %v11778 = vsel %vm6377, %v11777, 0.0
    %v11779 = vrot.slane %v11751, 2
    %v11780 = vsel %vm11768, %v11779, %v11778
    %v11781 = vrot.slane %v11746, 4
    %v11782 = vsel %vm6377, %v11781, 0.0
    %v11783 = vrot.slane %v11751, 3
    %v11784 = vsel %vm11768, %v11783, %v11782
    %v11785 = vsel %vm6377, %v11747, 0.0
    %v11786 = vrot.slane %v11752, 7
    %v11787 = vsel %vm11768, %v11786, %v11785
    %v11788 = vrot.slane %v11747, 1
    %v11789 = vsel %vm6377, %v11788, 0.0
    %v11790 = vsel %vm11768, %v11752, %v11789
    %v11791 = vrot.slane %v11747, 2
    %v11792 = vsel %vm6377, %v11791, 0.0
    %v11793 = vrot.slane %v11752, 1
    %v11794 = vsel %vm11768, %v11793, %v11792
    %v11795 = vrot.slane %v11747, 3
    %v11796 = vsel %vm6377, %v11795, 0.0
    %v11797 = vrot.slane %v11752, 2
    %v11798 = vsel %vm11768, %v11797, %v11796
    %v11799 = vrot.slane %v11747, 4
    %v11800 = vsel %vm6377, %v11799, 0.0
    %v11801 = vrot.slane %v11752, 3
    %v11802 = vsel %vm11768, %v11801, %v11800
    %v11803 = vsel %vm6377, %v11748, 0.0
    %v11804 = vrot.slane %v11753, 7
    %v11805 = vsel %vm11768, %v11804, %v11803
    %v11806 = vrot.slane %v11748, 1
    %v11807 = vsel %vm6377, %v11806, 0.0
    %v11808 = vsel %vm11768, %v11753, %v11807
    %v11809 = vrot.slane %v11748, 2
    %v11810 = vsel %vm6377, %v11809, 0.0
    %v11811 = vrot.slane %v11753, 1
    %v11812 = vsel %vm11768, %v11811, %v11810
    %v11813 = vrot.slane %v11748, 3
    %v11814 = vsel %vm6377, %v11813, 0.0
    %v11815 = vrot.slane %v11753, 2
    %v11816 = vsel %vm11768, %v11815, %v11814
    %v11817 = vrot.slane %v11748, 4
    %v11818 = vsel %vm6377, %v11817, 0.0
    %v11819 = vrot.slane %v11753, 3
    %v11820 = vsel %vm11768, %v11819, %v11818
    %v11821 = vsel %vm6377, %v11749, 0.0
    %v11822 = vrot.slane %v11754, 7
    %v11823 = vsel %vm11768, %v11822, %v11821
    %v11824 = vrot.slane %v11749, 1
    %v11825 = vsel %vm6377, %v11824, 0.0
    %v11826 = vsel %vm11768, %v11754, %v11825
    %v11827 = vrot.slane %v11749, 2
    %v11828 = vsel %vm6377, %v11827, 0.0
    %v11829 = vrot.slane %v11754, 1
    %v11830 = vsel %vm11768, %v11829, %v11828
    %v11831 = vrot.slane %v11749, 3
    %v11832 = vsel %vm6377, %v11831, 0.0
    %v11833 = vrot.slane %v11754, 2
    %v11834 = vsel %vm11768, %v11833, %v11832
    %v11835 = vrot.slane %v11749, 4
    %v11836 = vsel %vm6377, %v11835, 0.0
    %v11837 = vrot.slane %v11754, 3
    %v11838 = vsel %vm11768, %v11837, %v11836
    %v11839 = vsel %vm6377, %v11750, 0.0
    %v11840 = vrot.slane %v11755, 7
    %v11841 = vsel %vm11768, %v11840, %v11839
    %v11842 = vrot.slane %v11750, 1
    %v11843 = vsel %vm6377, %v11842, 0.0
    %v11844 = vsel %vm11768, %v11755, %v11843
    %v11845 = vrot.slane %v11750, 2
    %v11846 = vsel %vm6377, %v11845, 0.0
    %v11847 = vrot.slane %v11755, 1
    %v11848 = vsel %vm11768, %v11847, %v11846
    %v11849 = vrot.slane %v11750, 3
    %v11850 = vsel %vm6377, %v11849, 0.0
    %v11851 = vrot.slane %v11755, 2
    %v11852 = vsel %vm11768, %v11851, %v11850
    %v11853 = vrot.slane %v11750, 4
    %v11854 = vsel %vm6377, %v11853, 0.0
    %v11855 = vrot.slane %v11755, 3
    %v11856 = vsel %vm11768, %v11855, %v11854
    %v11857 = vld [vmem:[#allocation10] sm:$0xff]
    %v11858 = vld [vmem:[#allocation10 + $0x8] sm:$0xff]
    %v11859 = vld [vmem:[#allocation10 + $0x10] sm:$0xff]
    %v11860 = vld [vmem:[#allocation10 + $0x18] sm:$0xff]
    %v11861 = vld [vmem:[#allocation10 + $0x20] sm:$0xff]
    %v11862 = vld [vmem:[#allocation10 + $0x28] sm:$0xff]
    %v11863 = vld [vmem:[#allocation10 + $0x30] sm:$0xff]
    %v11864 = vld [vmem:[#allocation10 + $0x38] sm:$0xff]
    %v11865 = vld [vmem:[#allocation10 + $0x40] sm:$0xff]
    %v11866 = vld [vmem:[#allocation10 + $0x48] sm:$0xff]
    %v11867 = vld [vmem:[#allocation10 + $0x50] sm:$0xff]
    %v11868 = vld [vmem:[#allocation10 + $0x58] sm:$0xff]
    %v11869 = vld [vmem:[#allocation10 + $0x60] sm:$0xff]
    %v11870 = vld [vmem:[#allocation10 + $0x68] sm:$0xff]
    %v11871 = vld [vmem:[#allocation10 + $0x70] sm:$0xff]
    %v11872 = vld [vmem:[#allocation10 + $0x78] sm:$0xff]
    %v11873 = vld [vmem:[#allocation10 + $0x80] sm:$0xff]
    %v11874 = vld [vmem:[#allocation10 + $0x88] sm:$0xff]
    %v11875 = vld [vmem:[#allocation10 + $0x90] sm:$0xff]
    %v11876 = vld [vmem:[#allocation10 + $0x98] sm:$0xff]
    %v11877 = vld [vmem:[#allocation10 + $0xa0] sm:$0xff]
    %v11878 = vld [vmem:[#allocation10 + $0xa8] sm:$0xff]
    %v11879 = vld [vmem:[#allocation10 + $0xb0] sm:$0xff]
    %v11880 = vld [vmem:[#allocation10 + $0xb8] sm:$0xff]
    %v11881 = vld [vmem:[#allocation10 + $0xc0] sm:$0xff]
    %v11882 = vld [vmem:[#allocation10 + $0xc8] sm:$0xff]
    %v11883 = vld [vmem:[#allocation10 + $0xd0] sm:$0xff]
    %v11884 = vld [vmem:[#allocation10 + $0xd8] sm:$0xff]
    %v11885 = vld [vmem:[#allocation10 + $0xe0] sm:$0xff]
    %v11886 = vld [vmem:[#allocation10 + $0xe8] sm:$0xff]
    %v11887 = vld [vmem:[#allocation10 + $0xf0] sm:$0xff]
    %v11888 = vld [vmem:[#allocation10 + $0xf8] sm:$0xff]
    %v11889 = vld [vmem:[#allocation10 + $0x100] sm:$0xff]
    %v11890 = vld [vmem:[#allocation10 + $0x108] sm:$0xff]
    %v11891 = vld [vmem:[#allocation10 + $0x110] sm:$0xff]
    %v11892 = vld [vmem:[#allocation10 + $0x118] sm:$0xff]
    %v11893 = vld [vmem:[#allocation10 + $0x120] sm:$0xff]
    %v11894 = vld [vmem:[#allocation10 + $0x128] sm:$0xff]
    %v11895 = vld [vmem:[#allocation10 + $0x130] sm:$0xff]
    %v11896 = vld [vmem:[#allocation10 + $0x138] sm:$0xff]
    %v11897 = vld [vmem:[#allocation10 + $0x140] sm:$0xff]
    %v11898 = vld [vmem:[#allocation10 + $0x148] sm:$0xff]
    %v11899 = vld [vmem:[#allocation10 + $0x150] sm:$0xff]
    %v11900 = vld [vmem:[#allocation10 + $0x158] sm:$0xff]
    %v11901 = vld [vmem:[#allocation10 + $0x160] sm:$0xff]
    %v11902 = vld [vmem:[#allocation10 + $0x168] sm:$0xff]
    %v11903 = vld [vmem:[#allocation10 + $0x170] sm:$0xff]
    %v11904 = vld [vmem:[#allocation10 + $0x178] sm:$0xff]
    %v11905 = vld [vmem:[#allocation10 + $0x180] sm:$0xff]
    %v11906 = vld [vmem:[#allocation10 + $0x188] sm:$0xff]
    %v11907 = vld [vmem:[#allocation10 + $0x190] sm:$0xff]
    %v11908 = vld [vmem:[#allocation10 + $0x198] sm:$0xff]
    %v11909 = vld [vmem:[#allocation10 + $0x1a0] sm:$0xff]
    %v11910 = vld [vmem:[#allocation10 + $0x1a8] sm:$0xff]
    %v11911 = vld [vmem:[#allocation10 + $0x1b0] sm:$0xff]
    %v11912 = vld [vmem:[#allocation10 + $0x1b8] sm:$0xff]
    %v11913 = vld [vmem:[#allocation10 + $0x1c0] sm:$0xff]
    %v11914 = vld [vmem:[#allocation10 + $0x1c8] sm:$0xff]
    %v11915 = vld [vmem:[#allocation10 + $0x1d0] sm:$0xff]
    %v11916 = vld [vmem:[#allocation10 + $0x1d8] sm:$0xff]
    %v11917 = vld [vmem:[#allocation10 + $0x1e0] sm:$0xff]
    %v11918 = vld [vmem:[#allocation10 + $0x1e8] sm:$0xff]
    %v11919 = vld [vmem:[#allocation10 + $0x1f0] sm:$0xff]
    %v11920 = vld [vmem:[#allocation10 + $0x1f8] sm:$0xff]
    %v11921 = vld [vmem:[#allocation10 + $0x200] sm:$0xff]
    %v11922 = vld [vmem:[#allocation10 + $0x208] sm:$0xff]
    %v11923 = vld [vmem:[#allocation10 + $0x210] sm:$0xff]
    %v11924 = vld [vmem:[#allocation10 + $0x218] sm:$0xff]
    %v11925 = vld [vmem:[#allocation10 + $0x220] sm:$0xff]
    %v11926 = vld [vmem:[#allocation10 + $0x228] sm:$0xff]
    %v11927 = vld [vmem:[#allocation10 + $0x230] sm:$0xff]
    %v11928 = vld [vmem:[#allocation10 + $0x238] sm:$0xff]
    %v11929 = vld [vmem:[#allocation10 + $0x240] sm:$0xff]
    %v11930 = vld [vmem:[#allocation10 + $0x248] sm:$0xff]
    %v11931 = vld [vmem:[#allocation10 + $0x250] sm:$0xff]
    %v11932 = vld [vmem:[#allocation10 + $0x258] sm:$0xff]
    %v11933 = vld [vmem:[#allocation10 + $0x260] sm:$0xff]
    %v11934 = vld [vmem:[#allocation10 + $0x268] sm:$0xff]
    %v11935 = vld [vmem:[#allocation10 + $0x270] sm:$0xff]
    %v11936 = vld [vmem:[#allocation10 + $0x278] sm:$0xff]
    %v11937 = vld [vmem:[#allocation10 + $0x280] sm:$0xff]
    %v11938 = vld [vmem:[#allocation10 + $0x288] sm:$0xff]
    %v11939 = vld [vmem:[#allocation10 + $0x290] sm:$0xff]
    %v11940 = vld [vmem:[#allocation10 + $0x298] sm:$0xff]
    %v11941 = vld [vmem:[#allocation10 + $0x2a0] sm:$0xff]
    %v11942 = vld [vmem:[#allocation10 + $0x2a8] sm:$0xff]
    %v11943 = vld [vmem:[#allocation10 + $0x2b0] sm:$0xff]
    %v11944 = vld [vmem:[#allocation10 + $0x2b8] sm:$0xff]
    %v11945 = vld [vmem:[#allocation10 + $0x2c0] sm:$0xff]
    %v11946 = vld [vmem:[#allocation10 + $0x2c8] sm:$0xff]
    %v11947 = vld [vmem:[#allocation10 + $0x2d0] sm:$0xff]
    %v11948 = vld [vmem:[#allocation10 + $0x2d8] sm:$0xff]
    %v11949 = vld [vmem:[#allocation10 + $0x2e0] sm:$0xff]
    %v11950 = vld [vmem:[#allocation10 + $0x2e8] sm:$0xff]
    %v11951 = vld [vmem:[#allocation10 + $0x2f0] sm:$0xff]
    %v11952 = vld [vmem:[#allocation10 + $0x2f8] sm:$0xff]
    %v11953 = vld [vmem:[#allocation10 + $0x300] sm:$0xff]
    %v11954 = vld [vmem:[#allocation10 + $0x308] sm:$0xff]
    %v11955 = vld [vmem:[#allocation10 + $0x310] sm:$0xff]
    %v11956 = vld [vmem:[#allocation10 + $0x318] sm:$0xff]
    %v11957 = vld [vmem:[#allocation10 + $0x320] sm:$0xff]
    %v11958 = vld [vmem:[#allocation10 + $0x328] sm:$0xff]
    %v11959 = vld [vmem:[#allocation10 + $0x330] sm:$0xff]
    %v11960 = vld [vmem:[#allocation10 + $0x338] sm:$0xff]
    %v11961 = vld [vmem:[#allocation10 + $0x340] sm:$0xff]
    %v11962 = vld [vmem:[#allocation10 + $0x348] sm:$0xff]
    %v11963 = vld [vmem:[#allocation10 + $0x350] sm:$0xff]
    %v11964 = vld [vmem:[#allocation10 + $0x358] sm:$0xff]
    %v11965 = vld [vmem:[#allocation10 + $0x360] sm:$0xff]
    %v11966 = vld [vmem:[#allocation10 + $0x368] sm:$0xff]
    %v11967 = vld [vmem:[#allocation10 + $0x370] sm:$0xff]
    %v11968 = vld [vmem:[#allocation10 + $0x378] sm:$0xff]
    %v11969 = vld [vmem:[#allocation10 + $0x380] sm:$0xff]
    %v11970 = vld [vmem:[#allocation10 + $0x388] sm:$0xff]
    %v11971 = vld [vmem:[#allocation10 + $0x390] sm:$0xff]
    %v11972 = vld [vmem:[#allocation10 + $0x398] sm:$0xff]
    %v11973 = vld [vmem:[#allocation10 + $0x3a0] sm:$0xff]
    %v11974 = vld [vmem:[#allocation10 + $0x3a8] sm:$0xff]
    %v11975 = vld [vmem:[#allocation10 + $0x3b0] sm:$0xff]
    %v11976 = vld [vmem:[#allocation10 + $0x3b8] sm:$0xff]
    %v11977 = vld [vmem:[#allocation10 + $0x3c0] sm:$0xff]
    %v11978 = vld [vmem:[#allocation10 + $0x3c8] sm:$0xff]
    %v11979 = vld [vmem:[#allocation10 + $0x3d0] sm:$0xff]
    %v11980 = vld [vmem:[#allocation10 + $0x3d8] sm:$0xff]
    %v11981 = vld [vmem:[#allocation10 + $0x3e0] sm:$0xff]
    %v11982 = vld [vmem:[#allocation10 + $0x3e8] sm:$0xff]
    %v11983 = vld [vmem:[#allocation10 + $0x3f0] sm:$0xff]
    %v11984 = vld [vmem:[#allocation10 + $0x3f8] sm:$0xff]
    %v11985 = vld [vmem:[#allocation10 + $0x400] sm:$0xff]
    %v11986 = vld [vmem:[#allocation10 + $0x408] sm:$0xff]
    %v11987 = vld [vmem:[#allocation10 + $0x410] sm:$0xff]
    %v11988 = vld [vmem:[#allocation10 + $0x418] sm:$0xff]
    %v11989 = vld [vmem:[#allocation10 + $0x420] sm:$0xff]
    %v11990 = vld [vmem:[#allocation10 + $0x428] sm:$0xff]
    %v11991 = vld [vmem:[#allocation10 + $0x430] sm:$0xff]
    %v11992 = vld [vmem:[#allocation10 + $0x438] sm:$0xff]
    %v11993 = vld [vmem:[#allocation10 + $0x440] sm:$0xff]
    %v11994 = vld [vmem:[#allocation10 + $0x448] sm:$0xff]
    %v11995 = vld [vmem:[#allocation10 + $0x450] sm:$0xff]
    %v11996 = vld [vmem:[#allocation10 + $0x458] sm:$0xff]
    %v11997 = vld [vmem:[#allocation10 + $0x460] sm:$0xff]
    %v11998 = vld [vmem:[#allocation10 + $0x468] sm:$0xff]
    %v11999 = vld [vmem:[#allocation10 + $0x470] sm:$0xff]
    %v12000 = vld [vmem:[#allocation10 + $0x478] sm:$0xff]
    %v12001 = vld [vmem:[#allocation10 + $0x480] sm:$0xff]
    %v12002 = vld [vmem:[#allocation10 + $0x488] sm:$0xff]
    %v12003 = vld [vmem:[#allocation10 + $0x490] sm:$0xff]
    %v12004 = vld [vmem:[#allocation10 + $0x498] sm:$0xff]
    %v12005 = vld [vmem:[#allocation10 + $0x4a0] sm:$0xff]
    %v12006 = vld [vmem:[#allocation10 + $0x4a8] sm:$0xff]
    %v12007 = vld [vmem:[#allocation10 + $0x4b0] sm:$0xff]
    %v12008 = vld [vmem:[#allocation10 + $0x4b8] sm:$0xff]
    %v12009 = vld [vmem:[#allocation10 + $0x4c0] sm:$0xff]
    %v12010 = vld [vmem:[#allocation10 + $0x4c8] sm:$0xff]
    %v12011 = vld [vmem:[#allocation10 + $0x4d0] sm:$0xff]
    %v12012 = vld [vmem:[#allocation10 + $0x4d8] sm:$0xff]
    %v12013 = vld [vmem:[#allocation10 + $0x4e0] sm:$0xff]
    %v12014 = vld [vmem:[#allocation10 + $0x4e8] sm:$0xff]
    %v12015 = vld [vmem:[#allocation10 + $0x4f0] sm:$0xff]
    %v12016 = vld [vmem:[#allocation10 + $0x4f8] sm:$0xff]
    %v12017 = vld [vmem:[#allocation10 + $0x500] sm:$0xff]
    %v12018 = vld [vmem:[#allocation10 + $0x508] sm:$0xff]
    %v12019 = vld [vmem:[#allocation10 + $0x510] sm:$0xff]
    %v12020 = vld [vmem:[#allocation10 + $0x518] sm:$0xff]
    %v12021 = vld [vmem:[#allocation10 + $0x520] sm:$0xff]
    %v12022 = vld [vmem:[#allocation10 + $0x528] sm:$0xff]
    %v12023 = vld [vmem:[#allocation10 + $0x530] sm:$0xff]
    %v12024 = vld [vmem:[#allocation10 + $0x538] sm:$0xff]
    %v12025 = vld [vmem:[#allocation10 + $0x540] sm:$0xff]
    %v12026 = vld [vmem:[#allocation10 + $0x548] sm:$0xff]
    %v12027 = vld [vmem:[#allocation10 + $0x550] sm:$0xff]
    %v12028 = vld [vmem:[#allocation10 + $0x558] sm:$0xff]
    %v12029 = vld [vmem:[#allocation10 + $0x560] sm:$0xff]
    %v12030 = vld [vmem:[#allocation10 + $0x568] sm:$0xff]
    %v12031 = vld [vmem:[#allocation10 + $0x570] sm:$0xff]
    %v12032 = vld [vmem:[#allocation10 + $0x578] sm:$0xff]
    %v12033 = vld [vmem:[#allocation10 + $0x580] sm:$0xff]
    %v12034 = vld [vmem:[#allocation10 + $0x588] sm:$0xff]
    %v12035 = vld [vmem:[#allocation10 + $0x590] sm:$0xff]
    %v12036 = vld [vmem:[#allocation10 + $0x598] sm:$0xff]
    %v12037 = vld [vmem:[#allocation10 + $0x5a0] sm:$0xff]
    %v12038 = vld [vmem:[#allocation10 + $0x5a8] sm:$0xff]
    %v12039 = vld [vmem:[#allocation10 + $0x5b0] sm:$0xff]
    %v12040 = vld [vmem:[#allocation10 + $0x5b8] sm:$0xff]
    %v12041 = vld [vmem:[#allocation10 + $0x5c0] sm:$0xff]
    %v12042 = vld [vmem:[#allocation10 + $0x5c8] sm:$0xff]
    %v12043 = vld [vmem:[#allocation10 + $0x5d0] sm:$0xff]
    %v12044 = vld [vmem:[#allocation10 + $0x5d8] sm:$0xff]
    %v12045 = vld [vmem:[#allocation10 + $0x5e0] sm:$0xff]
    %v12046 = vld [vmem:[#allocation10 + $0x5e8] sm:$0xff]
    %v12047 = vld [vmem:[#allocation10 + $0x5f0] sm:$0xff]
    %v12048 = vld [vmem:[#allocation10 + $0x5f8] sm:$0xff]
    %v12049 = vld [vmem:[#allocation10 + $0x600] sm:$0xff]
    %v12050 = vld [vmem:[#allocation10 + $0x608] sm:$0xff]
    %v12051 = vld [vmem:[#allocation10 + $0x610] sm:$0xff]
    %v12052 = vld [vmem:[#allocation10 + $0x618] sm:$0xff]
    %v12053 = vld [vmem:[#allocation10 + $0x620] sm:$0xff]
    %v12054 = vld [vmem:[#allocation10 + $0x628] sm:$0xff]
    %v12055 = vld [vmem:[#allocation10 + $0x630] sm:$0xff]
    %v12056 = vld [vmem:[#allocation10 + $0x638] sm:$0xff]
    %v12057 = vld [vmem:[#allocation10 + $0x640] sm:$0xff]
    %v12058 = vld [vmem:[#allocation10 + $0x648] sm:$0xff]
    %v12059 = vld [vmem:[#allocation10 + $0x650] sm:$0xff]
    %v12060 = vld [vmem:[#allocation10 + $0x658] sm:$0xff]
    %v12061 = vld [vmem:[#allocation10 + $0x660] sm:$0xff]
    %v12062 = vld [vmem:[#allocation10 + $0x668] sm:$0xff]
    %v12063 = vld [vmem:[#allocation10 + $0x670] sm:$0xff]
    %v12064 = vld [vmem:[#allocation10 + $0x678] sm:$0xff]
    %v12065 = vld [vmem:[#allocation10 + $0x680] sm:$0xff]
    %v12066 = vld [vmem:[#allocation10 + $0x688] sm:$0xff]
    %v12067 = vld [vmem:[#allocation10 + $0x690] sm:$0xff]
    %v12068 = vld [vmem:[#allocation10 + $0x698] sm:$0xff]
    %v12069 = vld [vmem:[#allocation10 + $0x6a0] sm:$0xff]
    %v12070 = vld [vmem:[#allocation10 + $0x6a8] sm:$0xff]
    %v12071 = vld [vmem:[#allocation10 + $0x6b0] sm:$0xff]
    %v12072 = vld [vmem:[#allocation10 + $0x6b8] sm:$0xff]
    %v12073 = vld [vmem:[#allocation10 + $0x6c0] sm:$0xff]
    %v12074 = vld [vmem:[#allocation10 + $0x6c8] sm:$0xff]
    %v12075 = vld [vmem:[#allocation10 + $0x6d0] sm:$0xff]
    %v12076 = vld [vmem:[#allocation10 + $0x6d8] sm:$0xff]
    %v12077 = vld [vmem:[#allocation10 + $0x6e0] sm:$0xff]
    %v12078 = vld [vmem:[#allocation10 + $0x6e8] sm:$0xff]
    %v12079 = vld [vmem:[#allocation10 + $0x6f0] sm:$0xff]
    %v12080 = vld [vmem:[#allocation10 + $0x6f8] sm:$0xff]
    %v12081 = vld [vmem:[#allocation10 + $0x700] sm:$0xff]
    %v12082 = vld [vmem:[#allocation10 + $0x708] sm:$0xff]
    %v12083 = vld [vmem:[#allocation10 + $0x710] sm:$0xff]
    %v12084 = vld [vmem:[#allocation10 + $0x718] sm:$0xff]
    %v12085 = vld [vmem:[#allocation10 + $0x720] sm:$0xff]
    %v12086 = vld [vmem:[#allocation10 + $0x728] sm:$0xff]
    %v12087 = vld [vmem:[#allocation10 + $0x730] sm:$0xff]
    %v12088 = vld [vmem:[#allocation10 + $0x738] sm:$0xff]
    %v12089 = vld [vmem:[#allocation10 + $0x740] sm:$0xff]
    %v12090 = vld [vmem:[#allocation10 + $0x748] sm:$0xff]
    %v12091 = vld [vmem:[#allocation10 + $0x750] sm:$0xff]
    %v12092 = vld [vmem:[#allocation10 + $0x758] sm:$0xff]
    %v12093 = vld [vmem:[#allocation10 + $0x760] sm:$0xff]
    %v12094 = vld [vmem:[#allocation10 + $0x768] sm:$0xff]
    %v12095 = vld [vmem:[#allocation10 + $0x770] sm:$0xff]
    %v12096 = vld [vmem:[#allocation10 + $0x778] sm:$0xff]
    %v12097 = vld [vmem:[#allocation10 + $0x780] sm:$0xff]
    %v12098 = vld [vmem:[#allocation10 + $0x788] sm:$0xff]
    %v12099 = vld [vmem:[#allocation10 + $0x790] sm:$0xff]
    %v12100 = vld [vmem:[#allocation10 + $0x798] sm:$0xff]
    %v12101 = vld [vmem:[#allocation10 + $0x7a0] sm:$0xff]
    %v12102 = vld [vmem:[#allocation10 + $0x7a8] sm:$0xff]
    %v12103 = vld [vmem:[#allocation10 + $0x7b0] sm:$0xff]
    %v12104 = vld [vmem:[#allocation10 + $0x7b8] sm:$0xff]
    %v12105 = vld [vmem:[#allocation10 + $0x7c0] sm:$0xff]
    %v12106 = vld [vmem:[#allocation10 + $0x7c8] sm:$0xff]
    %v12107 = vld [vmem:[#allocation10 + $0x7d0] sm:$0xff]
    %v12108 = vld [vmem:[#allocation10 + $0x7d8] sm:$0xff]
    %v12109 = vld [vmem:[#allocation10 + $0x7e0] sm:$0xff]
    %v12110 = vld [vmem:[#allocation10 + $0x7e8] sm:$0xff]
    %v12111 = vld [vmem:[#allocation10 + $0x7f0] sm:$0xff]
    %v12112 = vld [vmem:[#allocation10 + $0x7f8] sm:$0xff]
    %v12113 = vld [vmem:[#allocation10 + $0x800] sm:$0xff]
    %v12114 = vld [vmem:[#allocation10 + $0x808] sm:$0xff]
    %v12115 = vld [vmem:[#allocation10 + $0x810] sm:$0xff]
    %v12116 = vld [vmem:[#allocation10 + $0x818] sm:$0xff]
    %v12117 = vld [vmem:[#allocation10 + $0x820] sm:$0xff]
    %v12118 = vld [vmem:[#allocation10 + $0x828] sm:$0xff]
    %v12119 = vld [vmem:[#allocation10 + $0x830] sm:$0xff]
    %v12120 = vld [vmem:[#allocation10 + $0x838] sm:$0xff]
    %v12121 = vld [vmem:[#allocation10 + $0x840] sm:$0xff]
    %v12122 = vld [vmem:[#allocation10 + $0x848] sm:$0xff]
    %v12123 = vld [vmem:[#allocation10 + $0x850] sm:$0xff]
    %v12124 = vld [vmem:[#allocation10 + $0x858] sm:$0xff]
    %v12125 = vld [vmem:[#allocation10 + $0x860] sm:$0xff]
    %v12126 = vld [vmem:[#allocation10 + $0x868] sm:$0xff]
    %v12127 = vld [vmem:[#allocation10 + $0x870] sm:$0xff]
    %v12128 = vld [vmem:[#allocation10 + $0x878] sm:$0xff]
    %v12129 = vld [vmem:[#allocation10 + $0x880] sm:$0xff]
    %v12130 = vld [vmem:[#allocation10 + $0x888] sm:$0xff]
    %v12131 = vld [vmem:[#allocation10 + $0x890] sm:$0xff]
    %v12132 = vld [vmem:[#allocation10 + $0x898] sm:$0xff]
    %v12133 = vld [vmem:[#allocation10 + $0x8a0] sm:$0xff]
    %v12134 = vld [vmem:[#allocation10 + $0x8a8] sm:$0xff]
    %v12135 = vld [vmem:[#allocation10 + $0x8b0] sm:$0xff]
    %v12136 = vld [vmem:[#allocation10 + $0x8b8] sm:$0xff]
    %v12137 = vld [vmem:[#allocation10 + $0x8c0] sm:$0xff]
    %v12138 = vld [vmem:[#allocation10 + $0x8c8] sm:$0xff]
    %v12139 = vld [vmem:[#allocation10 + $0x8d0] sm:$0xff]
    %v12140 = vld [vmem:[#allocation10 + $0x8d8] sm:$0xff]
    %v12141 = vld [vmem:[#allocation10 + $0x8e0] sm:$0xff]
    %v12142 = vld [vmem:[#allocation10 + $0x8e8] sm:$0xff]
    %v12143 = vld [vmem:[#allocation10 + $0x8f0] sm:$0xff]
    %v12144 = vld [vmem:[#allocation10 + $0x8f8] sm:$0xff]
    %v12145 = vld [vmem:[#allocation10 + $0x900] sm:$0xff]
    %v12146 = vld [vmem:[#allocation10 + $0x908] sm:$0xff]
    %v12147 = vld [vmem:[#allocation10 + $0x910] sm:$0xff]
    %v12148 = vld [vmem:[#allocation10 + $0x918] sm:$0xff]
    %v12149 = vld [vmem:[#allocation10 + $0x920] sm:$0xff]
    %v12150 = vld [vmem:[#allocation10 + $0x928] sm:$0xff]
    %v12151 = vld [vmem:[#allocation10 + $0x930] sm:$0xff]
    %v12152 = vld [vmem:[#allocation10 + $0x938] sm:$0xff]
    %v12153 = vld [vmem:[#allocation10 + $0x940] sm:$0xff]
    %v12154 = vld [vmem:[#allocation10 + $0x948] sm:$0xff]
    %v12155 = vld [vmem:[#allocation10 + $0x950] sm:$0xff]
    %v12156 = vld [vmem:[#allocation10 + $0x958] sm:$0xff]
    %v12157 = vld [vmem:[#allocation10 + $0x960] sm:$0xff]
    %v12158 = vld [vmem:[#allocation10 + $0x968] sm:$0xff]
    %v12159 = vld [vmem:[#allocation10 + $0x970] sm:$0xff]
    %v12160 = vld [vmem:[#allocation10 + $0x978] sm:$0xff]
    %v12161 = vld [vmem:[#allocation10 + $0x980] sm:$0xff]
    %v12162 = vld [vmem:[#allocation10 + $0x988] sm:$0xff]
    %v12163 = vld [vmem:[#allocation10 + $0x990] sm:$0xff]
    %v12164 = vld [vmem:[#allocation10 + $0x998] sm:$0xff]
    %v12165 = vld [vmem:[#allocation10 + $0x9a0] sm:$0xff]
    %v12166 = vld [vmem:[#allocation10 + $0x9a8] sm:$0xff]
    %v12167 = vld [vmem:[#allocation10 + $0x9b0] sm:$0xff]
    %v12168 = vld [vmem:[#allocation10 + $0x9b8] sm:$0xff]
    %v12169 = vld [vmem:[#allocation10 + $0x9c0] sm:$0xff]
    %v12170 = vld [vmem:[#allocation10 + $0x9c8] sm:$0xff]
    %v12171 = vld [vmem:[#allocation10 + $0x9d0] sm:$0xff]
    %v12172 = vld [vmem:[#allocation10 + $0x9d8] sm:$0xff]
    %v12173 = vld [vmem:[#allocation10 + $0x9e0] sm:$0xff]
    %v12174 = vld [vmem:[#allocation10 + $0x9e8] sm:$0xff]
    %v12175 = vld [vmem:[#allocation10 + $0x9f0] sm:$0xff]
    %v12176 = vld [vmem:[#allocation10 + $0x9f8] sm:$0xff]
    %v12177 = vld [vmem:[#allocation10 + $0xa00] sm:$0xff]
    %v12178 = vld [vmem:[#allocation10 + $0xa08] sm:$0xff]
    %v12179 = vld [vmem:[#allocation10 + $0xa10] sm:$0xff]
    %v12180 = vld [vmem:[#allocation10 + $0xa18] sm:$0xff]
    %v12181 = vld [vmem:[#allocation10 + $0xa20] sm:$0xff]
    %v12182 = vld [vmem:[#allocation10 + $0xa28] sm:$0xff]
    %v12183 = vld [vmem:[#allocation10 + $0xa30] sm:$0xff]
    %v12184 = vld [vmem:[#allocation10 + $0xa38] sm:$0xff]
    %v12185 = vld [vmem:[#allocation10 + $0xa40] sm:$0xff]
    %v12186 = vld [vmem:[#allocation10 + $0xa48] sm:$0xff]
    %v12187 = vld [vmem:[#allocation10 + $0xa50] sm:$0xff]
    %v12188 = vld [vmem:[#allocation10 + $0xa58] sm:$0xff]
    %v12189 = vld [vmem:[#allocation10 + $0xa60] sm:$0xff]
    %v12190 = vld [vmem:[#allocation10 + $0xa68] sm:$0xff]
    %v12191 = vld [vmem:[#allocation10 + $0xa70] sm:$0xff]
    %v12192 = vld [vmem:[#allocation10 + $0xa78] sm:$0xff]
    %v12193 = vld [vmem:[#allocation10 + $0xa80] sm:$0xff]
    %v12194 = vld [vmem:[#allocation10 + $0xa88] sm:$0xff]
    %v12195 = vld [vmem:[#allocation10 + $0xa90] sm:$0xff]
    %v12196 = vld [vmem:[#allocation10 + $0xa98] sm:$0xff]
    %v12197 = vld [vmem:[#allocation10 + $0xaa0] sm:$0xff]
    %v12198 = vld [vmem:[#allocation10 + $0xaa8] sm:$0xff]
    %v12199 = vld [vmem:[#allocation10 + $0xab0] sm:$0xff]
    %v12200 = vld [vmem:[#allocation10 + $0xab8] sm:$0xff]
    %v12201 = vld [vmem:[#allocation10 + $0xac0] sm:$0xff]
    %v12202 = vld [vmem:[#allocation10 + $0xac8] sm:$0xff]
    %v12203 = vld [vmem:[#allocation10 + $0xad0] sm:$0xff]
    %v12204 = vld [vmem:[#allocation10 + $0xad8] sm:$0xff]
    %v12205 = vld [vmem:[#allocation10 + $0xae0] sm:$0xff]
    %v12206 = vld [vmem:[#allocation10 + $0xae8] sm:$0xff]
    %v12207 = vld [vmem:[#allocation10 + $0xaf0] sm:$0xff]
    %v12208 = vld [vmem:[#allocation10 + $0xaf8] sm:$0xff]
    %v12209 = vld [vmem:[#allocation10 + $0xb00] sm:$0xff]
    %v12210 = vld [vmem:[#allocation10 + $0xb08] sm:$0xff]
    %v12211 = vld [vmem:[#allocation10 + $0xb10] sm:$0xff]
    %v12212 = vld [vmem:[#allocation10 + $0xb18] sm:$0xff]
    %v12213 = vld [vmem:[#allocation10 + $0xb20] sm:$0xff]
    %v12214 = vld [vmem:[#allocation10 + $0xb28] sm:$0xff]
    %v12215 = vld [vmem:[#allocation10 + $0xb30] sm:$0xff]
    %v12216 = vld [vmem:[#allocation10 + $0xb38] sm:$0xff]
    %v12217 = vld [vmem:[#allocation10 + $0xb40] sm:$0xff]
    %v12218 = vld [vmem:[#allocation10 + $0xb48] sm:$0xff]
    %v12219 = vld [vmem:[#allocation10 + $0xb50] sm:$0xff]
    %v12220 = vld [vmem:[#allocation10 + $0xb58] sm:$0xff]
    %v12221 = vld [vmem:[#allocation10 + $0xb60] sm:$0xff]
    %v12222 = vld [vmem:[#allocation10 + $0xb68] sm:$0xff]
    %v12223 = vld [vmem:[#allocation10 + $0xb70] sm:$0xff]
    %v12224 = vld [vmem:[#allocation10 + $0xb78] sm:$0xff]
    %v12225 = vld [vmem:[#allocation10 + $0xb80] sm:$0xff]
    %v12226 = vld [vmem:[#allocation10 + $0xb88] sm:$0xff]
    %v12227 = vld [vmem:[#allocation10 + $0xb90] sm:$0xff]
    %v12228 = vld [vmem:[#allocation10 + $0xb98] sm:$0xff]
    %v12229 = vld [vmem:[#allocation10 + $0xba0] sm:$0xff]
    %v12230 = vld [vmem:[#allocation10 + $0xba8] sm:$0xff]
    %v12231 = vld [vmem:[#allocation10 + $0xbb0] sm:$0xff]
    %v12232 = vld [vmem:[#allocation10 + $0xbb8] sm:$0xff]
    %v12233 = vld [vmem:[#allocation10 + $0xbc0] sm:$0xff]
    %v12234 = vld [vmem:[#allocation10 + $0xbc8] sm:$0xff]
    %v12235 = vld [vmem:[#allocation10 + $0xbd0] sm:$0xff]
    %v12236 = vld [vmem:[#allocation10 + $0xbd8] sm:$0xff]
    %v12237 = vld [vmem:[#allocation10 + $0xbe0] sm:$0xff]
    %v12238 = vld [vmem:[#allocation10 + $0xbe8] sm:$0xff]
    %v12239 = vld [vmem:[#allocation10 + $0xbf0] sm:$0xff]
    %v12240 = vld [vmem:[#allocation10 + $0xbf8] sm:$0xff]
    %v12241 = vld [vmem:[#allocation10 + $0xc00] sm:$0xff]
    %v12242 = vld [vmem:[#allocation10 + $0xc08] sm:$0xff]
    %v12243 = vld [vmem:[#allocation10 + $0xc10] sm:$0xff]
    %v12244 = vld [vmem:[#allocation10 + $0xc18] sm:$0xff]
    %v12245 = vld [vmem:[#allocation10 + $0xc20] sm:$0xff]
    %v12246 = vld [vmem:[#allocation10 + $0xc28] sm:$0xff]
    %v12247 = vld [vmem:[#allocation10 + $0xc30] sm:$0xff]
    %v12248 = vld [vmem:[#allocation10 + $0xc38] sm:$0xff]
    %v12249 = vld [vmem:[#allocation10 + $0xc40] sm:$0xff]
    %v12250 = vld [vmem:[#allocation10 + $0xc48] sm:$0xff]
    %v12251 = vld [vmem:[#allocation10 + $0xc50] sm:$0xff]
    %v12252 = vld [vmem:[#allocation10 + $0xc58] sm:$0xff]
    %v12253 = vld [vmem:[#allocation10 + $0xc60] sm:$0xff]
    %v12254 = vld [vmem:[#allocation10 + $0xc68] sm:$0xff]
    %v12255 = vld [vmem:[#allocation10 + $0xc70] sm:$0xff]
    %v12256 = vld [vmem:[#allocation10 + $0xc78] sm:$0xff]
    %v12257 = vld [vmem:[#allocation11] sm:$0x1]
    %v12259 = vlaneseq
    %v12260 = vshrl.u32 %v12259, 7
    %v12261 = vsub.s32 0, %v12260
    %v12262 = vrot.slane %v12257, %v12261
    %12264 = vmatprep.subr.mxu0 0.0
    %12265 = vmatpush1.msra.mxu0 %v11872
    %12266 = vmatprep.subr.mxu0 0.0
    %12267 = vmatpush1.msra.mxu0 %v11871
    %12268 = vmatprep.subr.mxu0 0.0
    %12269 = vmatpush1.msra.mxu0 %v11870
    %12270 = vmatprep.subr.mxu0 0.0
    %12271 = vmatpush1.msra.mxu0 %v11869
    %12272 = vmatprep.subr.mxu0 0.0
    %12273 = vmatpush1.msra.mxu0 %v11868
    %12274 = vmatprep.subr.mxu0 0.0
    %12275 = vmatpush1.msra.mxu0 %v11867
    %12276 = vmatprep.subr.mxu0 0.0
    %12277 = vmatpush1.msra.mxu0 %v11866
    %12278 = vmatprep.subr.mxu0 0.0
    %12279 = vmatpush1.msra.mxu0 %v11865
    %12280 = vmatprep.subr.mxu0 0.0
    %12281 = vmatpush1.msra.mxu0 %v11864
    %12282 = vmatprep.subr.mxu0 0.0
    %12283 = vmatpush1.msra.mxu0 %v11863
    %12284 = vmatprep.subr.mxu0 0.0
    %12285 = vmatpush1.msra.mxu0 %v11862
    %12286 = vmatprep.subr.mxu0 0.0
    %12287 = vmatpush1.msra.mxu0 %v11861
    %12288 = vmatprep.subr.mxu0 0.0
    %12289 = vmatpush1.msra.mxu0 %v11860
    %12290 = vmatprep.subr.mxu0 0.0
    %12291 = vmatpush1.msra.mxu0 %v11859
    %12292 = vmatprep.subr.mxu0 0.0
    %12293 = vmatpush1.msra.mxu0 %v11858
    %12294 = vmatprep.subr.mxu0 0.0
    %12295 = vmatpush1.msra.mxu0 %v11857
    %12296 = vmatprep.subr.mxu0 0.0
    %12297 = vmatpush2.msra.mxu0 %v11888
    %12298 = vmatprep.subr.mxu0 0.0
    %12299 = vmatpush2.msra.mxu0 %v11887
    %12300 = vmatprep.subr.mxu0 0.0
    %12301 = vmatpush2.msra.mxu0 %v11886
    %12302 = vmatprep.subr.mxu0 0.0
    %12303 = vmatpush2.msra.mxu0 %v11885
    %12304 = vmatprep.subr.mxu0 0.0
    %12305 = vmatpush2.msra.mxu0 %v11884
    %12306 = vmatprep.subr.mxu0 0.0
    %12307 = vmatpush2.msra.mxu0 %v11883
    %12308 = vmatprep.subr.mxu0 0.0
    %12309 = vmatpush2.msra.mxu0 %v11882
    %12310 = vmatprep.subr.mxu0 0.0
    %12311 = vmatpush2.msra.mxu0 %v11881
    %12312 = vmatprep.subr.mxu0 0.0
    %12313 = vmatpush2.msra.mxu0 %v11880
    %12314 = vmatprep.subr.mxu0 0.0
    %12315 = vmatpush2.msra.mxu0 %v11879
    %12316 = vmatprep.subr.mxu0 0.0
    %12317 = vmatpush2.msra.mxu0 %v11878
    %12318 = vmatprep.subr.mxu0 0.0
    %12319 = vmatpush2.msra.mxu0 %v11877
    %12320 = vmatprep.subr.mxu0 0.0
    %12321 = vmatpush2.msra.mxu0 %v11876
    %12322 = vmatprep.subr.mxu0 0.0
    %12323 = vmatpush2.msra.mxu0 %v11875
    %12324 = vmatprep.subr.mxu0 0.0
    %12325 = vmatpush2.msra.mxu0 %v11874
    %12326 = vmatprep.subr.mxu0 0.0
    %12327 = vmatpush2.msra.mxu0 %v11873
    %12328 = vmatprep.mubr.f32.mxu0 %v11772
    %12329 = vmatmul.mubr.f32.gmra.mxu0 %v11769
    %v12330 = vpop.f32.mrf.mxu0
    %v12331 = vadd.f32 %v12262, %v12330
    %v12332 = vpop.f32.mrf.mxu0
    %12333 = vdwg.mxu0
    %12334 = vmatprep.subr.mxu0 0.0
    %12335 = vmatpush1.msra.mxu0 %v11904
    %12336 = vmatprep.subr.mxu0 0.0
    %12337 = vmatpush1.msra.mxu0 %v11903
    %12338 = vmatprep.subr.mxu0 0.0
    %12339 = vmatpush1.msra.mxu0 %v11902
    %12340 = vmatprep.subr.mxu0 0.0
    %12341 = vmatpush1.msra.mxu0 %v11901
    %12342 = vmatprep.subr.mxu0 0.0
    %12343 = vmatpush1.msra.mxu0 %v11900
    %12344 = vmatprep.subr.mxu0 0.0
    %12345 = vmatpush1.msra.mxu0 %v11899
    %12346 = vmatprep.subr.mxu0 0.0
    %12347 = vmatpush1.msra.mxu0 %v11898
    %12348 = vmatprep.subr.mxu0 0.0
    %12349 = vmatpush1.msra.mxu0 %v11897
    %12350 = vmatprep.subr.mxu0 0.0
    %12351 = vmatpush1.msra.mxu0 %v11896
    %12352 = vmatprep.subr.mxu0 0.0
    %12353 = vmatpush1.msra.mxu0 %v11895
    %12354 = vmatprep.subr.mxu0 0.0
    %12355 = vmatpush1.msra.mxu0 %v11894
    %12356 = vmatprep.subr.mxu0 0.0
    %12357 = vmatpush1.msra.mxu0 %v11893
    %12358 = vmatprep.subr.mxu0 0.0
    %12359 = vmatpush1.msra.mxu0 %v11892
    %12360 = vmatprep.subr.mxu0 0.0
    %12361 = vmatpush1.msra.mxu0 %v11891
    %12362 = vmatprep.subr.mxu0 0.0
    %12363 = vmatpush1.msra.mxu0 %v11890
    %12364 = vmatprep.subr.mxu0 0.0
    %12365 = vmatpush1.msra.mxu0 %v11889
    %12366 = vmatprep.subr.mxu0 0.0
    %12367 = vmatpush2.msra.mxu0 %v11920
    %12368 = vmatprep.subr.mxu0 0.0
    %12369 = vmatpush2.msra.mxu0 %v11919
    %12370 = vmatprep.subr.mxu0 0.0
    %12371 = vmatpush2.msra.mxu0 %v11918
    %12372 = vmatprep.subr.mxu0 0.0
    %12373 = vmatpush2.msra.mxu0 %v11917
    %12374 = vmatprep.subr.mxu0 0.0
    %12375 = vmatpush2.msra.mxu0 %v11916
    %12376 = vmatprep.subr.mxu0 0.0
    %12377 = vmatpush2.msra.mxu0 %v11915
    %12378 = vmatprep.subr.mxu0 0.0
    %12379 = vmatpush2.msra.mxu0 %v11914
    %12380 = vmatprep.subr.mxu0 0.0
    %12381 = vmatpush2.msra.mxu0 %v11913
    %12382 = vmatprep.subr.mxu0 0.0
    %12383 = vmatpush2.msra.mxu0 %v11912
    %12384 = vmatprep.subr.mxu0 0.0
    %12385 = vmatpush2.msra.mxu0 %v11911
    %12386 = vmatprep.subr.mxu0 0.0
    %12387 = vmatpush2.msra.mxu0 %v11910
    %12388 = vmatprep.subr.mxu0 0.0
    %12389 = vmatpush2.msra.mxu0 %v11909
    %12390 = vmatprep.subr.mxu0 0.0
    %12391 = vmatpush2.msra.mxu0 %v11908
    %12392 = vmatprep.subr.mxu0 0.0
    %12393 = vmatpush2.msra.mxu0 %v11907
    %12394 = vmatprep.subr.mxu0 0.0
    %12395 = vmatpush2.msra.mxu0 %v11906
    %12396 = vmatprep.subr.mxu0 0.0
    %12397 = vmatpush2.msra.mxu0 %v11905
    %12398 = vmatprep.mubr.f32.mxu0 %v11780
    %12399 = vmatmul.mubr.f32.gmra.mxu0 %v11776
    %v12400 = vpop.f32.mrf.mxu0
    %v12401 = vadd.f32 %v12331, %v12400
    %v12402 = vpop.f32.mrf.mxu0
    %12403 = vdwg.mxu0
    %12404 = vmatprep.subr.mxu0 0.0
    %12405 = vmatpush1.msra.mxu0 %v11936
    %12406 = vmatprep.subr.mxu0 0.0
    %12407 = vmatpush1.msra.mxu0 %v11935
    %12408 = vmatprep.subr.mxu0 0.0
    %12409 = vmatpush1.msra.mxu0 %v11934
    %12410 = vmatprep.subr.mxu0 0.0
    %12411 = vmatpush1.msra.mxu0 %v11933
    %12412 = vmatprep.subr.mxu0 0.0
    %12413 = vmatpush1.msra.mxu0 %v11932
    %12414 = vmatprep.subr.mxu0 0.0
    %12415 = vmatpush1.msra.mxu0 %v11931
    %12416 = vmatprep.subr.mxu0 0.0
    %12417 = vmatpush1.msra.mxu0 %v11930
    %12418 = vmatprep.subr.mxu0 0.0
    %12419 = vmatpush1.msra.mxu0 %v11929
    %12420 = vmatprep.subr.mxu0 0.0
    %12421 = vmatpush1.msra.mxu0 %v11928
    %12422 = vmatprep.subr.mxu0 0.0
    %12423 = vmatpush1.msra.mxu0 %v11927
    %12424 = vmatprep.subr.mxu0 0.0
    %12425 = vmatpush1.msra.mxu0 %v11926
    %12426 = vmatprep.subr.mxu0 0.0
    %12427 = vmatpush1.msra.mxu0 %v11925
    %12428 = vmatprep.subr.mxu0 0.0
    %12429 = vmatpush1.msra.mxu0 %v11924
    %12430 = vmatprep.subr.mxu0 0.0
    %12431 = vmatpush1.msra.mxu0 %v11923
    %12432 = vmatprep.subr.mxu0 0.0
    %12433 = vmatpush1.msra.mxu0 %v11922
    %12434 = vmatprep.subr.mxu0 0.0
    %12435 = vmatpush1.msra.mxu0 %v11921
    %12436 = vmatprep.subr.mxu0 0.0
    %12437 = vmatpush2.msra.mxu0 %v11952
    %12438 = vmatprep.subr.mxu0 0.0
    %12439 = vmatpush2.msra.mxu0 %v11951
    %12440 = vmatprep.subr.mxu0 0.0
    %12441 = vmatpush2.msra.mxu0 %v11950
    %12442 = vmatprep.subr.mxu0 0.0
    %12443 = vmatpush2.msra.mxu0 %v11949
    %12444 = vmatprep.subr.mxu0 0.0
    %12445 = vmatpush2.msra.mxu0 %v11948
    %12446 = vmatprep.subr.mxu0 0.0
    %12447 = vmatpush2.msra.mxu0 %v11947
    %12448 = vmatprep.subr.mxu0 0.0
    %12449 = vmatpush2.msra.mxu0 %v11946
    %12450 = vmatprep.subr.mxu0 0.0
    %12451 = vmatpush2.msra.mxu0 %v11945
    %12452 = vmatprep.subr.mxu0 0.0
    %12453 = vmatpush2.msra.mxu0 %v11944
    %12454 = vmatprep.subr.mxu0 0.0
    %12455 = vmatpush2.msra.mxu0 %v11943
    %12456 = vmatprep.subr.mxu0 0.0
    %12457 = vmatpush2.msra.mxu0 %v11942
    %12458 = vmatprep.subr.mxu0 0.0
    %12459 = vmatpush2.msra.mxu0 %v11941
    %12460 = vmatprep.subr.mxu0 0.0
    %12461 = vmatpush2.msra.mxu0 %v11940
    %12462 = vmatprep.subr.mxu0 0.0
    %12463 = vmatpush2.msra.mxu0 %v11939
    %12464 = vmatprep.subr.mxu0 0.0
    %12465 = vmatpush2.msra.mxu0 %v11938
    %12466 = vmatprep.subr.mxu0 0.0
    %12467 = vmatpush2.msra.mxu0 %v11937
    %12468 = vmatprep.mubr.f32.mxu0 %v11787
    %12469 = vmatmul.mubr.f32.gmra.mxu0 %v11784
    %v12470 = vpop.f32.mrf.mxu0
    %v12471 = vadd.f32 %v12401, %v12470
    %v12472 = vpop.f32.mrf.mxu0
    %12473 = vdwg.mxu0
    %12474 = vmatprep.subr.mxu0 0.0
    %12475 = vmatpush1.msra.mxu0 %v11968
    %12476 = vmatprep.subr.mxu0 0.0
    %12477 = vmatpush1.msra.mxu0 %v11967
    %12478 = vmatprep.subr.mxu0 0.0
    %12479 = vmatpush1.msra.mxu0 %v11966
    %12480 = vmatprep.subr.mxu0 0.0
    %12481 = vmatpush1.msra.mxu0 %v11965
    %12482 = vmatprep.subr.mxu0 0.0
    %12483 = vmatpush1.msra.mxu0 %v11964
    %12484 = vmatprep.subr.mxu0 0.0
    %12485 = vmatpush1.msra.mxu0 %v11963
    %12486 = vmatprep.subr.mxu0 0.0
    %12487 = vmatpush1.msra.mxu0 %v11962
    %12488 = vmatprep.subr.mxu0 0.0
    %12489 = vmatpush1.msra.mxu0 %v11961
    %12490 = vmatprep.subr.mxu0 0.0
    %12491 = vmatpush1.msra.mxu0 %v11960
    %12492 = vmatprep.subr.mxu0 0.0
    %12493 = vmatpush1.msra.mxu0 %v11959
    %12494 = vmatprep.subr.mxu0 0.0
    %12495 = vmatpush1.msra.mxu0 %v11958
    %12496 = vmatprep.subr.mxu0 0.0
    %12497 = vmatpush1.msra.mxu0 %v11957
    %12498 = vmatprep.subr.mxu0 0.0
    %12499 = vmatpush1.msra.mxu0 %v11956
    %12500 = vmatprep.subr.mxu0 0.0
    %12501 = vmatpush1.msra.mxu0 %v11955
    %12502 = vmatprep.subr.mxu0 0.0
    %12503 = vmatpush1.msra.mxu0 %v11954
    %12504 = vmatprep.subr.mxu0 0.0
    %12505 = vmatpush1.msra.mxu0 %v11953
    %12506 = vmatprep.subr.mxu0 0.0
    %12507 = vmatpush2.msra.mxu0 %v11984
    %12508 = vmatprep.subr.mxu0 0.0
    %12509 = vmatpush2.msra.mxu0 %v11983
    %12510 = vmatprep.subr.mxu0 0.0
    %12511 = vmatpush2.msra.mxu0 %v11982
    %12512 = vmatprep.subr.mxu0 0.0
    %12513 = vmatpush2.msra.mxu0 %v11981
    %12514 = vmatprep.subr.mxu0 0.0
    %12515 = vmatpush2.msra.mxu0 %v11980
    %12516 = vmatprep.subr.mxu0 0.0
    %12517 = vmatpush2.msra.mxu0 %v11979
    %12518 = vmatprep.subr.mxu0 0.0
    %12519 = vmatpush2.msra.mxu0 %v11978
    %12520 = vmatprep.subr.mxu0 0.0
    %12521 = vmatpush2.msra.mxu0 %v11977
    %12522 = vmatprep.subr.mxu0 0.0
    %12523 = vmatpush2.msra.mxu0 %v11976
    %12524 = vmatprep.subr.mxu0 0.0
    %12525 = vmatpush2.msra.mxu0 %v11975
    %12526 = vmatprep.subr.mxu0 0.0
    %12527 = vmatpush2.msra.mxu0 %v11974
    %12528 = vmatprep.subr.mxu0 0.0
    %12529 = vmatpush2.msra.mxu0 %v11973
    %12530 = vmatprep.subr.mxu0 0.0
    %12531 = vmatpush2.msra.mxu0 %v11972
    %12532 = vmatprep.subr.mxu0 0.0
    %12533 = vmatpush2.msra.mxu0 %v11971
    %12534 = vmatprep.subr.mxu0 0.0
    %12535 = vmatpush2.msra.mxu0 %v11970
    %12536 = vmatprep.subr.mxu0 0.0
    %12537 = vmatpush2.msra.mxu0 %v11969
    %12538 = vmatprep.mubr.f32.mxu0 %v11794
    %12539 = vmatmul.mubr.f32.gmra.mxu0 %v11790
    %v12540 = vpop.f32.mrf.mxu0
    %v12541 = vadd.f32 %v12471, %v12540
    %v12542 = vpop.f32.mrf.mxu0
    %12543 = vdwg.mxu0
    %12544 = vmatprep.subr.mxu0 0.0
    %12545 = vmatpush1.msra.mxu0 %v12000
    %12546 = vmatprep.subr.mxu0 0.0
    %12547 = vmatpush1.msra.mxu0 %v11999
    %12548 = vmatprep.subr.mxu0 0.0
    %12549 = vmatpush1.msra.mxu0 %v11998
    %12550 = vmatprep.subr.mxu0 0.0
    %12551 = vmatpush1.msra.mxu0 %v11997
    %12552 = vmatprep.subr.mxu0 0.0
    %12553 = vmatpush1.msra.mxu0 %v11996
    %12554 = vmatprep.subr.mxu0 0.0
    %12555 = vmatpush1.msra.mxu0 %v11995
    %12556 = vmatprep.subr.mxu0 0.0
    %12557 = vmatpush1.msra.mxu0 %v11994
    %12558 = vmatprep.subr.mxu0 0.0
    %12559 = vmatpush1.msra.mxu0 %v11993
    %12560 = vmatprep.subr.mxu0 0.0
    %12561 = vmatpush1.msra.mxu0 %v11992
    %12562 = vmatprep.subr.mxu0 0.0
    %12563 = vmatpush1.msra.mxu0 %v11991
    %12564 = vmatprep.subr.mxu0 0.0
    %12565 = vmatpush1.msra.mxu0 %v11990
    %12566 = vmatprep.subr.mxu0 0.0
    %12567 = vmatpush1.msra.mxu0 %v11989
    %12568 = vmatprep.subr.mxu0 0.0
    %12569 = vmatpush1.msra.mxu0 %v11988
    %12570 = vmatprep.subr.mxu0 0.0
    %12571 = vmatpush1.msra.mxu0 %v11987
    %12572 = vmatprep.subr.mxu0 0.0
    %12573 = vmatpush1.msra.mxu0 %v11986
    %12574 = vmatprep.subr.mxu0 0.0
    %12575 = vmatpush1.msra.mxu0 %v11985
    %12576 = vmatprep.subr.mxu0 0.0
    %12577 = vmatpush2.msra.mxu0 %v12016
    %12578 = vmatprep.subr.mxu0 0.0
    %12579 = vmatpush2.msra.mxu0 %v12015
    %12580 = vmatprep.subr.mxu0 0.0
    %12581 = vmatpush2.msra.mxu0 %v12014
    %12582 = vmatprep.subr.mxu0 0.0
    %12583 = vmatpush2.msra.mxu0 %v12013
    %12584 = vmatprep.subr.mxu0 0.0
    %12585 = vmatpush2.msra.mxu0 %v12012
    %12586 = vmatprep.subr.mxu0 0.0
    %12587 = vmatpush2.msra.mxu0 %v12011
    %12588 = vmatprep.subr.mxu0 0.0
    %12589 = vmatpush2.msra.mxu0 %v12010
    %12590 = vmatprep.subr.mxu0 0.0
    %12591 = vmatpush2.msra.mxu0 %v12009
    %12592 = vmatprep.subr.mxu0 0.0
    %12593 = vmatpush2.msra.mxu0 %v12008
    %12594 = vmatprep.subr.mxu0 0.0
    %12595 = vmatpush2.msra.mxu0 %v12007
    %12596 = vmatprep.subr.mxu0 0.0
    %12597 = vmatpush2.msra.mxu0 %v12006
    %12598 = vmatprep.subr.mxu0 0.0
    %12599 = vmatpush2.msra.mxu0 %v12005
    %12600 = vmatprep.subr.mxu0 0.0
    %12601 = vmatpush2.msra.mxu0 %v12004
    %12602 = vmatprep.subr.mxu0 0.0
    %12603 = vmatpush2.msra.mxu0 %v12003
    %12604 = vmatprep.subr.mxu0 0.0
    %12605 = vmatpush2.msra.mxu0 %v12002
    %12606 = vmatprep.subr.mxu0 0.0
    %12607 = vmatpush2.msra.mxu0 %v12001
    %12608 = vmatprep.mubr.f32.mxu0 %v11802
    %12609 = vmatmul.mubr.f32.gmra.mxu0 %v11798
    %v12610 = vpop.f32.mrf.mxu0
    %v12611 = vadd.f32 %v12541, %v12610
    %v12612 = vpop.f32.mrf.mxu0
    %12613 = vdwg.mxu0
    %12614 = vmatprep.subr.mxu0 0.0
    %12615 = vmatpush1.msra.mxu0 %v12032
    %12616 = vmatprep.subr.mxu0 0.0
    %12617 = vmatpush1.msra.mxu0 %v12031
    %12618 = vmatprep.subr.mxu0 0.0
    %12619 = vmatpush1.msra.mxu0 %v12030
    %12620 = vmatprep.subr.mxu0 0.0
    %12621 = vmatpush1.msra.mxu0 %v12029
    %12622 = vmatprep.subr.mxu0 0.0
    %12623 = vmatpush1.msra.mxu0 %v12028
    %12624 = vmatprep.subr.mxu0 0.0
    %12625 = vmatpush1.msra.mxu0 %v12027
    %12626 = vmatprep.subr.mxu0 0.0
    %12627 = vmatpush1.msra.mxu0 %v12026
    %12628 = vmatprep.subr.mxu0 0.0
    %12629 = vmatpush1.msra.mxu0 %v12025
    %12630 = vmatprep.subr.mxu0 0.0
    %12631 = vmatpush1.msra.mxu0 %v12024
    %12632 = vmatprep.subr.mxu0 0.0
    %12633 = vmatpush1.msra.mxu0 %v12023
    %12634 = vmatprep.subr.mxu0 0.0
    %12635 = vmatpush1.msra.mxu0 %v12022
    %12636 = vmatprep.subr.mxu0 0.0
    %12637 = vmatpush1.msra.mxu0 %v12021
    %12638 = vmatprep.subr.mxu0 0.0
    %12639 = vmatpush1.msra.mxu0 %v12020
    %12640 = vmatprep.subr.mxu0 0.0
    %12641 = vmatpush1.msra.mxu0 %v12019
    %12642 = vmatprep.subr.mxu0 0.0
    %12643 = vmatpush1.msra.mxu0 %v12018
    %12644 = vmatprep.subr.mxu0 0.0
    %12645 = vmatpush1.msra.mxu0 %v12017
    %12646 = vmatprep.subr.mxu0 0.0
    %12647 = vmatpush2.msra.mxu0 %v12048
    %12648 = vmatprep.subr.mxu0 0.0
    %12649 = vmatpush2.msra.mxu0 %v12047
    %12650 = vmatprep.subr.mxu0 0.0
    %12651 = vmatpush2.msra.mxu0 %v12046
    %12652 = vmatprep.subr.mxu0 0.0
    %12653 = vmatpush2.msra.mxu0 %v12045
    %12654 = vmatprep.subr.mxu0 0.0
    %12655 = vmatpush2.msra.mxu0 %v12044
    %12656 = vmatprep.subr.mxu0 0.0
    %12657 = vmatpush2.msra.mxu0 %v12043
    %12658 = vmatprep.subr.mxu0 0.0
    %12659 = vmatpush2.msra.mxu0 %v12042
    %12660 = vmatprep.subr.mxu0 0.0
    %12661 = vmatpush2.msra.mxu0 %v12041
    %12662 = vmatprep.subr.mxu0 0.0
    %12663 = vmatpush2.msra.mxu0 %v12040
    %12664 = vmatprep.subr.mxu0 0.0
    %12665 = vmatpush2.msra.mxu0 %v12039
    %12666 = vmatprep.subr.mxu0 0.0
    %12667 = vmatpush2.msra.mxu0 %v12038
    %12668 = vmatprep.subr.mxu0 0.0
    %12669 = vmatpush2.msra.mxu0 %v12037
    %12670 = vmatprep.subr.mxu0 0.0
    %12671 = vmatpush2.msra.mxu0 %v12036
    %12672 = vmatprep.subr.mxu0 0.0
    %12673 = vmatpush2.msra.mxu0 %v12035
    %12674 = vmatprep.subr.mxu0 0.0
    %12675 = vmatpush2.msra.mxu0 %v12034
    %12676 = vmatprep.subr.mxu0 0.0
    %12677 = vmatpush2.msra.mxu0 %v12033
    %12678 = vmatprep.mubr.f32.mxu0 %v11808
    %12679 = vmatmul.mubr.f32.gmra.mxu0 %v11805
    %v12680 = vpop.f32.mrf.mxu0
    %v12681 = vadd.f32 %v12611, %v12680
    %v12682 = vpop.f32.mrf.mxu0
    %12683 = vdwg.mxu0
    %12684 = vmatprep.subr.mxu0 0.0
    %12685 = vmatpush1.msra.mxu0 %v12064
    %12686 = vmatprep.subr.mxu0 0.0
    %12687 = vmatpush1.msra.mxu0 %v12063
    %12688 = vmatprep.subr.mxu0 0.0
    %12689 = vmatpush1.msra.mxu0 %v12062
    %12690 = vmatprep.subr.mxu0 0.0
    %12691 = vmatpush1.msra.mxu0 %v12061
    %12692 = vmatprep.subr.mxu0 0.0
    %12693 = vmatpush1.msra.mxu0 %v12060
    %12694 = vmatprep.subr.mxu0 0.0
    %12695 = vmatpush1.msra.mxu0 %v12059
    %12696 = vmatprep.subr.mxu0 0.0
    %12697 = vmatpush1.msra.mxu0 %v12058
    %12698 = vmatprep.subr.mxu0 0.0
    %12699 = vmatpush1.msra.mxu0 %v12057
    %12700 = vmatprep.subr.mxu0 0.0
    %12701 = vmatpush1.msra.mxu0 %v12056
    %12702 = vmatprep.subr.mxu0 0.0
    %12703 = vmatpush1.msra.mxu0 %v12055
    %12704 = vmatprep.subr.mxu0 0.0
    %12705 = vmatpush1.msra.mxu0 %v12054
    %12706 = vmatprep.subr.mxu0 0.0
    %12707 = vmatpush1.msra.mxu0 %v12053
    %12708 = vmatprep.subr.mxu0 0.0
    %12709 = vmatpush1.msra.mxu0 %v12052
    %12710 = vmatprep.subr.mxu0 0.0
    %12711 = vmatpush1.msra.mxu0 %v12051
    %12712 = vmatprep.subr.mxu0 0.0
    %12713 = vmatpush1.msra.mxu0 %v12050
    %12714 = vmatprep.subr.mxu0 0.0
    %12715 = vmatpush1.msra.mxu0 %v12049
    %12716 = vmatprep.subr.mxu0 0.0
    %12717 = vmatpush2.msra.mxu0 %v12080
    %12718 = vmatprep.subr.mxu0 0.0
    %12719 = vmatpush2.msra.mxu0 %v12079
    %12720 = vmatprep.subr.mxu0 0.0
    %12721 = vmatpush2.msra.mxu0 %v12078
    %12722 = vmatprep.subr.mxu0 0.0
    %12723 = vmatpush2.msra.mxu0 %v12077
    %12724 = vmatprep.subr.mxu0 0.0
    %12725 = vmatpush2.msra.mxu0 %v12076
    %12726 = vmatprep.subr.mxu0 0.0
    %12727 = vmatpush2.msra.mxu0 %v12075
    %12728 = vmatprep.subr.mxu0 0.0
    %12729 = vmatpush2.msra.mxu0 %v12074
    %12730 = vmatprep.subr.mxu0 0.0
    %12731 = vmatpush2.msra.mxu0 %v12073
    %12732 = vmatprep.subr.mxu0 0.0
    %12733 = vmatpush2.msra.mxu0 %v12072
    %12734 = vmatprep.subr.mxu0 0.0
    %12735 = vmatpush2.msra.mxu0 %v12071
    %12736 = vmatprep.subr.mxu0 0.0
    %12737 = vmatpush2.msra.mxu0 %v12070
    %12738 = vmatprep.subr.mxu0 0.0
    %12739 = vmatpush2.msra.mxu0 %v12069
    %12740 = vmatprep.subr.mxu0 0.0
    %12741 = vmatpush2.msra.mxu0 %v12068
    %12742 = vmatprep.subr.mxu0 0.0
    %12743 = vmatpush2.msra.mxu0 %v12067
    %12744 = vmatprep.subr.mxu0 0.0
    %12745 = vmatpush2.msra.mxu0 %v12066
    %12746 = vmatprep.subr.mxu0 0.0
    %12747 = vmatpush2.msra.mxu0 %v12065
    %12748 = vmatprep.mubr.f32.mxu0 %v11816
    %12749 = vmatmul.mubr.f32.gmra.mxu0 %v11812
    %v12750 = vpop.f32.mrf.mxu0
    %v12751 = vadd.f32 %v12681, %v12750
    %v12752 = vpop.f32.mrf.mxu0
    %12753 = vdwg.mxu0
    %12754 = vmatprep.subr.mxu0 0.0
    %12755 = vmatpush1.msra.mxu0 %v12096
    %12756 = vmatprep.subr.mxu0 0.0
    %12757 = vmatpush1.msra.mxu0 %v12095
    %12758 = vmatprep.subr.mxu0 0.0
    %12759 = vmatpush1.msra.mxu0 %v12094
    %12760 = vmatprep.subr.mxu0 0.0
    %12761 = vmatpush1.msra.mxu0 %v12093
    %12762 = vmatprep.subr.mxu0 0.0
    %12763 = vmatpush1.msra.mxu0 %v12092
    %12764 = vmatprep.subr.mxu0 0.0
    %12765 = vmatpush1.msra.mxu0 %v12091
    %12766 = vmatprep.subr.mxu0 0.0
    %12767 = vmatpush1.msra.mxu0 %v12090
    %12768 = vmatprep.subr.mxu0 0.0
    %12769 = vmatpush1.msra.mxu0 %v12089
    %12770 = vmatprep.subr.mxu0 0.0
    %12771 = vmatpush1.msra.mxu0 %v12088
    %12772 = vmatprep.subr.mxu0 0.0
    %12773 = vmatpush1.msra.mxu0 %v12087
    %12774 = vmatprep.subr.mxu0 0.0
    %12775 = vmatpush1.msra.mxu0 %v12086
    %12776 = vmatprep.subr.mxu0 0.0
    %12777 = vmatpush1.msra.mxu0 %v12085
    %12778 = vmatprep.subr.mxu0 0.0
    %12779 = vmatpush1.msra.mxu0 %v12084
    %12780 = vmatprep.subr.mxu0 0.0
    %12781 = vmatpush1.msra.mxu0 %v12083
    %12782 = vmatprep.subr.mxu0 0.0
    %12783 = vmatpush1.msra.mxu0 %v12082
    %12784 = vmatprep.subr.mxu0 0.0
    %12785 = vmatpush1.msra.mxu0 %v12081
    %12786 = vmatprep.subr.mxu0 0.0
    %12787 = vmatpush2.msra.mxu0 %v12112
    %12788 = vmatprep.subr.mxu0 0.0
    %12789 = vmatpush2.msra.mxu0 %v12111
    %12790 = vmatprep.subr.mxu0 0.0
    %12791 = vmatpush2.msra.mxu0 %v12110
    %12792 = vmatprep.subr.mxu0 0.0
    %12793 = vmatpush2.msra.mxu0 %v12109
    %12794 = vmatprep.subr.mxu0 0.0
    %12795 = vmatpush2.msra.mxu0 %v12108
    %12796 = vmatprep.subr.mxu0 0.0
    %12797 = vmatpush2.msra.mxu0 %v12107
    %12798 = vmatprep.subr.mxu0 0.0
    %12799 = vmatpush2.msra.mxu0 %v12106
    %12800 = vmatprep.subr.mxu0 0.0
    %12801 = vmatpush2.msra.mxu0 %v12105
    %12802 = vmatprep.subr.mxu0 0.0
    %12803 = vmatpush2.msra.mxu0 %v12104
    %12804 = vmatprep.subr.mxu0 0.0
    %12805 = vmatpush2.msra.mxu0 %v12103
    %12806 = vmatprep.subr.mxu0 0.0
    %12807 = vmatpush2.msra.mxu0 %v12102
    %12808 = vmatprep.subr.mxu0 0.0
    %12809 = vmatpush2.msra.mxu0 %v12101
    %12810 = vmatprep.subr.mxu0 0.0
    %12811 = vmatpush2.msra.mxu0 %v12100
    %12812 = vmatprep.subr.mxu0 0.0
    %12813 = vmatpush2.msra.mxu0 %v12099
    %12814 = vmatprep.subr.mxu0 0.0
    %12815 = vmatpush2.msra.mxu0 %v12098
    %12816 = vmatprep.subr.mxu0 0.0
    %12817 = vmatpush2.msra.mxu0 %v12097
    %12818 = vmatprep.mubr.f32.mxu0 %v11823
    %12819 = vmatmul.mubr.f32.gmra.mxu0 %v11820
    %v12820 = vpop.f32.mrf.mxu0
    %v12821 = vadd.f32 %v12751, %v12820
    %v12822 = vpop.f32.mrf.mxu0
    %12823 = vdwg.mxu0
    %12824 = vmatprep.subr.mxu0 0.0
    %12825 = vmatpush1.msra.mxu0 %v12128
    %12826 = vmatprep.subr.mxu0 0.0
    %12827 = vmatpush1.msra.mxu0 %v12127
    %12828 = vmatprep.subr.mxu0 0.0
    %12829 = vmatpush1.msra.mxu0 %v12126
    %12830 = vmatprep.subr.mxu0 0.0
    %12831 = vmatpush1.msra.mxu0 %v12125
    %12832 = vmatprep.subr.mxu0 0.0
    %12833 = vmatpush1.msra.mxu0 %v12124
    %12834 = vmatprep.subr.mxu0 0.0
    %12835 = vmatpush1.msra.mxu0 %v12123
    %12836 = vmatprep.subr.mxu0 0.0
    %12837 = vmatpush1.msra.mxu0 %v12122
    %12838 = vmatprep.subr.mxu0 0.0
    %12839 = vmatpush1.msra.mxu0 %v12121
    %12840 = vmatprep.subr.mxu0 0.0
    %12841 = vmatpush1.msra.mxu0 %v12120
    %12842 = vmatprep.subr.mxu0 0.0
    %12843 = vmatpush1.msra.mxu0 %v12119
    %12844 = vmatprep.subr.mxu0 0.0
    %12845 = vmatpush1.msra.mxu0 %v12118
    %12846 = vmatprep.subr.mxu0 0.0
    %12847 = vmatpush1.msra.mxu0 %v12117
    %12848 = vmatprep.subr.mxu0 0.0
    %12849 = vmatpush1.msra.mxu0 %v12116
    %12850 = vmatprep.subr.mxu0 0.0
    %12851 = vmatpush1.msra.mxu0 %v12115
    %12852 = vmatprep.subr.mxu0 0.0
    %12853 = vmatpush1.msra.mxu0 %v12114
    %12854 = vmatprep.subr.mxu0 0.0
    %12855 = vmatpush1.msra.mxu0 %v12113
    %12856 = vmatprep.subr.mxu0 0.0
    %12857 = vmatpush2.msra.mxu0 %v12144
    %12858 = vmatprep.subr.mxu0 0.0
    %12859 = vmatpush2.msra.mxu0 %v12143
    %12860 = vmatprep.subr.mxu0 0.0
    %12861 = vmatpush2.msra.mxu0 %v12142
    %12862 = vmatprep.subr.mxu0 0.0
    %12863 = vmatpush2.msra.mxu0 %v12141
    %12864 = vmatprep.subr.mxu0 0.0
    %12865 = vmatpush2.msra.mxu0 %v12140
    %12866 = vmatprep.subr.mxu0 0.0
    %12867 = vmatpush2.msra.mxu0 %v12139
    %12868 = vmatprep.subr.mxu0 0.0
    %12869 = vmatpush2.msra.mxu0 %v12138
    %12870 = vmatprep.subr.mxu0 0.0
    %12871 = vmatpush2.msra.mxu0 %v12137
    %12872 = vmatprep.subr.mxu0 0.0
    %12873 = vmatpush2.msra.mxu0 %v12136
    %12874 = vmatprep.subr.mxu0 0.0
    %12875 = vmatpush2.msra.mxu0 %v12135
    %12876 = vmatprep.subr.mxu0 0.0
    %12877 = vmatpush2.msra.mxu0 %v12134
    %12878 = vmatprep.subr.mxu0 0.0
    %12879 = vmatpush2.msra.mxu0 %v12133
    %12880 = vmatprep.subr.mxu0 0.0
    %12881 = vmatpush2.msra.mxu0 %v12132
    %12882 = vmatprep.subr.mxu0 0.0
    %12883 = vmatpush2.msra.mxu0 %v12131
    %12884 = vmatprep.subr.mxu0 0.0
    %12885 = vmatpush2.msra.mxu0 %v12130
    %12886 = vmatprep.subr.mxu0 0.0
    %12887 = vmatpush2.msra.mxu0 %v12129
    %12888 = vmatprep.mubr.f32.mxu0 %v11830
    %12889 = vmatmul.mubr.f32.gmra.mxu0 %v11826
    %v12890 = vpop.f32.mrf.mxu0
    %v12891 = vadd.f32 %v12821, %v12890
    %v12892 = vpop.f32.mrf.mxu0
    %12893 = vdwg.mxu0
    %12894 = vmatprep.subr.mxu0 0.0
    %12895 = vmatpush1.msra.mxu0 %v12160
    %12896 = vmatprep.subr.mxu0 0.0
    %12897 = vmatpush1.msra.mxu0 %v12159
    %12898 = vmatprep.subr.mxu0 0.0
    %12899 = vmatpush1.msra.mxu0 %v12158
    %12900 = vmatprep.subr.mxu0 0.0
    %12901 = vmatpush1.msra.mxu0 %v12157
    %12902 = vmatprep.subr.mxu0 0.0
    %12903 = vmatpush1.msra.mxu0 %v12156
    %12904 = vmatprep.subr.mxu0 0.0
    %12905 = vmatpush1.msra.mxu0 %v12155
    %12906 = vmatprep.subr.mxu0 0.0
    %12907 = vmatpush1.msra.mxu0 %v12154
    %12908 = vmatprep.subr.mxu0 0.0
    %12909 = vmatpush1.msra.mxu0 %v12153
    %12910 = vmatprep.subr.mxu0 0.0
    %12911 = vmatpush1.msra.mxu0 %v12152
    %12912 = vmatprep.subr.mxu0 0.0
    %12913 = vmatpush1.msra.mxu0 %v12151
    %12914 = vmatprep.subr.mxu0 0.0
    %12915 = vmatpush1.msra.mxu0 %v12150
    %12916 = vmatprep.subr.mxu0 0.0
    %12917 = vmatpush1.msra.mxu0 %v12149
    %12918 = vmatprep.subr.mxu0 0.0
    %12919 = vmatpush1.msra.mxu0 %v12148
    %12920 = vmatprep.subr.mxu0 0.0
    %12921 = vmatpush1.msra.mxu0 %v12147
    %12922 = vmatprep.subr.mxu0 0.0
    %12923 = vmatpush1.msra.mxu0 %v12146
    %12924 = vmatprep.subr.mxu0 0.0
    %12925 = vmatpush1.msra.mxu0 %v12145
    %12926 = vmatprep.subr.mxu0 0.0
    %12927 = vmatpush2.msra.mxu0 %v12176
    %12928 = vmatprep.subr.mxu0 0.0
    %12929 = vmatpush2.msra.mxu0 %v12175
    %12930 = vmatprep.subr.mxu0 0.0
    %12931 = vmatpush2.msra.mxu0 %v12174
    %12932 = vmatprep.subr.mxu0 0.0
    %12933 = vmatpush2.msra.mxu0 %v12173
    %12934 = vmatprep.subr.mxu0 0.0
    %12935 = vmatpush2.msra.mxu0 %v12172
    %12936 = vmatprep.subr.mxu0 0.0
    %12937 = vmatpush2.msra.mxu0 %v12171
    %12938 = vmatprep.subr.mxu0 0.0
    %12939 = vmatpush2.msra.mxu0 %v12170
    %12940 = vmatprep.subr.mxu0 0.0
    %12941 = vmatpush2.msra.mxu0 %v12169
    %12942 = vmatprep.subr.mxu0 0.0
    %12943 = vmatpush2.msra.mxu0 %v12168
    %12944 = vmatprep.subr.mxu0 0.0
    %12945 = vmatpush2.msra.mxu0 %v12167
    %12946 = vmatprep.subr.mxu0 0.0
    %12947 = vmatpush2.msra.mxu0 %v12166
    %12948 = vmatprep.subr.mxu0 0.0
    %12949 = vmatpush2.msra.mxu0 %v12165
    %12950 = vmatprep.subr.mxu0 0.0
    %12951 = vmatpush2.msra.mxu0 %v12164
    %12952 = vmatprep.subr.mxu0 0.0
    %12953 = vmatpush2.msra.mxu0 %v12163
    %12954 = vmatprep.subr.mxu0 0.0
    %12955 = vmatpush2.msra.mxu0 %v12162
    %12956 = vmatprep.subr.mxu0 0.0
    %12957 = vmatpush2.msra.mxu0 %v12161
    %12958 = vmatprep.mubr.f32.mxu0 %v11838
    %12959 = vmatmul.mubr.f32.gmra.mxu0 %v11834
    %v12960 = vpop.f32.mrf.mxu0
    %v12961 = vadd.f32 %v12891, %v12960
    %v12962 = vpop.f32.mrf.mxu0
    %12963 = vdwg.mxu0
    %12964 = vmatprep.subr.mxu0 0.0
    %12965 = vmatpush1.msra.mxu0 %v12192
    %12966 = vmatprep.subr.mxu0 0.0
    %12967 = vmatpush1.msra.mxu0 %v12191
    %12968 = vmatprep.subr.mxu0 0.0
    %12969 = vmatpush1.msra.mxu0 %v12190
    %12970 = vmatprep.subr.mxu0 0.0
    %12971 = vmatpush1.msra.mxu0 %v12189
    %12972 = vmatprep.subr.mxu0 0.0
    %12973 = vmatpush1.msra.mxu0 %v12188
    %12974 = vmatprep.subr.mxu0 0.0
    %12975 = vmatpush1.msra.mxu0 %v12187
    %12976 = vmatprep.subr.mxu0 0.0
    %12977 = vmatpush1.msra.mxu0 %v12186
    %12978 = vmatprep.subr.mxu0 0.0
    %12979 = vmatpush1.msra.mxu0 %v12185
    %12980 = vmatprep.subr.mxu0 0.0
    %12981 = vmatpush1.msra.mxu0 %v12184
    %12982 = vmatprep.subr.mxu0 0.0
    %12983 = vmatpush1.msra.mxu0 %v12183
    %12984 = vmatprep.subr.mxu0 0.0
    %12985 = vmatpush1.msra.mxu0 %v12182
    %12986 = vmatprep.subr.mxu0 0.0
    %12987 = vmatpush1.msra.mxu0 %v12181
    %12988 = vmatprep.subr.mxu0 0.0
    %12989 = vmatpush1.msra.mxu0 %v12180
    %12990 = vmatprep.subr.mxu0 0.0
    %12991 = vmatpush1.msra.mxu0 %v12179
    %12992 = vmatprep.subr.mxu0 0.0
    %12993 = vmatpush1.msra.mxu0 %v12178
    %12994 = vmatprep.subr.mxu0 0.0
    %12995 = vmatpush1.msra.mxu0 %v12177
    %12996 = vmatprep.subr.mxu0 0.0
    %12997 = vmatpush2.msra.mxu0 %v12208
    %12998 = vmatprep.subr.mxu0 0.0
    %12999 = vmatpush2.msra.mxu0 %v12207
    %13000 = vmatprep.subr.mxu0 0.0
    %13001 = vmatpush2.msra.mxu0 %v12206
    %13002 = vmatprep.subr.mxu0 0.0
    %13003 = vmatpush2.msra.mxu0 %v12205
    %13004 = vmatprep.subr.mxu0 0.0
    %13005 = vmatpush2.msra.mxu0 %v12204
    %13006 = vmatprep.subr.mxu0 0.0
    %13007 = vmatpush2.msra.mxu0 %v12203
    %13008 = vmatprep.subr.mxu0 0.0
    %13009 = vmatpush2.msra.mxu0 %v12202
    %13010 = vmatprep.subr.mxu0 0.0
    %13011 = vmatpush2.msra.mxu0 %v12201
    %13012 = vmatprep.subr.mxu0 0.0
    %13013 = vmatpush2.msra.mxu0 %v12200
    %13014 = vmatprep.subr.mxu0 0.0
    %13015 = vmatpush2.msra.mxu0 %v12199
    %13016 = vmatprep.subr.mxu0 0.0
    %13017 = vmatpush2.msra.mxu0 %v12198
    %13018 = vmatprep.subr.mxu0 0.0
    %13019 = vmatpush2.msra.mxu0 %v12197
    %13020 = vmatprep.subr.mxu0 0.0
    %13021 = vmatpush2.msra.mxu0 %v12196
    %13022 = vmatprep.subr.mxu0 0.0
    %13023 = vmatpush2.msra.mxu0 %v12195
    %13024 = vmatprep.subr.mxu0 0.0
    %13025 = vmatpush2.msra.mxu0 %v12194
    %13026 = vmatprep.subr.mxu0 0.0
    %13027 = vmatpush2.msra.mxu0 %v12193
    %13028 = vmatprep.mubr.f32.mxu0 %v11844
    %13029 = vmatmul.mubr.f32.gmra.mxu0 %v11841
    %v13030 = vpop.f32.mrf.mxu0
    %v13031 = vadd.f32 %v12961, %v13030
    %v13032 = vpop.f32.mrf.mxu0
    %13033 = vdwg.mxu0
    %13034 = vmatprep.subr.mxu0 0.0
    %13035 = vmatpush1.msra.mxu0 %v12224
    %13036 = vmatprep.subr.mxu0 0.0
    %13037 = vmatpush1.msra.mxu0 %v12223
    %13038 = vmatprep.subr.mxu0 0.0
    %13039 = vmatpush1.msra.mxu0 %v12222
    %13040 = vmatprep.subr.mxu0 0.0
    %13041 = vmatpush1.msra.mxu0 %v12221
    %13042 = vmatprep.subr.mxu0 0.0
    %13043 = vmatpush1.msra.mxu0 %v12220
    %13044 = vmatprep.subr.mxu0 0.0
    %13045 = vmatpush1.msra.mxu0 %v12219
    %13046 = vmatprep.subr.mxu0 0.0
    %13047 = vmatpush1.msra.mxu0 %v12218
    %13048 = vmatprep.subr.mxu0 0.0
    %13049 = vmatpush1.msra.mxu0 %v12217
    %13050 = vmatprep.subr.mxu0 0.0
    %13051 = vmatpush1.msra.mxu0 %v12216
    %13052 = vmatprep.subr.mxu0 0.0
    %13053 = vmatpush1.msra.mxu0 %v12215
    %13054 = vmatprep.subr.mxu0 0.0
    %13055 = vmatpush1.msra.mxu0 %v12214
    %13056 = vmatprep.subr.mxu0 0.0
    %13057 = vmatpush1.msra.mxu0 %v12213
    %13058 = vmatprep.subr.mxu0 0.0
    %13059 = vmatpush1.msra.mxu0 %v12212
    %13060 = vmatprep.subr.mxu0 0.0
    %13061 = vmatpush1.msra.mxu0 %v12211
    %13062 = vmatprep.subr.mxu0 0.0
    %13063 = vmatpush1.msra.mxu0 %v12210
    %13064 = vmatprep.subr.mxu0 0.0
    %13065 = vmatpush1.msra.mxu0 %v12209
    %13066 = vmatprep.subr.mxu0 0.0
    %13067 = vmatpush2.msra.mxu0 %v12240
    %13068 = vmatprep.subr.mxu0 0.0
    %13069 = vmatpush2.msra.mxu0 %v12239
    %13070 = vmatprep.subr.mxu0 0.0
    %13071 = vmatpush2.msra.mxu0 %v12238
    %13072 = vmatprep.subr.mxu0 0.0
    %13073 = vmatpush2.msra.mxu0 %v12237
    %13074 = vmatprep.subr.mxu0 0.0
    %13075 = vmatpush2.msra.mxu0 %v12236
    %13076 = vmatprep.subr.mxu0 0.0
    %13077 = vmatpush2.msra.mxu0 %v12235
    %13078 = vmatprep.subr.mxu0 0.0
    %13079 = vmatpush2.msra.mxu0 %v12234
    %13080 = vmatprep.subr.mxu0 0.0
    %13081 = vmatpush2.msra.mxu0 %v12233
    %13082 = vmatprep.subr.mxu0 0.0
    %13083 = vmatpush2.msra.mxu0 %v12232
    %13084 = vmatprep.subr.mxu0 0.0
    %13085 = vmatpush2.msra.mxu0 %v12231
    %13086 = vmatprep.subr.mxu0 0.0
    %13087 = vmatpush2.msra.mxu0 %v12230
    %13088 = vmatprep.subr.mxu0 0.0
    %13089 = vmatpush2.msra.mxu0 %v12229
    %13090 = vmatprep.subr.mxu0 0.0
    %13091 = vmatpush2.msra.mxu0 %v12228
    %13092 = vmatprep.subr.mxu0 0.0
    %13093 = vmatpush2.msra.mxu0 %v12227
    %13094 = vmatprep.subr.mxu0 0.0
    %13095 = vmatpush2.msra.mxu0 %v12226
    %13096 = vmatprep.subr.mxu0 0.0
    %13097 = vmatpush2.msra.mxu0 %v12225
    %13098 = vmatprep.mubr.f32.mxu0 %v11852
    %13099 = vmatmul.mubr.f32.gmra.mxu0 %v11848
    %v13100 = vpop.f32.mrf.mxu0
    %v13101 = vadd.f32 %v13031, %v13100
    %v13102 = vpop.f32.mrf.mxu0
    %13103 = vdwg.mxu0
    %13104 = vmatprep.subr.mxu0 0.0
    %13105 = vmatpush1.msra.mxu0 %v12256
    %13106 = vmatprep.subr.mxu0 0.0
    %13107 = vmatpush1.msra.mxu0 %v12255
    %13108 = vmatprep.subr.mxu0 0.0
    %13109 = vmatpush1.msra.mxu0 %v12254
    %13110 = vmatprep.subr.mxu0 0.0
    %13111 = vmatpush1.msra.mxu0 %v12253
    %13112 = vmatprep.subr.mxu0 0.0
    %13113 = vmatpush1.msra.mxu0 %v12252
    %13114 = vmatprep.subr.mxu0 0.0
    %13115 = vmatpush1.msra.mxu0 %v12251
    %13116 = vmatprep.subr.mxu0 0.0
    %13117 = vmatpush1.msra.mxu0 %v12250
    %13118 = vmatprep.subr.mxu0 0.0
    %13119 = vmatpush1.msra.mxu0 %v12249
    %13120 = vmatprep.subr.mxu0 0.0
    %13121 = vmatpush1.msra.mxu0 %v12248
    %13122 = vmatprep.subr.mxu0 0.0
    %13123 = vmatpush1.msra.mxu0 %v12247
    %13124 = vmatprep.subr.mxu0 0.0
    %13125 = vmatpush1.msra.mxu0 %v12246
    %13126 = vmatprep.subr.mxu0 0.0
    %13127 = vmatpush1.msra.mxu0 %v12245
    %13128 = vmatprep.subr.mxu0 0.0
    %13129 = vmatpush1.msra.mxu0 %v12244
    %13130 = vmatprep.subr.mxu0 0.0
    %13131 = vmatpush1.msra.mxu0 %v12243
    %13132 = vmatprep.subr.mxu0 0.0
    %13133 = vmatpush1.msra.mxu0 %v12242
    %13134 = vmatprep.subr.mxu0 0.0
    %13135 = vmatpush1.msra.mxu0 %v12241
    %13136 = vmatprep.subr.mxu0 0.0
    %13137 = vmatpush2.msra.mxu0 0.0
    %13138 = vmatprep.subr.mxu0 0.0
    %13139 = vmatpush2.msra.mxu0 0.0
    %13140 = vmatprep.subr.mxu0 0.0
    %13141 = vmatpush2.msra.mxu0 0.0
    %13142 = vmatprep.subr.mxu0 0.0
    %13143 = vmatpush2.msra.mxu0 0.0
    %13144 = vmatprep.subr.mxu0 0.0
    %13145 = vmatpush2.msra.mxu0 0.0
    %13146 = vmatprep.subr.mxu0 0.0
    %13147 = vmatpush2.msra.mxu0 0.0
    %13148 = vmatprep.subr.mxu0 0.0
    %13149 = vmatpush2.msra.mxu0 0.0
    %13150 = vmatprep.subr.mxu0 0.0
    %13151 = vmatpush2.msra.mxu0 0.0
    %13152 = vmatprep.subr.mxu0 0.0
    %13153 = vmatpush2.msra.mxu0 0.0
    %13154 = vmatprep.subr.mxu0 0.0
    %13155 = vmatpush2.msra.mxu0 0.0
    %13156 = vmatprep.subr.mxu0 0.0
    %13157 = vmatpush2.msra.mxu0 0.0
    %13158 = vmatprep.subr.mxu0 0.0
    %13159 = vmatpush2.msra.mxu0 0.0
    %13160 = vmatprep.subr.mxu0 0.0
    %13161 = vmatpush2.msra.mxu0 0.0
    %13162 = vmatprep.subr.mxu0 0.0
    %13163 = vmatpush2.msra.mxu0 0.0
    %13164 = vmatprep.subr.mxu0 0.0
    %13165 = vmatpush2.msra.mxu0 0.0
    %13166 = vmatprep.subr.mxu0 0.0
    %13167 = vmatpush2.msra.mxu0 0.0
    %13168 = vmatprep.mubr.f32.mxu0 0.0
    %13169 = vmatmul.mubr.f32.gmra.mxu0 %v11856
    %v13170 = vpop.f32.mrf.mxu0
    %v13171 = vadd.f32 %v13101, %v13170
    %v13172 = vpop.f32.mrf.mxu0
    %13173 = vdwg.mxu0
    %v13174 = vmax.f32 %v13171, 0.0
    %v13175 = vld [vmem:[#allocation13] sm:$0xff]
    %v13176 = vld [vmem:[#allocation13 + $0x8] sm:$0xff]
    %v13177 = vld [vmem:[#allocation13 + $0x10] sm:$0xff]
    %v13178 = vld [vmem:[#allocation13 + $0x18] sm:$0xff]
    %v13179 = vld [vmem:[#allocation13 + $0x20] sm:$0xff]
    %v13180 = vld [vmem:[#allocation13 + $0x28] sm:$0xff]
    %v13181 = vld [vmem:[#allocation13 + $0x30] sm:$0xff]
    %v13182 = vld [vmem:[#allocation13 + $0x38] sm:$0xff]
    %v13183 = vld [vmem:[#allocation13 + $0x40] sm:$0xff]
    %v13184 = vld [vmem:[#allocation13 + $0x48] sm:$0xff]
    %v13185 = vld [vmem:[#allocation13 + $0x50] sm:$0xff]
    %v13186 = vld [vmem:[#allocation13 + $0x58] sm:$0xff]
    %v13187 = vld [vmem:[#allocation13 + $0x60] sm:$0xff]
    %v13188 = vld [vmem:[#allocation13 + $0x68] sm:$0xff]
    %v13189 = vld [vmem:[#allocation13 + $0x70] sm:$0xff]
    %v13190 = vld [vmem:[#allocation13 + $0x78] sm:$0xff]
    %v13191 = vld [vmem:[#allocation14] sm:$0x1]
    %v13193 = vlaneseq
    %v13194 = vshrl.u32 %v13193, 7
    %v13195 = vsub.s32 0, %v13194
    %v13196 = vrot.slane %v13191, %v13195
    %13198 = vmatprep.subr.mxu0 0.0
    %13199 = vmatpush1.msra.mxu0 %v13190
    %13200 = vmatprep.subr.mxu0 0.0
    %13201 = vmatpush1.msra.mxu0 %v13189
    %13202 = vmatprep.subr.mxu0 0.0
    %13203 = vmatpush1.msra.mxu0 %v13188
    %13204 = vmatprep.subr.mxu0 0.0
    %13205 = vmatpush1.msra.mxu0 %v13187
    %13206 = vmatprep.subr.mxu0 0.0
    %13207 = vmatpush1.msra.mxu0 %v13186
    %13208 = vmatprep.subr.mxu0 0.0
    %13209 = vmatpush1.msra.mxu0 %v13185
    %13210 = vmatprep.subr.mxu0 0.0
    %13211 = vmatpush1.msra.mxu0 %v13184
    %13212 = vmatprep.subr.mxu0 0.0
    %13213 = vmatpush1.msra.mxu0 %v13183
    %13214 = vmatprep.subr.mxu0 0.0
    %13215 = vmatpush1.msra.mxu0 %v13182
    %13216 = vmatprep.subr.mxu0 0.0
    %13217 = vmatpush1.msra.mxu0 %v13181
    %13218 = vmatprep.subr.mxu0 0.0
    %13219 = vmatpush1.msra.mxu0 %v13180
    %13220 = vmatprep.subr.mxu0 0.0
    %13221 = vmatpush1.msra.mxu0 %v13179
    %13222 = vmatprep.subr.mxu0 0.0
    %13223 = vmatpush1.msra.mxu0 %v13178
    %13224 = vmatprep.subr.mxu0 0.0
    %13225 = vmatpush1.msra.mxu0 %v13177
    %13226 = vmatprep.subr.mxu0 0.0
    %13227 = vmatpush1.msra.mxu0 %v13176
    %13228 = vmatprep.subr.mxu0 0.0
    %13229 = vmatpush1.msra.mxu0 %v13175
    %13230 = vmatprep.subr.mxu0 0.0
    %13231 = vmatpush2.msra.mxu0 0.0
    %13232 = vmatprep.subr.mxu0 0.0
    %13233 = vmatpush2.msra.mxu0 0.0
    %13234 = vmatprep.subr.mxu0 0.0
    %13235 = vmatpush2.msra.mxu0 0.0
    %13236 = vmatprep.subr.mxu0 0.0
    %13237 = vmatpush2.msra.mxu0 0.0
    %13238 = vmatprep.subr.mxu0 0.0
    %13239 = vmatpush2.msra.mxu0 0.0
    %13240 = vmatprep.subr.mxu0 0.0
    %13241 = vmatpush2.msra.mxu0 0.0
    %13242 = vmatprep.subr.mxu0 0.0
    %13243 = vmatpush2.msra.mxu0 0.0
    %13244 = vmatprep.subr.mxu0 0.0
    %13245 = vmatpush2.msra.mxu0 0.0
    %13246 = vmatprep.subr.mxu0 0.0
    %13247 = vmatpush2.msra.mxu0 0.0
    %13248 = vmatprep.subr.mxu0 0.0
    %13249 = vmatpush2.msra.mxu0 0.0
    %13250 = vmatprep.subr.mxu0 0.0
    %13251 = vmatpush2.msra.mxu0 0.0
    %13252 = vmatprep.subr.mxu0 0.0
    %13253 = vmatpush2.msra.mxu0 0.0
    %13254 = vmatprep.subr.mxu0 0.0
    %13255 = vmatpush2.msra.mxu0 0.0
    %13256 = vmatprep.subr.mxu0 0.0
    %13257 = vmatpush2.msra.mxu0 0.0
    %13258 = vmatprep.subr.mxu0 0.0
    %13259 = vmatpush2.msra.mxu0 0.0
    %13260 = vmatprep.subr.mxu0 0.0
    %13261 = vmatpush2.msra.mxu0 0.0
    %13262 = vmatprep.mubr.f32.mxu0 0.0
    %13263 = vmatmul.mubr.f32.gmra.mxu0 %v13174
    %v13264 = vpop.f32.mrf.mxu0
    %v13265 = vadd.f32 %v13196, %v13264
    %v13266 = vpop.f32.mrf.mxu0
    %13267 = vdwg.mxu0
    %13268 = vst [vmem:[#allocation16] sm:$0x3] %v13265
    // Predicated region
    $region70: #{cnn_forward.1} parent=1 // pred_check
      _
    $region71: #{cnn_forward.1} parent=1 // pred_check_branch
      %13270 = sbr.rel (0) target = $region73
    $region72: #{cnn_forward.1} parent=1 // pred_region
      %s13272 = ssub.s32 32, 32
      %13273 = vsyncadd [#allocation4], %s13272
      %s13275 = sshll.u32 [#allocation16], 4
      %s13276 = int_to_ptr.vmem [resolvable:$true] %s13275
      %13278 = dma.vmem_to_hbm [thread:$0]  %s13276, 32, %s9, [#allocation4]
    $region73: #{cnn_forward.1} parent=1 // pred_fallthru
      _
    // Predicated region
    $region74: #{cnn_forward.1} parent=1 // pred_check
      _
    $region75: #{cnn_forward.1} parent=1 // pred_check_branch
      %13280 = sbr.rel (0) target = $region77
    $region76: #{cnn_forward.1} parent=1 // pred_region
      %13281 = dma.done [#allocation4], 32
    $region77: #{cnn_forward.1} parent=1 // pred_fallthru
      _
    %13282 = vsyncpa [#allocation3], 1
    %13283 = vsyncpa [#allocation6], 1
    %13284 = vsyncpa [#allocation9], 1
    %13285 = vsyncpa [#allocation12], 1
    %13286 = vsyncpa [#allocation15], 1
    %13287 = vsyncpa [#allocation4], 1

</llo_original>
